<compile_context>
chip_gen: v5e
topology: v5e:2x2
jax: 0.10.0
libtpu: 0.0.40
codegen_flags: <defaults>
</compile_context>

<pallas_src>
import functools
import math

import jax
import jax.numpy as jnp
from jax import lax
from jax.experimental import pallas as pl
from jax.experimental.pallas import tpu as pltpu


# ---------------------------------------------------------------------------
# Kernel
# ---------------------------------------------------------------------------
def multivae_kernel(
    x_ref,            # (TB, N)   bf16   interaction rows (un-normalized)
    s_ref,            # (TB, 1)   f32    per-row 1 / max(||x||, eps), exact f32
    w1_ref, b1_ref,   # (N, H)    bf16 / (1, H)  f32     encoder Linear 1
    w2_ref, b2_ref,   # (H, 2L)   bf16 / (1, 2L) f32     encoder Linear 2 (mu|logvar fused)
    w3_ref, b3_ref,   # (L, H) or (H, H) bf16 / (1, H) f32  decoder Linear 1 (maybe precomposed)
    w4_ref, b4_ref,   # (H, N)    bf16 / (1, N)  f32     decoder Linear 2
    recon_ref,        # (TB, N)   recon dtype (bf16 by default)
    enc_ref,          # (TB, 2L)  f32    fused mu|logvar output
    *, act_dtype, fuse_decoder,
):
    mxu_dtype = w2_ref.dtype

    def act(pre):
        # tanh in bf16 on v6e/v7x (EUP throughput, halves activation traffic);
        # f32 tanh on pre-v6 chips.  Output dtype always matches the MXU weights.
        if act_dtype == jnp.float32:
            return jnp.tanh(pre).astype(mxu_dtype)
        return jnp.tanh(pre.astype(act_dtype)).astype(mxu_dtype)

    # Encoder layer 1.  F.normalize(x, dim=1) is folded in after the matmul
    # (the scale is per-row, matmul is linear): h1 * s == (x * s) @ w1.
    h1 = jnp.dot(x_ref[...], w1_ref[...], preferred_element_type=jnp.float32)
    h = act(h1 * s_ref[...] + b1_ref[...])

    # Encoder layer 2 (mu | logvar fused) -> one lane-dense (TB, 2L) store.
    enc = jnp.dot(h, w2_ref[...], preferred_element_type=jnp.float32) + b2_ref[...]
    enc_ref[...] = enc

    # Decoder (eval mode: Dropout = identity, z = mu).
    if fuse_decoder:
        # w3_ref/b3_ref hold the precomposed (mu-projection o decoder.0) weights,
        # so the (H,H) matmul fully fills a 256-wide MXU and skips the h2 slice.
        d_in = h
    else:
        latent = w3_ref.shape[0]
        d_in = enc[:, :latent].astype(mxu_dtype)
    d = act(jnp.dot(d_in, w3_ref[...], preferred_element_type=jnp.float32)
            + b3_ref[...])
    recon = jnp.dot(d, w4_ref[...], preferred_element_type=jnp.float32) + b4_ref[...]
    recon_ref[...] = recon.astype(recon_ref.dtype)


# ---------------------------------------------------------------------------
# Generation / tiling helpers
# ---------------------------------------------------------------------------
def _device_kind():
    try:
        return jax.devices()[0].device_kind.lower()
    except Exception:
        return ""


def _is_pre_v6(kind):
    # v2-v5: 128-wide MXU, no bf16 VPU/EUP -> keep f32 tanh, skip decoder fusion.
    return any(tag in kind for tag in ("v2", "v3", "v4", "v5"))


def _is_v7(kind):
    return ("v7" in kind) or ("7x" in kind)


def _pick_block_b(B):
    # Prefer big tiles (amortize the ~0.35 us/step overhead, fill MXU rows) but
    # keep grid >= 2 so the "parallel" batch axis shards across both v7x TCs.
    for cand in (256, 128, 64, 32, 16, 8):
        if B % cand == 0 and B // cand >= 2:
            return cand
    return B


# ---------------------------------------------------------------------------
# Parameter preparation (cast / precompose ONCE, reuse across forward calls)
# ---------------------------------------------------------------------------
def prepare_params(params, *, fuse_decoder=None, act_dtype=None):
    kind = _device_kind()
    pre_v6 = _is_pre_v6(kind)
    if fuse_decoder is None:
        fuse_decoder = not pre_v6
    if act_dtype is None:
        act_dtype = jnp.float32 if pre_v6 else jnp.bfloat16

    bf16 = jnp.bfloat16
    L = params["w2"].shape[1] // 2
    kp = {
        "w1": params["w1"].astype(bf16), "b1": params["b1"],
        "w2": params["w2"].astype(bf16), "b2": params["b2"],
        "w4": params["w4"].astype(bf16), "b4": params["b4"],
        "fuse_decoder": fuse_decoder, "act_dtype": act_dtype,
    }
    if fuse_decoder:
        # Eval-mode-only precomposition (no dropout/noise between the layers):
        # z = mu = h @ w2_mu + b2_mu  =>  d_pre = h @ (w2_mu @ w3) + (b2_mu @ w3 + b3).
        # Compose in f32, cast once to bf16.
        w2_mu = params["w2"][:, :L]
        b2_mu = params["b2"][:, :L]
        kp["w3"] = (w2_mu @ params["w3"]).astype(bf16)          # (H, H)
        kp["b3"] = b2_mu @ params["w3"] + params["b3"]          # (1, H) f32
    else:
        kp["w3"] = params["w3"].astype(bf16)                    # (L, H)
        kp["b3"] = params["b3"]
    return kp


# ---------------------------------------------------------------------------
# pallas_call construction
# ---------------------------------------------------------------------------
def _build_call(B, N, H, L2, block_b, fuse_decoder, act_dtype, recon_dtype,
                single_buffer_weights, vmem_limit):
    grid = (B // block_b,)
    batch_map = lambda i: (i, 0)     # streamed over the batch grid
    resident = lambda i: (0, 0)      # same block every step -> VMEM-resident

    def wspec(shape):
        # Constant index_maps never re-fetch: single-buffer the resident weights.
        if single_buffer_weights:
            return pl.BlockSpec(shape, resident, pipeline_mode=pl.Buffered(1))
        return pl.BlockSpec(shape, resident)

    dec_in = H if fuse_decoder else (L2 // 2)

    in_specs = [
        pl.BlockSpec((block_b, N), batch_map),   # x (bf16)
        pl.BlockSpec((block_b, 1), batch_map),   # s (f32 row scales)
        wspec((N, H)), wspec((1, H)),            # w1, b1
        wspec((H, L2)), wspec((1, L2)),          # w2, b2
        wspec((dec_in, H)), wspec((1, H)),       # w3, b3 (maybe precomposed)
        wspec((H, N)), wspec((1, N)),            # w4, b4
    ]
    out_specs = (
        pl.BlockSpec((block_b, N), batch_map),   # recon
        pl.BlockSpec((block_b, L2), batch_map),  # mu|logvar fused
    )

    kernel = functools.partial(multivae_kernel, act_dtype=act_dtype,
                               fuse_decoder=fuse_decoder)
    return pl.pallas_call(
        kernel,
        out_shape=(
            jax.ShapeDtypeStruct((B, N), recon_dtype),
            jax.ShapeDtypeStruct((B, L2), jnp.float32),
        ),
        grid_spec=pltpu.PrefetchScalarGridSpec(
            num_scalar_prefetch=0,
            grid=grid,
            in_specs=in_specs,
            out_specs=out_specs,
        ),
        compiler_params=pltpu.CompilerParams(
            dimension_semantics=("parallel",),
            vmem_limit_bytes=vmem_limit,
        ),
    )


def multivae_forward(x, kparams, *, block_b=None, recon_dtype=jnp.bfloat16):
    """x: (B, N) float32.  kparams: output of prepare_params()."""
    B, N = x.shape
    H = kparams["w1"].shape[1]
    L2 = kparams["w2"].shape[1]
    L = L2 // 2
    fuse_decoder = kparams["fuse_decoder"]
    act_dtype = kparams["act_dtype"]

    if block_b is None:
        block_b = _pick_block_b(B)
    assert B % block_b == 0, "batch must be divisible by the batch tile"

    # F.normalize(x, dim=1) scale computed in exact f32 in the wrapper
    # (eps = 1e-12 -> eps^2 = 1e-24), passed as a tiny (B, 1) input.
    xf = x.astype(jnp.float32)
    s = lax.rsqrt(jnp.maximum(jnp.sum(xf * xf, axis=1, keepdims=True), 1e-24))
    x_mxu = x.astype(kparams["w1"].dtype)

    args = (x_mxu, s,
            kparams["w1"], kparams["b1"], kparams["w2"], kparams["b2"],
            kparams["w3"], kparams["b3"], kparams["w4"], kparams["b4"])

    weight_bytes = sum(int(kparams[k].size) * kparams[k].dtype.itemsize
                       for k in ("w1", "w2", "w3", "w4"))
    bias_bytes = sum(int(kparams[k].size) * 4 for k in ("b1", "b2", "b3", "b4"))
    stream_bytes = 2 * (block_b * N * 2                                   # x tile (bf16)
                        + block_b * 4                                     # s tile
                        + block_b * N * jnp.dtype(recon_dtype).itemsize   # recon tile
                        + block_b * L2 * 4)                               # mu|logvar tile
    vmem_cap = (48 << 20) if _is_v7(_device_kind()) else (96 << 20)

    def run(single_buffer_weights):
        wmul = 1 if single_buffer_weights else 2
        vmem_limit = wmul * (weight_bytes + bias_bytes) + stream_bytes + (4 << 20)
        vmem_limit = int(min(max(vmem_limit, 16 << 20), vmem_cap))
        call = _build_call(B, N, H, L2, block_b, fuse_decoder, act_dtype,
                           recon_dtype, single_buffer_weights, vmem_limit)
        out = call(*args)
        jax.block_until_ready(out)
        return out

    try:
        recon, enc = run(True)       # single-buffered resident weights
    except Exception:                # pl.Buffered(1) unsupported -> default buffering
        recon, enc = run(False)

    return recon, enc[:, :L], enc[:, L:]


# ---------------------------------------------------------------------------
# Synthetic parameters + pure-JAX reference
# ---------------------------------------------------------------------------
def init_params(key, num_items, hidden_dim, latent_dim):
    """Deterministic synthetic parameters (PyTorch Linear shapes, pre-transposed).

    w2/b2 are kept as a single fused (hidden_dim, 2*latent_dim) projection.
    """
    ks = jax.random.split(key, 8)

    def lin(kw, kb, fan_in, fan_out):
        bound = 1.0 / math.sqrt(fan_in)
        w = jax.random.uniform(kw, (fan_in, fan_out), jnp.float32, -bound, bound)
        b = jax.random.uniform(kb, (1, fan_out), jnp.float32, -bound, bound)
        return w, b

    w1, b1 = lin(ks[0], ks[1], num_items, hidden_dim)
    w2, b2 = lin(ks[2], ks[3], hidden_dim, 2 * latent_dim)
    w3, b3 = lin(ks[4], ks[5], latent_dim, hidden_dim)
    w4, b4 = lin(ks[6], ks[7], hidden_dim, num_items)

    return {"w1": w1, "b1": b1, "w2": w2, "b2": b2,
            "w3": w3, "b3": b3, "w4": w4, "b4": b4}


def reference_forward(x, params):
    """Pure-JAX f32 reference of the same eval-mode forward (faithful to the module)."""
    L = params["w2"].shape[1] // 2
    norm = jnp.maximum(jnp.sqrt(jnp.sum(x * x, axis=1, keepdims=True)), 1e-12)
    xn = x / norm
    h = jnp.tanh(xn @ params["w1"] + params["b1"])
    h2 = h @ params["w2"] + params["b2"]
    mu, logvar = h2[:, :L], h2[:, L:]
    d = jnp.tanh(mu @ params["w3"] + params["b3"])
    recon = d @ params["w4"] + params["b4"]
    return recon, mu, logvar


if __name__ == "__main__":
    B, NUM_ITEMS, HIDDEN, LATENT = 512, 256, 256, 128

    key = jax.random.PRNGKey(0)
    kx, kp = jax.random.split(key)
    # Synthetic non-negative interaction indicators (typical MultiVAE input).
    x = jax.random.bernoulli(kx, 0.1, (B, NUM_ITEMS)).astype(jnp.float32)
    params = init_params(kp, NUM_ITEMS, HIDDEN, LATENT)
    kparams = prepare_params(params)   # bf16 casts / precomposition done ONCE

    recon, mu, logvar = multivae_forward(x, kparams)
    jax.block_until_ready((recon, mu, logvar))

    r_recon, r_mu, r_logvar = reference_forward(x, params)
    assert recon.shape == (B, NUM_ITEMS)
    assert mu.shape == (B, LATENT) and logvar.shape == (B, LATENT)
    # bf16 MXU operands / bf16 recon output vs pure-f32 reference -> loosened tol.
    assert jnp.allclose(recon.astype(jnp.float32), r_recon, atol=2e-2, rtol=2e-2)
    assert jnp.allclose(mu, r_mu, atol=2e-2, rtol=2e-2)
    assert jnp.allclose(logvar, r_logvar, atol=2e-2, rtol=2e-2)

    print("KERNEL_OK")
</pallas_src>

<mosaic_0001>
module attributes {stable_mosaic.version = 11 : i64} {
  func.func @multivae_kernel(%arg0: i32, %arg1: memref<256x256xbf16, #tpu.memory_space<vmem>>, %arg2: memref<256x1xf32, #tpu.memory_space<vmem>>, %arg3: memref<256x256xbf16, #tpu.memory_space<vmem>>, %arg4: memref<1x256xf32, #tpu.memory_space<vmem>>, %arg5: memref<256x256xbf16, #tpu.memory_space<vmem>>, %arg6: memref<1x256xf32, #tpu.memory_space<vmem>>, %arg7: memref<256x256xbf16, #tpu.memory_space<vmem>>, %arg8: memref<1x256xf32, #tpu.memory_space<vmem>>, %arg9: memref<256x256xbf16, #tpu.memory_space<vmem>>, %arg10: memref<1x256xf32, #tpu.memory_space<vmem>>, %arg11: memref<256x256xbf16, #tpu.memory_space<vmem>>, %arg12: memref<256x256xf32, #tpu.memory_space<vmem>>) attributes {dimension_semantics = [#tpu.dimension_semantics<parallel>], iteration_bounds = array<i64: 2>, scalar_prefetch = 0 : i64, scratch_operands = 0 : i64, tpu.core_type = #tpu.core_type<tc>, window_params = [{transform_indices = @transform_0, window_bounds = array<i64: 256, 256>}, {transform_indices = @transform_1, window_bounds = array<i64: 256, 1>}, {pipeline_mode = #tpu.pipeline_mode<synchronous>, transform_indices = @transform_2, window_bounds = array<i64: 256, 256>}, {pipeline_mode = #tpu.pipeline_mode<synchronous>, transform_indices = @transform_3, window_bounds = array<i64: 1, 256>}, {pipeline_mode = #tpu.pipeline_mode<synchronous>, transform_indices = @transform_4, window_bounds = array<i64: 256, 256>}, {pipeline_mode = #tpu.pipeline_mode<synchronous>, transform_indices = @transform_5, window_bounds = array<i64: 1, 256>}, {pipeline_mode = #tpu.pipeline_mode<synchronous>, transform_indices = @transform_6, window_bounds = array<i64: 256, 256>}, {pipeline_mode = #tpu.pipeline_mode<synchronous>, transform_indices = @transform_7, window_bounds = array<i64: 1, 256>}, {pipeline_mode = #tpu.pipeline_mode<synchronous>, transform_indices = @transform_8, window_bounds = array<i64: 256, 256>}, {pipeline_mode = #tpu.pipeline_mode<synchronous>, transform_indices = @transform_9, window_bounds = array<i64: 1, 256>}, {transform_indices = @transform_10, window_bounds = array<i64: 256, 256>}, {transform_indices = @transform_11, window_bounds = array<i64: 256, 256>}]} {
    %c0 = arith.constant 0 : index
    %c0_0 = arith.constant 0 : index
    %0 = vector.load %arg1[%c0, %c0_0] : memref<256x256xbf16, #tpu.memory_space<vmem>>, vector<256x256xbf16>
    %c0_1 = arith.constant 0 : index
    %c0_2 = arith.constant 0 : index
    %1 = vector.load %arg3[%c0_1, %c0_2] : memref<256x256xbf16, #tpu.memory_space<vmem>>, vector<256x256xbf16>
    %cst = arith.constant dense<0.000000e+00> : vector<256x256xf32>
    %2 = tpu.matmul %0, %1, %cst {dimension_numbers = #tpu.dot_dimension_numbers<[1], [0], [0], [1], [0, 0, 1, 1], [], []>} : vector<256x256xbf16>, vector<256x256xbf16>, vector<256x256xf32> -> vector<256x256xf32>
    %c0_3 = arith.constant 0 : index
    %c0_4 = arith.constant 0 : index
    %3 = vector.load %arg2[%c0_3, %c0_4] : memref<256x1xf32, #tpu.memory_space<vmem>>, vector<256x1xf32>
    %4 = vector.broadcast %3 : vector<256x1xf32> to vector<256x256xf32>
    %5 = arith.mulf %2, %4 : vector<256x256xf32>
    %c0_5 = arith.constant 0 : index
    %c0_6 = arith.constant 0 : index
    %6 = vector.load %arg4[%c0_5, %c0_6] : memref<1x256xf32, #tpu.memory_space<vmem>>, vector<1x256xf32>
    %7 = vector.broadcast %6 : vector<1x256xf32> to vector<256x256xf32>
    %8 = arith.addf %5, %7 : vector<256x256xf32>
    %9 = arith.truncf %8 : vector<256x256xf32> to vector<256x256xbf16>
    %10 = math.tanh %9 : vector<256x256xbf16>
    %c0_7 = arith.constant 0 : index
    %c0_8 = arith.constant 0 : index
    %11 = vector.load %arg5[%c0_7, %c0_8] : memref<256x256xbf16, #tpu.memory_space<vmem>>, vector<256x256xbf16>
    %cst_9 = arith.constant dense<0.000000e+00> : vector<256x256xf32>
    %12 = tpu.matmul %10, %11, %cst_9 {dimension_numbers = #tpu.dot_dimension_numbers<[1], [0], [0], [1], [0, 0, 1, 1], [], []>} : vector<256x256xbf16>, vector<256x256xbf16>, vector<256x256xf32> -> vector<256x256xf32>
    %c0_10 = arith.constant 0 : index
    %c0_11 = arith.constant 0 : index
    %13 = vector.load %arg6[%c0_10, %c0_11] : memref<1x256xf32, #tpu.memory_space<vmem>>, vector<1x256xf32>
    %14 = vector.broadcast %13 : vector<1x256xf32> to vector<256x256xf32>
    %15 = arith.addf %12, %14 : vector<256x256xf32>
    %c0_12 = arith.constant 0 : index
    %c0_13 = arith.constant 0 : index
    %16 = vector.load %arg12[%c0_12, %c0_13] : memref<256x256xf32, #tpu.memory_space<vmem>>, vector<256x256xf32>
    tpu.vector_store %arg12[%c0_12, %c0_13], %15 {strides = array<i32>} : memref<256x256xf32, #tpu.memory_space<vmem>>, vector<256x256xf32>,
    %c0_14 = arith.constant 0 : index
    %c0_15 = arith.constant 0 : index
    %17 = vector.load %arg7[%c0_14, %c0_15] : memref<256x256xbf16, #tpu.memory_space<vmem>>, vector<256x256xbf16>
    %cst_16 = arith.constant dense<0.000000e+00> : vector<256x256xf32>
    %18 = tpu.matmul %10, %17, %cst_16 {dimension_numbers = #tpu.dot_dimension_numbers<[1], [0], [0], [1], [0, 0, 1, 1], [], []>} : vector<256x256xbf16>, vector<256x256xbf16>, vector<256x256xf32> -> vector<256x256xf32>
    %c0_17 = arith.constant 0 : index
    %c0_18 = arith.constant 0 : index
    %19 = vector.load %arg8[%c0_17, %c0_18] : memref<1x256xf32, #tpu.memory_space<vmem>>, vector<1x256xf32>
    %20 = vector.broadcast %19 : vector<1x256xf32> to vector<256x256xf32>
    %21 = arith.addf %18, %20 : vector<256x256xf32>
    %22 = arith.truncf %21 : vector<256x256xf32> to vector<256x256xbf16>
    %23 = math.tanh %22 : vector<256x256xbf16>
    %c0_19 = arith.constant 0 : index
    %c0_20 = arith.constant 0 : index
    %24 = vector.load %arg9[%c0_19, %c0_20] : memref<256x256xbf16, #tpu.memory_space<vmem>>, vector<256x256xbf16>
    %cst_21 = arith.constant dense<0.000000e+00> : vector<256x256xf32>
    %25 = tpu.matmul %23, %24, %cst_21 {dimension_numbers = #tpu.dot_dimension_numbers<[1], [0], [0], [1], [0, 0, 1, 1], [], []>} : vector<256x256xbf16>, vector<256x256xbf16>, vector<256x256xf32> -> vector<256x256xf32>
    %c0_22 = arith.constant 0 : index
    %c0_23 = arith.constant 0 : index
    %26 = vector.load %arg10[%c0_22, %c0_23] : memref<1x256xf32, #tpu.memory_space<vmem>>, vector<1x256xf32>
    %27 = vector.broadcast %26 : vector<1x256xf32> to vector<256x256xf32>
    %28 = arith.addf %25, %27 : vector<256x256xf32>
    %29 = arith.truncf %28 : vector<256x256xf32> to vector<256x256xbf16>
    %c0_24 = arith.constant 0 : index
    %c0_25 = arith.constant 0 : index
    %30 = vector.load %arg11[%c0_24, %c0_25] : memref<256x256xbf16, #tpu.memory_space<vmem>>, vector<256x256xbf16>
    tpu.vector_store %arg11[%c0_24, %c0_25], %29 {strides = array<i32>} : memref<256x256xbf16, #tpu.memory_space<vmem>>, vector<256x256xbf16>,
    return
  }
  func.func @transform_0(%arg0: i32) -> (i32, i32) {
    %c0_i32 = arith.constant 0 : i32
    %c0_i32_0 = arith.constant 0 : i32
    return %arg0, %c0_i32 : i32, i32
  }
  func.func @transform_1(%arg0: i32) -> (i32, i32) {
    %c0_i32 = arith.constant 0 : i32
    %c0_i32_0 = arith.constant 0 : i32
    return %arg0, %c0_i32 : i32, i32
  }
  func.func @transform_2(%arg0: i32) -> (i32, i32) {
    %c0_i32 = arith.constant 0 : i32
    %c0_i32_0 = arith.constant 0 : i32
    %c0_i32_1 = arith.constant 0 : i32
    return %c0_i32, %c0_i32_0 : i32, i32
  }
  func.func @transform_3(%arg0: i32) -> (i32, i32) {
    %c0_i32 = arith.constant 0 : i32
    %c0_i32_0 = arith.constant 0 : i32
    %c0_i32_1 = arith.constant 0 : i32
    return %c0_i32, %c0_i32_0 : i32, i32
  }
  func.func @transform_4(%arg0: i32) -> (i32, i32) {
    %c0_i32 = arith.constant 0 : i32
    %c0_i32_0 = arith.constant 0 : i32
    %c0_i32_1 = arith.constant 0 : i32
    return %c0_i32, %c0_i32_0 : i32, i32
  }
  func.func @transform_5(%arg0: i32) -> (i32, i32) {
    %c0_i32 = arith.constant 0 : i32
    %c0_i32_0 = arith.constant 0 : i32
    %c0_i32_1 = arith.constant 0 : i32
    return %c0_i32, %c0_i32_0 : i32, i32
  }
  func.func @transform_6(%arg0: i32) -> (i32, i32) {
    %c0_i32 = arith.constant 0 : i32
    %c0_i32_0 = arith.constant 0 : i32
    %c0_i32_1 = arith.constant 0 : i32
    return %c0_i32, %c0_i32_0 : i32, i32
  }
  func.func @transform_7(%arg0: i32) -> (i32, i32) {
    %c0_i32 = arith.constant 0 : i32
    %c0_i32_0 = arith.constant 0 : i32
    %c0_i32_1 = arith.constant 0 : i32
    return %c0_i32, %c0_i32_0 : i32, i32
  }
  func.func @transform_8(%arg0: i32) -> (i32, i32) {
    %c0_i32 = arith.constant 0 : i32
    %c0_i32_0 = arith.constant 0 : i32
    %c0_i32_1 = arith.constant 0 : i32
    return %c0_i32, %c0_i32_0 : i32, i32
  }
  func.func @transform_9(%arg0: i32) -> (i32, i32) {
    %c0_i32 = arith.constant 0 : i32
    %c0_i32_0 = arith.constant 0 : i32
    %c0_i32_1 = arith.constant 0 : i32
    return %c0_i32, %c0_i32_0 : i32, i32
  }
  func.func @transform_10(%arg0: i32) -> (i32, i32) {
    %c0_i32 = arith.constant 0 : i32
    %c0_i32_0 = arith.constant 0 : i32
    return %arg0, %c0_i32 : i32, i32
  }
  func.func @transform_11(%arg0: i32) -> (i32, i32) {
    %c0_i32 = arith.constant 0 : i32
    %c0_i32_0 = arith.constant 0 : i32
    return %arg0, %c0_i32 : i32, i32
  }
}

module attributes {stable_mosaic.version = 11 : i64} {
  func.func @multivae_kernel(%arg0: i32, %arg1: memref<256x256xbf16, #tpu.memory_space<vmem>>, %arg2: memref<256x1xf32, #tpu.memory_space<vmem>>, %arg3: memref<256x256xbf16, #tpu.memory_space<vmem>>, %arg4: memref<1x256xf32, #tpu.memory_space<vmem>>, %arg5: memref<256x256xbf16, #tpu.memory_space<vmem>>, %arg6: memref<1x256xf32, #tpu.memory_space<vmem>>, %arg7: memref<256x256xbf16, #tpu.memory_space<vmem>>, %arg8: memref<1x256xf32, #tpu.memory_space<vmem>>, %arg9: memref<256x256xbf16, #tpu.memory_space<vmem>>, %arg10: memref<1x256xf32, #tpu.memory_space<vmem>>, %arg11: memref<256x256xbf16, #tpu.memory_space<vmem>>, %arg12: memref<256x256xf32, #tpu.memory_space<vmem>>) attributes {dimension_semantics = [#tpu.dimension_semantics<parallel>], iteration_bounds = array<i64: 2>, scalar_prefetch = 0 : i64, scratch_operands = 0 : i64, tpu.core_type = #tpu.core_type<tc>, window_params = [{transform_indices = @transform_0, window_bounds = array<i64: 256, 256>}, {transform_indices = @transform_1, window_bounds = array<i64: 256, 1>}, {pipeline_mode = #tpu.pipeline_mode<synchronous>, transform_indices = @transform_2, window_bounds = array<i64: 256, 256>}, {pipeline_mode = #tpu.pipeline_mode<synchronous>, transform_indices = @transform_3, window_bounds = array<i64: 1, 256>}, {pipeline_mode = #tpu.pipeline_mode<synchronous>, transform_indices = @transform_4, window_bounds = array<i64: 256, 256>}, {pipeline_mode = #tpu.pipeline_mode<synchronous>, transform_indices = @transform_5, window_bounds = array<i64: 1, 256>}, {pipeline_mode = #tpu.pipeline_mode<synchronous>, transform_indices = @transform_6, window_bounds = array<i64: 256, 256>}, {pipeline_mode = #tpu.pipeline_mode<synchronous>, transform_indices = @transform_7, window_bounds = array<i64: 1, 256>}, {pipeline_mode = #tpu.pipeline_mode<synchronous>, transform_indices = @transform_8, window_bounds = array<i64: 256, 256>}, {pipeline_mode = #tpu.pipeline_mode<synchronous>, transform_indices = @transform_9, window_bounds = array<i64: 1, 256>}, {transform_indices = @transform_10, window_bounds = array<i64: 256, 256>}, {transform_indices = @transform_11, window_bounds = array<i64: 256, 256>}]} {
    %c0 = arith.constant 0 : index
    %c0_0 = arith.constant 0 : index
    %0 = vector.load %arg1[%c0, %c0_0] : memref<256x256xbf16, #tpu.memory_space<vmem>>, vector<256x256xbf16>
    %c0_1 = arith.constant 0 : index
    %c0_2 = arith.constant 0 : index
    %1 = vector.load %arg3[%c0_1, %c0_2] : memref<256x256xbf16, #tpu.memory_space<vmem>>, vector<256x256xbf16>
    %cst = arith.constant dense<0.000000e+00> : vector<256x256xf32>
    %2 = tpu.matmul %0, %1, %cst {dimension_numbers = #tpu.dot_dimension_numbers<[1], [0], [0], [1], [0, 0, 1, 1], [], []>} : vector<256x256xbf16>, vector<256x256xbf16>, vector<256x256xf32> -> vector<256x256xf32>
    %c0_3 = arith.constant 0 : index
    %c0_4 = arith.constant 0 : index
    %3 = vector.load %arg2[%c0_3, %c0_4] : memref<256x1xf32, #tpu.memory_space<vmem>>, vector<256x1xf32>
    %4 = vector.broadcast %3 : vector<256x1xf32> to vector<256x256xf32>
    %5 = arith.mulf %2, %4 : vector<256x256xf32>
    %c0_5 = arith.constant 0 : index
    %c0_6 = arith.constant 0 : index
    %6 = vector.load %arg4[%c0_5, %c0_6] : memref<1x256xf32, #tpu.memory_space<vmem>>, vector<1x256xf32>
    %7 = vector.broadcast %6 : vector<1x256xf32> to vector<256x256xf32>
    %8 = arith.addf %5, %7 : vector<256x256xf32>
    %9 = arith.truncf %8 : vector<256x256xf32> to vector<256x256xbf16>
    %10 = math.tanh %9 : vector<256x256xbf16>
    %c0_7 = arith.constant 0 : index
    %c0_8 = arith.constant 0 : index
    %11 = vector.load %arg5[%c0_7, %c0_8] : memref<256x256xbf16, #tpu.memory_space<vmem>>, vector<256x256xbf16>
    %cst_9 = arith.constant dense<0.000000e+00> : vector<256x256xf32>
    %12 = tpu.matmul %10, %11, %cst_9 {dimension_numbers = #tpu.dot_dimension_numbers<[1], [0], [0], [1], [0, 0, 1, 1], [], []>} : vector<256x256xbf16>, vector<256x256xbf16>, vector<256x256xf32> -> vector<256x256xf32>
    %c0_10 = arith.constant 0 : index
    %c0_11 = arith.constant 0 : index
    %13 = vector.load %arg6[%c0_10, %c0_11] : memref<1x256xf32, #tpu.memory_space<vmem>>, vector<1x256xf32>
    %14 = vector.broadcast %13 : vector<1x256xf32> to vector<256x256xf32>
    %15 = arith.addf %12, %14 : vector<256x256xf32>
    %c0_12 = arith.constant 0 : index
    %c0_13 = arith.constant 0 : index
    %16 = vector.load %arg12[%c0_12, %c0_13] : memref<256x256xf32, #tpu.memory_space<vmem>>, vector<256x256xf32>
    tpu.vector_store %arg12[%c0_12, %c0_13], %15 {strides = array<i32>} : memref<256x256xf32, #tpu.memory_space<vmem>>, vector<256x256xf32>,
    %c0_14 = arith.constant 0 : index
    %c0_15 = arith.constant 0 : index
    %17 = vector.load %arg7[%c0_14, %c0_15] : memref<256x256xbf16, #tpu.memory_space<vmem>>, vector<256x256xbf16>
    %cst_16 = arith.constant dense<0.000000e+00> : vector<256x256xf32>
    %18 = tpu.matmul %10, %17, %cst_16 {dimension_numbers = #tpu.dot_dimension_numbers<[1], [0], [0], [1], [0, 0, 1, 1], [], []>} : vector<256x256xbf16>, vector<256x256xbf16>, vector<256x256xf32> -> vector<256x256xf32>
    %c0_17 = arith.constant 0 : index
    %c0_18 = arith.constant 0 : index
    %19 = vector.load %arg8[%c0_17, %c0_18] : memref<1x256xf32, #tpu.memory_space<vmem>>, vector<1x256xf32>
    %20 = vector.broadcast %19 : vector<1x256xf32> to vector<256x256xf32>
    %21 = arith.addf %18, %20 : vector<256x256xf32>
    %22 = arith.truncf %21 : vector<256x256xf32> to vector<256x256xbf16>
    %23 = math.tanh %22 : vector<256x256xbf16>
    %c0_19 = arith.constant 0 : index
    %c0_20 = arith.constant 0 : index
    %24 = vector.load %arg9[%c0_19, %c0_20] : memref<256x256xbf16, #tpu.memory_space<vmem>>, vector<256x256xbf16>
    %cst_21 = arith.constant dense<0.000000e+00> : vector<256x256xf32>
    %25 = tpu.matmul %23, %24, %cst_21 {dimension_numbers = #tpu.dot_dimension_numbers<[1], [0], [0], [1], [0, 0, 1, 1], [], []>} : vector<256x256xbf16>, vector<256x256xbf16>, vector<256x256xf32> -> vector<256x256xf32>
    %c0_22 = arith.constant 0 : index
    %c0_23 = arith.constant 0 : index
    %26 = vector.load %arg10[%c0_22, %c0_23] : memref<1x256xf32, #tpu.memory_space<vmem>>, vector<1x256xf32>
    %27 = vector.broadcast %26 : vector<1x256xf32> to vector<256x256xf32>
    %28 = arith.addf %25, %27 : vector<256x256xf32>
    %29 = arith.truncf %28 : vector<256x256xf32> to vector<256x256xbf16>
    %c0_24 = arith.constant 0 : index
    %c0_25 = arith.constant 0 : index
    %30 = vector.load %arg11[%c0_24, %c0_25] : memref<256x256xbf16, #tpu.memory_space<vmem>>, vector<256x256xbf16>
    tpu.vector_store %arg11[%c0_24, %c0_25], %29 {strides = array<i32>} : memref<256x256xbf16, #tpu.memory_space<vmem>>, vector<256x256xbf16>,
    return
  }
  func.func @transform_0(%arg0: i32) -> (i32, i32) {
    %c0_i32 = arith.constant 0 : i32
    %c0_i32_0 = arith.constant 0 : i32
    return %arg0, %c0_i32 : i32, i32
  }
  func.func @transform_1(%arg0: i32) -> (i32, i32) {
    %c0_i32 = arith.constant 0 : i32
    %c0_i32_0 = arith.constant 0 : i32
    return %arg0, %c0_i32 : i32, i32
  }
  func.func @transform_2(%arg0: i32) -> (i32, i32) {
    %c0_i32 = arith.constant 0 : i32
    %c0_i32_0 = arith.constant 0 : i32
    %c0_i32_1 = arith.constant 0 : i32
    return %c0_i32, %c0_i32_0 : i32, i32
  }
  func.func @transform_3(%arg0: i32) -> (i32, i32) {
    %c0_i32 = arith.constant 0 : i32
    %c0_i32_0 = arith.constant 0 : i32
    %c0_i32_1 = arith.constant 0 : i32
    return %c0_i32, %c0_i32_0 : i32, i32
  }
  func.func @transform_4(%arg0: i32) -> (i32, i32) {
    %c0_i32 = arith.constant 0 : i32
    %c0_i32_0 = arith.constant 0 : i32
    %c0_i32_1 = arith.constant 0 : i32
    return %c0_i32, %c0_i32_0 : i32, i32
  }
  func.func @transform_5(%arg0: i32) -> (i32, i32) {
    %c0_i32 = arith.constant 0 : i32
    %c0_i32_0 = arith.constant 0 : i32
    %c0_i32_1 = arith.constant 0 : i32
    return %c0_i32, %c0_i32_0 : i32, i32
  }
  func.func @transform_6(%arg0: i32) -> (i32, i32) {
    %c0_i32 = arith.constant 0 : i32
    %c0_i32_0 = arith.constant 0 : i32
    %c0_i32_1 = arith.constant 0 : i32
    return %c0_i32, %c0_i32_0 : i32, i32
  }
  func.func @transform_7(%arg0: i32) -> (i32, i32) {
    %c0_i32 = arith.constant 0 : i32
    %c0_i32_0 = arith.constant 0 : i32
    %c0_i32_1 = arith.constant 0 : i32
    return %c0_i32, %c0_i32_0 : i32, i32
  }
  func.func @transform_8(%arg0: i32) -> (i32, i32) {
    %c0_i32 = arith.constant 0 : i32
    %c0_i32_0 = arith.constant 0 : i32
    %c0_i32_1 = arith.constant 0 : i32
    return %c0_i32, %c0_i32_0 : i32, i32
  }
  func.func @transform_9(%arg0: i32) -> (i32, i32) {
    %c0_i32 = arith.constant 0 : i32
    %c0_i32_0 = arith.constant 0 : i32
    %c0_i32_1 = arith.constant 0 : i32
    return %c0_i32, %c0_i32_0 : i32, i32
  }
  func.func @transform_10(%arg0: i32) -> (i32, i32) {
    %c0_i32 = arith.constant 0 : i32
    %c0_i32_0 = arith.constant 0 : i32
    return %arg0, %c0_i32 : i32, i32
  }
  func.func @transform_11(%arg0: i32) -> (i32, i32) {
    %c0_i32 = arith.constant 0 : i32
    %c0_i32_0 = arith.constant 0 : i32
    return %arg0, %c0_i32 : i32, i32
  }
}

</mosaic_0001>

<llo_original>
// kernel: tpu_custom_call.1
$region0: #{tpu_custom_call.1}
  #allocation0 [shape = 'u32[]', space=smem, size = 0x4, offset = 0x4, fixed_abs, tag = 'smem constant byte address 0x4 - core index']
  #allocation1 [shape = 'u32[72,128]{1,0:T(1,128)}', space=vmem, size = 0x9000, scoped, tag = 'internal scratch']
  %s0 = inlined_call_operand.vmem [shape: bf16[512,256], index: 0, kind: input, shape index: {}]
  %s1 = inlined_call_operand.vmem [shape: f32[512,1], index: 1, kind: input, shape index: {}]
  %s2 = inlined_call_operand.hbm [shape: bf16[256,256], index: 2, kind: input, shape index: {}]
  %s3 = inlined_call_operand.vmem [shape: f32[1,256], index: 3, kind: input, shape index: {}]
  %s4 = inlined_call_operand.hbm [shape: bf16[256,256], index: 4, kind: input, shape index: {}]
  %s5 = inlined_call_operand.vmem [shape: f32[1,256], index: 5, kind: input, shape index: {}]
  %s6 = inlined_call_operand.hbm [shape: bf16[256,256], index: 6, kind: input, shape index: {}]
  %s7 = inlined_call_operand.vmem [shape: f32[1,256], index: 7, kind: input, shape index: {}]
  %s8 = inlined_call_operand.hbm [shape: bf16[256,256], index: 8, kind: input, shape index: {}]
  %s9 = inlined_call_operand.vmem [shape: f32[1,256], index: 9, kind: input, shape index: {}]
  %s10 = inlined_call_operand.hbm [shape: bf16[512,256], index: 10, kind: output, shape index: {0}]
  %s11 = inlined_call_operand.hbm [shape: f32[512,256], index: 11, kind: output, shape index: {1}]
  %12 = xla_tuple %s10, %s11
  %s13 = sld [smem:[#allocation0]]
  $region97: #{tpu_custom_call.1} parent=0
    _
  %s15 = ssub.s32 1, %s13
  %s16 = scalar_select 0, %s15, %s13
  $region1: #{tpu_custom_call.1} parent=0
    #allocation2 [shape = 'u8[131072]{0}', space=vmem, size = 0x20000, scoped, tag = 'input window, operand 2, single buffered']
    #allocation3 [shape = 's32[2]{0}', space=sflag, size = 0x8, scoped, tag = 'scoped memory for tpu_custom_call.1']
    #allocation4 [shape = 's32[2]{0}', space=sflag, size = 0x8, scoped, tag = 'scoped memory for tpu_custom_call.1']
    #allocation5 [shape = 'u8[131072]{0}', space=vmem, size = 0x20000, scoped, tag = 'input window, operand 4, single buffered']
    #allocation6 [shape = 's32[1]{0}', space=sflag, size = 0x4, scoped, tag = 'scoped memory for tpu_custom_call.1']
    #allocation7 [shape = 'u8[131072]{0}', space=vmem, size = 0x20000, scoped, tag = 'input window, operand 6, single buffered']
    #allocation8 [shape = 'u8[131072]{0}', space=vmem, size = 0x20000, scoped, tag = 'input window, operand 8, single buffered']
    #allocation9 [shape = 's32[1]{0}', space=sflag, size = 0x4, scoped, tag = 'scoped memory for tpu_custom_call.1']
    #allocation10 [shape = 'u8[262144]{0}', space=vmem, size = 0x40000, scoped, tag = 'output window, operand 0']
    #allocation11 [shape = 'u8[524288]{0}', space=vmem, size = 0x80000, scoped, tag = 'output window, operand 1']
    #allocation12 [shape = 's32[2]{0}', space=sflag, size = 0x8, scoped, tag = 'scoped memory for tpu_custom_call.1']
    %17 = vsyncpa [#allocation3], 0
    %18 = vsyncpa [#allocation6], 0
    %19 = vsyncpa [#allocation9], 0
    %20 = vsyncpa [#allocation4], 0
    %s21 = scalar_lea.sflag [#allocation4], 1
    %22 = vsyncpa %s21, 0
    %23 = vsyncpa [#allocation12], 0
    %s24 = scalar_lea.sflag [#allocation12], 1
    %25 = vsyncpa %s24, 0
    loop: start=0, step=1, limit=4
    $region2: #{tpu_custom_call.1} parent=1 // loop_pre_header
      _
    $region3: #{tpu_custom_call.1} parent=1 // loop_header
      %s27 = sphi 0, %s31
      %p28 = scmp.ge.s32.totalorder %s27, 4
      %s37 = sphi 0, %s39
      %s40 = sphi 0, %s37
      %s41 = sphi 0, %s40
      %s57 = sphi 0, %s41
      %s63 = sphi 0, %s65
      %s66 = sphi 0, %s63
      %s67 = sphi 0, %s66
      %s83 = sphi 0, %s67
      %s87 = sphi 0, %s87
      %s89 = sphi 0, %s87
      %s90 = sphi 0, %s89
      %s104 = sphi 0, %s90
      %s108 = sphi 0, %s108
      %s110 = sphi 0, %s108
      %s111 = sphi 0, %s110
      %s125 = sphi 0, %s111
      %s129 = sphi 0, %s129
      %s131 = sphi 0, %s129
      %s132 = sphi 0, %s131
      %s146 = sphi 0, %s132
      %s150 = sphi 0, %s150
      %s152 = sphi 0, %s150
      %s153 = sphi 0, %s152
      %s167 = sphi 0, %s153
      %s171 = sphi 0, %s171
      %s173 = sphi 0, %s171
      %s174 = sphi 0, %s173
      %s188 = sphi 0, %s174
      %s192 = sphi 0, %s192
      %s194 = sphi 0, %s192
      %s195 = sphi 0, %s194
      %s209 = sphi 0, %s195
      %s213 = sphi 0, %s213
      %s215 = sphi 0, %s213
      %s216 = sphi 0, %s215
      %s230 = sphi 0, %s216
      %s234 = sphi 0, %s234
      %s236 = sphi 0, %s234
      %s237 = sphi 0, %s236
      %s251 = sphi 0, %s237
      %s257 = sphi 0, %s259
      %s260 = sphi 0, %s257
      %s261 = sphi 0, %s260
      %s277 = sphi 0, %s261
      %s283 = sphi 0, %s285
      %s286 = sphi 0, %s283
      %s287 = sphi 0, %s286
      %s303 = sphi 0, %s287
    $region4: #{tpu_custom_call.1} parent=1 // loop_header_branch
      %30 = sbr.rel (%p28) target = $region8
    $region5: #{tpu_custom_call.1} parent=1 // loop_body
      %s32 = ssub.s32 %s27, 1
      %s33 = ssub.s32 %s27, 2
      %s34 = sadd.s32 %s27, 1
      %s35 = ssub.s32 %s27, %s34
      %p36 = scmp.eq.s32.totalorder %s35, 0
      %s38 = sadd.s32 %s37, 1
      %s39 = scalar_select %p36, %s37, %s38
      %p42 = pneg %p36
      %p43 = scmp.eq.s32.totalorder %s27, 1
      %p44 = por %p42, %p43
      %p45 = scmp.ne.s32.totalorder %s37, %s40
      %p46 = scmp.eq.s32.totalorder %s27, 0
      %p47 = por %p45, %p46
      %p48 = scmp.ne.s32.totalorder %s37, %s40
      %p49 = scmp.eq.s32.totalorder %s32, 1
      %p50 = por %p48, %p49
      %p51 = scmp.ne.s32.totalorder %s40, %s41
      %p52 = scmp.eq.s32.totalorder %s32, 0
      %p53 = por %p51, %p52
      %p54 = scmp.ne.s32.totalorder %s40, %s41
      %p55 = scmp.eq.s32.totalorder %s33, 1
      %p56 = por %p54, %p55
      %p58 = scmp.ne.s32.totalorder %s41, %s57
      %p59 = scmp.eq.s32.totalorder %s33, 0
      %p60 = por %p58, %p59
      %s61 = ssub.s32 %s27, %s34
      %p62 = scmp.eq.s32.totalorder %s61, 0
      %s64 = sadd.s32 %s63, 1
      %s65 = scalar_select %p62, %s63, %s64
      %p68 = pneg %p62
      %p69 = scmp.eq.s32.totalorder %s27, 1
      %p70 = por %p68, %p69
      %p71 = scmp.ne.s32.totalorder %s63, %s66
      %p72 = scmp.eq.s32.totalorder %s27, 0
      %p73 = por %p71, %p72
      %p74 = scmp.ne.s32.totalorder %s63, %s66
      %p75 = scmp.eq.s32.totalorder %s32, 1
      %p76 = por %p74, %p75
      %p77 = scmp.ne.s32.totalorder %s66, %s67
      %p78 = scmp.eq.s32.totalorder %s32, 0
      %p79 = por %p77, %p78
      %p80 = scmp.ne.s32.totalorder %s66, %s67
      %p81 = scmp.eq.s32.totalorder %s33, 1
      %p82 = por %p80, %p81
      %p84 = scmp.ne.s32.totalorder %s67, %s83
      %p85 = scmp.eq.s32.totalorder %s33, 0
      %p86 = por %p84, %p85
      %s88 = sadd.s32 %s87, 1
      %p91 = scmp.eq.s32.totalorder %s27, 1
      %p92 = scmp.ne.s32.totalorder %s87, %s89
      %p93 = scmp.eq.s32.totalorder %s27, 0
      %p94 = por %p92, %p93
      %p95 = scmp.ne.s32.totalorder %s87, %s89
      %p96 = scmp.eq.s32.totalorder %s32, 1
      %p97 = por %p95, %p96
      %p98 = scmp.ne.s32.totalorder %s89, %s90
      %p99 = scmp.eq.s32.totalorder %s32, 0
      %p100 = por %p98, %p99
      %p101 = scmp.ne.s32.totalorder %s89, %s90
      %p102 = scmp.eq.s32.totalorder %s33, 1
      %p103 = por %p101, %p102
      %p105 = scmp.ne.s32.totalorder %s90, %s104
      %p106 = scmp.eq.s32.totalorder %s33, 0
      %p107 = por %p105, %p106
      %s109 = sadd.s32 %s108, 1
      %p112 = scmp.eq.s32.totalorder %s27, 1
      %p113 = scmp.ne.s32.totalorder %s108, %s110
      %p114 = scmp.eq.s32.totalorder %s27, 0
      %p115 = por %p113, %p114
      %p116 = scmp.ne.s32.totalorder %s108, %s110
      %p117 = scmp.eq.s32.totalorder %s32, 1
      %p118 = por %p116, %p117
      %p119 = scmp.ne.s32.totalorder %s110, %s111
      %p120 = scmp.eq.s32.totalorder %s32, 0
      %p121 = por %p119, %p120
      %p122 = scmp.ne.s32.totalorder %s110, %s111
      %p123 = scmp.eq.s32.totalorder %s33, 1
      %p124 = por %p122, %p123
      %p126 = scmp.ne.s32.totalorder %s111, %s125
      %p127 = scmp.eq.s32.totalorder %s33, 0
      %p128 = por %p126, %p127
      %s130 = sadd.s32 %s129, 1
      %p133 = scmp.eq.s32.totalorder %s27, 1
      %p134 = scmp.ne.s32.totalorder %s129, %s131
      %p135 = scmp.eq.s32.totalorder %s27, 0
      %p136 = por %p134, %p135
      %p137 = scmp.ne.s32.totalorder %s129, %s131
      %p138 = scmp.eq.s32.totalorder %s32, 1
      %p139 = por %p137, %p138
      %p140 = scmp.ne.s32.totalorder %s131, %s132
      %p141 = scmp.eq.s32.totalorder %s32, 0
      %p142 = por %p140, %p141
      %p143 = scmp.ne.s32.totalorder %s131, %s132
      %p144 = scmp.eq.s32.totalorder %s33, 1
      %p145 = por %p143, %p144
      %p147 = scmp.ne.s32.totalorder %s132, %s146
      %p148 = scmp.eq.s32.totalorder %s33, 0
      %p149 = por %p147, %p148
      %s151 = sadd.s32 %s150, 1
      %p154 = scmp.eq.s32.totalorder %s27, 1
      %p155 = scmp.ne.s32.totalorder %s150, %s152
      %p156 = scmp.eq.s32.totalorder %s27, 0
      %p157 = por %p155, %p156
      %p158 = scmp.ne.s32.totalorder %s150, %s152
      %p159 = scmp.eq.s32.totalorder %s32, 1
      %p160 = por %p158, %p159
      %p161 = scmp.ne.s32.totalorder %s152, %s153
      %p162 = scmp.eq.s32.totalorder %s32, 0
      %p163 = por %p161, %p162
      %p164 = scmp.ne.s32.totalorder %s152, %s153
      %p165 = scmp.eq.s32.totalorder %s33, 1
      %p166 = por %p164, %p165
      %p168 = scmp.ne.s32.totalorder %s153, %s167
      %p169 = scmp.eq.s32.totalorder %s33, 0
      %p170 = por %p168, %p169
      %s172 = sadd.s32 %s171, 1
      %p175 = scmp.eq.s32.totalorder %s27, 1
      %p176 = scmp.ne.s32.totalorder %s171, %s173
      %p177 = scmp.eq.s32.totalorder %s27, 0
      %p178 = por %p176, %p177
      %p179 = scmp.ne.s32.totalorder %s171, %s173
      %p180 = scmp.eq.s32.totalorder %s32, 1
      %p181 = por %p179, %p180
      %p182 = scmp.ne.s32.totalorder %s173, %s174
      %p183 = scmp.eq.s32.totalorder %s32, 0
      %p184 = por %p182, %p183
      %p185 = scmp.ne.s32.totalorder %s173, %s174
      %p186 = scmp.eq.s32.totalorder %s33, 1
      %p187 = por %p185, %p186
      %p189 = scmp.ne.s32.totalorder %s174, %s188
      %p190 = scmp.eq.s32.totalorder %s33, 0
      %p191 = por %p189, %p190
      %s193 = sadd.s32 %s192, 1
      %p196 = scmp.eq.s32.totalorder %s27, 1
      %p197 = scmp.ne.s32.totalorder %s192, %s194
      %p198 = scmp.eq.s32.totalorder %s27, 0
      %p199 = por %p197, %p198
      %p200 = scmp.ne.s32.totalorder %s192, %s194
      %p201 = scmp.eq.s32.totalorder %s32, 1
      %p202 = por %p200, %p201
      %p203 = scmp.ne.s32.totalorder %s194, %s195
      %p204 = scmp.eq.s32.totalorder %s32, 0
      %p205 = por %p203, %p204
      %p206 = scmp.ne.s32.totalorder %s194, %s195
      %p207 = scmp.eq.s32.totalorder %s33, 1
      %p208 = por %p206, %p207
      %p210 = scmp.ne.s32.totalorder %s195, %s209
      %p211 = scmp.eq.s32.totalorder %s33, 0
      %p212 = por %p210, %p211
      %s214 = sadd.s32 %s213, 1
      %p217 = scmp.eq.s32.totalorder %s27, 1
      %p218 = scmp.ne.s32.totalorder %s213, %s215
      %p219 = scmp.eq.s32.totalorder %s27, 0
      %p220 = por %p218, %p219
      %p221 = scmp.ne.s32.totalorder %s213, %s215
      %p222 = scmp.eq.s32.totalorder %s32, 1
      %p223 = por %p221, %p222
      %p224 = scmp.ne.s32.totalorder %s215, %s216
      %p225 = scmp.eq.s32.totalorder %s32, 0
      %p226 = por %p224, %p225
      %p227 = scmp.ne.s32.totalorder %s215, %s216
      %p228 = scmp.eq.s32.totalorder %s33, 1
      %p229 = por %p227, %p228
      %p231 = scmp.ne.s32.totalorder %s216, %s230
      %p232 = scmp.eq.s32.totalorder %s33, 0
      %p233 = por %p231, %p232
      %s235 = sadd.s32 %s234, 1
      %p238 = scmp.eq.s32.totalorder %s27, 1
      %p239 = scmp.ne.s32.totalorder %s234, %s236
      %p240 = scmp.eq.s32.totalorder %s27, 0
      %p241 = por %p239, %p240
      %p242 = scmp.ne.s32.totalorder %s234, %s236
      %p243 = scmp.eq.s32.totalorder %s32, 1
      %p244 = por %p242, %p243
      %p245 = scmp.ne.s32.totalorder %s236, %s237
      %p246 = scmp.eq.s32.totalorder %s32, 0
      %p247 = por %p245, %p246
      %p248 = scmp.ne.s32.totalorder %s236, %s237
      %p249 = scmp.eq.s32.totalorder %s33, 1
      %p250 = por %p248, %p249
      %p252 = scmp.ne.s32.totalorder %s237, %s251
      %p253 = scmp.eq.s32.totalorder %s33, 0
      %p254 = por %p252, %p253
      %s255 = ssub.s32 %s27, %s34
      %p256 = scmp.eq.s32.totalorder %s255, 0
      %s258 = sadd.s32 %s257, 1
      %s259 = scalar_select %p256, %s257, %s258
      %p262 = pneg %p256
      %p263 = scmp.eq.s32.totalorder %s27, 1
      %p264 = por %p262, %p263
      %p265 = scmp.ne.s32.totalorder %s257, %s260
      %p266 = scmp.eq.s32.totalorder %s27, 0
      %p267 = por %p265, %p266
      %p268 = scmp.ne.s32.totalorder %s257, %s260
      %p269 = scmp.eq.s32.totalorder %s32, 1
      %p270 = por %p268, %p269
      %p271 = scmp.ne.s32.totalorder %s260, %s261
      %p272 = scmp.eq.s32.totalorder %s32, 0
      %p273 = por %p271, %p272
      %p274 = scmp.ne.s32.totalorder %s260, %s261
      %p275 = scmp.eq.s32.totalorder %s33, 1
      %p276 = por %p274, %p275
      %p278 = scmp.ne.s32.totalorder %s261, %s277
      %p279 = scmp.eq.s32.totalorder %s33, 0
      %p280 = por %p278, %p279
      %s281 = ssub.s32 %s27, %s34
      %p282 = scmp.eq.s32.totalorder %s281, 0
      %s284 = sadd.s32 %s283, 1
      %s285 = scalar_select %p282, %s283, %s284
      %p288 = pneg %p282
      %p289 = scmp.eq.s32.totalorder %s27, 1
      %p290 = por %p288, %p289
      %p291 = scmp.ne.s32.totalorder %s283, %s286
      %p292 = scmp.eq.s32.totalorder %s27, 0
      %p293 = por %p291, %p292
      %p294 = scmp.ne.s32.totalorder %s283, %s286
      %p295 = scmp.eq.s32.totalorder %s32, 1
      %p296 = por %p294, %p295
      %p297 = scmp.ne.s32.totalorder %s286, %s287
      %p298 = scmp.eq.s32.totalorder %s32, 0
      %p299 = por %p297, %p298
      %p300 = scmp.ne.s32.totalorder %s286, %s287
      %p301 = scmp.eq.s32.totalorder %s33, 1
      %p302 = por %p300, %p301
      %p304 = scmp.ne.s32.totalorder %s287, %s303
      %p305 = scmp.eq.s32.totalorder %s33, 0
      %p306 = por %p304, %p305
      %p307 = scmp.le.s32.totalorder 1, %s27
      %p308 = scmp.lt.s32.totalorder %s27, 3
      %p309 = pnand %p307, %p308
      %p310 = pneg %p309
      // Predicated region
      $region9: #{tpu_custom_call.1} parent=5 // pred_check
        _
      $region10: #{tpu_custom_call.1} parent=5 // pred_check_branch
        %312 = sbr.rel (%p309) target = $region12
      $region11: #{tpu_custom_call.1} parent=5 // pred_region
        %s313 = ssub.s32 %s27, 1
        // Predicated region
        $region13: #{tpu_custom_call.1} parent=11 // pred_check
          %p314 = pneg %p100
        $region14: #{tpu_custom_call.1} parent=11 // pred_check_branch
          %316 = sbr.rel (%p314) target = $region16
        $region15: #{tpu_custom_call.1} parent=11 // pred_region
          %318 = vsyncadd [#allocation3], 0
          %s319 = sshll.u32 %s2, 4
          %s320 = int_to_ptr.hbm [resolvable:$true] %s319
          %s321 = sshll.u32 [#allocation2], 4
          %s322 = int_to_ptr.vmem [resolvable:$true] %s321
          %327 = dma.hbm_to_vmem [thread:$0]  %s320, 4096, %s322, [#allocation3], 128, 128, 8
        $region16: #{tpu_custom_call.1} parent=11 // pred_fallthru
          _
        // Predicated region
        $region17: #{tpu_custom_call.1} parent=11 // pred_check
          %p328 = pneg %p121
        $region18: #{tpu_custom_call.1} parent=11 // pred_check_branch
          %330 = sbr.rel (%p328) target = $region20
        $region19: #{tpu_custom_call.1} parent=11 // pred_region
          _
        $region20: #{tpu_custom_call.1} parent=11 // pred_fallthru
          _
        // Predicated region
        $region21: #{tpu_custom_call.1} parent=11 // pred_check
          %p331 = pneg %p142
        $region22: #{tpu_custom_call.1} parent=11 // pred_check_branch
          %333 = sbr.rel (%p331) target = $region24
        $region23: #{tpu_custom_call.1} parent=11 // pred_region
          %335 = vsyncadd [#allocation6], 0
          %s336 = sshll.u32 %s4, 4
          %s337 = int_to_ptr.hbm [resolvable:$true] %s336
          %s338 = sshll.u32 [#allocation5], 4
          %s339 = int_to_ptr.vmem [resolvable:$true] %s338
          %344 = dma.hbm_to_vmem [thread:$0]  %s337, 4096, %s339, [#allocation6], 128, 128, 8
        $region24: #{tpu_custom_call.1} parent=11 // pred_fallthru
          _
        // Predicated region
        $region25: #{tpu_custom_call.1} parent=11 // pred_check
          %p345 = pneg %p163
        $region26: #{tpu_custom_call.1} parent=11 // pred_check_branch
          %347 = sbr.rel (%p345) target = $region28
        $region27: #{tpu_custom_call.1} parent=11 // pred_region
          _
        $region28: #{tpu_custom_call.1} parent=11 // pred_fallthru
          _
        // Predicated region
        $region29: #{tpu_custom_call.1} parent=11 // pred_check
          %p348 = pneg %p184
        $region30: #{tpu_custom_call.1} parent=11 // pred_check_branch
          %350 = sbr.rel (%p348) target = $region32
        $region31: #{tpu_custom_call.1} parent=11 // pred_region
          %352 = vsyncadd [#allocation6], 0
          %s353 = sshll.u32 %s6, 4
          %s354 = int_to_ptr.hbm [resolvable:$true] %s353
          %s355 = sshll.u32 [#allocation7], 4
          %s356 = int_to_ptr.vmem [resolvable:$true] %s355
          %361 = dma.hbm_to_vmem [thread:$0]  %s354, 4096, %s356, [#allocation6], 128, 128, 8
        $region32: #{tpu_custom_call.1} parent=11 // pred_fallthru
          _
        // Predicated region
        $region33: #{tpu_custom_call.1} parent=11 // pred_check
          %p362 = pneg %p205
        $region34: #{tpu_custom_call.1} parent=11 // pred_check_branch
          %364 = sbr.rel (%p362) target = $region36
        $region35: #{tpu_custom_call.1} parent=11 // pred_region
          _
        $region36: #{tpu_custom_call.1} parent=11 // pred_fallthru
          _
        // Predicated region
        $region37: #{tpu_custom_call.1} parent=11 // pred_check
          %p365 = pneg %p226
        $region38: #{tpu_custom_call.1} parent=11 // pred_check_branch
          %367 = sbr.rel (%p365) target = $region40
        $region39: #{tpu_custom_call.1} parent=11 // pred_region
          %369 = vsyncadd [#allocation9], 0
          %s370 = sshll.u32 %s8, 4
          %s371 = int_to_ptr.hbm [resolvable:$true] %s370
          %s372 = sshll.u32 [#allocation8], 4
          %s373 = int_to_ptr.vmem [resolvable:$true] %s372
          %378 = dma.hbm_to_vmem [thread:$0]  %s371, 4096, %s373, [#allocation9], 128, 128, 8
        $region40: #{tpu_custom_call.1} parent=11 // pred_fallthru
          _
        // Predicated region
        $region41: #{tpu_custom_call.1} parent=11 // pred_check
          %p379 = pneg %p247
        $region42: #{tpu_custom_call.1} parent=11 // pred_check_branch
          %381 = sbr.rel (%p379) target = $region44
        $region43: #{tpu_custom_call.1} parent=11 // pred_region
          _
        $region44: #{tpu_custom_call.1} parent=11 // pred_fallthru
          _
      $region12: #{tpu_custom_call.1} parent=5 // pred_fallthru
        _
      %p382 = scmp.lt.s32.totalorder %s27, 2
      // Predicated region
      $region45: #{tpu_custom_call.1} parent=5 // pred_check
        %p383 = pneg %p382
      $region46: #{tpu_custom_call.1} parent=5 // pred_check_branch
        %385 = sbr.rel (%p383) target = $region48
      $region47: #{tpu_custom_call.1} parent=5 // pred_region
        // Predicated region
        $region49: #{tpu_custom_call.1} parent=47 // pred_check
          %p386 = pneg %p47
        $region50: #{tpu_custom_call.1} parent=47 // pred_check_branch
          %388 = sbr.rel (%p386) target = $region52
        $region51: #{tpu_custom_call.1} parent=47 // pred_region
          %s389 = smul.u32 32, %s27
          %p390 = scmp.lt.s32.totalorder %s389, 63
          %s391 = scalar_select %p390, %s389, 63
          %s392 = smul.addr %s391, 2
          %s393 = smul.addr %s392, 4
          %s394 = scalar_lea.vmem %s0, %s393
          %s395 = smul.u32 32, %s27
        $region52: #{tpu_custom_call.1} parent=47 // pred_fallthru
          _
        // Predicated region
        $region53: #{tpu_custom_call.1} parent=47 // pred_check
          %p396 = pneg %p73
        $region54: #{tpu_custom_call.1} parent=47 // pred_check_branch
          %398 = sbr.rel (%p396) target = $region56
        $region55: #{tpu_custom_call.1} parent=47 // pred_region
          %s399 = smul.u32 32, %s27
          %p400 = scmp.lt.s32.totalorder %s399, 63
          %s401 = scalar_select %p400, %s399, 63
          %s402 = smul.addr %s401, 8
          %s403 = scalar_lea.vmem %s1, %s402
          %s404 = smul.u32 32, %s27
        $region56: #{tpu_custom_call.1} parent=47 // pred_fallthru
          _
      $region48: #{tpu_custom_call.1} parent=5 // pred_fallthru
        _
      %p405 = scmp.le.s32.totalorder 1, %s27
      %p406 = scmp.lt.s32.totalorder %s27, 3
      %p407 = pnand %p405, %p406
      %p408 = pneg %p407
      // Predicated region
      $region57: #{tpu_custom_call.1} parent=5 // pred_check
        _
      $region58: #{tpu_custom_call.1} parent=5 // pred_check_branch
        %410 = sbr.rel (%p407) target = $region60
      $region59: #{tpu_custom_call.1} parent=5 // pred_region
        %s411 = ssub.s32 %s27, 1
        // Predicated region
        $region61: #{tpu_custom_call.1} parent=59 // pred_check
          %p412 = pneg %p100
        $region62: #{tpu_custom_call.1} parent=59 // pred_check_branch
          %414 = sbr.rel (%p412) target = $region64
        $region63: #{tpu_custom_call.1} parent=59 // pred_region
          %416 = dma.done [#allocation3], 4096
        $region64: #{tpu_custom_call.1} parent=59 // pred_fallthru
          _
        // Predicated region
        $region65: #{tpu_custom_call.1} parent=59 // pred_check
          %p417 = pneg %p142
        $region66: #{tpu_custom_call.1} parent=59 // pred_check_branch
          %419 = sbr.rel (%p417) target = $region68
        $region67: #{tpu_custom_call.1} parent=59 // pred_region
          %421 = dma.done [#allocation6], 4096
        $region68: #{tpu_custom_call.1} parent=59 // pred_fallthru
          _
        // Predicated region
        $region69: #{tpu_custom_call.1} parent=59 // pred_check
          %p422 = pneg %p184
        $region70: #{tpu_custom_call.1} parent=59 // pred_check_branch
          %424 = sbr.rel (%p422) target = $region72
        $region71: #{tpu_custom_call.1} parent=59 // pred_region
          %426 = dma.done [#allocation6], 4096
        $region72: #{tpu_custom_call.1} parent=59 // pred_fallthru
          _
        // Predicated region
        $region73: #{tpu_custom_call.1} parent=59 // pred_check
          %p427 = pneg %p226
        $region74: #{tpu_custom_call.1} parent=59 // pred_check_branch
          %429 = sbr.rel (%p427) target = $region76
        $region75: #{tpu_custom_call.1} parent=59 // pred_region
          %431 = dma.done [#allocation9], 4096
        $region76: #{tpu_custom_call.1} parent=59 // pred_fallthru
          _
        %s432 = smul.u32 32, %s32
        %p433 = scmp.lt.s32.totalorder %s432, 63
        %s434 = scalar_select %p433, %s432, 63
        %s435 = smul.addr %s434, 2
        %s436 = smul.addr %s435, 4
        %s437 = scalar_lea.vmem %s0, %s436
        %p438 = pneg %p53
        %p439 = pneg %p50
        %s440 = smul.u32 32, %s32
        %p441 = scmp.lt.s32.totalorder %s440, 63
        %s442 = scalar_select %p441, %s440, 63
        %s443 = smul.addr %s442, 8
        %s444 = scalar_lea.vmem %s1, %s443
        %p445 = pneg %p79
        %p446 = pneg %p76
        %p447 = pneg %p100
        %p448 = pneg %p97
        %p449 = pneg %p121
        %p450 = pneg %p118
        %p451 = pneg %p142
        %p452 = pneg %p139
        %p453 = pneg %p163
        %p454 = pneg %p160
        %p455 = pneg %p184
        %p456 = pneg %p181
        %p457 = pneg %p205
        %p458 = pneg %p202
        %p459 = pneg %p226
        %p460 = pneg %p223
        %p461 = pneg %p247
        %p462 = pneg %p244
        %p463 = pneg %p273
        %p464 = pneg %p270
        %s465 = sand.u32 %s260, 1
        %s466 = scalar_lea.sflag [#allocation4], %s465
        %s467 = sand.u32 %s260, 1
        %s468 = smul.addr %s467, 256
        %s469 = scalar_lea.vmem [#allocation10], %s468
        %p470 = pneg %p299
        %p471 = pneg %p296
        %s472 = sand.u32 %s286, 1
        %s473 = scalar_lea.sflag [#allocation12], %s472
        %s474 = sand.u32 %s286, 1
        %s475 = smul.addr %s474, 512
        %s476 = scalar_lea.vmem [#allocation11], %s475
        %s477 = smul.u32 32, %s32
        %p478 = scmp.lt.s32.totalorder %s477, 63
        %s479 = scalar_select %p478, %s477, 63
        %s480 = smul.addr %s479, 2
        %s481 = smul.addr %s480, 4
        %s482 = scalar_lea.vmem %s0, %s481
        %s483 = smul.u32 32, %s32
        %s484 = smul.u32 32, %s32
        %p485 = scmp.lt.s32.totalorder %s484, 63
        %s486 = scalar_select %p485, %s484, 63
        %s487 = smul.addr %s486, 8
        %s488 = scalar_lea.vmem %s1, %s487
        %s489 = smul.u32 32, %s32
        %s490 = smul.u32 32, %s32
        %s491 = smul.u32 32, %s32
        %v492 = vld [vmem:[%s482] sm:$0xff]
        %v493 = vld [vmem:[%s482 + $0x8] sm:$0xff]
        %v494 = vld [vmem:[%s482 + $0x10] sm:$0xff]
        %v495 = vld [vmem:[%s482 + $0x18] sm:$0xff]
        %v496 = vld [vmem:[%s482 + $0x20] sm:$0xff]
        %v497 = vld [vmem:[%s482 + $0x28] sm:$0xff]
        %v498 = vld [vmem:[%s482 + $0x30] sm:$0xff]
        %v499 = vld [vmem:[%s482 + $0x38] sm:$0xff]
        %v500 = vld [vmem:[%s482 + $0x40] sm:$0xff]
        %v501 = vld [vmem:[%s482 + $0x48] sm:$0xff]
        %v502 = vld [vmem:[%s482 + $0x50] sm:$0xff]
        %v503 = vld [vmem:[%s482 + $0x58] sm:$0xff]
        %v504 = vld [vmem:[%s482 + $0x60] sm:$0xff]
        %v505 = vld [vmem:[%s482 + $0x68] sm:$0xff]
        %v506 = vld [vmem:[%s482 + $0x70] sm:$0xff]
        %v507 = vld [vmem:[%s482 + $0x78] sm:$0xff]
        %v508 = vld [vmem:[%s482 + $0x80] sm:$0xff]
        %v509 = vld [vmem:[%s482 + $0x88] sm:$0xff]
        %v510 = vld [vmem:[%s482 + $0x90] sm:$0xff]
        %v511 = vld [vmem:[%s482 + $0x98] sm:$0xff]
        %v512 = vld [vmem:[%s482 + $0xa0] sm:$0xff]
        %v513 = vld [vmem:[%s482 + $0xa8] sm:$0xff]
        %v514 = vld [vmem:[%s482 + $0xb0] sm:$0xff]
        %v515 = vld [vmem:[%s482 + $0xb8] sm:$0xff]
        %v516 = vld [vmem:[%s482 + $0xc0] sm:$0xff]
        %v517 = vld [vmem:[%s482 + $0xc8] sm:$0xff]
        %v518 = vld [vmem:[%s482 + $0xd0] sm:$0xff]
        %v519 = vld [vmem:[%s482 + $0xd8] sm:$0xff]
        %v520 = vld [vmem:[%s482 + $0xe0] sm:$0xff]
        %v521 = vld [vmem:[%s482 + $0xe8] sm:$0xff]
        %v522 = vld [vmem:[%s482 + $0xf0] sm:$0xff]
        %v523 = vld [vmem:[%s482 + $0xf8] sm:$0xff]
        %v524 = vld [vmem:[#allocation2] sm:$0xff]
        %v525 = vld [vmem:[#allocation2 + $0x8] sm:$0xff]
        %v526 = vld [vmem:[#allocation2 + $0x10] sm:$0xff]
        %v527 = vld [vmem:[#allocation2 + $0x18] sm:$0xff]
        %v528 = vld [vmem:[#allocation2 + $0x20] sm:$0xff]
        %v529 = vld [vmem:[#allocation2 + $0x28] sm:$0xff]
        %v530 = vld [vmem:[#allocation2 + $0x30] sm:$0xff]
        %v531 = vld [vmem:[#allocation2 + $0x38] sm:$0xff]
        %v532 = vld [vmem:[#allocation2 + $0x40] sm:$0xff]
        %v533 = vld [vmem:[#allocation2 + $0x48] sm:$0xff]
        %v534 = vld [vmem:[#allocation2 + $0x50] sm:$0xff]
        %v535 = vld [vmem:[#allocation2 + $0x58] sm:$0xff]
        %v536 = vld [vmem:[#allocation2 + $0x60] sm:$0xff]
        %v537 = vld [vmem:[#allocation2 + $0x68] sm:$0xff]
        %v538 = vld [vmem:[#allocation2 + $0x70] sm:$0xff]
        %v539 = vld [vmem:[#allocation2 + $0x78] sm:$0xff]
        %v540 = vld [vmem:[#allocation2 + $0x80] sm:$0xff]
        %v541 = vld [vmem:[#allocation2 + $0x88] sm:$0xff]
        %v542 = vld [vmem:[#allocation2 + $0x90] sm:$0xff]
        %v543 = vld [vmem:[#allocation2 + $0x98] sm:$0xff]
        %v544 = vld [vmem:[#allocation2 + $0xa0] sm:$0xff]
        %v545 = vld [vmem:[#allocation2 + $0xa8] sm:$0xff]
        %v546 = vld [vmem:[#allocation2 + $0xb0] sm:$0xff]
        %v547 = vld [vmem:[#allocation2 + $0xb8] sm:$0xff]
        %v548 = vld [vmem:[#allocation2 + $0xc0] sm:$0xff]
        %v549 = vld [vmem:[#allocation2 + $0xc8] sm:$0xff]
        %v550 = vld [vmem:[#allocation2 + $0xd0] sm:$0xff]
        %v551 = vld [vmem:[#allocation2 + $0xd8] sm:$0xff]
        %v552 = vld [vmem:[#allocation2 + $0xe0] sm:$0xff]
        %v553 = vld [vmem:[#allocation2 + $0xe8] sm:$0xff]
        %v554 = vld [vmem:[#allocation2 + $0xf0] sm:$0xff]
        %v555 = vld [vmem:[#allocation2 + $0xf8] sm:$0xff]
        %v588 = vunpack.c.l.b16 %v492
        %v589 = vunpack.c.h.b16 %v492
        %v590 = vunpack.c.l.b16 %v493
        %v591 = vunpack.c.h.b16 %v493
        %v592 = vunpack.c.l.b16 %v494
        %v593 = vunpack.c.h.b16 %v494
        %v594 = vunpack.c.l.b16 %v495
        %v595 = vunpack.c.h.b16 %v495
        %v596 = vunpack.c.l.b16 %v496
        %v597 = vunpack.c.h.b16 %v496
        %v598 = vunpack.c.l.b16 %v497
        %v599 = vunpack.c.h.b16 %v497
        %v600 = vunpack.c.l.b16 %v498
        %v601 = vunpack.c.h.b16 %v498
        %v602 = vunpack.c.l.b16 %v499
        %v603 = vunpack.c.h.b16 %v499
        %v604 = vunpack.c.l.b16 %v500
        %v605 = vunpack.c.h.b16 %v500
        %v606 = vunpack.c.l.b16 %v501
        %v607 = vunpack.c.h.b16 %v501
        %v608 = vunpack.c.l.b16 %v502
        %v609 = vunpack.c.h.b16 %v502
        %v610 = vunpack.c.l.b16 %v503
        %v611 = vunpack.c.h.b16 %v503
        %v612 = vunpack.c.l.b16 %v504
        %v613 = vunpack.c.h.b16 %v504
        %v614 = vunpack.c.l.b16 %v505
        %v615 = vunpack.c.h.b16 %v505
        %v616 = vunpack.c.l.b16 %v506
        %v617 = vunpack.c.h.b16 %v506
        %v618 = vunpack.c.l.b16 %v507
        %v619 = vunpack.c.h.b16 %v507
        %v620 = vunpack.c.l.b16 %v508
        %v621 = vunpack.c.h.b16 %v508
        %v622 = vunpack.c.l.b16 %v509
        %v623 = vunpack.c.h.b16 %v509
        %v624 = vunpack.c.l.b16 %v510
        %v625 = vunpack.c.h.b16 %v510
        %v626 = vunpack.c.l.b16 %v511
        %v627 = vunpack.c.h.b16 %v511
        %v628 = vunpack.c.l.b16 %v512
        %v629 = vunpack.c.h.b16 %v512
        %v630 = vunpack.c.l.b16 %v513
        %v631 = vunpack.c.h.b16 %v513
        %v632 = vunpack.c.l.b16 %v514
        %v633 = vunpack.c.h.b16 %v514
        %v634 = vunpack.c.l.b16 %v515
        %v635 = vunpack.c.h.b16 %v515
        %v636 = vunpack.c.l.b16 %v516
        %v637 = vunpack.c.h.b16 %v516
        %v638 = vunpack.c.l.b16 %v517
        %v639 = vunpack.c.h.b16 %v517
        %v640 = vunpack.c.l.b16 %v518
        %v641 = vunpack.c.h.b16 %v518
        %v642 = vunpack.c.l.b16 %v519
        %v643 = vunpack.c.h.b16 %v519
        %v644 = vunpack.c.l.b16 %v520
        %v645 = vunpack.c.h.b16 %v520
        %v646 = vunpack.c.l.b16 %v521
        %v647 = vunpack.c.h.b16 %v521
        %v648 = vunpack.c.l.b16 %v522
        %v649 = vunpack.c.h.b16 %v522
        %v650 = vunpack.c.l.b16 %v523
        %v651 = vunpack.c.h.b16 %v523
        %v652 = vpack.c.b16 %v590, %v588
        %v653 = vpack.c.b16 %v591, %v589
        %v654 = vpack.c.b16 %v594, %v592
        %v655 = vpack.c.b16 %v595, %v593
        %v656 = vpack.c.b16 %v598, %v596
        %v657 = vpack.c.b16 %v599, %v597
        %v658 = vpack.c.b16 %v602, %v600
        %v659 = vpack.c.b16 %v603, %v601
        %v660 = vpack.c.b16 %v606, %v604
        %v661 = vpack.c.b16 %v607, %v605
        %v662 = vpack.c.b16 %v610, %v608
        %v663 = vpack.c.b16 %v611, %v609
        %v664 = vpack.c.b16 %v614, %v612
        %v665 = vpack.c.b16 %v615, %v613
        %v666 = vpack.c.b16 %v618, %v616
        %v667 = vpack.c.b16 %v619, %v617
        %v668 = vpack.c.b16 %v622, %v620
        %v669 = vpack.c.b16 %v623, %v621
        %v670 = vpack.c.b16 %v626, %v624
        %v671 = vpack.c.b16 %v627, %v625
        %v672 = vpack.c.b16 %v630, %v628
        %v673 = vpack.c.b16 %v631, %v629
        %v674 = vpack.c.b16 %v634, %v632
        %v675 = vpack.c.b16 %v635, %v633
        %v676 = vpack.c.b16 %v638, %v636
        %v677 = vpack.c.b16 %v639, %v637
        %v678 = vpack.c.b16 %v642, %v640
        %v679 = vpack.c.b16 %v643, %v641
        %v680 = vpack.c.b16 %v646, %v644
        %v681 = vpack.c.b16 %v647, %v645
        %v682 = vpack.c.b16 %v650, %v648
        %v683 = vpack.c.b16 %v651, %v649
        %v748 = vunpack.c.l.b16 %v524
        %v749 = vunpack.c.h.b16 %v524
        %v750 = vunpack.c.l.b16 %v525
        %v751 = vunpack.c.h.b16 %v525
        %v752 = vunpack.c.l.b16 %v526
        %v753 = vunpack.c.h.b16 %v526
        %v754 = vunpack.c.l.b16 %v527
        %v755 = vunpack.c.h.b16 %v527
        %v756 = vunpack.c.l.b16 %v528
        %v757 = vunpack.c.h.b16 %v528
        %v758 = vunpack.c.l.b16 %v529
        %v759 = vunpack.c.h.b16 %v529
        %v760 = vunpack.c.l.b16 %v530
        %v761 = vunpack.c.h.b16 %v530
        %v762 = vunpack.c.l.b16 %v531
        %v763 = vunpack.c.h.b16 %v531
        %v764 = vunpack.c.l.b16 %v532
        %v765 = vunpack.c.h.b16 %v532
        %v766 = vunpack.c.l.b16 %v533
        %v767 = vunpack.c.h.b16 %v533
        %v768 = vunpack.c.l.b16 %v534
        %v769 = vunpack.c.h.b16 %v534
        %v770 = vunpack.c.l.b16 %v535
        %v771 = vunpack.c.h.b16 %v535
        %v772 = vunpack.c.l.b16 %v536
        %v773 = vunpack.c.h.b16 %v536
        %v774 = vunpack.c.l.b16 %v537
        %v775 = vunpack.c.h.b16 %v537
        %v776 = vunpack.c.l.b16 %v538
        %v777 = vunpack.c.h.b16 %v538
        %v778 = vunpack.c.l.b16 %v539
        %v779 = vunpack.c.h.b16 %v539
        %v780 = vunpack.c.l.b16 %v540
        %v781 = vunpack.c.h.b16 %v540
        %v782 = vunpack.c.l.b16 %v541
        %v783 = vunpack.c.h.b16 %v541
        %v784 = vunpack.c.l.b16 %v542
        %v785 = vunpack.c.h.b16 %v542
        %v786 = vunpack.c.l.b16 %v543
        %v787 = vunpack.c.h.b16 %v543
        %v788 = vunpack.c.l.b16 %v544
        %v789 = vunpack.c.h.b16 %v544
        %v790 = vunpack.c.l.b16 %v545
        %v791 = vunpack.c.h.b16 %v545
        %v792 = vunpack.c.l.b16 %v546
        %v793 = vunpack.c.h.b16 %v546
        %v794 = vunpack.c.l.b16 %v547
        %v795 = vunpack.c.h.b16 %v547
        %v796 = vunpack.c.l.b16 %v548
        %v797 = vunpack.c.h.b16 %v548
        %v798 = vunpack.c.l.b16 %v549
        %v799 = vunpack.c.h.b16 %v549
        %v800 = vunpack.c.l.b16 %v550
        %v801 = vunpack.c.h.b16 %v550
        %v802 = vunpack.c.l.b16 %v551
        %v803 = vunpack.c.h.b16 %v551
        %v804 = vunpack.c.l.b16 %v552
        %v805 = vunpack.c.h.b16 %v552
        %v806 = vunpack.c.l.b16 %v553
        %v807 = vunpack.c.h.b16 %v553
        %v808 = vunpack.c.l.b16 %v554
        %v809 = vunpack.c.h.b16 %v554
        %v810 = vunpack.c.l.b16 %v555
        %v811 = vunpack.c.h.b16 %v555
        %v812 = vpack.c.b16 %v750, %v748
        %v813 = vpack.c.b16 %v751, %v749
        %v814 = vpack.c.b16 %v754, %v752
        %v815 = vpack.c.b16 %v755, %v753
        %v816 = vpack.c.b16 %v758, %v756
        %v817 = vpack.c.b16 %v759, %v757
        %v818 = vpack.c.b16 %v762, %v760
        %v819 = vpack.c.b16 %v763, %v761
        %v820 = vpack.c.b16 %v766, %v764
        %v821 = vpack.c.b16 %v767, %v765
        %v822 = vpack.c.b16 %v770, %v768
        %v823 = vpack.c.b16 %v771, %v769
        %v824 = vpack.c.b16 %v774, %v772
        %v825 = vpack.c.b16 %v775, %v773
        %v826 = vpack.c.b16 %v778, %v776
        %v827 = vpack.c.b16 %v779, %v777
        %v828 = vpack.c.b16 %v782, %v780
        %v829 = vpack.c.b16 %v783, %v781
        %v830 = vpack.c.b16 %v786, %v784
        %v831 = vpack.c.b16 %v787, %v785
        %v832 = vpack.c.b16 %v790, %v788
        %v833 = vpack.c.b16 %v791, %v789
        %v834 = vpack.c.b16 %v794, %v792
        %v835 = vpack.c.b16 %v795, %v793
        %v836 = vpack.c.b16 %v798, %v796
        %v837 = vpack.c.b16 %v799, %v797
        %v838 = vpack.c.b16 %v802, %v800
        %v839 = vpack.c.b16 %v803, %v801
        %v840 = vpack.c.b16 %v806, %v804
        %v841 = vpack.c.b16 %v807, %v805
        %v842 = vpack.c.b16 %v810, %v808
        %v843 = vpack.c.b16 %v811, %v809
        %876 = vmatpush.bf16.msra.mxu0 %v826
        %877 = vmatpush.bf16.msra.mxu0 %v824
        %878 = vmatpush.bf16.msra.mxu0 %v822
        %879 = vmatpush.bf16.msra.mxu0 %v820
        %880 = vmatpush.bf16.msra.mxu0 %v818
        %881 = vmatpush.bf16.msra.mxu0 %v816
        %882 = vmatpush.bf16.msra.mxu0 %v814
        %883 = vmatpush.bf16.msra.mxu0 %v812
        %884 = vmatmul.bf16.gmra.mxu0 %v652
        %v885 = vpop.f32.mrf.mxu0
        %v886 = vadd.f32 0.0, %v885
        %v887 = vpop.f32.mrf.mxu0
        %v888 = vadd.f32 0.0, %v887
        %889 = vmatmul.bf16.gmra.mxu0 %v654
        %v890 = vpop.f32.mrf.mxu0
        %v891 = vadd.f32 0.0, %v890
        %v892 = vpop.f32.mrf.mxu0
        %v893 = vadd.f32 0.0, %v892
        %894 = vmatmul.bf16.gmra.mxu0 %v656
        %v895 = vpop.f32.mrf.mxu0
        %v896 = vadd.f32 0.0, %v895
        %v897 = vpop.f32.mrf.mxu0
        %v898 = vadd.f32 0.0, %v897
        %899 = vmatmul.bf16.gmra.mxu0 %v658
        %v900 = vpop.f32.mrf.mxu0
        %v901 = vadd.f32 0.0, %v900
        %v902 = vpop.f32.mrf.mxu0
        %v903 = vadd.f32 0.0, %v902
        %904 = vmatmul.bf16.gmra.mxu0 %v660
        %v905 = vpop.f32.mrf.mxu0
        %v906 = vadd.f32 0.0, %v905
        %v907 = vpop.f32.mrf.mxu0
        %v908 = vadd.f32 0.0, %v907
        %909 = vmatmul.bf16.gmra.mxu0 %v662
        %v910 = vpop.f32.mrf.mxu0
        %v911 = vadd.f32 0.0, %v910
        %v912 = vpop.f32.mrf.mxu0
        %v913 = vadd.f32 0.0, %v912
        %914 = vmatmul.bf16.gmra.mxu0 %v664
        %v915 = vpop.f32.mrf.mxu0
        %v916 = vadd.f32 0.0, %v915
        %v917 = vpop.f32.mrf.mxu0
        %v918 = vadd.f32 0.0, %v917
        %919 = vmatmul.bf16.gmra.mxu0 %v666
        %v920 = vpop.f32.mrf.mxu0
        %v921 = vadd.f32 0.0, %v920
        %v922 = vpop.f32.mrf.mxu0
        %v923 = vadd.f32 0.0, %v922
        %924 = vmatmul.bf16.gmra.mxu0 %v668
        %v925 = vpop.f32.mrf.mxu0
        %v926 = vadd.f32 0.0, %v925
        %v927 = vpop.f32.mrf.mxu0
        %v928 = vadd.f32 0.0, %v927
        %929 = vmatmul.bf16.gmra.mxu0 %v670
        %v930 = vpop.f32.mrf.mxu0
        %v931 = vadd.f32 0.0, %v930
        %v932 = vpop.f32.mrf.mxu0
        %v933 = vadd.f32 0.0, %v932
        %934 = vmatmul.bf16.gmra.mxu0 %v672
        %v935 = vpop.f32.mrf.mxu0
        %v936 = vadd.f32 0.0, %v935
        %v937 = vpop.f32.mrf.mxu0
        %v938 = vadd.f32 0.0, %v937
        %939 = vmatmul.bf16.gmra.mxu0 %v674
        %v940 = vpop.f32.mrf.mxu0
        %v941 = vadd.f32 0.0, %v940
        %v942 = vpop.f32.mrf.mxu0
        %v943 = vadd.f32 0.0, %v942
        %944 = vmatmul.bf16.gmra.mxu0 %v676
        %v945 = vpop.f32.mrf.mxu0
        %v946 = vadd.f32 0.0, %v945
        %v947 = vpop.f32.mrf.mxu0
        %v948 = vadd.f32 0.0, %v947
        %949 = vmatmul.bf16.gmra.mxu0 %v678
        %v950 = vpop.f32.mrf.mxu0
        %v951 = vadd.f32 0.0, %v950
        %v952 = vpop.f32.mrf.mxu0
        %v953 = vadd.f32 0.0, %v952
        %954 = vmatmul.bf16.gmra.mxu0 %v680
        %v955 = vpop.f32.mrf.mxu0
        %v956 = vadd.f32 0.0, %v955
        %v957 = vpop.f32.mrf.mxu0
        %v958 = vadd.f32 0.0, %v957
        %959 = vmatmul.bf16.gmra.mxu0 %v682
        %v960 = vpop.f32.mrf.mxu0
        %v961 = vadd.f32 0.0, %v960
        %v962 = vpop.f32.mrf.mxu0
        %v963 = vadd.f32 0.0, %v962
        %964 = vdwg.mxu0
        %965 = vmatpush.bf16.msra.mxu0 %v842
        %966 = vmatpush.bf16.msra.mxu0 %v840
        %967 = vmatpush.bf16.msra.mxu0 %v838
        %968 = vmatpush.bf16.msra.mxu0 %v836
        %969 = vmatpush.bf16.msra.mxu0 %v834
        %970 = vmatpush.bf16.msra.mxu0 %v832
        %971 = vmatpush.bf16.msra.mxu0 %v830
        %972 = vmatpush.bf16.msra.mxu0 %v828
        %973 = vmatmul.bf16.gmra.mxu0 %v653
        %v974 = vpop.f32.mrf.mxu0
        %v975 = vadd.f32 %v886, %v974
        %v976 = vpop.f32.mrf.mxu0
        %v977 = vadd.f32 %v888, %v976
        %978 = vmatmul.bf16.gmra.mxu0 %v655
        %v979 = vpop.f32.mrf.mxu0
        %v980 = vadd.f32 %v891, %v979
        %v981 = vpop.f32.mrf.mxu0
        %v982 = vadd.f32 %v893, %v981
        %983 = vmatmul.bf16.gmra.mxu0 %v657
        %v984 = vpop.f32.mrf.mxu0
        %v985 = vadd.f32 %v896, %v984
        %v986 = vpop.f32.mrf.mxu0
        %v987 = vadd.f32 %v898, %v986
        %988 = vmatmul.bf16.gmra.mxu0 %v659
        %v989 = vpop.f32.mrf.mxu0
        %v990 = vadd.f32 %v901, %v989
        %v991 = vpop.f32.mrf.mxu0
        %v992 = vadd.f32 %v903, %v991
        %993 = vmatmul.bf16.gmra.mxu0 %v661
        %v994 = vpop.f32.mrf.mxu0
        %v995 = vadd.f32 %v906, %v994
        %v996 = vpop.f32.mrf.mxu0
        %v997 = vadd.f32 %v908, %v996
        %998 = vmatmul.bf16.gmra.mxu0 %v663
        %v999 = vpop.f32.mrf.mxu0
        %v1000 = vadd.f32 %v911, %v999
        %v1001 = vpop.f32.mrf.mxu0
        %v1002 = vadd.f32 %v913, %v1001
        %1003 = vmatmul.bf16.gmra.mxu0 %v665
        %v1004 = vpop.f32.mrf.mxu0
        %v1005 = vadd.f32 %v916, %v1004
        %v1006 = vpop.f32.mrf.mxu0
        %v1007 = vadd.f32 %v918, %v1006
        %1008 = vmatmul.bf16.gmra.mxu0 %v667
        %v1009 = vpop.f32.mrf.mxu0
        %v1010 = vadd.f32 %v921, %v1009
        %v1011 = vpop.f32.mrf.mxu0
        %v1012 = vadd.f32 %v923, %v1011
        %1013 = vmatmul.bf16.gmra.mxu0 %v669
        %v1014 = vpop.f32.mrf.mxu0
        %v1015 = vadd.f32 %v926, %v1014
        %v1016 = vpop.f32.mrf.mxu0
        %v1017 = vadd.f32 %v928, %v1016
        %1018 = vmatmul.bf16.gmra.mxu0 %v671
        %v1019 = vpop.f32.mrf.mxu0
        %v1020 = vadd.f32 %v931, %v1019
        %v1021 = vpop.f32.mrf.mxu0
        %v1022 = vadd.f32 %v933, %v1021
        %1023 = vmatmul.bf16.gmra.mxu0 %v673
        %v1024 = vpop.f32.mrf.mxu0
        %v1025 = vadd.f32 %v936, %v1024
        %v1026 = vpop.f32.mrf.mxu0
        %v1027 = vadd.f32 %v938, %v1026
        %1028 = vmatmul.bf16.gmra.mxu0 %v675
        %v1029 = vpop.f32.mrf.mxu0
        %v1030 = vadd.f32 %v941, %v1029
        %v1031 = vpop.f32.mrf.mxu0
        %v1032 = vadd.f32 %v943, %v1031
        %1033 = vmatmul.bf16.gmra.mxu0 %v677
        %v1034 = vpop.f32.mrf.mxu0
        %v1035 = vadd.f32 %v946, %v1034
        %v1036 = vpop.f32.mrf.mxu0
        %v1037 = vadd.f32 %v948, %v1036
        %1038 = vmatmul.bf16.gmra.mxu0 %v679
        %v1039 = vpop.f32.mrf.mxu0
        %v1040 = vadd.f32 %v951, %v1039
        %v1041 = vpop.f32.mrf.mxu0
        %v1042 = vadd.f32 %v953, %v1041
        %1043 = vmatmul.bf16.gmra.mxu0 %v681
        %v1044 = vpop.f32.mrf.mxu0
        %v1045 = vadd.f32 %v956, %v1044
        %v1046 = vpop.f32.mrf.mxu0
        %v1047 = vadd.f32 %v958, %v1046
        %1048 = vmatmul.bf16.gmra.mxu0 %v683
        %v1049 = vpop.f32.mrf.mxu0
        %v1050 = vadd.f32 %v961, %v1049
        %v1051 = vpop.f32.mrf.mxu0
        %v1052 = vadd.f32 %v963, %v1051
        %1053 = vdwg.mxu0
        %1054 = vmatpush.bf16.msra.mxu0 %v827
        %1055 = vmatpush.bf16.msra.mxu0 %v825
        %1056 = vmatpush.bf16.msra.mxu0 %v823
        %1057 = vmatpush.bf16.msra.mxu0 %v821
        %1058 = vmatpush.bf16.msra.mxu0 %v819
        %1059 = vmatpush.bf16.msra.mxu0 %v817
        %1060 = vmatpush.bf16.msra.mxu0 %v815
        %1061 = vmatpush.bf16.msra.mxu0 %v813
        %1062 = vmatmul.bf16.gmra.mxu0 %v652
        %v1063 = vpop.f32.mrf.mxu0
        %v1064 = vadd.f32 0.0, %v1063
        %v1065 = vpop.f32.mrf.mxu0
        %v1066 = vadd.f32 0.0, %v1065
        %1067 = vmatmul.bf16.gmra.mxu0 %v654
        %v1068 = vpop.f32.mrf.mxu0
        %v1069 = vadd.f32 0.0, %v1068
        %v1070 = vpop.f32.mrf.mxu0
        %v1071 = vadd.f32 0.0, %v1070
        %1072 = vmatmul.bf16.gmra.mxu0 %v656
        %v1073 = vpop.f32.mrf.mxu0
        %v1074 = vadd.f32 0.0, %v1073
        %v1075 = vpop.f32.mrf.mxu0
        %v1076 = vadd.f32 0.0, %v1075
        %1077 = vmatmul.bf16.gmra.mxu0 %v658
        %v1078 = vpop.f32.mrf.mxu0
        %v1079 = vadd.f32 0.0, %v1078
        %v1080 = vpop.f32.mrf.mxu0
        %v1081 = vadd.f32 0.0, %v1080
        %1082 = vmatmul.bf16.gmra.mxu0 %v660
        %v1083 = vpop.f32.mrf.mxu0
        %v1084 = vadd.f32 0.0, %v1083
        %v1085 = vpop.f32.mrf.mxu0
        %v1086 = vadd.f32 0.0, %v1085
        %1087 = vmatmul.bf16.gmra.mxu0 %v662
        %v1088 = vpop.f32.mrf.mxu0
        %v1089 = vadd.f32 0.0, %v1088
        %v1090 = vpop.f32.mrf.mxu0
        %v1091 = vadd.f32 0.0, %v1090
        %1092 = vmatmul.bf16.gmra.mxu0 %v664
        %v1093 = vpop.f32.mrf.mxu0
        %v1094 = vadd.f32 0.0, %v1093
        %v1095 = vpop.f32.mrf.mxu0
        %v1096 = vadd.f32 0.0, %v1095
        %1097 = vmatmul.bf16.gmra.mxu0 %v666
        %v1098 = vpop.f32.mrf.mxu0
        %v1099 = vadd.f32 0.0, %v1098
        %v1100 = vpop.f32.mrf.mxu0
        %v1101 = vadd.f32 0.0, %v1100
        %1102 = vmatmul.bf16.gmra.mxu0 %v668
        %v1103 = vpop.f32.mrf.mxu0
        %v1104 = vadd.f32 0.0, %v1103
        %v1105 = vpop.f32.mrf.mxu0
        %v1106 = vadd.f32 0.0, %v1105
        %1107 = vmatmul.bf16.gmra.mxu0 %v670
        %v1108 = vpop.f32.mrf.mxu0
        %v1109 = vadd.f32 0.0, %v1108
        %v1110 = vpop.f32.mrf.mxu0
        %v1111 = vadd.f32 0.0, %v1110
        %1112 = vmatmul.bf16.gmra.mxu0 %v672
        %v1113 = vpop.f32.mrf.mxu0
        %v1114 = vadd.f32 0.0, %v1113
        %v1115 = vpop.f32.mrf.mxu0
        %v1116 = vadd.f32 0.0, %v1115
        %1117 = vmatmul.bf16.gmra.mxu0 %v674
        %v1118 = vpop.f32.mrf.mxu0
        %v1119 = vadd.f32 0.0, %v1118
        %v1120 = vpop.f32.mrf.mxu0
        %v1121 = vadd.f32 0.0, %v1120
        %1122 = vmatmul.bf16.gmra.mxu0 %v676
        %v1123 = vpop.f32.mrf.mxu0
        %v1124 = vadd.f32 0.0, %v1123
        %v1125 = vpop.f32.mrf.mxu0
        %v1126 = vadd.f32 0.0, %v1125
        %1127 = vmatmul.bf16.gmra.mxu0 %v678
        %v1128 = vpop.f32.mrf.mxu0
        %v1129 = vadd.f32 0.0, %v1128
        %v1130 = vpop.f32.mrf.mxu0
        %v1131 = vadd.f32 0.0, %v1130
        %1132 = vmatmul.bf16.gmra.mxu0 %v680
        %v1133 = vpop.f32.mrf.mxu0
        %v1134 = vadd.f32 0.0, %v1133
        %v1135 = vpop.f32.mrf.mxu0
        %v1136 = vadd.f32 0.0, %v1135
        %1137 = vmatmul.bf16.gmra.mxu0 %v682
        %v1138 = vpop.f32.mrf.mxu0
        %v1139 = vadd.f32 0.0, %v1138
        %v1140 = vpop.f32.mrf.mxu0
        %v1141 = vadd.f32 0.0, %v1140
        %1142 = vdwg.mxu0
        %1143 = vmatpush.bf16.msra.mxu0 %v843
        %1144 = vmatpush.bf16.msra.mxu0 %v841
        %1145 = vmatpush.bf16.msra.mxu0 %v839
        %1146 = vmatpush.bf16.msra.mxu0 %v837
        %1147 = vmatpush.bf16.msra.mxu0 %v835
        %1148 = vmatpush.bf16.msra.mxu0 %v833
        %1149 = vmatpush.bf16.msra.mxu0 %v831
        %1150 = vmatpush.bf16.msra.mxu0 %v829
        %1151 = vmatmul.bf16.gmra.mxu0 %v653
        %v1152 = vpop.f32.mrf.mxu0
        %v1153 = vadd.f32 %v1064, %v1152
        %v1154 = vpop.f32.mrf.mxu0
        %v1155 = vadd.f32 %v1066, %v1154
        %1156 = vmatmul.bf16.gmra.mxu0 %v655
        %v1157 = vpop.f32.mrf.mxu0
        %v1158 = vadd.f32 %v1069, %v1157
        %v1159 = vpop.f32.mrf.mxu0
        %v1160 = vadd.f32 %v1071, %v1159
        %1161 = vmatmul.bf16.gmra.mxu0 %v657
        %v1162 = vpop.f32.mrf.mxu0
        %v1163 = vadd.f32 %v1074, %v1162
        %v1164 = vpop.f32.mrf.mxu0
        %v1165 = vadd.f32 %v1076, %v1164
        %1166 = vmatmul.bf16.gmra.mxu0 %v659
        %v1167 = vpop.f32.mrf.mxu0
        %v1168 = vadd.f32 %v1079, %v1167
        %v1169 = vpop.f32.mrf.mxu0
        %v1170 = vadd.f32 %v1081, %v1169
        %1171 = vmatmul.bf16.gmra.mxu0 %v661
        %v1172 = vpop.f32.mrf.mxu0
        %v1173 = vadd.f32 %v1084, %v1172
        %v1174 = vpop.f32.mrf.mxu0
        %v1175 = vadd.f32 %v1086, %v1174
        %1176 = vmatmul.bf16.gmra.mxu0 %v663
        %v1177 = vpop.f32.mrf.mxu0
        %v1178 = vadd.f32 %v1089, %v1177
        %v1179 = vpop.f32.mrf.mxu0
        %v1180 = vadd.f32 %v1091, %v1179
        %1181 = vmatmul.bf16.gmra.mxu0 %v665
        %v1182 = vpop.f32.mrf.mxu0
        %v1183 = vadd.f32 %v1094, %v1182
        %v1184 = vpop.f32.mrf.mxu0
        %v1185 = vadd.f32 %v1096, %v1184
        %1186 = vmatmul.bf16.gmra.mxu0 %v667
        %v1187 = vpop.f32.mrf.mxu0
        %v1188 = vadd.f32 %v1099, %v1187
        %v1189 = vpop.f32.mrf.mxu0
        %v1190 = vadd.f32 %v1101, %v1189
        %1191 = vmatmul.bf16.gmra.mxu0 %v669
        %v1192 = vpop.f32.mrf.mxu0
        %v1193 = vadd.f32 %v1104, %v1192
        %v1194 = vpop.f32.mrf.mxu0
        %v1195 = vadd.f32 %v1106, %v1194
        %1196 = vmatmul.bf16.gmra.mxu0 %v671
        %v1197 = vpop.f32.mrf.mxu0
        %v1198 = vadd.f32 %v1109, %v1197
        %v1199 = vpop.f32.mrf.mxu0
        %v1200 = vadd.f32 %v1111, %v1199
        %1201 = vmatmul.bf16.gmra.mxu0 %v673
        %v1202 = vpop.f32.mrf.mxu0
        %v1203 = vadd.f32 %v1114, %v1202
        %v1204 = vpop.f32.mrf.mxu0
        %v1205 = vadd.f32 %v1116, %v1204
        %1206 = vmatmul.bf16.gmra.mxu0 %v675
        %v1207 = vpop.f32.mrf.mxu0
        %v1208 = vadd.f32 %v1119, %v1207
        %v1209 = vpop.f32.mrf.mxu0
        %v1210 = vadd.f32 %v1121, %v1209
        %1211 = vmatmul.bf16.gmra.mxu0 %v677
        %v1212 = vpop.f32.mrf.mxu0
        %v1213 = vadd.f32 %v1124, %v1212
        %v1214 = vpop.f32.mrf.mxu0
        %v1215 = vadd.f32 %v1126, %v1214
        %1216 = vmatmul.bf16.gmra.mxu0 %v679
        %v1217 = vpop.f32.mrf.mxu0
        %v1218 = vadd.f32 %v1129, %v1217
        %v1219 = vpop.f32.mrf.mxu0
        %v1220 = vadd.f32 %v1131, %v1219
        %1221 = vmatmul.bf16.gmra.mxu0 %v681
        %v1222 = vpop.f32.mrf.mxu0
        %v1223 = vadd.f32 %v1134, %v1222
        %v1224 = vpop.f32.mrf.mxu0
        %v1225 = vadd.f32 %v1136, %v1224
        %1226 = vmatmul.bf16.gmra.mxu0 %v683
        %v1227 = vpop.f32.mrf.mxu0
        %v1228 = vadd.f32 %v1139, %v1227
        %v1229 = vpop.f32.mrf.mxu0
        %v1230 = vadd.f32 %v1141, %v1229
        %1231 = vdwg.mxu0
        %v1232 = vld [vmem:[%s488] sm:$0xff]
        %v1233 = vld [vmem:[%s488 + $0x8] sm:$0xff]
        %v1234 = vld [vmem:[%s488 + $0x10] sm:$0xff]
        %v1235 = vld [vmem:[%s488 + $0x18] sm:$0xff]
        %v1236 = vld [vmem:[%s488 + $0x20] sm:$0xff]
        %v1237 = vld [vmem:[%s488 + $0x28] sm:$0xff]
        %v1238 = vld [vmem:[%s488 + $0x30] sm:$0xff]
        %v1239 = vld [vmem:[%s488 + $0x38] sm:$0xff]
        %v1240 = vld [vmem:[%s488 + $0x40] sm:$0xff]
        %v1241 = vld [vmem:[%s488 + $0x48] sm:$0xff]
        %v1242 = vld [vmem:[%s488 + $0x50] sm:$0xff]
        %v1243 = vld [vmem:[%s488 + $0x58] sm:$0xff]
        %v1244 = vld [vmem:[%s488 + $0x60] sm:$0xff]
        %v1245 = vld [vmem:[%s488 + $0x68] sm:$0xff]
        %v1246 = vld [vmem:[%s488 + $0x70] sm:$0xff]
        %v1247 = vld [vmem:[%s488 + $0x78] sm:$0xff]
        %v1248 = vld [vmem:[%s488 + $0x80] sm:$0xff]
        %v1249 = vld [vmem:[%s488 + $0x88] sm:$0xff]
        %v1250 = vld [vmem:[%s488 + $0x90] sm:$0xff]
        %v1251 = vld [vmem:[%s488 + $0x98] sm:$0xff]
        %v1252 = vld [vmem:[%s488 + $0xa0] sm:$0xff]
        %v1253 = vld [vmem:[%s488 + $0xa8] sm:$0xff]
        %v1254 = vld [vmem:[%s488 + $0xb0] sm:$0xff]
        %v1255 = vld [vmem:[%s488 + $0xb8] sm:$0xff]
        %v1256 = vld [vmem:[%s488 + $0xc0] sm:$0xff]
        %v1257 = vld [vmem:[%s488 + $0xc8] sm:$0xff]
        %v1258 = vld [vmem:[%s488 + $0xd0] sm:$0xff]
        %v1259 = vld [vmem:[%s488 + $0xd8] sm:$0xff]
        %v1260 = vld [vmem:[%s488 + $0xe0] sm:$0xff]
        %v1261 = vld [vmem:[%s488 + $0xe8] sm:$0xff]
        %v1262 = vld [vmem:[%s488 + $0xf0] sm:$0xff]
        %v1263 = vld [vmem:[%s488 + $0xf8] sm:$0xff]
        %1265 = vset.pattern.permute.xlu0 0
        %1266 = vperm.xlu0 %1265, %v1232
        %v1267 = vpop.permute.xlu0 %1266
        %1270 = vset.pattern.permute.xlu0 0
        %1271 = vperm.xlu0 %1270, %v1233
        %v1272 = vpop.permute.xlu0 %1271
        %1275 = vset.pattern.permute.xlu0 0
        %1276 = vperm.xlu0 %1275, %v1234
        %v1277 = vpop.permute.xlu0 %1276
        %1280 = vset.pattern.permute.xlu0 0
        %1281 = vperm.xlu0 %1280, %v1235
        %v1282 = vpop.permute.xlu0 %1281
        %1285 = vset.pattern.permute.xlu0 0
        %1286 = vperm.xlu0 %1285, %v1236
        %v1287 = vpop.permute.xlu0 %1286
        %1290 = vset.pattern.permute.xlu0 0
        %1291 = vperm.xlu0 %1290, %v1237
        %v1292 = vpop.permute.xlu0 %1291
        %1295 = vset.pattern.permute.xlu0 0
        %1296 = vperm.xlu0 %1295, %v1238
        %v1297 = vpop.permute.xlu0 %1296
        %1300 = vset.pattern.permute.xlu0 0
        %1301 = vperm.xlu0 %1300, %v1239
        %v1302 = vpop.permute.xlu0 %1301
        %1305 = vset.pattern.permute.xlu0 0
        %1306 = vperm.xlu0 %1305, %v1240
        %v1307 = vpop.permute.xlu0 %1306
        %1310 = vset.pattern.permute.xlu0 0
        %1311 = vperm.xlu0 %1310, %v1241
        %v1312 = vpop.permute.xlu0 %1311
        %1315 = vset.pattern.permute.xlu0 0
        %1316 = vperm.xlu0 %1315, %v1242
        %v1317 = vpop.permute.xlu0 %1316
        %1320 = vset.pattern.permute.xlu0 0
        %1321 = vperm.xlu0 %1320, %v1243
        %v1322 = vpop.permute.xlu0 %1321
        %1325 = vset.pattern.permute.xlu0 0
        %1326 = vperm.xlu0 %1325, %v1244
        %v1327 = vpop.permute.xlu0 %1326
        %1330 = vset.pattern.permute.xlu0 0
        %1331 = vperm.xlu0 %1330, %v1245
        %v1332 = vpop.permute.xlu0 %1331
        %1335 = vset.pattern.permute.xlu0 0
        %1336 = vperm.xlu0 %1335, %v1246
        %v1337 = vpop.permute.xlu0 %1336
        %1340 = vset.pattern.permute.xlu0 0
        %1341 = vperm.xlu0 %1340, %v1247
        %v1342 = vpop.permute.xlu0 %1341
        %1345 = vset.pattern.permute.xlu0 0
        %1346 = vperm.xlu0 %1345, %v1248
        %v1347 = vpop.permute.xlu0 %1346
        %1350 = vset.pattern.permute.xlu0 0
        %1351 = vperm.xlu0 %1350, %v1249
        %v1352 = vpop.permute.xlu0 %1351
        %1355 = vset.pattern.permute.xlu0 0
        %1356 = vperm.xlu0 %1355, %v1250
        %v1357 = vpop.permute.xlu0 %1356
        %1360 = vset.pattern.permute.xlu0 0
        %1361 = vperm.xlu0 %1360, %v1251
        %v1362 = vpop.permute.xlu0 %1361
        %1365 = vset.pattern.permute.xlu0 0
        %1366 = vperm.xlu0 %1365, %v1252
        %v1367 = vpop.permute.xlu0 %1366
        %1370 = vset.pattern.permute.xlu0 0
        %1371 = vperm.xlu0 %1370, %v1253
        %v1372 = vpop.permute.xlu0 %1371
        %1375 = vset.pattern.permute.xlu0 0
        %1376 = vperm.xlu0 %1375, %v1254
        %v1377 = vpop.permute.xlu0 %1376
        %1380 = vset.pattern.permute.xlu0 0
        %1381 = vperm.xlu0 %1380, %v1255
        %v1382 = vpop.permute.xlu0 %1381
        %1385 = vset.pattern.permute.xlu0 0
        %1386 = vperm.xlu0 %1385, %v1256
        %v1387 = vpop.permute.xlu0 %1386
        %1390 = vset.pattern.permute.xlu0 0
        %1391 = vperm.xlu0 %1390, %v1257
        %v1392 = vpop.permute.xlu0 %1391
        %1395 = vset.pattern.permute.xlu0 0
        %1396 = vperm.xlu0 %1395, %v1258
        %v1397 = vpop.permute.xlu0 %1396
        %1400 = vset.pattern.permute.xlu0 0
        %1401 = vperm.xlu0 %1400, %v1259
        %v1402 = vpop.permute.xlu0 %1401
        %1405 = vset.pattern.permute.xlu0 0
        %1406 = vperm.xlu0 %1405, %v1260
        %v1407 = vpop.permute.xlu0 %1406
        %1410 = vset.pattern.permute.xlu0 0
        %1411 = vperm.xlu0 %1410, %v1261
        %v1412 = vpop.permute.xlu0 %1411
        %1415 = vset.pattern.permute.xlu0 0
        %1416 = vperm.xlu0 %1415, %v1262
        %v1417 = vpop.permute.xlu0 %1416
        %1420 = vset.pattern.permute.xlu0 0
        %1421 = vperm.xlu0 %1420, %v1263
        %v1422 = vpop.permute.xlu0 %1421
        %v1424 = vmul.f32 %v975, %v1267
        %v1425 = vmul.f32 %v1153, %v1267
        %v1426 = vmul.f32 %v977, %v1272
        %v1427 = vmul.f32 %v1155, %v1272
        %v1428 = vmul.f32 %v980, %v1277
        %v1429 = vmul.f32 %v1158, %v1277
        %v1430 = vmul.f32 %v982, %v1282
        %v1431 = vmul.f32 %v1160, %v1282
        %v1432 = vmul.f32 %v985, %v1287
        %v1433 = vmul.f32 %v1163, %v1287
        %v1434 = vmul.f32 %v987, %v1292
        %v1435 = vmul.f32 %v1165, %v1292
        %v1436 = vmul.f32 %v990, %v1297
        %v1437 = vmul.f32 %v1168, %v1297
        %v1438 = vmul.f32 %v992, %v1302
        %v1439 = vmul.f32 %v1170, %v1302
        %v1440 = vmul.f32 %v995, %v1307
        %v1441 = vmul.f32 %v1173, %v1307
        %v1442 = vmul.f32 %v997, %v1312
        %v1443 = vmul.f32 %v1175, %v1312
        %v1444 = vmul.f32 %v1000, %v1317
        %v1445 = vmul.f32 %v1178, %v1317
        %v1446 = vmul.f32 %v1002, %v1322
        %v1447 = vmul.f32 %v1180, %v1322
        %v1448 = vmul.f32 %v1005, %v1327
        %v1449 = vmul.f32 %v1183, %v1327
        %v1450 = vmul.f32 %v1007, %v1332
        %v1451 = vmul.f32 %v1185, %v1332
        %v1452 = vmul.f32 %v1010, %v1337
        %v1453 = vmul.f32 %v1188, %v1337
        %v1454 = vmul.f32 %v1012, %v1342
        %v1455 = vmul.f32 %v1190, %v1342
        %v1456 = vmul.f32 %v1015, %v1347
        %v1457 = vmul.f32 %v1193, %v1347
        %v1458 = vmul.f32 %v1017, %v1352
        %v1459 = vmul.f32 %v1195, %v1352
        %v1460 = vmul.f32 %v1020, %v1357
        %v1461 = vmul.f32 %v1198, %v1357
        %v1462 = vmul.f32 %v1022, %v1362
        %v1463 = vmul.f32 %v1200, %v1362
        %v1464 = vmul.f32 %v1025, %v1367
        %v1465 = vmul.f32 %v1203, %v1367
        %v1466 = vmul.f32 %v1027, %v1372
        %v1467 = vmul.f32 %v1205, %v1372
        %v1468 = vmul.f32 %v1030, %v1377
        %v1469 = vmul.f32 %v1208, %v1377
        %v1470 = vmul.f32 %v1032, %v1382
        %v1471 = vmul.f32 %v1210, %v1382
        %v1472 = vmul.f32 %v1035, %v1387
        %v1473 = vmul.f32 %v1213, %v1387
        %v1474 = vmul.f32 %v1037, %v1392
        %v1475 = vmul.f32 %v1215, %v1392
        %v1476 = vmul.f32 %v1040, %v1397
        %v1477 = vmul.f32 %v1218, %v1397
        %v1478 = vmul.f32 %v1042, %v1402
        %v1479 = vmul.f32 %v1220, %v1402
        %v1480 = vmul.f32 %v1045, %v1407
        %v1481 = vmul.f32 %v1223, %v1407
        %v1482 = vmul.f32 %v1047, %v1412
        %v1483 = vmul.f32 %v1225, %v1412
        %v1484 = vmul.f32 %v1050, %v1417
        %v1485 = vmul.f32 %v1228, %v1417
        %v1486 = vmul.f32 %v1052, %v1422
        %v1487 = vmul.f32 %v1230, %v1422
        %v1488 = vld [vmem:[%s3] sm:$0x3]
        %v1490 = vperm.slane %v1488, 0
        %v1491 = vperm.slane %v1488, 1
        %v1494 = vadd.f32 %v1424, %v1490
        %v1495 = vadd.f32 %v1425, %v1491
        %v1496 = vadd.f32 %v1426, %v1490
        %v1497 = vadd.f32 %v1427, %v1491
        %v1498 = vadd.f32 %v1428, %v1490
        %v1499 = vadd.f32 %v1429, %v1491
        %v1500 = vadd.f32 %v1430, %v1490
        %v1501 = vadd.f32 %v1431, %v1491
        %v1502 = vadd.f32 %v1432, %v1490
        %v1503 = vadd.f32 %v1433, %v1491
        %v1504 = vadd.f32 %v1434, %v1490
        %v1505 = vadd.f32 %v1435, %v1491
        %v1506 = vadd.f32 %v1436, %v1490
        %v1507 = vadd.f32 %v1437, %v1491
        %v1508 = vadd.f32 %v1438, %v1490
        %v1509 = vadd.f32 %v1439, %v1491
        %v1510 = vadd.f32 %v1440, %v1490
        %v1511 = vadd.f32 %v1441, %v1491
        %v1512 = vadd.f32 %v1442, %v1490
        %v1513 = vadd.f32 %v1443, %v1491
        %v1514 = vadd.f32 %v1444, %v1490
        %v1515 = vadd.f32 %v1445, %v1491
        %v1516 = vadd.f32 %v1446, %v1490
        %v1517 = vadd.f32 %v1447, %v1491
        %v1518 = vadd.f32 %v1448, %v1490
        %v1519 = vadd.f32 %v1449, %v1491
        %v1520 = vadd.f32 %v1450, %v1490
        %v1521 = vadd.f32 %v1451, %v1491
        %v1522 = vadd.f32 %v1452, %v1490
        %v1523 = vadd.f32 %v1453, %v1491
        %v1524 = vadd.f32 %v1454, %v1490
        %v1525 = vadd.f32 %v1455, %v1491
        %v1526 = vadd.f32 %v1456, %v1490
        %v1527 = vadd.f32 %v1457, %v1491
        %v1528 = vadd.f32 %v1458, %v1490
        %v1529 = vadd.f32 %v1459, %v1491
        %v1530 = vadd.f32 %v1460, %v1490
        %v1531 = vadd.f32 %v1461, %v1491
        %v1532 = vadd.f32 %v1462, %v1490
        %v1533 = vadd.f32 %v1463, %v1491
        %v1534 = vadd.f32 %v1464, %v1490
        %v1535 = vadd.f32 %v1465, %v1491
        %v1536 = vadd.f32 %v1466, %v1490
        %v1537 = vadd.f32 %v1467, %v1491
        %v1538 = vadd.f32 %v1468, %v1490
        %v1539 = vadd.f32 %v1469, %v1491
        %v1540 = vadd.f32 %v1470, %v1490
        %v1541 = vadd.f32 %v1471, %v1491
        %v1542 = vadd.f32 %v1472, %v1490
        %v1543 = vadd.f32 %v1473, %v1491
        %v1544 = vadd.f32 %v1474, %v1490
        %v1545 = vadd.f32 %v1475, %v1491
        %v1546 = vadd.f32 %v1476, %v1490
        %v1547 = vadd.f32 %v1477, %v1491
        %v1548 = vadd.f32 %v1478, %v1490
        %v1549 = vadd.f32 %v1479, %v1491
        %v1550 = vadd.f32 %v1480, %v1490
        %v1551 = vadd.f32 %v1481, %v1491
        %v1552 = vadd.f32 %v1482, %v1490
        %v1553 = vadd.f32 %v1483, %v1491
        %v1554 = vadd.f32 %v1484, %v1490
        %v1555 = vadd.f32 %v1485, %v1491
        %v1556 = vadd.f32 %v1486, %v1490
        %v1557 = vadd.f32 %v1487, %v1491
        %v1558 = vpack.c.bf16 %v1496, %v1494
        %v1559 = vpack.c.bf16 %v1497, %v1495
        %v1560 = vpack.c.bf16 %v1500, %v1498
        %v1561 = vpack.c.bf16 %v1501, %v1499
        %v1562 = vpack.c.bf16 %v1504, %v1502
        %v1563 = vpack.c.bf16 %v1505, %v1503
        %v1564 = vpack.c.bf16 %v1508, %v1506
        %v1565 = vpack.c.bf16 %v1509, %v1507
        %v1566 = vpack.c.bf16 %v1512, %v1510
        %v1567 = vpack.c.bf16 %v1513, %v1511
        %v1568 = vpack.c.bf16 %v1516, %v1514
        %v1569 = vpack.c.bf16 %v1517, %v1515
        %v1570 = vpack.c.bf16 %v1520, %v1518
        %v1571 = vpack.c.bf16 %v1521, %v1519
        %v1572 = vpack.c.bf16 %v1524, %v1522
        %v1573 = vpack.c.bf16 %v1525, %v1523
        %v1574 = vpack.c.bf16 %v1528, %v1526
        %v1575 = vpack.c.bf16 %v1529, %v1527
        %v1576 = vpack.c.bf16 %v1532, %v1530
        %v1577 = vpack.c.bf16 %v1533, %v1531
        %v1578 = vpack.c.bf16 %v1536, %v1534
        %v1579 = vpack.c.bf16 %v1537, %v1535
        %v1580 = vpack.c.bf16 %v1540, %v1538
        %v1581 = vpack.c.bf16 %v1541, %v1539
        %v1582 = vpack.c.bf16 %v1544, %v1542
        %v1583 = vpack.c.bf16 %v1545, %v1543
        %v1584 = vpack.c.bf16 %v1548, %v1546
        %v1585 = vpack.c.bf16 %v1549, %v1547
        %v1586 = vpack.c.bf16 %v1552, %v1550
        %v1587 = vpack.c.bf16 %v1553, %v1551
        %v1588 = vpack.c.bf16 %v1556, %v1554
        %v1589 = vpack.c.bf16 %v1557, %v1555
        %v1590 = vunpack.c.l.bf16 %v1558
        %v1591 = vunpack.c.l.bf16 %v1559
        %v1592 = vunpack.c.h.bf16 %v1558
        %v1593 = vunpack.c.h.bf16 %v1559
        %v1594 = vunpack.c.l.bf16 %v1560
        %v1595 = vunpack.c.l.bf16 %v1561
        %v1596 = vunpack.c.h.bf16 %v1560
        %v1597 = vunpack.c.h.bf16 %v1561
        %v1598 = vunpack.c.l.bf16 %v1562
        %v1599 = vunpack.c.l.bf16 %v1563
        %v1600 = vunpack.c.h.bf16 %v1562
        %v1601 = vunpack.c.h.bf16 %v1563
        %v1602 = vunpack.c.l.bf16 %v1564
        %v1603 = vunpack.c.l.bf16 %v1565
        %v1604 = vunpack.c.h.bf16 %v1564
        %v1605 = vunpack.c.h.bf16 %v1565
        %v1606 = vunpack.c.l.bf16 %v1566
        %v1607 = vunpack.c.l.bf16 %v1567
        %v1608 = vunpack.c.h.bf16 %v1566
        %v1609 = vunpack.c.h.bf16 %v1567
        %v1610 = vunpack.c.l.bf16 %v1568
        %v1611 = vunpack.c.l.bf16 %v1569
        %v1612 = vunpack.c.h.bf16 %v1568
        %v1613 = vunpack.c.h.bf16 %v1569
        %v1614 = vunpack.c.l.bf16 %v1570
        %v1615 = vunpack.c.l.bf16 %v1571
        %v1616 = vunpack.c.h.bf16 %v1570
        %v1617 = vunpack.c.h.bf16 %v1571
        %v1618 = vunpack.c.l.bf16 %v1572
        %v1619 = vunpack.c.l.bf16 %v1573
        %v1620 = vunpack.c.h.bf16 %v1572
        %v1621 = vunpack.c.h.bf16 %v1573
        %v1622 = vunpack.c.l.bf16 %v1574
        %v1623 = vunpack.c.l.bf16 %v1575
        %v1624 = vunpack.c.h.bf16 %v1574
        %v1625 = vunpack.c.h.bf16 %v1575
        %v1626 = vunpack.c.l.bf16 %v1576
        %v1627 = vunpack.c.l.bf16 %v1577
        %v1628 = vunpack.c.h.bf16 %v1576
        %v1629 = vunpack.c.h.bf16 %v1577
        %v1630 = vunpack.c.l.bf16 %v1578
        %v1631 = vunpack.c.l.bf16 %v1579
        %v1632 = vunpack.c.h.bf16 %v1578
        %v1633 = vunpack.c.h.bf16 %v1579
        %v1634 = vunpack.c.l.bf16 %v1580
        %v1635 = vunpack.c.l.bf16 %v1581
        %v1636 = vunpack.c.h.bf16 %v1580
        %v1637 = vunpack.c.h.bf16 %v1581
        %v1638 = vunpack.c.l.bf16 %v1582
        %v1639 = vunpack.c.l.bf16 %v1583
        %v1640 = vunpack.c.h.bf16 %v1582
        %v1641 = vunpack.c.h.bf16 %v1583
        %v1642 = vunpack.c.l.bf16 %v1584
        %v1643 = vunpack.c.l.bf16 %v1585
        %v1644 = vunpack.c.h.bf16 %v1584
        %v1645 = vunpack.c.h.bf16 %v1585
        %v1646 = vunpack.c.l.bf16 %v1586
        %v1647 = vunpack.c.l.bf16 %v1587
        %v1648 = vunpack.c.h.bf16 %v1586
        %v1649 = vunpack.c.h.bf16 %v1587
        %v1650 = vunpack.c.l.bf16 %v1588
        %v1651 = vunpack.c.l.bf16 %v1589
        %v1652 = vunpack.c.h.bf16 %v1588
        %v1653 = vunpack.c.h.bf16 %v1589
        %v1654 = vtanh.pop %v1590
        %v1655 = vtanh.pop %v1591
        %v1656 = vtanh.pop %v1592
        %v1657 = vtanh.pop %v1593
        %v1658 = vtanh.pop %v1594
        %v1659 = vtanh.pop %v1595
        %v1660 = vtanh.pop %v1596
        %v1661 = vtanh.pop %v1597
        %v1662 = vtanh.pop %v1598
        %v1663 = vtanh.pop %v1599
        %v1664 = vtanh.pop %v1600
        %v1665 = vtanh.pop %v1601
        %v1666 = vtanh.pop %v1602
        %v1667 = vtanh.pop %v1603
        %v1668 = vtanh.pop %v1604
        %v1669 = vtanh.pop %v1605
        %v1670 = vtanh.pop %v1606
        %v1671 = vtanh.pop %v1607
        %v1672 = vtanh.pop %v1608
        %v1673 = vtanh.pop %v1609
        %v1674 = vtanh.pop %v1610
        %v1675 = vtanh.pop %v1611
        %v1676 = vtanh.pop %v1612
        %v1677 = vtanh.pop %v1613
        %v1678 = vtanh.pop %v1614
        %v1679 = vtanh.pop %v1615
        %v1680 = vtanh.pop %v1616
        %v1681 = vtanh.pop %v1617
        %v1682 = vtanh.pop %v1618
        %v1683 = vtanh.pop %v1619
        %v1684 = vtanh.pop %v1620
        %v1685 = vtanh.pop %v1621
        %v1686 = vtanh.pop %v1622
        %v1687 = vtanh.pop %v1623
        %v1688 = vtanh.pop %v1624
        %v1689 = vtanh.pop %v1625
        %v1690 = vtanh.pop %v1626
        %v1691 = vtanh.pop %v1627
        %v1692 = vtanh.pop %v1628
        %v1693 = vtanh.pop %v1629
        %v1694 = vtanh.pop %v1630
        %v1695 = vtanh.pop %v1631
        %v1696 = vtanh.pop %v1632
        %v1697 = vtanh.pop %v1633
        %v1698 = vtanh.pop %v1634
        %v1699 = vtanh.pop %v1635
        %v1700 = vtanh.pop %v1636
        %v1701 = vtanh.pop %v1637
        %v1702 = vtanh.pop %v1638
        %v1703 = vtanh.pop %v1639
        %v1704 = vtanh.pop %v1640
        %v1705 = vtanh.pop %v1641
        %v1706 = vtanh.pop %v1642
        %v1707 = vtanh.pop %v1643
        %v1708 = vtanh.pop %v1644
        %v1709 = vtanh.pop %v1645
        %v1710 = vtanh.pop %v1646
        %v1711 = vtanh.pop %v1647
        %v1712 = vtanh.pop %v1648
        %v1713 = vtanh.pop %v1649
        %v1714 = vtanh.pop %v1650
        %v1715 = vtanh.pop %v1651
        %v1716 = vtanh.pop %v1652
        %v1717 = vtanh.pop %v1653
        %v1718 = vpack.c.bf16 %v1656, %v1654
        %v1719 = vpack.c.bf16 %v1657, %v1655
        %v1720 = vpack.c.bf16 %v1660, %v1658
        %v1721 = vpack.c.bf16 %v1661, %v1659
        %v1722 = vpack.c.bf16 %v1664, %v1662
        %v1723 = vpack.c.bf16 %v1665, %v1663
        %v1724 = vpack.c.bf16 %v1668, %v1666
        %v1725 = vpack.c.bf16 %v1669, %v1667
        %v1726 = vpack.c.bf16 %v1672, %v1670
        %v1727 = vpack.c.bf16 %v1673, %v1671
        %v1728 = vpack.c.bf16 %v1676, %v1674
        %v1729 = vpack.c.bf16 %v1677, %v1675
        %v1730 = vpack.c.bf16 %v1680, %v1678
        %v1731 = vpack.c.bf16 %v1681, %v1679
        %v1732 = vpack.c.bf16 %v1684, %v1682
        %v1733 = vpack.c.bf16 %v1685, %v1683
        %v1734 = vpack.c.bf16 %v1688, %v1686
        %v1735 = vpack.c.bf16 %v1689, %v1687
        %v1736 = vpack.c.bf16 %v1692, %v1690
        %v1737 = vpack.c.bf16 %v1693, %v1691
        %v1738 = vpack.c.bf16 %v1696, %v1694
        %v1739 = vpack.c.bf16 %v1697, %v1695
        %v1740 = vpack.c.bf16 %v1700, %v1698
        %v1741 = vpack.c.bf16 %v1701, %v1699
        %v1742 = vpack.c.bf16 %v1704, %v1702
        %v1743 = vpack.c.bf16 %v1705, %v1703
        %v1744 = vpack.c.bf16 %v1708, %v1706
        %v1745 = vpack.c.bf16 %v1709, %v1707
        %v1746 = vpack.c.bf16 %v1712, %v1710
        %v1747 = vpack.c.bf16 %v1713, %v1711
        %v1748 = vpack.c.bf16 %v1716, %v1714
        %v1749 = vpack.c.bf16 %v1717, %v1715
        %v1750 = vld [vmem:[#allocation5] sm:$0xff]
        %v1751 = vld [vmem:[#allocation5 + $0x8] sm:$0xff]
        %v1752 = vld [vmem:[#allocation5 + $0x10] sm:$0xff]
        %v1753 = vld [vmem:[#allocation5 + $0x18] sm:$0xff]
        %v1754 = vld [vmem:[#allocation5 + $0x20] sm:$0xff]
        %v1755 = vld [vmem:[#allocation5 + $0x28] sm:$0xff]
        %v1756 = vld [vmem:[#allocation5 + $0x30] sm:$0xff]
        %v1757 = vld [vmem:[#allocation5 + $0x38] sm:$0xff]
        %v1758 = vld [vmem:[#allocation5 + $0x40] sm:$0xff]
        %v1759 = vld [vmem:[#allocation5 + $0x48] sm:$0xff]
        %v1760 = vld [vmem:[#allocation5 + $0x50] sm:$0xff]
        %v1761 = vld [vmem:[#allocation5 + $0x58] sm:$0xff]
        %v1762 = vld [vmem:[#allocation5 + $0x60] sm:$0xff]
        %v1763 = vld [vmem:[#allocation5 + $0x68] sm:$0xff]
        %v1764 = vld [vmem:[#allocation5 + $0x70] sm:$0xff]
        %v1765 = vld [vmem:[#allocation5 + $0x78] sm:$0xff]
        %v1766 = vld [vmem:[#allocation5 + $0x80] sm:$0xff]
        %v1767 = vld [vmem:[#allocation5 + $0x88] sm:$0xff]
        %v1768 = vld [vmem:[#allocation5 + $0x90] sm:$0xff]
        %v1769 = vld [vmem:[#allocation5 + $0x98] sm:$0xff]
        %v1770 = vld [vmem:[#allocation5 + $0xa0] sm:$0xff]
        %v1771 = vld [vmem:[#allocation5 + $0xa8] sm:$0xff]
        %v1772 = vld [vmem:[#allocation5 + $0xb0] sm:$0xff]
        %v1773 = vld [vmem:[#allocation5 + $0xb8] sm:$0xff]
        %v1774 = vld [vmem:[#allocation5 + $0xc0] sm:$0xff]
        %v1775 = vld [vmem:[#allocation5 + $0xc8] sm:$0xff]
        %v1776 = vld [vmem:[#allocation5 + $0xd0] sm:$0xff]
        %v1777 = vld [vmem:[#allocation5 + $0xd8] sm:$0xff]
        %v1778 = vld [vmem:[#allocation5 + $0xe0] sm:$0xff]
        %v1779 = vld [vmem:[#allocation5 + $0xe8] sm:$0xff]
        %v1780 = vld [vmem:[#allocation5 + $0xf0] sm:$0xff]
        %v1781 = vld [vmem:[#allocation5 + $0xf8] sm:$0xff]
        %v1782 = vld [vmem:[%s5] sm:$0x3]
        %v1784 = vperm.slane %v1782, 0
        %v1785 = vperm.slane %v1782, 1
        %v1820 = vunpack.c.l.b16 %v1750
        %v1821 = vunpack.c.h.b16 %v1750
        %v1822 = vunpack.c.l.b16 %v1751
        %v1823 = vunpack.c.h.b16 %v1751
        %v1824 = vunpack.c.l.b16 %v1752
        %v1825 = vunpack.c.h.b16 %v1752
        %v1826 = vunpack.c.l.b16 %v1753
        %v1827 = vunpack.c.h.b16 %v1753
        %v1828 = vunpack.c.l.b16 %v1754
        %v1829 = vunpack.c.h.b16 %v1754
        %v1830 = vunpack.c.l.b16 %v1755
        %v1831 = vunpack.c.h.b16 %v1755
        %v1832 = vunpack.c.l.b16 %v1756
        %v1833 = vunpack.c.h.b16 %v1756
        %v1834 = vunpack.c.l.b16 %v1757
        %v1835 = vunpack.c.h.b16 %v1757
        %v1836 = vunpack.c.l.b16 %v1758
        %v1837 = vunpack.c.h.b16 %v1758
        %v1838 = vunpack.c.l.b16 %v1759
        %v1839 = vunpack.c.h.b16 %v1759
        %v1840 = vunpack.c.l.b16 %v1760
        %v1841 = vunpack.c.h.b16 %v1760
        %v1842 = vunpack.c.l.b16 %v1761
        %v1843 = vunpack.c.h.b16 %v1761
        %v1844 = vunpack.c.l.b16 %v1762
        %v1845 = vunpack.c.h.b16 %v1762
        %v1846 = vunpack.c.l.b16 %v1763
        %v1847 = vunpack.c.h.b16 %v1763
        %v1848 = vunpack.c.l.b16 %v1764
        %v1849 = vunpack.c.h.b16 %v1764
        %v1850 = vunpack.c.l.b16 %v1765
        %v1851 = vunpack.c.h.b16 %v1765
        %v1852 = vunpack.c.l.b16 %v1766
        %v1853 = vunpack.c.h.b16 %v1766
        %v1854 = vunpack.c.l.b16 %v1767
        %v1855 = vunpack.c.h.b16 %v1767
        %v1856 = vunpack.c.l.b16 %v1768
        %v1857 = vunpack.c.h.b16 %v1768
        %v1858 = vunpack.c.l.b16 %v1769
        %v1859 = vunpack.c.h.b16 %v1769
        %v1860 = vunpack.c.l.b16 %v1770
        %v1861 = vunpack.c.h.b16 %v1770
        %v1862 = vunpack.c.l.b16 %v1771
        %v1863 = vunpack.c.h.b16 %v1771
        %v1864 = vunpack.c.l.b16 %v1772
        %v1865 = vunpack.c.h.b16 %v1772
        %v1866 = vunpack.c.l.b16 %v1773
        %v1867 = vunpack.c.h.b16 %v1773
        %v1868 = vunpack.c.l.b16 %v1774
        %v1869 = vunpack.c.h.b16 %v1774
        %v1870 = vunpack.c.l.b16 %v1775
        %v1871 = vunpack.c.h.b16 %v1775
        %v1872 = vunpack.c.l.b16 %v1776
        %v1873 = vunpack.c.h.b16 %v1776
        %v1874 = vunpack.c.l.b16 %v1777
        %v1875 = vunpack.c.h.b16 %v1777
        %v1876 = vunpack.c.l.b16 %v1778
        %v1877 = vunpack.c.h.b16 %v1778
        %v1878 = vunpack.c.l.b16 %v1779
        %v1879 = vunpack.c.h.b16 %v1779
        %v1880 = vunpack.c.l.b16 %v1780
        %v1881 = vunpack.c.h.b16 %v1780
        %v1882 = vunpack.c.l.b16 %v1781
        %v1883 = vunpack.c.h.b16 %v1781
        %v1884 = vpack.c.b16 %v1822, %v1820
        %v1885 = vpack.c.b16 %v1823, %v1821
        %v1886 = vpack.c.b16 %v1826, %v1824
        %v1887 = vpack.c.b16 %v1827, %v1825
        %v1888 = vpack.c.b16 %v1830, %v1828
        %v1889 = vpack.c.b16 %v1831, %v1829
        %v1890 = vpack.c.b16 %v1834, %v1832
        %v1891 = vpack.c.b16 %v1835, %v1833
        %v1892 = vpack.c.b16 %v1838, %v1836
        %v1893 = vpack.c.b16 %v1839, %v1837
        %v1894 = vpack.c.b16 %v1842, %v1840
        %v1895 = vpack.c.b16 %v1843, %v1841
        %v1896 = vpack.c.b16 %v1846, %v1844
        %v1897 = vpack.c.b16 %v1847, %v1845
        %v1898 = vpack.c.b16 %v1850, %v1848
        %v1899 = vpack.c.b16 %v1851, %v1849
        %v1900 = vpack.c.b16 %v1854, %v1852
        %v1901 = vpack.c.b16 %v1855, %v1853
        %v1902 = vpack.c.b16 %v1858, %v1856
        %v1903 = vpack.c.b16 %v1859, %v1857
        %v1904 = vpack.c.b16 %v1862, %v1860
        %v1905 = vpack.c.b16 %v1863, %v1861
        %v1906 = vpack.c.b16 %v1866, %v1864
        %v1907 = vpack.c.b16 %v1867, %v1865
        %v1908 = vpack.c.b16 %v1870, %v1868
        %v1909 = vpack.c.b16 %v1871, %v1869
        %v1910 = vpack.c.b16 %v1874, %v1872
        %v1911 = vpack.c.b16 %v1875, %v1873
        %v1912 = vpack.c.b16 %v1878, %v1876
        %v1913 = vpack.c.b16 %v1879, %v1877
        %v1914 = vpack.c.b16 %v1882, %v1880
        %v1915 = vpack.c.b16 %v1883, %v1881
        %1948 = vmatpush.bf16.msra.mxu0 %v1898
        %1949 = vmatpush.bf16.msra.mxu0 %v1896
        %1950 = vmatpush.bf16.msra.mxu0 %v1894
        %1951 = vmatpush.bf16.msra.mxu0 %v1892
        %1952 = vmatpush.bf16.msra.mxu0 %v1890
        %1953 = vmatpush.bf16.msra.mxu0 %v1888
        %1954 = vmatpush.bf16.msra.mxu0 %v1886
        %1955 = vmatpush.bf16.msra.mxu0 %v1884
        %1956 = vmatmul.bf16.gmra.mxu0 %v1718
        %v1957 = vpop.f32.mrf.mxu0
        %v1958 = vadd.f32 %v1784, %v1957
        %v1959 = vpop.f32.mrf.mxu0
        %v1960 = vadd.f32 %v1784, %v1959
        %1961 = vmatmul.bf16.gmra.mxu0 %v1720
        %v1962 = vpop.f32.mrf.mxu0
        %v1963 = vadd.f32 %v1784, %v1962
        %v1964 = vpop.f32.mrf.mxu0
        %v1965 = vadd.f32 %v1784, %v1964
        %1966 = vmatmul.bf16.gmra.mxu0 %v1722
        %v1967 = vpop.f32.mrf.mxu0
        %v1968 = vadd.f32 %v1784, %v1967
        %v1969 = vpop.f32.mrf.mxu0
        %v1970 = vadd.f32 %v1784, %v1969
        %1971 = vmatmul.bf16.gmra.mxu0 %v1724
        %v1972 = vpop.f32.mrf.mxu0
        %v1973 = vadd.f32 %v1784, %v1972
        %v1974 = vpop.f32.mrf.mxu0
        %v1975 = vadd.f32 %v1784, %v1974
        %1976 = vmatmul.bf16.gmra.mxu0 %v1726
        %v1977 = vpop.f32.mrf.mxu0
        %v1978 = vadd.f32 %v1784, %v1977
        %v1979 = vpop.f32.mrf.mxu0
        %v1980 = vadd.f32 %v1784, %v1979
        %1981 = vmatmul.bf16.gmra.mxu0 %v1728
        %v1982 = vpop.f32.mrf.mxu0
        %v1983 = vadd.f32 %v1784, %v1982
        %v1984 = vpop.f32.mrf.mxu0
        %v1985 = vadd.f32 %v1784, %v1984
        %1986 = vmatmul.bf16.gmra.mxu0 %v1730
        %v1987 = vpop.f32.mrf.mxu0
        %v1988 = vadd.f32 %v1784, %v1987
        %v1989 = vpop.f32.mrf.mxu0
        %v1990 = vadd.f32 %v1784, %v1989
        %1991 = vmatmul.bf16.gmra.mxu0 %v1732
        %v1992 = vpop.f32.mrf.mxu0
        %v1993 = vadd.f32 %v1784, %v1992
        %v1994 = vpop.f32.mrf.mxu0
        %v1995 = vadd.f32 %v1784, %v1994
        %1996 = vmatmul.bf16.gmra.mxu0 %v1734
        %v1997 = vpop.f32.mrf.mxu0
        %v1998 = vadd.f32 %v1784, %v1997
        %v1999 = vpop.f32.mrf.mxu0
        %v2000 = vadd.f32 %v1784, %v1999
        %2001 = vmatmul.bf16.gmra.mxu0 %v1736
        %v2002 = vpop.f32.mrf.mxu0
        %v2003 = vadd.f32 %v1784, %v2002
        %v2004 = vpop.f32.mrf.mxu0
        %v2005 = vadd.f32 %v1784, %v2004
        %2006 = vmatmul.bf16.gmra.mxu0 %v1738
        %v2007 = vpop.f32.mrf.mxu0
        %v2008 = vadd.f32 %v1784, %v2007
        %v2009 = vpop.f32.mrf.mxu0
        %v2010 = vadd.f32 %v1784, %v2009
        %2011 = vmatmul.bf16.gmra.mxu0 %v1740
        %v2012 = vpop.f32.mrf.mxu0
        %v2013 = vadd.f32 %v1784, %v2012
        %v2014 = vpop.f32.mrf.mxu0
        %v2015 = vadd.f32 %v1784, %v2014
        %2016 = vmatmul.bf16.gmra.mxu0 %v1742
        %v2017 = vpop.f32.mrf.mxu0
        %v2018 = vadd.f32 %v1784, %v2017
        %v2019 = vpop.f32.mrf.mxu0
        %v2020 = vadd.f32 %v1784, %v2019
        %2021 = vmatmul.bf16.gmra.mxu0 %v1744
        %v2022 = vpop.f32.mrf.mxu0
        %v2023 = vadd.f32 %v1784, %v2022
        %v2024 = vpop.f32.mrf.mxu0
        %v2025 = vadd.f32 %v1784, %v2024
        %2026 = vmatmul.bf16.gmra.mxu0 %v1746
        %v2027 = vpop.f32.mrf.mxu0
        %v2028 = vadd.f32 %v1784, %v2027
        %v2029 = vpop.f32.mrf.mxu0
        %v2030 = vadd.f32 %v1784, %v2029
        %2031 = vmatmul.bf16.gmra.mxu0 %v1748
        %v2032 = vpop.f32.mrf.mxu0
        %v2033 = vadd.f32 %v1784, %v2032
        %v2034 = vpop.f32.mrf.mxu0
        %v2035 = vadd.f32 %v1784, %v2034
        %2036 = vdwg.mxu0
        %2037 = vmatpush.bf16.msra.mxu0 %v1914
        %2038 = vmatpush.bf16.msra.mxu0 %v1912
        %2039 = vmatpush.bf16.msra.mxu0 %v1910
        %2040 = vmatpush.bf16.msra.mxu0 %v1908
        %2041 = vmatpush.bf16.msra.mxu0 %v1906
        %2042 = vmatpush.bf16.msra.mxu0 %v1904
        %2043 = vmatpush.bf16.msra.mxu0 %v1902
        %2044 = vmatpush.bf16.msra.mxu0 %v1900
        %2045 = vmatmul.bf16.gmra.mxu0 %v1719
        %v2046 = vpop.f32.mrf.mxu0
        %v2047 = vadd.f32 %v1958, %v2046
        %v2048 = vpop.f32.mrf.mxu0
        %v2049 = vadd.f32 %v1960, %v2048
        %2050 = vmatmul.bf16.gmra.mxu0 %v1721
        %v2051 = vpop.f32.mrf.mxu0
        %v2052 = vadd.f32 %v1963, %v2051
        %v2053 = vpop.f32.mrf.mxu0
        %v2054 = vadd.f32 %v1965, %v2053
        %2055 = vmatmul.bf16.gmra.mxu0 %v1723
        %v2056 = vpop.f32.mrf.mxu0
        %v2057 = vadd.f32 %v1968, %v2056
        %v2058 = vpop.f32.mrf.mxu0
        %v2059 = vadd.f32 %v1970, %v2058
        %2060 = vmatmul.bf16.gmra.mxu0 %v1725
        %v2061 = vpop.f32.mrf.mxu0
        %v2062 = vadd.f32 %v1973, %v2061
        %v2063 = vpop.f32.mrf.mxu0
        %v2064 = vadd.f32 %v1975, %v2063
        %2065 = vmatmul.bf16.gmra.mxu0 %v1727
        %v2066 = vpop.f32.mrf.mxu0
        %v2067 = vadd.f32 %v1978, %v2066
        %v2068 = vpop.f32.mrf.mxu0
        %v2069 = vadd.f32 %v1980, %v2068
        %2070 = vmatmul.bf16.gmra.mxu0 %v1729
        %v2071 = vpop.f32.mrf.mxu0
        %v2072 = vadd.f32 %v1983, %v2071
        %v2073 = vpop.f32.mrf.mxu0
        %v2074 = vadd.f32 %v1985, %v2073
        %2075 = vmatmul.bf16.gmra.mxu0 %v1731
        %v2076 = vpop.f32.mrf.mxu0
        %v2077 = vadd.f32 %v1988, %v2076
        %v2078 = vpop.f32.mrf.mxu0
        %v2079 = vadd.f32 %v1990, %v2078
        %2080 = vmatmul.bf16.gmra.mxu0 %v1733
        %v2081 = vpop.f32.mrf.mxu0
        %v2082 = vadd.f32 %v1993, %v2081
        %v2083 = vpop.f32.mrf.mxu0
        %v2084 = vadd.f32 %v1995, %v2083
        %2085 = vmatmul.bf16.gmra.mxu0 %v1735
        %v2086 = vpop.f32.mrf.mxu0
        %v2087 = vadd.f32 %v1998, %v2086
        %v2088 = vpop.f32.mrf.mxu0
        %v2089 = vadd.f32 %v2000, %v2088
        %2090 = vmatmul.bf16.gmra.mxu0 %v1737
        %v2091 = vpop.f32.mrf.mxu0
        %v2092 = vadd.f32 %v2003, %v2091
        %v2093 = vpop.f32.mrf.mxu0
        %v2094 = vadd.f32 %v2005, %v2093
        %2095 = vmatmul.bf16.gmra.mxu0 %v1739
        %v2096 = vpop.f32.mrf.mxu0
        %v2097 = vadd.f32 %v2008, %v2096
        %v2098 = vpop.f32.mrf.mxu0
        %v2099 = vadd.f32 %v2010, %v2098
        %2100 = vmatmul.bf16.gmra.mxu0 %v1741
        %v2101 = vpop.f32.mrf.mxu0
        %v2102 = vadd.f32 %v2013, %v2101
        %v2103 = vpop.f32.mrf.mxu0
        %v2104 = vadd.f32 %v2015, %v2103
        %2105 = vmatmul.bf16.gmra.mxu0 %v1743
        %v2106 = vpop.f32.mrf.mxu0
        %v2107 = vadd.f32 %v2018, %v2106
        %v2108 = vpop.f32.mrf.mxu0
        %v2109 = vadd.f32 %v2020, %v2108
        %2110 = vmatmul.bf16.gmra.mxu0 %v1745
        %v2111 = vpop.f32.mrf.mxu0
        %v2112 = vadd.f32 %v2023, %v2111
        %v2113 = vpop.f32.mrf.mxu0
        %v2114 = vadd.f32 %v2025, %v2113
        %2115 = vmatmul.bf16.gmra.mxu0 %v1747
        %v2116 = vpop.f32.mrf.mxu0
        %v2117 = vadd.f32 %v2028, %v2116
        %v2118 = vpop.f32.mrf.mxu0
        %v2119 = vadd.f32 %v2030, %v2118
        %2120 = vmatmul.bf16.gmra.mxu0 %v1749
        %v2121 = vpop.f32.mrf.mxu0
        %v2122 = vadd.f32 %v2033, %v2121
        %v2123 = vpop.f32.mrf.mxu0
        %v2124 = vadd.f32 %v2035, %v2123
        %2125 = vdwg.mxu0
        %2126 = vmatpush.bf16.msra.mxu0 %v1899
        %2127 = vmatpush.bf16.msra.mxu0 %v1897
        %2128 = vmatpush.bf16.msra.mxu0 %v1895
        %2129 = vmatpush.bf16.msra.mxu0 %v1893
        %2130 = vmatpush.bf16.msra.mxu0 %v1891
        %2131 = vmatpush.bf16.msra.mxu0 %v1889
        %2132 = vmatpush.bf16.msra.mxu0 %v1887
        %2133 = vmatpush.bf16.msra.mxu0 %v1885
        %2134 = vmatmul.bf16.gmra.mxu0 %v1718
        %v2135 = vpop.f32.mrf.mxu0
        %v2136 = vadd.f32 %v1785, %v2135
        %v2137 = vpop.f32.mrf.mxu0
        %v2138 = vadd.f32 %v1785, %v2137
        %2139 = vmatmul.bf16.gmra.mxu0 %v1720
        %v2140 = vpop.f32.mrf.mxu0
        %v2141 = vadd.f32 %v1785, %v2140
        %v2142 = vpop.f32.mrf.mxu0
        %v2143 = vadd.f32 %v1785, %v2142
        %2144 = vmatmul.bf16.gmra.mxu0 %v1722
        %v2145 = vpop.f32.mrf.mxu0
        %v2146 = vadd.f32 %v1785, %v2145
        %v2147 = vpop.f32.mrf.mxu0
        %v2148 = vadd.f32 %v1785, %v2147
        %2149 = vmatmul.bf16.gmra.mxu0 %v1724
        %v2150 = vpop.f32.mrf.mxu0
        %v2151 = vadd.f32 %v1785, %v2150
        %v2152 = vpop.f32.mrf.mxu0
        %v2153 = vadd.f32 %v1785, %v2152
        %2154 = vmatmul.bf16.gmra.mxu0 %v1726
        %v2155 = vpop.f32.mrf.mxu0
        %v2156 = vadd.f32 %v1785, %v2155
        %v2157 = vpop.f32.mrf.mxu0
        %v2158 = vadd.f32 %v1785, %v2157
        %2159 = vmatmul.bf16.gmra.mxu0 %v1728
        %v2160 = vpop.f32.mrf.mxu0
        %v2161 = vadd.f32 %v1785, %v2160
        %v2162 = vpop.f32.mrf.mxu0
        %v2163 = vadd.f32 %v1785, %v2162
        %2164 = vmatmul.bf16.gmra.mxu0 %v1730
        %v2165 = vpop.f32.mrf.mxu0
        %v2166 = vadd.f32 %v1785, %v2165
        %v2167 = vpop.f32.mrf.mxu0
        %v2168 = vadd.f32 %v1785, %v2167
        %2169 = vmatmul.bf16.gmra.mxu0 %v1732
        %v2170 = vpop.f32.mrf.mxu0
        %v2171 = vadd.f32 %v1785, %v2170
        %v2172 = vpop.f32.mrf.mxu0
        %v2173 = vadd.f32 %v1785, %v2172
        %2174 = vmatmul.bf16.gmra.mxu0 %v1734
        %v2175 = vpop.f32.mrf.mxu0
        %v2176 = vadd.f32 %v1785, %v2175
        %v2177 = vpop.f32.mrf.mxu0
        %v2178 = vadd.f32 %v1785, %v2177
        %2179 = vmatmul.bf16.gmra.mxu0 %v1736
        %v2180 = vpop.f32.mrf.mxu0
        %v2181 = vadd.f32 %v1785, %v2180
        %v2182 = vpop.f32.mrf.mxu0
        %v2183 = vadd.f32 %v1785, %v2182
        %2184 = vmatmul.bf16.gmra.mxu0 %v1738
        %v2185 = vpop.f32.mrf.mxu0
        %v2186 = vadd.f32 %v1785, %v2185
        %v2187 = vpop.f32.mrf.mxu0
        %v2188 = vadd.f32 %v1785, %v2187
        %2189 = vmatmul.bf16.gmra.mxu0 %v1740
        %v2190 = vpop.f32.mrf.mxu0
        %v2191 = vadd.f32 %v1785, %v2190
        %v2192 = vpop.f32.mrf.mxu0
        %v2193 = vadd.f32 %v1785, %v2192
        %2194 = vmatmul.bf16.gmra.mxu0 %v1742
        %v2195 = vpop.f32.mrf.mxu0
        %v2196 = vadd.f32 %v1785, %v2195
        %v2197 = vpop.f32.mrf.mxu0
        %v2198 = vadd.f32 %v1785, %v2197
        %2199 = vmatmul.bf16.gmra.mxu0 %v1744
        %v2200 = vpop.f32.mrf.mxu0
        %v2201 = vadd.f32 %v1785, %v2200
        %v2202 = vpop.f32.mrf.mxu0
        %v2203 = vadd.f32 %v1785, %v2202
        %2204 = vmatmul.bf16.gmra.mxu0 %v1746
        %v2205 = vpop.f32.mrf.mxu0
        %v2206 = vadd.f32 %v1785, %v2205
        %v2207 = vpop.f32.mrf.mxu0
        %v2208 = vadd.f32 %v1785, %v2207
        %2209 = vmatmul.bf16.gmra.mxu0 %v1748
        %v2210 = vpop.f32.mrf.mxu0
        %v2211 = vadd.f32 %v1785, %v2210
        %v2212 = vpop.f32.mrf.mxu0
        %v2213 = vadd.f32 %v1785, %v2212
        %2214 = vdwg.mxu0
        %2215 = vmatpush.bf16.msra.mxu0 %v1915
        %2216 = vmatpush.bf16.msra.mxu0 %v1913
        %2217 = vmatpush.bf16.msra.mxu0 %v1911
        %2218 = vmatpush.bf16.msra.mxu0 %v1909
        %2219 = vmatpush.bf16.msra.mxu0 %v1907
        %2220 = vmatpush.bf16.msra.mxu0 %v1905
        %2221 = vmatpush.bf16.msra.mxu0 %v1903
        %2222 = vmatpush.bf16.msra.mxu0 %v1901
        %2223 = vmatmul.bf16.gmra.mxu0 %v1719
        %v2224 = vpop.f32.mrf.mxu0
        %v2225 = vadd.f32 %v2136, %v2224
        %v2226 = vpop.f32.mrf.mxu0
        %v2227 = vadd.f32 %v2138, %v2226
        %2228 = vmatmul.bf16.gmra.mxu0 %v1721
        %v2229 = vpop.f32.mrf.mxu0
        %v2230 = vadd.f32 %v2141, %v2229
        %v2231 = vpop.f32.mrf.mxu0
        %v2232 = vadd.f32 %v2143, %v2231
        %2233 = vmatmul.bf16.gmra.mxu0 %v1723
        %v2234 = vpop.f32.mrf.mxu0
        %v2235 = vadd.f32 %v2146, %v2234
        %v2236 = vpop.f32.mrf.mxu0
        %v2237 = vadd.f32 %v2148, %v2236
        %2238 = vmatmul.bf16.gmra.mxu0 %v1725
        %v2239 = vpop.f32.mrf.mxu0
        %v2240 = vadd.f32 %v2151, %v2239
        %v2241 = vpop.f32.mrf.mxu0
        %v2242 = vadd.f32 %v2153, %v2241
        %2243 = vmatmul.bf16.gmra.mxu0 %v1727
        %v2244 = vpop.f32.mrf.mxu0
        %v2245 = vadd.f32 %v2156, %v2244
        %v2246 = vpop.f32.mrf.mxu0
        %v2247 = vadd.f32 %v2158, %v2246
        %2248 = vmatmul.bf16.gmra.mxu0 %v1729
        %v2249 = vpop.f32.mrf.mxu0
        %v2250 = vadd.f32 %v2161, %v2249
        %v2251 = vpop.f32.mrf.mxu0
        %v2252 = vadd.f32 %v2163, %v2251
        %2253 = vmatmul.bf16.gmra.mxu0 %v1731
        %v2254 = vpop.f32.mrf.mxu0
        %v2255 = vadd.f32 %v2166, %v2254
        %v2256 = vpop.f32.mrf.mxu0
        %v2257 = vadd.f32 %v2168, %v2256
        %2258 = vmatmul.bf16.gmra.mxu0 %v1733
        %v2259 = vpop.f32.mrf.mxu0
        %v2260 = vadd.f32 %v2171, %v2259
        %v2261 = vpop.f32.mrf.mxu0
        %v2262 = vadd.f32 %v2173, %v2261
        %2263 = vmatmul.bf16.gmra.mxu0 %v1735
        %v2264 = vpop.f32.mrf.mxu0
        %v2265 = vadd.f32 %v2176, %v2264
        %v2266 = vpop.f32.mrf.mxu0
        %v2267 = vadd.f32 %v2178, %v2266
        %2268 = vmatmul.bf16.gmra.mxu0 %v1737
        %v2269 = vpop.f32.mrf.mxu0
        %v2270 = vadd.f32 %v2181, %v2269
        %v2271 = vpop.f32.mrf.mxu0
        %v2272 = vadd.f32 %v2183, %v2271
        %2273 = vmatmul.bf16.gmra.mxu0 %v1739
        %v2274 = vpop.f32.mrf.mxu0
        %v2275 = vadd.f32 %v2186, %v2274
        %v2276 = vpop.f32.mrf.mxu0
        %v2277 = vadd.f32 %v2188, %v2276
        %2278 = vmatmul.bf16.gmra.mxu0 %v1741
        %v2279 = vpop.f32.mrf.mxu0
        %v2280 = vadd.f32 %v2191, %v2279
        %v2281 = vpop.f32.mrf.mxu0
        %v2282 = vadd.f32 %v2193, %v2281
        %2283 = vmatmul.bf16.gmra.mxu0 %v1743
        %v2284 = vpop.f32.mrf.mxu0
        %v2285 = vadd.f32 %v2196, %v2284
        %v2286 = vpop.f32.mrf.mxu0
        %v2287 = vadd.f32 %v2198, %v2286
        %2288 = vmatmul.bf16.gmra.mxu0 %v1745
        %v2289 = vpop.f32.mrf.mxu0
        %v2290 = vadd.f32 %v2201, %v2289
        %v2291 = vpop.f32.mrf.mxu0
        %v2292 = vadd.f32 %v2203, %v2291
        %2293 = vmatmul.bf16.gmra.mxu0 %v1747
        %v2294 = vpop.f32.mrf.mxu0
        %v2295 = vadd.f32 %v2206, %v2294
        %v2296 = vpop.f32.mrf.mxu0
        %v2297 = vadd.f32 %v2208, %v2296
        %2298 = vmatmul.bf16.gmra.mxu0 %v1749
        %v2299 = vpop.f32.mrf.mxu0
        %v2300 = vadd.f32 %v2211, %v2299
        %v2301 = vpop.f32.mrf.mxu0
        %v2302 = vadd.f32 %v2213, %v2301
        %2303 = vdwg.mxu0
        %2304 = vst [vmem:[%s476] sm:$0xff] %v2047
        %2305 = vst [vmem:[%s476 + $0x8] sm:$0xff] %v2225
        %2306 = vst [vmem:[%s476 + $0x10] sm:$0xff] %v2049
        %2307 = vst [vmem:[%s476 + $0x18] sm:$0xff] %v2227
        %2308 = vst [vmem:[%s476 + $0x20] sm:$0xff] %v2052
        %2309 = vst [vmem:[%s476 + $0x28] sm:$0xff] %v2230
        %2310 = vst [vmem:[%s476 + $0x30] sm:$0xff] %v2054
        %2311 = vst [vmem:[%s476 + $0x38] sm:$0xff] %v2232
        %2312 = vst [vmem:[%s476 + $0x40] sm:$0xff] %v2057
        %2313 = vst [vmem:[%s476 + $0x48] sm:$0xff] %v2235
        %2314 = vst [vmem:[%s476 + $0x50] sm:$0xff] %v2059
        %2315 = vst [vmem:[%s476 + $0x58] sm:$0xff] %v2237
        %2316 = vst [vmem:[%s476 + $0x60] sm:$0xff] %v2062
        %2317 = vst [vmem:[%s476 + $0x68] sm:$0xff] %v2240
        %2318 = vst [vmem:[%s476 + $0x70] sm:$0xff] %v2064
        %2319 = vst [vmem:[%s476 + $0x78] sm:$0xff] %v2242
        %2320 = vst [vmem:[%s476 + $0x80] sm:$0xff] %v2067
        %2321 = vst [vmem:[%s476 + $0x88] sm:$0xff] %v2245
        %2322 = vst [vmem:[%s476 + $0x90] sm:$0xff] %v2069
        %2323 = vst [vmem:[%s476 + $0x98] sm:$0xff] %v2247
        %2324 = vst [vmem:[%s476 + $0xa0] sm:$0xff] %v2072
        %2325 = vst [vmem:[%s476 + $0xa8] sm:$0xff] %v2250
        %2326 = vst [vmem:[%s476 + $0xb0] sm:$0xff] %v2074
        %2327 = vst [vmem:[%s476 + $0xb8] sm:$0xff] %v2252
        %2328 = vst [vmem:[%s476 + $0xc0] sm:$0xff] %v2077
        %2329 = vst [vmem:[%s476 + $0xc8] sm:$0xff] %v2255
        %2330 = vst [vmem:[%s476 + $0xd0] sm:$0xff] %v2079
        %2331 = vst [vmem:[%s476 + $0xd8] sm:$0xff] %v2257
        %2332 = vst [vmem:[%s476 + $0xe0] sm:$0xff] %v2082
        %2333 = vst [vmem:[%s476 + $0xe8] sm:$0xff] %v2260
        %2334 = vst [vmem:[%s476 + $0xf0] sm:$0xff] %v2084
        %2335 = vst [vmem:[%s476 + $0xf8] sm:$0xff] %v2262
        %2336 = vst [vmem:[%s476 + $0x100] sm:$0xff] %v2087
        %2337 = vst [vmem:[%s476 + $0x108] sm:$0xff] %v2265
        %2338 = vst [vmem:[%s476 + $0x110] sm:$0xff] %v2089
        %2339 = vst [vmem:[%s476 + $0x118] sm:$0xff] %v2267
        %2340 = vst [vmem:[%s476 + $0x120] sm:$0xff] %v2092
        %2341 = vst [vmem:[%s476 + $0x128] sm:$0xff] %v2270
        %2342 = vst [vmem:[%s476 + $0x130] sm:$0xff] %v2094
        %2343 = vst [vmem:[%s476 + $0x138] sm:$0xff] %v2272
        %2344 = vst [vmem:[%s476 + $0x140] sm:$0xff] %v2097
        %2345 = vst [vmem:[%s476 + $0x148] sm:$0xff] %v2275
        %2346 = vst [vmem:[%s476 + $0x150] sm:$0xff] %v2099
        %2347 = vst [vmem:[%s476 + $0x158] sm:$0xff] %v2277
        %2348 = vst [vmem:[%s476 + $0x160] sm:$0xff] %v2102
        %2349 = vst [vmem:[%s476 + $0x168] sm:$0xff] %v2280
        %2350 = vst [vmem:[%s476 + $0x170] sm:$0xff] %v2104
        %2351 = vst [vmem:[%s476 + $0x178] sm:$0xff] %v2282
        %2352 = vst [vmem:[%s476 + $0x180] sm:$0xff] %v2107
        %2353 = vst [vmem:[%s476 + $0x188] sm:$0xff] %v2285
        %2354 = vst [vmem:[%s476 + $0x190] sm:$0xff] %v2109
        %2355 = vst [vmem:[%s476 + $0x198] sm:$0xff] %v2287
        %2356 = vst [vmem:[%s476 + $0x1a0] sm:$0xff] %v2112
        %2357 = vst [vmem:[%s476 + $0x1a8] sm:$0xff] %v2290
        %2358 = vst [vmem:[%s476 + $0x1b0] sm:$0xff] %v2114
        %2359 = vst [vmem:[%s476 + $0x1b8] sm:$0xff] %v2292
        %2360 = vst [vmem:[%s476 + $0x1c0] sm:$0xff] %v2117
        %2361 = vst [vmem:[%s476 + $0x1c8] sm:$0xff] %v2295
        %2362 = vst [vmem:[%s476 + $0x1d0] sm:$0xff] %v2119
        %2363 = vst [vmem:[%s476 + $0x1d8] sm:$0xff] %v2297
        %2364 = vst [vmem:[%s476 + $0x1e0] sm:$0xff] %v2122
        %2365 = vst [vmem:[%s476 + $0x1e8] sm:$0xff] %v2300
        %2366 = vst [vmem:[%s476 + $0x1f0] sm:$0xff] %v2124
        %2367 = vst [vmem:[%s476 + $0x1f8] sm:$0xff] %v2302
        %v2368 = vld [vmem:[#allocation7] sm:$0xff]
        %v2369 = vld [vmem:[#allocation7 + $0x8] sm:$0xff]
        %v2370 = vld [vmem:[#allocation7 + $0x10] sm:$0xff]
        %v2371 = vld [vmem:[#allocation7 + $0x18] sm:$0xff]
        %v2372 = vld [vmem:[#allocation7 + $0x20] sm:$0xff]
        %v2373 = vld [vmem:[#allocation7 + $0x28] sm:$0xff]
        %v2374 = vld [vmem:[#allocation7 + $0x30] sm:$0xff]
        %v2375 = vld [vmem:[#allocation7 + $0x38] sm:$0xff]
        %v2376 = vld [vmem:[#allocation7 + $0x40] sm:$0xff]
        %v2377 = vld [vmem:[#allocation7 + $0x48] sm:$0xff]
        %v2378 = vld [vmem:[#allocation7 + $0x50] sm:$0xff]
        %v2379 = vld [vmem:[#allocation7 + $0x58] sm:$0xff]
        %v2380 = vld [vmem:[#allocation7 + $0x60] sm:$0xff]
        %v2381 = vld [vmem:[#allocation7 + $0x68] sm:$0xff]
        %v2382 = vld [vmem:[#allocation7 + $0x70] sm:$0xff]
        %v2383 = vld [vmem:[#allocation7 + $0x78] sm:$0xff]
        %v2384 = vld [vmem:[#allocation7 + $0x80] sm:$0xff]
        %v2385 = vld [vmem:[#allocation7 + $0x88] sm:$0xff]
        %v2386 = vld [vmem:[#allocation7 + $0x90] sm:$0xff]
        %v2387 = vld [vmem:[#allocation7 + $0x98] sm:$0xff]
        %v2388 = vld [vmem:[#allocation7 + $0xa0] sm:$0xff]
        %v2389 = vld [vmem:[#allocation7 + $0xa8] sm:$0xff]
        %v2390 = vld [vmem:[#allocation7 + $0xb0] sm:$0xff]
        %v2391 = vld [vmem:[#allocation7 + $0xb8] sm:$0xff]
        %v2392 = vld [vmem:[#allocation7 + $0xc0] sm:$0xff]
        %v2393 = vld [vmem:[#allocation7 + $0xc8] sm:$0xff]
        %v2394 = vld [vmem:[#allocation7 + $0xd0] sm:$0xff]
        %v2395 = vld [vmem:[#allocation7 + $0xd8] sm:$0xff]
        %v2396 = vld [vmem:[#allocation7 + $0xe0] sm:$0xff]
        %v2397 = vld [vmem:[#allocation7 + $0xe8] sm:$0xff]
        %v2398 = vld [vmem:[#allocation7 + $0xf0] sm:$0xff]
        %v2399 = vld [vmem:[#allocation7 + $0xf8] sm:$0xff]
        %v2400 = vld [vmem:[%s7] sm:$0x3]
        %v2402 = vperm.slane %v2400, 0
        %v2403 = vperm.slane %v2400, 1
        %v2438 = vunpack.c.l.b16 %v2368
        %v2439 = vunpack.c.h.b16 %v2368
        %v2440 = vunpack.c.l.b16 %v2369
        %v2441 = vunpack.c.h.b16 %v2369
        %v2442 = vunpack.c.l.b16 %v2370
        %v2443 = vunpack.c.h.b16 %v2370
        %v2444 = vunpack.c.l.b16 %v2371
        %v2445 = vunpack.c.h.b16 %v2371
        %v2446 = vunpack.c.l.b16 %v2372
        %v2447 = vunpack.c.h.b16 %v2372
        %v2448 = vunpack.c.l.b16 %v2373
        %v2449 = vunpack.c.h.b16 %v2373
        %v2450 = vunpack.c.l.b16 %v2374
        %v2451 = vunpack.c.h.b16 %v2374
        %v2452 = vunpack.c.l.b16 %v2375
        %v2453 = vunpack.c.h.b16 %v2375
        %v2454 = vunpack.c.l.b16 %v2376
        %v2455 = vunpack.c.h.b16 %v2376
        %v2456 = vunpack.c.l.b16 %v2377
        %v2457 = vunpack.c.h.b16 %v2377
        %v2458 = vunpack.c.l.b16 %v2378
        %v2459 = vunpack.c.h.b16 %v2378
        %v2460 = vunpack.c.l.b16 %v2379
        %v2461 = vunpack.c.h.b16 %v2379
        %v2462 = vunpack.c.l.b16 %v2380
        %v2463 = vunpack.c.h.b16 %v2380
        %v2464 = vunpack.c.l.b16 %v2381
        %v2465 = vunpack.c.h.b16 %v2381
        %v2466 = vunpack.c.l.b16 %v2382
        %v2467 = vunpack.c.h.b16 %v2382
        %v2468 = vunpack.c.l.b16 %v2383
        %v2469 = vunpack.c.h.b16 %v2383
        %v2470 = vunpack.c.l.b16 %v2384
        %v2471 = vunpack.c.h.b16 %v2384
        %v2472 = vunpack.c.l.b16 %v2385
        %v2473 = vunpack.c.h.b16 %v2385
        %v2474 = vunpack.c.l.b16 %v2386
        %v2475 = vunpack.c.h.b16 %v2386
        %v2476 = vunpack.c.l.b16 %v2387
        %v2477 = vunpack.c.h.b16 %v2387
        %v2478 = vunpack.c.l.b16 %v2388
        %v2479 = vunpack.c.h.b16 %v2388
        %v2480 = vunpack.c.l.b16 %v2389
        %v2481 = vunpack.c.h.b16 %v2389
        %v2482 = vunpack.c.l.b16 %v2390
        %v2483 = vunpack.c.h.b16 %v2390
        %v2484 = vunpack.c.l.b16 %v2391
        %v2485 = vunpack.c.h.b16 %v2391
        %v2486 = vunpack.c.l.b16 %v2392
        %v2487 = vunpack.c.h.b16 %v2392
        %v2488 = vunpack.c.l.b16 %v2393
        %v2489 = vunpack.c.h.b16 %v2393
        %v2490 = vunpack.c.l.b16 %v2394
        %v2491 = vunpack.c.h.b16 %v2394
        %v2492 = vunpack.c.l.b16 %v2395
        %v2493 = vunpack.c.h.b16 %v2395
        %v2494 = vunpack.c.l.b16 %v2396
        %v2495 = vunpack.c.h.b16 %v2396
        %v2496 = vunpack.c.l.b16 %v2397
        %v2497 = vunpack.c.h.b16 %v2397
        %v2498 = vunpack.c.l.b16 %v2398
        %v2499 = vunpack.c.h.b16 %v2398
        %v2500 = vunpack.c.l.b16 %v2399
        %v2501 = vunpack.c.h.b16 %v2399
        %v2502 = vpack.c.b16 %v2440, %v2438
        %v2503 = vpack.c.b16 %v2441, %v2439
        %v2504 = vpack.c.b16 %v2444, %v2442
        %v2505 = vpack.c.b16 %v2445, %v2443
        %v2506 = vpack.c.b16 %v2448, %v2446
        %v2507 = vpack.c.b16 %v2449, %v2447
        %v2508 = vpack.c.b16 %v2452, %v2450
        %v2509 = vpack.c.b16 %v2453, %v2451
        %v2510 = vpack.c.b16 %v2456, %v2454
        %v2511 = vpack.c.b16 %v2457, %v2455
        %v2512 = vpack.c.b16 %v2460, %v2458
        %v2513 = vpack.c.b16 %v2461, %v2459
        %v2514 = vpack.c.b16 %v2464, %v2462
        %v2515 = vpack.c.b16 %v2465, %v2463
        %v2516 = vpack.c.b16 %v2468, %v2466
        %v2517 = vpack.c.b16 %v2469, %v2467
        %v2518 = vpack.c.b16 %v2472, %v2470
        %v2519 = vpack.c.b16 %v2473, %v2471
        %v2520 = vpack.c.b16 %v2476, %v2474
        %v2521 = vpack.c.b16 %v2477, %v2475
        %v2522 = vpack.c.b16 %v2480, %v2478
        %v2523 = vpack.c.b16 %v2481, %v2479
        %v2524 = vpack.c.b16 %v2484, %v2482
        %v2525 = vpack.c.b16 %v2485, %v2483
        %v2526 = vpack.c.b16 %v2488, %v2486
        %v2527 = vpack.c.b16 %v2489, %v2487
        %v2528 = vpack.c.b16 %v2492, %v2490
        %v2529 = vpack.c.b16 %v2493, %v2491
        %v2530 = vpack.c.b16 %v2496, %v2494
        %v2531 = vpack.c.b16 %v2497, %v2495
        %v2532 = vpack.c.b16 %v2500, %v2498
        %v2533 = vpack.c.b16 %v2501, %v2499
        %2566 = vmatpush.bf16.msra.mxu0 %v2516
        %2567 = vmatpush.bf16.msra.mxu0 %v2514
        %2568 = vmatpush.bf16.msra.mxu0 %v2512
        %2569 = vmatpush.bf16.msra.mxu0 %v2510
        %2570 = vmatpush.bf16.msra.mxu0 %v2508
        %2571 = vmatpush.bf16.msra.mxu0 %v2506
        %2572 = vmatpush.bf16.msra.mxu0 %v2504
        %2573 = vmatpush.bf16.msra.mxu0 %v2502
        %2574 = vmatmul.bf16.gmra.mxu0 %v1718
        %v2575 = vpop.f32.mrf.mxu0
        %v2576 = vadd.f32 %v2402, %v2575
        %v2577 = vpop.f32.mrf.mxu0
        %v2578 = vadd.f32 %v2402, %v2577
        %2579 = vmatmul.bf16.gmra.mxu0 %v1720
        %v2580 = vpop.f32.mrf.mxu0
        %v2581 = vadd.f32 %v2402, %v2580
        %v2582 = vpop.f32.mrf.mxu0
        %v2583 = vadd.f32 %v2402, %v2582
        %2584 = vmatmul.bf16.gmra.mxu0 %v1722
        %v2585 = vpop.f32.mrf.mxu0
        %v2586 = vadd.f32 %v2402, %v2585
        %v2587 = vpop.f32.mrf.mxu0
        %v2588 = vadd.f32 %v2402, %v2587
        %2589 = vmatmul.bf16.gmra.mxu0 %v1724
        %v2590 = vpop.f32.mrf.mxu0
        %v2591 = vadd.f32 %v2402, %v2590
        %v2592 = vpop.f32.mrf.mxu0
        %v2593 = vadd.f32 %v2402, %v2592
        %2594 = vmatmul.bf16.gmra.mxu0 %v1726
        %v2595 = vpop.f32.mrf.mxu0
        %v2596 = vadd.f32 %v2402, %v2595
        %v2597 = vpop.f32.mrf.mxu0
        %v2598 = vadd.f32 %v2402, %v2597
        %2599 = vmatmul.bf16.gmra.mxu0 %v1728
        %v2600 = vpop.f32.mrf.mxu0
        %v2601 = vadd.f32 %v2402, %v2600
        %v2602 = vpop.f32.mrf.mxu0
        %v2603 = vadd.f32 %v2402, %v2602
        %2604 = vmatmul.bf16.gmra.mxu0 %v1730
        %v2605 = vpop.f32.mrf.mxu0
        %v2606 = vadd.f32 %v2402, %v2605
        %v2607 = vpop.f32.mrf.mxu0
        %v2608 = vadd.f32 %v2402, %v2607
        %2609 = vmatmul.bf16.gmra.mxu0 %v1732
        %v2610 = vpop.f32.mrf.mxu0
        %v2611 = vadd.f32 %v2402, %v2610
        %v2612 = vpop.f32.mrf.mxu0
        %v2613 = vadd.f32 %v2402, %v2612
        %2614 = vmatmul.bf16.gmra.mxu0 %v1734
        %v2615 = vpop.f32.mrf.mxu0
        %v2616 = vadd.f32 %v2402, %v2615
        %v2617 = vpop.f32.mrf.mxu0
        %v2618 = vadd.f32 %v2402, %v2617
        %2619 = vmatmul.bf16.gmra.mxu0 %v1736
        %v2620 = vpop.f32.mrf.mxu0
        %v2621 = vadd.f32 %v2402, %v2620
        %v2622 = vpop.f32.mrf.mxu0
        %v2623 = vadd.f32 %v2402, %v2622
        %2624 = vmatmul.bf16.gmra.mxu0 %v1738
        %v2625 = vpop.f32.mrf.mxu0
        %v2626 = vadd.f32 %v2402, %v2625
        %v2627 = vpop.f32.mrf.mxu0
        %v2628 = vadd.f32 %v2402, %v2627
        %2629 = vmatmul.bf16.gmra.mxu0 %v1740
        %v2630 = vpop.f32.mrf.mxu0
        %v2631 = vadd.f32 %v2402, %v2630
        %v2632 = vpop.f32.mrf.mxu0
        %v2633 = vadd.f32 %v2402, %v2632
        %2634 = vmatmul.bf16.gmra.mxu0 %v1742
        %v2635 = vpop.f32.mrf.mxu0
        %v2636 = vadd.f32 %v2402, %v2635
        %v2637 = vpop.f32.mrf.mxu0
        %v2638 = vadd.f32 %v2402, %v2637
        %2639 = vmatmul.bf16.gmra.mxu0 %v1744
        %v2640 = vpop.f32.mrf.mxu0
        %v2641 = vadd.f32 %v2402, %v2640
        %v2642 = vpop.f32.mrf.mxu0
        %v2643 = vadd.f32 %v2402, %v2642
        %2644 = vmatmul.bf16.gmra.mxu0 %v1746
        %v2645 = vpop.f32.mrf.mxu0
        %v2646 = vadd.f32 %v2402, %v2645
        %v2647 = vpop.f32.mrf.mxu0
        %v2648 = vadd.f32 %v2402, %v2647
        %2649 = vmatmul.bf16.gmra.mxu0 %v1748
        %v2650 = vpop.f32.mrf.mxu0
        %v2651 = vadd.f32 %v2402, %v2650
        %v2652 = vpop.f32.mrf.mxu0
        %v2653 = vadd.f32 %v2402, %v2652
        %2654 = vdwg.mxu0
        %2655 = vmatpush.bf16.msra.mxu0 %v2532
        %2656 = vmatpush.bf16.msra.mxu0 %v2530
        %2657 = vmatpush.bf16.msra.mxu0 %v2528
        %2658 = vmatpush.bf16.msra.mxu0 %v2526
        %2659 = vmatpush.bf16.msra.mxu0 %v2524
        %2660 = vmatpush.bf16.msra.mxu0 %v2522
        %2661 = vmatpush.bf16.msra.mxu0 %v2520
        %2662 = vmatpush.bf16.msra.mxu0 %v2518
        %2663 = vmatmul.bf16.gmra.mxu0 %v1719
        %v2664 = vpop.f32.mrf.mxu0
        %v2665 = vadd.f32 %v2576, %v2664
        %v2666 = vpop.f32.mrf.mxu0
        %v2667 = vadd.f32 %v2578, %v2666
        %2668 = vmatmul.bf16.gmra.mxu0 %v1721
        %v2669 = vpop.f32.mrf.mxu0
        %v2670 = vadd.f32 %v2581, %v2669
        %v2671 = vpop.f32.mrf.mxu0
        %v2672 = vadd.f32 %v2583, %v2671
        %2673 = vmatmul.bf16.gmra.mxu0 %v1723
        %v2674 = vpop.f32.mrf.mxu0
        %v2675 = vadd.f32 %v2586, %v2674
        %v2676 = vpop.f32.mrf.mxu0
        %v2677 = vadd.f32 %v2588, %v2676
        %2678 = vmatmul.bf16.gmra.mxu0 %v1725
        %v2679 = vpop.f32.mrf.mxu0
        %v2680 = vadd.f32 %v2591, %v2679
        %v2681 = vpop.f32.mrf.mxu0
        %v2682 = vadd.f32 %v2593, %v2681
        %2683 = vmatmul.bf16.gmra.mxu0 %v1727
        %v2684 = vpop.f32.mrf.mxu0
        %v2685 = vadd.f32 %v2596, %v2684
        %v2686 = vpop.f32.mrf.mxu0
        %v2687 = vadd.f32 %v2598, %v2686
        %2688 = vmatmul.bf16.gmra.mxu0 %v1729
        %v2689 = vpop.f32.mrf.mxu0
        %v2690 = vadd.f32 %v2601, %v2689
        %v2691 = vpop.f32.mrf.mxu0
        %v2692 = vadd.f32 %v2603, %v2691
        %2693 = vmatmul.bf16.gmra.mxu0 %v1731
        %v2694 = vpop.f32.mrf.mxu0
        %v2695 = vadd.f32 %v2606, %v2694
        %v2696 = vpop.f32.mrf.mxu0
        %v2697 = vadd.f32 %v2608, %v2696
        %2698 = vmatmul.bf16.gmra.mxu0 %v1733
        %v2699 = vpop.f32.mrf.mxu0
        %v2700 = vadd.f32 %v2611, %v2699
        %v2701 = vpop.f32.mrf.mxu0
        %v2702 = vadd.f32 %v2613, %v2701
        %2703 = vmatmul.bf16.gmra.mxu0 %v1735
        %v2704 = vpop.f32.mrf.mxu0
        %v2705 = vadd.f32 %v2616, %v2704
        %v2706 = vpop.f32.mrf.mxu0
        %v2707 = vadd.f32 %v2618, %v2706
        %2708 = vmatmul.bf16.gmra.mxu0 %v1737
        %v2709 = vpop.f32.mrf.mxu0
        %v2710 = vadd.f32 %v2621, %v2709
        %v2711 = vpop.f32.mrf.mxu0
        %v2712 = vadd.f32 %v2623, %v2711
        %2713 = vmatmul.bf16.gmra.mxu0 %v1739
        %v2714 = vpop.f32.mrf.mxu0
        %v2715 = vadd.f32 %v2626, %v2714
        %v2716 = vpop.f32.mrf.mxu0
        %v2717 = vadd.f32 %v2628, %v2716
        %2718 = vmatmul.bf16.gmra.mxu0 %v1741
        %v2719 = vpop.f32.mrf.mxu0
        %v2720 = vadd.f32 %v2631, %v2719
        %v2721 = vpop.f32.mrf.mxu0
        %v2722 = vadd.f32 %v2633, %v2721
        %2723 = vmatmul.bf16.gmra.mxu0 %v1743
        %v2724 = vpop.f32.mrf.mxu0
        %v2725 = vadd.f32 %v2636, %v2724
        %v2726 = vpop.f32.mrf.mxu0
        %v2727 = vadd.f32 %v2638, %v2726
        %2728 = vmatmul.bf16.gmra.mxu0 %v1745
        %v2729 = vpop.f32.mrf.mxu0
        %v2730 = vadd.f32 %v2641, %v2729
        %v2731 = vpop.f32.mrf.mxu0
        %v2732 = vadd.f32 %v2643, %v2731
        %2733 = vmatmul.bf16.gmra.mxu0 %v1747
        %v2734 = vpop.f32.mrf.mxu0
        %v2735 = vadd.f32 %v2646, %v2734
        %v2736 = vpop.f32.mrf.mxu0
        %v2737 = vadd.f32 %v2648, %v2736
        %2738 = vmatmul.bf16.gmra.mxu0 %v1749
        %v2739 = vpop.f32.mrf.mxu0
        %v2740 = vadd.f32 %v2651, %v2739
        %v2741 = vpop.f32.mrf.mxu0
        %v2742 = vadd.f32 %v2653, %v2741
        %2743 = vdwg.mxu0
        %2744 = vmatpush.bf16.msra.mxu0 %v2517
        %2745 = vmatpush.bf16.msra.mxu0 %v2515
        %2746 = vmatpush.bf16.msra.mxu0 %v2513
        %2747 = vmatpush.bf16.msra.mxu0 %v2511
        %2748 = vmatpush.bf16.msra.mxu0 %v2509
        %2749 = vmatpush.bf16.msra.mxu0 %v2507
        %2750 = vmatpush.bf16.msra.mxu0 %v2505
        %2751 = vmatpush.bf16.msra.mxu0 %v2503
        %2752 = vmatmul.bf16.gmra.mxu0 %v1718
        %v2753 = vpop.f32.mrf.mxu0
        %v2754 = vadd.f32 %v2403, %v2753
        %v2755 = vpop.f32.mrf.mxu0
        %v2756 = vadd.f32 %v2403, %v2755
        %2757 = vmatmul.bf16.gmra.mxu0 %v1720
        %v2758 = vpop.f32.mrf.mxu0
        %v2759 = vadd.f32 %v2403, %v2758
        %v2760 = vpop.f32.mrf.mxu0
        %v2761 = vadd.f32 %v2403, %v2760
        %2762 = vmatmul.bf16.gmra.mxu0 %v1722
        %v2763 = vpop.f32.mrf.mxu0
        %v2764 = vadd.f32 %v2403, %v2763
        %v2765 = vpop.f32.mrf.mxu0
        %v2766 = vadd.f32 %v2403, %v2765
        %2767 = vmatmul.bf16.gmra.mxu0 %v1724
        %v2768 = vpop.f32.mrf.mxu0
        %v2769 = vadd.f32 %v2403, %v2768
        %v2770 = vpop.f32.mrf.mxu0
        %v2771 = vadd.f32 %v2403, %v2770
        %2772 = vmatmul.bf16.gmra.mxu0 %v1726
        %v2773 = vpop.f32.mrf.mxu0
        %v2774 = vadd.f32 %v2403, %v2773
        %v2775 = vpop.f32.mrf.mxu0
        %v2776 = vadd.f32 %v2403, %v2775
        %2777 = vmatmul.bf16.gmra.mxu0 %v1728
        %v2778 = vpop.f32.mrf.mxu0
        %v2779 = vadd.f32 %v2403, %v2778
        %v2780 = vpop.f32.mrf.mxu0
        %v2781 = vadd.f32 %v2403, %v2780
        %2782 = vmatmul.bf16.gmra.mxu0 %v1730
        %v2783 = vpop.f32.mrf.mxu0
        %v2784 = vadd.f32 %v2403, %v2783
        %v2785 = vpop.f32.mrf.mxu0
        %v2786 = vadd.f32 %v2403, %v2785
        %2787 = vmatmul.bf16.gmra.mxu0 %v1732
        %v2788 = vpop.f32.mrf.mxu0
        %v2789 = vadd.f32 %v2403, %v2788
        %v2790 = vpop.f32.mrf.mxu0
        %v2791 = vadd.f32 %v2403, %v2790
        %2792 = vmatmul.bf16.gmra.mxu0 %v1734
        %v2793 = vpop.f32.mrf.mxu0
        %v2794 = vadd.f32 %v2403, %v2793
        %v2795 = vpop.f32.mrf.mxu0
        %v2796 = vadd.f32 %v2403, %v2795
        %2797 = vmatmul.bf16.gmra.mxu0 %v1736
        %v2798 = vpop.f32.mrf.mxu0
        %v2799 = vadd.f32 %v2403, %v2798
        %v2800 = vpop.f32.mrf.mxu0
        %v2801 = vadd.f32 %v2403, %v2800
        %2802 = vmatmul.bf16.gmra.mxu0 %v1738
        %v2803 = vpop.f32.mrf.mxu0
        %v2804 = vadd.f32 %v2403, %v2803
        %v2805 = vpop.f32.mrf.mxu0
        %v2806 = vadd.f32 %v2403, %v2805
        %2807 = vmatmul.bf16.gmra.mxu0 %v1740
        %v2808 = vpop.f32.mrf.mxu0
        %v2809 = vadd.f32 %v2403, %v2808
        %v2810 = vpop.f32.mrf.mxu0
        %v2811 = vadd.f32 %v2403, %v2810
        %2812 = vmatmul.bf16.gmra.mxu0 %v1742
        %v2813 = vpop.f32.mrf.mxu0
        %v2814 = vadd.f32 %v2403, %v2813
        %v2815 = vpop.f32.mrf.mxu0
        %v2816 = vadd.f32 %v2403, %v2815
        %2817 = vmatmul.bf16.gmra.mxu0 %v1744
        %v2818 = vpop.f32.mrf.mxu0
        %v2819 = vadd.f32 %v2403, %v2818
        %v2820 = vpop.f32.mrf.mxu0
        %v2821 = vadd.f32 %v2403, %v2820
        %2822 = vmatmul.bf16.gmra.mxu0 %v1746
        %v2823 = vpop.f32.mrf.mxu0
        %v2824 = vadd.f32 %v2403, %v2823
        %v2825 = vpop.f32.mrf.mxu0
        %v2826 = vadd.f32 %v2403, %v2825
        %2827 = vmatmul.bf16.gmra.mxu0 %v1748
        %v2828 = vpop.f32.mrf.mxu0
        %v2829 = vadd.f32 %v2403, %v2828
        %v2830 = vpop.f32.mrf.mxu0
        %v2831 = vadd.f32 %v2403, %v2830
        %2832 = vdwg.mxu0
        %2833 = vmatpush.bf16.msra.mxu0 %v2533
        %2834 = vmatpush.bf16.msra.mxu0 %v2531
        %2835 = vmatpush.bf16.msra.mxu0 %v2529
        %2836 = vmatpush.bf16.msra.mxu0 %v2527
        %2837 = vmatpush.bf16.msra.mxu0 %v2525
        %2838 = vmatpush.bf16.msra.mxu0 %v2523
        %2839 = vmatpush.bf16.msra.mxu0 %v2521
        %2840 = vmatpush.bf16.msra.mxu0 %v2519
        %2841 = vmatmul.bf16.gmra.mxu0 %v1719
        %v2842 = vpop.f32.mrf.mxu0
        %v2843 = vadd.f32 %v2754, %v2842
        %v2844 = vpop.f32.mrf.mxu0
        %v2845 = vadd.f32 %v2756, %v2844
        %2846 = vmatmul.bf16.gmra.mxu0 %v1721
        %v2847 = vpop.f32.mrf.mxu0
        %v2848 = vadd.f32 %v2759, %v2847
        %v2849 = vpop.f32.mrf.mxu0
        %v2850 = vadd.f32 %v2761, %v2849
        %2851 = vmatmul.bf16.gmra.mxu0 %v1723
        %v2852 = vpop.f32.mrf.mxu0
        %v2853 = vadd.f32 %v2764, %v2852
        %v2854 = vpop.f32.mrf.mxu0
        %v2855 = vadd.f32 %v2766, %v2854
        %2856 = vmatmul.bf16.gmra.mxu0 %v1725
        %v2857 = vpop.f32.mrf.mxu0
        %v2858 = vadd.f32 %v2769, %v2857
        %v2859 = vpop.f32.mrf.mxu0
        %v2860 = vadd.f32 %v2771, %v2859
        %2861 = vmatmul.bf16.gmra.mxu0 %v1727
        %v2862 = vpop.f32.mrf.mxu0
        %v2863 = vadd.f32 %v2774, %v2862
        %v2864 = vpop.f32.mrf.mxu0
        %v2865 = vadd.f32 %v2776, %v2864
        %2866 = vmatmul.bf16.gmra.mxu0 %v1729
        %v2867 = vpop.f32.mrf.mxu0
        %v2868 = vadd.f32 %v2779, %v2867
        %v2869 = vpop.f32.mrf.mxu0
        %v2870 = vadd.f32 %v2781, %v2869
        %2871 = vmatmul.bf16.gmra.mxu0 %v1731
        %v2872 = vpop.f32.mrf.mxu0
        %v2873 = vadd.f32 %v2784, %v2872
        %v2874 = vpop.f32.mrf.mxu0
        %v2875 = vadd.f32 %v2786, %v2874
        %2876 = vmatmul.bf16.gmra.mxu0 %v1733
        %v2877 = vpop.f32.mrf.mxu0
        %v2878 = vadd.f32 %v2789, %v2877
        %v2879 = vpop.f32.mrf.mxu0
        %v2880 = vadd.f32 %v2791, %v2879
        %2881 = vmatmul.bf16.gmra.mxu0 %v1735
        %v2882 = vpop.f32.mrf.mxu0
        %v2883 = vadd.f32 %v2794, %v2882
        %v2884 = vpop.f32.mrf.mxu0
        %v2885 = vadd.f32 %v2796, %v2884
        %2886 = vmatmul.bf16.gmra.mxu0 %v1737
        %v2887 = vpop.f32.mrf.mxu0
        %v2888 = vadd.f32 %v2799, %v2887
        %v2889 = vpop.f32.mrf.mxu0
        %v2890 = vadd.f32 %v2801, %v2889
        %2891 = vmatmul.bf16.gmra.mxu0 %v1739
        %v2892 = vpop.f32.mrf.mxu0
        %v2893 = vadd.f32 %v2804, %v2892
        %v2894 = vpop.f32.mrf.mxu0
        %v2895 = vadd.f32 %v2806, %v2894
        %2896 = vmatmul.bf16.gmra.mxu0 %v1741
        %v2897 = vpop.f32.mrf.mxu0
        %v2898 = vadd.f32 %v2809, %v2897
        %v2899 = vpop.f32.mrf.mxu0
        %v2900 = vadd.f32 %v2811, %v2899
        %2901 = vmatmul.bf16.gmra.mxu0 %v1743
        %v2902 = vpop.f32.mrf.mxu0
        %v2903 = vadd.f32 %v2814, %v2902
        %v2904 = vpop.f32.mrf.mxu0
        %v2905 = vadd.f32 %v2816, %v2904
        %2906 = vmatmul.bf16.gmra.mxu0 %v1745
        %v2907 = vpop.f32.mrf.mxu0
        %v2908 = vadd.f32 %v2819, %v2907
        %v2909 = vpop.f32.mrf.mxu0
        %v2910 = vadd.f32 %v2821, %v2909
        %2911 = vmatmul.bf16.gmra.mxu0 %v1747
        %v2912 = vpop.f32.mrf.mxu0
        %v2913 = vadd.f32 %v2824, %v2912
        %v2914 = vpop.f32.mrf.mxu0
        %v2915 = vadd.f32 %v2826, %v2914
        %2916 = vmatmul.bf16.gmra.mxu0 %v1749
        %v2917 = vpop.f32.mrf.mxu0
        %v2918 = vadd.f32 %v2829, %v2917
        %v2919 = vpop.f32.mrf.mxu0
        %v2920 = vadd.f32 %v2831, %v2919
        %2921 = vdwg.mxu0
        %v2922 = vpack.c.bf16 %v2667, %v2665
        %v2923 = vpack.c.bf16 %v2845, %v2843
        %v2924 = vpack.c.bf16 %v2672, %v2670
        %v2925 = vpack.c.bf16 %v2850, %v2848
        %v2926 = vpack.c.bf16 %v2677, %v2675
        %v2927 = vpack.c.bf16 %v2855, %v2853
        %v2928 = vpack.c.bf16 %v2682, %v2680
        %v2929 = vpack.c.bf16 %v2860, %v2858
        %v2930 = vpack.c.bf16 %v2687, %v2685
        %v2931 = vpack.c.bf16 %v2865, %v2863
        %v2932 = vpack.c.bf16 %v2692, %v2690
        %v2933 = vpack.c.bf16 %v2870, %v2868
        %v2934 = vpack.c.bf16 %v2697, %v2695
        %v2935 = vpack.c.bf16 %v2875, %v2873
        %v2936 = vpack.c.bf16 %v2702, %v2700
        %v2937 = vpack.c.bf16 %v2880, %v2878
        %v2938 = vpack.c.bf16 %v2707, %v2705
        %v2939 = vpack.c.bf16 %v2885, %v2883
        %v2940 = vpack.c.bf16 %v2712, %v2710
        %v2941 = vpack.c.bf16 %v2890, %v2888
        %v2942 = vpack.c.bf16 %v2717, %v2715
        %v2943 = vpack.c.bf16 %v2895, %v2893
        %v2944 = vpack.c.bf16 %v2722, %v2720
        %v2945 = vpack.c.bf16 %v2900, %v2898
        %v2946 = vpack.c.bf16 %v2727, %v2725
        %v2947 = vpack.c.bf16 %v2905, %v2903
        %v2948 = vpack.c.bf16 %v2732, %v2730
        %v2949 = vpack.c.bf16 %v2910, %v2908
        %v2950 = vpack.c.bf16 %v2737, %v2735
        %v2951 = vpack.c.bf16 %v2915, %v2913
        %v2952 = vpack.c.bf16 %v2742, %v2740
        %v2953 = vpack.c.bf16 %v2920, %v2918
        %v2954 = vunpack.c.l.bf16 %v2922
        %v2955 = vunpack.c.l.bf16 %v2923
        %v2956 = vunpack.c.h.bf16 %v2922
        %v2957 = vunpack.c.h.bf16 %v2923
        %v2958 = vunpack.c.l.bf16 %v2924
        %v2959 = vunpack.c.l.bf16 %v2925
        %v2960 = vunpack.c.h.bf16 %v2924
        %v2961 = vunpack.c.h.bf16 %v2925
        %v2962 = vunpack.c.l.bf16 %v2926
        %v2963 = vunpack.c.l.bf16 %v2927
        %v2964 = vunpack.c.h.bf16 %v2926
        %v2965 = vunpack.c.h.bf16 %v2927
        %v2966 = vunpack.c.l.bf16 %v2928
        %v2967 = vunpack.c.l.bf16 %v2929
        %v2968 = vunpack.c.h.bf16 %v2928
        %v2969 = vunpack.c.h.bf16 %v2929
        %v2970 = vunpack.c.l.bf16 %v2930
        %v2971 = vunpack.c.l.bf16 %v2931
        %v2972 = vunpack.c.h.bf16 %v2930
        %v2973 = vunpack.c.h.bf16 %v2931
        %v2974 = vunpack.c.l.bf16 %v2932
        %v2975 = vunpack.c.l.bf16 %v2933
        %v2976 = vunpack.c.h.bf16 %v2932
        %v2977 = vunpack.c.h.bf16 %v2933
        %v2978 = vunpack.c.l.bf16 %v2934
        %v2979 = vunpack.c.l.bf16 %v2935
        %v2980 = vunpack.c.h.bf16 %v2934
        %v2981 = vunpack.c.h.bf16 %v2935
        %v2982 = vunpack.c.l.bf16 %v2936
        %v2983 = vunpack.c.l.bf16 %v2937
        %v2984 = vunpack.c.h.bf16 %v2936
        %v2985 = vunpack.c.h.bf16 %v2937
        %v2986 = vunpack.c.l.bf16 %v2938
        %v2987 = vunpack.c.l.bf16 %v2939
        %v2988 = vunpack.c.h.bf16 %v2938
        %v2989 = vunpack.c.h.bf16 %v2939
        %v2990 = vunpack.c.l.bf16 %v2940
        %v2991 = vunpack.c.l.bf16 %v2941
        %v2992 = vunpack.c.h.bf16 %v2940
        %v2993 = vunpack.c.h.bf16 %v2941
        %v2994 = vunpack.c.l.bf16 %v2942
        %v2995 = vunpack.c.l.bf16 %v2943
        %v2996 = vunpack.c.h.bf16 %v2942
        %v2997 = vunpack.c.h.bf16 %v2943
        %v2998 = vunpack.c.l.bf16 %v2944
        %v2999 = vunpack.c.l.bf16 %v2945
        %v3000 = vunpack.c.h.bf16 %v2944
        %v3001 = vunpack.c.h.bf16 %v2945
        %v3002 = vunpack.c.l.bf16 %v2946
        %v3003 = vunpack.c.l.bf16 %v2947
        %v3004 = vunpack.c.h.bf16 %v2946
        %v3005 = vunpack.c.h.bf16 %v2947
        %v3006 = vunpack.c.l.bf16 %v2948
        %v3007 = vunpack.c.l.bf16 %v2949
        %v3008 = vunpack.c.h.bf16 %v2948
        %v3009 = vunpack.c.h.bf16 %v2949
        %v3010 = vunpack.c.l.bf16 %v2950
        %v3011 = vunpack.c.l.bf16 %v2951
        %v3012 = vunpack.c.h.bf16 %v2950
        %v3013 = vunpack.c.h.bf16 %v2951
        %v3014 = vunpack.c.l.bf16 %v2952
        %v3015 = vunpack.c.l.bf16 %v2953
        %v3016 = vunpack.c.h.bf16 %v2952
        %v3017 = vunpack.c.h.bf16 %v2953
        %v3018 = vtanh.pop %v2954
        %v3019 = vtanh.pop %v2955
        %v3020 = vtanh.pop %v2956
        %v3021 = vtanh.pop %v2957
        %v3022 = vtanh.pop %v2958
        %v3023 = vtanh.pop %v2959
        %v3024 = vtanh.pop %v2960
        %v3025 = vtanh.pop %v2961
        %v3026 = vtanh.pop %v2962
        %v3027 = vtanh.pop %v2963
        %v3028 = vtanh.pop %v2964
        %v3029 = vtanh.pop %v2965
        %v3030 = vtanh.pop %v2966
        %v3031 = vtanh.pop %v2967
        %v3032 = vtanh.pop %v2968
        %v3033 = vtanh.pop %v2969
        %v3034 = vtanh.pop %v2970
        %v3035 = vtanh.pop %v2971
        %v3036 = vtanh.pop %v2972
        %v3037 = vtanh.pop %v2973
        %v3038 = vtanh.pop %v2974
        %v3039 = vtanh.pop %v2975
        %v3040 = vtanh.pop %v2976
        %v3041 = vtanh.pop %v2977
        %v3042 = vtanh.pop %v2978
        %v3043 = vtanh.pop %v2979
        %v3044 = vtanh.pop %v2980
        %v3045 = vtanh.pop %v2981
        %v3046 = vtanh.pop %v2982
        %v3047 = vtanh.pop %v2983
        %v3048 = vtanh.pop %v2984
        %v3049 = vtanh.pop %v2985
        %v3050 = vtanh.pop %v2986
        %v3051 = vtanh.pop %v2987
        %v3052 = vtanh.pop %v2988
        %v3053 = vtanh.pop %v2989
        %v3054 = vtanh.pop %v2990
        %v3055 = vtanh.pop %v2991
        %v3056 = vtanh.pop %v2992
        %v3057 = vtanh.pop %v2993
        %v3058 = vtanh.pop %v2994
        %v3059 = vtanh.pop %v2995
        %v3060 = vtanh.pop %v2996
        %v3061 = vtanh.pop %v2997
        %v3062 = vtanh.pop %v2998
        %v3063 = vtanh.pop %v2999
        %v3064 = vtanh.pop %v3000
        %v3065 = vtanh.pop %v3001
        %v3066 = vtanh.pop %v3002
        %v3067 = vtanh.pop %v3003
        %v3068 = vtanh.pop %v3004
        %v3069 = vtanh.pop %v3005
        %v3070 = vtanh.pop %v3006
        %v3071 = vtanh.pop %v3007
        %v3072 = vtanh.pop %v3008
        %v3073 = vtanh.pop %v3009
        %v3074 = vtanh.pop %v3010
        %v3075 = vtanh.pop %v3011
        %v3076 = vtanh.pop %v3012
        %v3077 = vtanh.pop %v3013
        %v3078 = vtanh.pop %v3014
        %v3079 = vtanh.pop %v3015
        %v3080 = vtanh.pop %v3016
        %v3081 = vtanh.pop %v3017
        %v3082 = vpack.c.bf16 %v3020, %v3018
        %v3083 = vpack.c.bf16 %v3021, %v3019
        %v3084 = vpack.c.bf16 %v3024, %v3022
        %v3085 = vpack.c.bf16 %v3025, %v3023
        %v3086 = vpack.c.bf16 %v3028, %v3026
        %v3087 = vpack.c.bf16 %v3029, %v3027
        %v3088 = vpack.c.bf16 %v3032, %v3030
        %v3089 = vpack.c.bf16 %v3033, %v3031
        %v3090 = vpack.c.bf16 %v3036, %v3034
        %v3091 = vpack.c.bf16 %v3037, %v3035
        %v3092 = vpack.c.bf16 %v3040, %v3038
        %v3093 = vpack.c.bf16 %v3041, %v3039
        %v3094 = vpack.c.bf16 %v3044, %v3042
        %v3095 = vpack.c.bf16 %v3045, %v3043
        %v3096 = vpack.c.bf16 %v3048, %v3046
        %v3097 = vpack.c.bf16 %v3049, %v3047
        %v3098 = vpack.c.bf16 %v3052, %v3050
        %v3099 = vpack.c.bf16 %v3053, %v3051
        %v3100 = vpack.c.bf16 %v3056, %v3054
        %v3101 = vpack.c.bf16 %v3057, %v3055
        %v3102 = vpack.c.bf16 %v3060, %v3058
        %v3103 = vpack.c.bf16 %v3061, %v3059
        %v3104 = vpack.c.bf16 %v3064, %v3062
        %v3105 = vpack.c.bf16 %v3065, %v3063
        %v3106 = vpack.c.bf16 %v3068, %v3066
        %v3107 = vpack.c.bf16 %v3069, %v3067
        %v3108 = vpack.c.bf16 %v3072, %v3070
        %v3109 = vpack.c.bf16 %v3073, %v3071
        %v3110 = vpack.c.bf16 %v3076, %v3074
        %v3111 = vpack.c.bf16 %v3077, %v3075
        %v3112 = vpack.c.bf16 %v3080, %v3078
        %v3113 = vpack.c.bf16 %v3081, %v3079
        %v3114 = vld [vmem:[#allocation8] sm:$0xff]
        %v3115 = vld [vmem:[#allocation8 + $0x8] sm:$0xff]
        %v3116 = vld [vmem:[#allocation8 + $0x10] sm:$0xff]
        %v3117 = vld [vmem:[#allocation8 + $0x18] sm:$0xff]
        %v3118 = vld [vmem:[#allocation8 + $0x20] sm:$0xff]
        %v3119 = vld [vmem:[#allocation8 + $0x28] sm:$0xff]
        %v3120 = vld [vmem:[#allocation8 + $0x30] sm:$0xff]
        %v3121 = vld [vmem:[#allocation8 + $0x38] sm:$0xff]
        %v3122 = vld [vmem:[#allocation8 + $0x40] sm:$0xff]
        %v3123 = vld [vmem:[#allocation8 + $0x48] sm:$0xff]
        %v3124 = vld [vmem:[#allocation8 + $0x50] sm:$0xff]
        %v3125 = vld [vmem:[#allocation8 + $0x58] sm:$0xff]
        %v3126 = vld [vmem:[#allocation8 + $0x60] sm:$0xff]
        %v3127 = vld [vmem:[#allocation8 + $0x68] sm:$0xff]
        %v3128 = vld [vmem:[#allocation8 + $0x70] sm:$0xff]
        %v3129 = vld [vmem:[#allocation8 + $0x78] sm:$0xff]
        %v3130 = vld [vmem:[#allocation8 + $0x80] sm:$0xff]
        %v3131 = vld [vmem:[#allocation8 + $0x88] sm:$0xff]
        %v3132 = vld [vmem:[#allocation8 + $0x90] sm:$0xff]
        %v3133 = vld [vmem:[#allocation8 + $0x98] sm:$0xff]
        %v3134 = vld [vmem:[#allocation8 + $0xa0] sm:$0xff]
        %v3135 = vld [vmem:[#allocation8 + $0xa8] sm:$0xff]
        %v3136 = vld [vmem:[#allocation8 + $0xb0] sm:$0xff]
        %v3137 = vld [vmem:[#allocation8 + $0xb8] sm:$0xff]
        %v3138 = vld [vmem:[#allocation8 + $0xc0] sm:$0xff]
        %v3139 = vld [vmem:[#allocation8 + $0xc8] sm:$0xff]
        %v3140 = vld [vmem:[#allocation8 + $0xd0] sm:$0xff]
        %v3141 = vld [vmem:[#allocation8 + $0xd8] sm:$0xff]
        %v3142 = vld [vmem:[#allocation8 + $0xe0] sm:$0xff]
        %v3143 = vld [vmem:[#allocation8 + $0xe8] sm:$0xff]
        %v3144 = vld [vmem:[#allocation8 + $0xf0] sm:$0xff]
        %v3145 = vld [vmem:[#allocation8 + $0xf8] sm:$0xff]
        %v3146 = vld [vmem:[%s9] sm:$0x3]
        %v3148 = vperm.slane %v3146, 0
        %v3149 = vperm.slane %v3146, 1
        %v3184 = vunpack.c.l.b16 %v3114
        %v3185 = vunpack.c.h.b16 %v3114
        %v3186 = vunpack.c.l.b16 %v3115
        %v3187 = vunpack.c.h.b16 %v3115
        %v3188 = vunpack.c.l.b16 %v3116
        %v3189 = vunpack.c.h.b16 %v3116
        %v3190 = vunpack.c.l.b16 %v3117
        %v3191 = vunpack.c.h.b16 %v3117
        %v3192 = vunpack.c.l.b16 %v3118
        %v3193 = vunpack.c.h.b16 %v3118
        %v3194 = vunpack.c.l.b16 %v3119
        %v3195 = vunpack.c.h.b16 %v3119
        %v3196 = vunpack.c.l.b16 %v3120
        %v3197 = vunpack.c.h.b16 %v3120
        %v3198 = vunpack.c.l.b16 %v3121
        %v3199 = vunpack.c.h.b16 %v3121
        %v3200 = vunpack.c.l.b16 %v3122
        %v3201 = vunpack.c.h.b16 %v3122
        %v3202 = vunpack.c.l.b16 %v3123
        %v3203 = vunpack.c.h.b16 %v3123
        %v3204 = vunpack.c.l.b16 %v3124
        %v3205 = vunpack.c.h.b16 %v3124
        %v3206 = vunpack.c.l.b16 %v3125
        %v3207 = vunpack.c.h.b16 %v3125
        %v3208 = vunpack.c.l.b16 %v3126
        %v3209 = vunpack.c.h.b16 %v3126
        %v3210 = vunpack.c.l.b16 %v3127
        %v3211 = vunpack.c.h.b16 %v3127
        %v3212 = vunpack.c.l.b16 %v3128
        %v3213 = vunpack.c.h.b16 %v3128
        %v3214 = vunpack.c.l.b16 %v3129
        %v3215 = vunpack.c.h.b16 %v3129
        %v3216 = vunpack.c.l.b16 %v3130
        %v3217 = vunpack.c.h.b16 %v3130
        %v3218 = vunpack.c.l.b16 %v3131
        %v3219 = vunpack.c.h.b16 %v3131
        %v3220 = vunpack.c.l.b16 %v3132
        %v3221 = vunpack.c.h.b16 %v3132
        %v3222 = vunpack.c.l.b16 %v3133
        %v3223 = vunpack.c.h.b16 %v3133
        %v3224 = vunpack.c.l.b16 %v3134
        %v3225 = vunpack.c.h.b16 %v3134
        %v3226 = vunpack.c.l.b16 %v3135
        %v3227 = vunpack.c.h.b16 %v3135
        %v3228 = vunpack.c.l.b16 %v3136
        %v3229 = vunpack.c.h.b16 %v3136
        %v3230 = vunpack.c.l.b16 %v3137
        %v3231 = vunpack.c.h.b16 %v3137
        %v3232 = vunpack.c.l.b16 %v3138
        %v3233 = vunpack.c.h.b16 %v3138
        %v3234 = vunpack.c.l.b16 %v3139
        %v3235 = vunpack.c.h.b16 %v3139
        %v3236 = vunpack.c.l.b16 %v3140
        %v3237 = vunpack.c.h.b16 %v3140
        %v3238 = vunpack.c.l.b16 %v3141
        %v3239 = vunpack.c.h.b16 %v3141
        %v3240 = vunpack.c.l.b16 %v3142
        %v3241 = vunpack.c.h.b16 %v3142
        %v3242 = vunpack.c.l.b16 %v3143
        %v3243 = vunpack.c.h.b16 %v3143
        %v3244 = vunpack.c.l.b16 %v3144
        %v3245 = vunpack.c.h.b16 %v3144
        %v3246 = vunpack.c.l.b16 %v3145
        %v3247 = vunpack.c.h.b16 %v3145
        %v3248 = vpack.c.b16 %v3186, %v3184
        %v3249 = vpack.c.b16 %v3187, %v3185
        %v3250 = vpack.c.b16 %v3190, %v3188
        %v3251 = vpack.c.b16 %v3191, %v3189
        %v3252 = vpack.c.b16 %v3194, %v3192
        %v3253 = vpack.c.b16 %v3195, %v3193
        %v3254 = vpack.c.b16 %v3198, %v3196
        %v3255 = vpack.c.b16 %v3199, %v3197
        %v3256 = vpack.c.b16 %v3202, %v3200
        %v3257 = vpack.c.b16 %v3203, %v3201
        %v3258 = vpack.c.b16 %v3206, %v3204
        %v3259 = vpack.c.b16 %v3207, %v3205
        %v3260 = vpack.c.b16 %v3210, %v3208
        %v3261 = vpack.c.b16 %v3211, %v3209
        %v3262 = vpack.c.b16 %v3214, %v3212
        %v3263 = vpack.c.b16 %v3215, %v3213
        %v3264 = vpack.c.b16 %v3218, %v3216
        %v3265 = vpack.c.b16 %v3219, %v3217
        %v3266 = vpack.c.b16 %v3222, %v3220
        %v3267 = vpack.c.b16 %v3223, %v3221
        %v3268 = vpack.c.b16 %v3226, %v3224
        %v3269 = vpack.c.b16 %v3227, %v3225
        %v3270 = vpack.c.b16 %v3230, %v3228
        %v3271 = vpack.c.b16 %v3231, %v3229
        %v3272 = vpack.c.b16 %v3234, %v3232
        %v3273 = vpack.c.b16 %v3235, %v3233
        %v3274 = vpack.c.b16 %v3238, %v3236
        %v3275 = vpack.c.b16 %v3239, %v3237
        %v3276 = vpack.c.b16 %v3242, %v3240
        %v3277 = vpack.c.b16 %v3243, %v3241
        %v3278 = vpack.c.b16 %v3246, %v3244
        %v3279 = vpack.c.b16 %v3247, %v3245
        %3312 = vmatpush.bf16.msra.mxu0 %v3262
        %3313 = vmatpush.bf16.msra.mxu0 %v3260
        %3314 = vmatpush.bf16.msra.mxu0 %v3258
        %3315 = vmatpush.bf16.msra.mxu0 %v3256
        %3316 = vmatpush.bf16.msra.mxu0 %v3254
        %3317 = vmatpush.bf16.msra.mxu0 %v3252
        %3318 = vmatpush.bf16.msra.mxu0 %v3250
        %3319 = vmatpush.bf16.msra.mxu0 %v3248
        %3320 = vmatmul.bf16.gmra.mxu0 %v3082
        %v3321 = vpop.f32.mrf.mxu0
        %v3322 = vadd.f32 %v3148, %v3321
        %v3323 = vpop.f32.mrf.mxu0
        %v3324 = vadd.f32 %v3148, %v3323
        %3325 = vmatmul.bf16.gmra.mxu0 %v3084
        %v3326 = vpop.f32.mrf.mxu0
        %v3327 = vadd.f32 %v3148, %v3326
        %v3328 = vpop.f32.mrf.mxu0
        %v3329 = vadd.f32 %v3148, %v3328
        %3330 = vmatmul.bf16.gmra.mxu0 %v3086
        %v3331 = vpop.f32.mrf.mxu0
        %v3332 = vadd.f32 %v3148, %v3331
        %v3333 = vpop.f32.mrf.mxu0
        %v3334 = vadd.f32 %v3148, %v3333
        %3335 = vmatmul.bf16.gmra.mxu0 %v3088
        %v3336 = vpop.f32.mrf.mxu0
        %v3337 = vadd.f32 %v3148, %v3336
        %v3338 = vpop.f32.mrf.mxu0
        %v3339 = vadd.f32 %v3148, %v3338
        %3340 = vmatmul.bf16.gmra.mxu0 %v3090
        %v3341 = vpop.f32.mrf.mxu0
        %v3342 = vadd.f32 %v3148, %v3341
        %v3343 = vpop.f32.mrf.mxu0
        %v3344 = vadd.f32 %v3148, %v3343
        %3345 = vmatmul.bf16.gmra.mxu0 %v3092
        %v3346 = vpop.f32.mrf.mxu0
        %v3347 = vadd.f32 %v3148, %v3346
        %v3348 = vpop.f32.mrf.mxu0
        %v3349 = vadd.f32 %v3148, %v3348
        %3350 = vmatmul.bf16.gmra.mxu0 %v3094
        %v3351 = vpop.f32.mrf.mxu0
        %v3352 = vadd.f32 %v3148, %v3351
        %v3353 = vpop.f32.mrf.mxu0
        %v3354 = vadd.f32 %v3148, %v3353
        %3355 = vmatmul.bf16.gmra.mxu0 %v3096
        %v3356 = vpop.f32.mrf.mxu0
        %v3357 = vadd.f32 %v3148, %v3356
        %v3358 = vpop.f32.mrf.mxu0
        %v3359 = vadd.f32 %v3148, %v3358
        %3360 = vmatmul.bf16.gmra.mxu0 %v3098
        %v3361 = vpop.f32.mrf.mxu0
        %v3362 = vadd.f32 %v3148, %v3361
        %v3363 = vpop.f32.mrf.mxu0
        %v3364 = vadd.f32 %v3148, %v3363
        %3365 = vmatmul.bf16.gmra.mxu0 %v3100
        %v3366 = vpop.f32.mrf.mxu0
        %v3367 = vadd.f32 %v3148, %v3366
        %v3368 = vpop.f32.mrf.mxu0
        %v3369 = vadd.f32 %v3148, %v3368
        %3370 = vmatmul.bf16.gmra.mxu0 %v3102
        %v3371 = vpop.f32.mrf.mxu0
        %v3372 = vadd.f32 %v3148, %v3371
        %v3373 = vpop.f32.mrf.mxu0
        %v3374 = vadd.f32 %v3148, %v3373
        %3375 = vmatmul.bf16.gmra.mxu0 %v3104
        %v3376 = vpop.f32.mrf.mxu0
        %v3377 = vadd.f32 %v3148, %v3376
        %v3378 = vpop.f32.mrf.mxu0
        %v3379 = vadd.f32 %v3148, %v3378
        %3380 = vmatmul.bf16.gmra.mxu0 %v3106
        %v3381 = vpop.f32.mrf.mxu0
        %v3382 = vadd.f32 %v3148, %v3381
        %v3383 = vpop.f32.mrf.mxu0
        %v3384 = vadd.f32 %v3148, %v3383
        %3385 = vmatmul.bf16.gmra.mxu0 %v3108
        %v3386 = vpop.f32.mrf.mxu0
        %v3387 = vadd.f32 %v3148, %v3386
        %v3388 = vpop.f32.mrf.mxu0
        %v3389 = vadd.f32 %v3148, %v3388
        %3390 = vmatmul.bf16.gmra.mxu0 %v3110
        %v3391 = vpop.f32.mrf.mxu0
        %v3392 = vadd.f32 %v3148, %v3391
        %v3393 = vpop.f32.mrf.mxu0
        %v3394 = vadd.f32 %v3148, %v3393
        %3395 = vmatmul.bf16.gmra.mxu0 %v3112
        %v3396 = vpop.f32.mrf.mxu0
        %v3397 = vadd.f32 %v3148, %v3396
        %v3398 = vpop.f32.mrf.mxu0
        %v3399 = vadd.f32 %v3148, %v3398
        %3400 = vdwg.mxu0
        %3401 = vmatpush.bf16.msra.mxu0 %v3278
        %3402 = vmatpush.bf16.msra.mxu0 %v3276
        %3403 = vmatpush.bf16.msra.mxu0 %v3274
        %3404 = vmatpush.bf16.msra.mxu0 %v3272
        %3405 = vmatpush.bf16.msra.mxu0 %v3270
        %3406 = vmatpush.bf16.msra.mxu0 %v3268
        %3407 = vmatpush.bf16.msra.mxu0 %v3266
        %3408 = vmatpush.bf16.msra.mxu0 %v3264
        %3409 = vmatmul.bf16.gmra.mxu0 %v3083
        %v3410 = vpop.f32.mrf.mxu0
        %v3411 = vadd.f32 %v3322, %v3410
        %v3412 = vpop.f32.mrf.mxu0
        %v3413 = vadd.f32 %v3324, %v3412
        %3414 = vmatmul.bf16.gmra.mxu0 %v3085
        %v3415 = vpop.f32.mrf.mxu0
        %v3416 = vadd.f32 %v3327, %v3415
        %v3417 = vpop.f32.mrf.mxu0
        %v3418 = vadd.f32 %v3329, %v3417
        %3419 = vmatmul.bf16.gmra.mxu0 %v3087
        %v3420 = vpop.f32.mrf.mxu0
        %v3421 = vadd.f32 %v3332, %v3420
        %v3422 = vpop.f32.mrf.mxu0
        %v3423 = vadd.f32 %v3334, %v3422
        %3424 = vmatmul.bf16.gmra.mxu0 %v3089
        %v3425 = vpop.f32.mrf.mxu0
        %v3426 = vadd.f32 %v3337, %v3425
        %v3427 = vpop.f32.mrf.mxu0
        %v3428 = vadd.f32 %v3339, %v3427
        %3429 = vmatmul.bf16.gmra.mxu0 %v3091
        %v3430 = vpop.f32.mrf.mxu0
        %v3431 = vadd.f32 %v3342, %v3430
        %v3432 = vpop.f32.mrf.mxu0
        %v3433 = vadd.f32 %v3344, %v3432
        %3434 = vmatmul.bf16.gmra.mxu0 %v3093
        %v3435 = vpop.f32.mrf.mxu0
        %v3436 = vadd.f32 %v3347, %v3435
        %v3437 = vpop.f32.mrf.mxu0
        %v3438 = vadd.f32 %v3349, %v3437
        %3439 = vmatmul.bf16.gmra.mxu0 %v3095
        %v3440 = vpop.f32.mrf.mxu0
        %v3441 = vadd.f32 %v3352, %v3440
        %v3442 = vpop.f32.mrf.mxu0
        %v3443 = vadd.f32 %v3354, %v3442
        %3444 = vmatmul.bf16.gmra.mxu0 %v3097
        %v3445 = vpop.f32.mrf.mxu0
        %v3446 = vadd.f32 %v3357, %v3445
        %v3447 = vpop.f32.mrf.mxu0
        %v3448 = vadd.f32 %v3359, %v3447
        %3449 = vmatmul.bf16.gmra.mxu0 %v3099
        %v3450 = vpop.f32.mrf.mxu0
        %v3451 = vadd.f32 %v3362, %v3450
        %v3452 = vpop.f32.mrf.mxu0
        %v3453 = vadd.f32 %v3364, %v3452
        %3454 = vmatmul.bf16.gmra.mxu0 %v3101
        %v3455 = vpop.f32.mrf.mxu0
        %v3456 = vadd.f32 %v3367, %v3455
        %v3457 = vpop.f32.mrf.mxu0
        %v3458 = vadd.f32 %v3369, %v3457
        %3459 = vmatmul.bf16.gmra.mxu0 %v3103
        %v3460 = vpop.f32.mrf.mxu0
        %v3461 = vadd.f32 %v3372, %v3460
        %v3462 = vpop.f32.mrf.mxu0
        %v3463 = vadd.f32 %v3374, %v3462
        %3464 = vmatmul.bf16.gmra.mxu0 %v3105
        %v3465 = vpop.f32.mrf.mxu0
        %v3466 = vadd.f32 %v3377, %v3465
        %v3467 = vpop.f32.mrf.mxu0
        %v3468 = vadd.f32 %v3379, %v3467
        %3469 = vmatmul.bf16.gmra.mxu0 %v3107
        %v3470 = vpop.f32.mrf.mxu0
        %v3471 = vadd.f32 %v3382, %v3470
        %v3472 = vpop.f32.mrf.mxu0
        %v3473 = vadd.f32 %v3384, %v3472
        %3474 = vmatmul.bf16.gmra.mxu0 %v3109
        %v3475 = vpop.f32.mrf.mxu0
        %v3476 = vadd.f32 %v3387, %v3475
        %v3477 = vpop.f32.mrf.mxu0
        %v3478 = vadd.f32 %v3389, %v3477
        %3479 = vmatmul.bf16.gmra.mxu0 %v3111
        %v3480 = vpop.f32.mrf.mxu0
        %v3481 = vadd.f32 %v3392, %v3480
        %v3482 = vpop.f32.mrf.mxu0
        %v3483 = vadd.f32 %v3394, %v3482
        %3484 = vmatmul.bf16.gmra.mxu0 %v3113
        %v3485 = vpop.f32.mrf.mxu0
        %v3486 = vadd.f32 %v3397, %v3485
        %v3487 = vpop.f32.mrf.mxu0
        %v3488 = vadd.f32 %v3399, %v3487
        %3489 = vdwg.mxu0
        %3490 = vmatpush.bf16.msra.mxu0 %v3263
        %3491 = vmatpush.bf16.msra.mxu0 %v3261
        %3492 = vmatpush.bf16.msra.mxu0 %v3259
        %3493 = vmatpush.bf16.msra.mxu0 %v3257
        %3494 = vmatpush.bf16.msra.mxu0 %v3255
        %3495 = vmatpush.bf16.msra.mxu0 %v3253
        %3496 = vmatpush.bf16.msra.mxu0 %v3251
        %3497 = vmatpush.bf16.msra.mxu0 %v3249
        %3498 = vmatmul.bf16.gmra.mxu0 %v3082
        %v3499 = vpop.f32.mrf.mxu0
        %v3500 = vadd.f32 %v3149, %v3499
        %v3501 = vpop.f32.mrf.mxu0
        %v3502 = vadd.f32 %v3149, %v3501
        %3503 = vmatmul.bf16.gmra.mxu0 %v3084
        %v3504 = vpop.f32.mrf.mxu0
        %v3505 = vadd.f32 %v3149, %v3504
        %v3506 = vpop.f32.mrf.mxu0
        %v3507 = vadd.f32 %v3149, %v3506
        %3508 = vmatmul.bf16.gmra.mxu0 %v3086
        %v3509 = vpop.f32.mrf.mxu0
        %v3510 = vadd.f32 %v3149, %v3509
        %v3511 = vpop.f32.mrf.mxu0
        %v3512 = vadd.f32 %v3149, %v3511
        %3513 = vmatmul.bf16.gmra.mxu0 %v3088
        %v3514 = vpop.f32.mrf.mxu0
        %v3515 = vadd.f32 %v3149, %v3514
        %v3516 = vpop.f32.mrf.mxu0
        %v3517 = vadd.f32 %v3149, %v3516
        %3518 = vmatmul.bf16.gmra.mxu0 %v3090
        %v3519 = vpop.f32.mrf.mxu0
        %v3520 = vadd.f32 %v3149, %v3519
        %v3521 = vpop.f32.mrf.mxu0
        %v3522 = vadd.f32 %v3149, %v3521
        %3523 = vmatmul.bf16.gmra.mxu0 %v3092
        %v3524 = vpop.f32.mrf.mxu0
        %v3525 = vadd.f32 %v3149, %v3524
        %v3526 = vpop.f32.mrf.mxu0
        %v3527 = vadd.f32 %v3149, %v3526
        %3528 = vmatmul.bf16.gmra.mxu0 %v3094
        %v3529 = vpop.f32.mrf.mxu0
        %v3530 = vadd.f32 %v3149, %v3529
        %v3531 = vpop.f32.mrf.mxu0
        %v3532 = vadd.f32 %v3149, %v3531
        %3533 = vmatmul.bf16.gmra.mxu0 %v3096
        %v3534 = vpop.f32.mrf.mxu0
        %v3535 = vadd.f32 %v3149, %v3534
        %v3536 = vpop.f32.mrf.mxu0
        %v3537 = vadd.f32 %v3149, %v3536
        %3538 = vmatmul.bf16.gmra.mxu0 %v3098
        %v3539 = vpop.f32.mrf.mxu0
        %v3540 = vadd.f32 %v3149, %v3539
        %v3541 = vpop.f32.mrf.mxu0
        %v3542 = vadd.f32 %v3149, %v3541
        %3543 = vmatmul.bf16.gmra.mxu0 %v3100
        %v3544 = vpop.f32.mrf.mxu0
        %v3545 = vadd.f32 %v3149, %v3544
        %v3546 = vpop.f32.mrf.mxu0
        %v3547 = vadd.f32 %v3149, %v3546
        %3548 = vmatmul.bf16.gmra.mxu0 %v3102
        %v3549 = vpop.f32.mrf.mxu0
        %v3550 = vadd.f32 %v3149, %v3549
        %v3551 = vpop.f32.mrf.mxu0
        %v3552 = vadd.f32 %v3149, %v3551
        %3553 = vmatmul.bf16.gmra.mxu0 %v3104
        %v3554 = vpop.f32.mrf.mxu0
        %v3555 = vadd.f32 %v3149, %v3554
        %v3556 = vpop.f32.mrf.mxu0
        %v3557 = vadd.f32 %v3149, %v3556
        %3558 = vmatmul.bf16.gmra.mxu0 %v3106
        %v3559 = vpop.f32.mrf.mxu0
        %v3560 = vadd.f32 %v3149, %v3559
        %v3561 = vpop.f32.mrf.mxu0
        %v3562 = vadd.f32 %v3149, %v3561
        %3563 = vmatmul.bf16.gmra.mxu0 %v3108
        %v3564 = vpop.f32.mrf.mxu0
        %v3565 = vadd.f32 %v3149, %v3564
        %v3566 = vpop.f32.mrf.mxu0
        %v3567 = vadd.f32 %v3149, %v3566
        %3568 = vmatmul.bf16.gmra.mxu0 %v3110
        %v3569 = vpop.f32.mrf.mxu0
        %v3570 = vadd.f32 %v3149, %v3569
        %v3571 = vpop.f32.mrf.mxu0
        %v3572 = vadd.f32 %v3149, %v3571
        %3573 = vmatmul.bf16.gmra.mxu0 %v3112
        %v3574 = vpop.f32.mrf.mxu0
        %v3575 = vadd.f32 %v3149, %v3574
        %v3576 = vpop.f32.mrf.mxu0
        %v3577 = vadd.f32 %v3149, %v3576
        %3578 = vdwg.mxu0
        %3579 = vmatpush.bf16.msra.mxu0 %v3279
        %3580 = vmatpush.bf16.msra.mxu0 %v3277
        %3581 = vmatpush.bf16.msra.mxu0 %v3275
        %3582 = vmatpush.bf16.msra.mxu0 %v3273
        %3583 = vmatpush.bf16.msra.mxu0 %v3271
        %3584 = vmatpush.bf16.msra.mxu0 %v3269
        %3585 = vmatpush.bf16.msra.mxu0 %v3267
        %3586 = vmatpush.bf16.msra.mxu0 %v3265
        %3587 = vmatmul.bf16.gmra.mxu0 %v3083
        %v3588 = vpop.f32.mrf.mxu0
        %v3589 = vadd.f32 %v3500, %v3588
        %v3590 = vpop.f32.mrf.mxu0
        %v3591 = vadd.f32 %v3502, %v3590
        %3592 = vmatmul.bf16.gmra.mxu0 %v3085
        %v3593 = vpop.f32.mrf.mxu0
        %v3594 = vadd.f32 %v3505, %v3593
        %v3595 = vpop.f32.mrf.mxu0
        %v3596 = vadd.f32 %v3507, %v3595
        %3597 = vmatmul.bf16.gmra.mxu0 %v3087
        %v3598 = vpop.f32.mrf.mxu0
        %v3599 = vadd.f32 %v3510, %v3598
        %v3600 = vpop.f32.mrf.mxu0
        %v3601 = vadd.f32 %v3512, %v3600
        %3602 = vmatmul.bf16.gmra.mxu0 %v3089
        %v3603 = vpop.f32.mrf.mxu0
        %v3604 = vadd.f32 %v3515, %v3603
        %v3605 = vpop.f32.mrf.mxu0
        %v3606 = vadd.f32 %v3517, %v3605
        %3607 = vmatmul.bf16.gmra.mxu0 %v3091
        %v3608 = vpop.f32.mrf.mxu0
        %v3609 = vadd.f32 %v3520, %v3608
        %v3610 = vpop.f32.mrf.mxu0
        %v3611 = vadd.f32 %v3522, %v3610
        %3612 = vmatmul.bf16.gmra.mxu0 %v3093
        %v3613 = vpop.f32.mrf.mxu0
        %v3614 = vadd.f32 %v3525, %v3613
        %v3615 = vpop.f32.mrf.mxu0
        %v3616 = vadd.f32 %v3527, %v3615
        %3617 = vmatmul.bf16.gmra.mxu0 %v3095
        %v3618 = vpop.f32.mrf.mxu0
        %v3619 = vadd.f32 %v3530, %v3618
        %v3620 = vpop.f32.mrf.mxu0
        %v3621 = vadd.f32 %v3532, %v3620
        %3622 = vmatmul.bf16.gmra.mxu0 %v3097
        %v3623 = vpop.f32.mrf.mxu0
        %v3624 = vadd.f32 %v3535, %v3623
        %v3625 = vpop.f32.mrf.mxu0
        %v3626 = vadd.f32 %v3537, %v3625
        %3627 = vmatmul.bf16.gmra.mxu0 %v3099
        %v3628 = vpop.f32.mrf.mxu0
        %v3629 = vadd.f32 %v3540, %v3628
        %v3630 = vpop.f32.mrf.mxu0
        %v3631 = vadd.f32 %v3542, %v3630
        %3632 = vmatmul.bf16.gmra.mxu0 %v3101
        %v3633 = vpop.f32.mrf.mxu0
        %v3634 = vadd.f32 %v3545, %v3633
        %v3635 = vpop.f32.mrf.mxu0
        %v3636 = vadd.f32 %v3547, %v3635
        %3637 = vmatmul.bf16.gmra.mxu0 %v3103
        %v3638 = vpop.f32.mrf.mxu0
        %v3639 = vadd.f32 %v3550, %v3638
        %v3640 = vpop.f32.mrf.mxu0
        %v3641 = vadd.f32 %v3552, %v3640
        %3642 = vmatmul.bf16.gmra.mxu0 %v3105
        %v3643 = vpop.f32.mrf.mxu0
        %v3644 = vadd.f32 %v3555, %v3643
        %v3645 = vpop.f32.mrf.mxu0
        %v3646 = vadd.f32 %v3557, %v3645
        %3647 = vmatmul.bf16.gmra.mxu0 %v3107
        %v3648 = vpop.f32.mrf.mxu0
        %v3649 = vadd.f32 %v3560, %v3648
        %v3650 = vpop.f32.mrf.mxu0
        %v3651 = vadd.f32 %v3562, %v3650
        %3652 = vmatmul.bf16.gmra.mxu0 %v3109
        %v3653 = vpop.f32.mrf.mxu0
        %v3654 = vadd.f32 %v3565, %v3653
        %v3655 = vpop.f32.mrf.mxu0
        %v3656 = vadd.f32 %v3567, %v3655
        %3657 = vmatmul.bf16.gmra.mxu0 %v3111
        %v3658 = vpop.f32.mrf.mxu0
        %v3659 = vadd.f32 %v3570, %v3658
        %v3660 = vpop.f32.mrf.mxu0
        %v3661 = vadd.f32 %v3572, %v3660
        %3662 = vmatmul.bf16.gmra.mxu0 %v3113
        %v3663 = vpop.f32.mrf.mxu0
        %v3664 = vadd.f32 %v3575, %v3663
        %v3665 = vpop.f32.mrf.mxu0
        %v3666 = vadd.f32 %v3577, %v3665
        %3667 = vdwg.mxu0
        %v3668 = vpack.c.bf16 %v3589, %v3411
        %v3669 = vpack.c.bf16 %v3591, %v3413
        %v3670 = vpack.c.bf16 %v3594, %v3416
        %v3671 = vpack.c.bf16 %v3596, %v3418
        %v3672 = vpack.c.bf16 %v3599, %v3421
        %v3673 = vpack.c.bf16 %v3601, %v3423
        %v3674 = vpack.c.bf16 %v3604, %v3426
        %v3675 = vpack.c.bf16 %v3606, %v3428
        %v3676 = vpack.c.bf16 %v3609, %v3431
        %v3677 = vpack.c.bf16 %v3611, %v3433
        %v3678 = vpack.c.bf16 %v3614, %v3436
        %v3679 = vpack.c.bf16 %v3616, %v3438
        %v3680 = vpack.c.bf16 %v3619, %v3441
        %v3681 = vpack.c.bf16 %v3621, %v3443
        %v3682 = vpack.c.bf16 %v3624, %v3446
        %v3683 = vpack.c.bf16 %v3626, %v3448
        %v3684 = vpack.c.bf16 %v3629, %v3451
        %v3685 = vpack.c.bf16 %v3631, %v3453
        %v3686 = vpack.c.bf16 %v3634, %v3456
        %v3687 = vpack.c.bf16 %v3636, %v3458
        %v3688 = vpack.c.bf16 %v3639, %v3461
        %v3689 = vpack.c.bf16 %v3641, %v3463
        %v3690 = vpack.c.bf16 %v3644, %v3466
        %v3691 = vpack.c.bf16 %v3646, %v3468
        %v3692 = vpack.c.bf16 %v3649, %v3471
        %v3693 = vpack.c.bf16 %v3651, %v3473
        %v3694 = vpack.c.bf16 %v3654, %v3476
        %v3695 = vpack.c.bf16 %v3656, %v3478
        %v3696 = vpack.c.bf16 %v3659, %v3481
        %v3697 = vpack.c.bf16 %v3661, %v3483
        %v3698 = vpack.c.bf16 %v3664, %v3486
        %v3699 = vpack.c.bf16 %v3666, %v3488
        %3700 = vst [vmem:[%s469] sm:$0xff] %v3668
        %3701 = vst [vmem:[%s469 + $0x8] sm:$0xff] %v3669
        %3702 = vst [vmem:[%s469 + $0x10] sm:$0xff] %v3670
        %3703 = vst [vmem:[%s469 + $0x18] sm:$0xff] %v3671
        %3704 = vst [vmem:[%s469 + $0x20] sm:$0xff] %v3672
        %3705 = vst [vmem:[%s469 + $0x28] sm:$0xff] %v3673
        %3706 = vst [vmem:[%s469 + $0x30] sm:$0xff] %v3674
        %3707 = vst [vmem:[%s469 + $0x38] sm:$0xff] %v3675
        %3708 = vst [vmem:[%s469 + $0x40] sm:$0xff] %v3676
        %3709 = vst [vmem:[%s469 + $0x48] sm:$0xff] %v3677
        %3710 = vst [vmem:[%s469 + $0x50] sm:$0xff] %v3678
        %3711 = vst [vmem:[%s469 + $0x58] sm:$0xff] %v3679
        %3712 = vst [vmem:[%s469 + $0x60] sm:$0xff] %v3680
        %3713 = vst [vmem:[%s469 + $0x68] sm:$0xff] %v3681
        %3714 = vst [vmem:[%s469 + $0x70] sm:$0xff] %v3682
        %3715 = vst [vmem:[%s469 + $0x78] sm:$0xff] %v3683
        %3716 = vst [vmem:[%s469 + $0x80] sm:$0xff] %v3684
        %3717 = vst [vmem:[%s469 + $0x88] sm:$0xff] %v3685
        %3718 = vst [vmem:[%s469 + $0x90] sm:$0xff] %v3686
        %3719 = vst [vmem:[%s469 + $0x98] sm:$0xff] %v3687
        %3720 = vst [vmem:[%s469 + $0xa0] sm:$0xff] %v3688
        %3721 = vst [vmem:[%s469 + $0xa8] sm:$0xff] %v3689
        %3722 = vst [vmem:[%s469 + $0xb0] sm:$0xff] %v3690
        %3723 = vst [vmem:[%s469 + $0xb8] sm:$0xff] %v3691
        %3724 = vst [vmem:[%s469 + $0xc0] sm:$0xff] %v3692
        %3725 = vst [vmem:[%s469 + $0xc8] sm:$0xff] %v3693
        %3726 = vst [vmem:[%s469 + $0xd0] sm:$0xff] %v3694
        %3727 = vst [vmem:[%s469 + $0xd8] sm:$0xff] %v3695
        %3728 = vst [vmem:[%s469 + $0xe0] sm:$0xff] %v3696
        %3729 = vst [vmem:[%s469 + $0xe8] sm:$0xff] %v3697
        %3730 = vst [vmem:[%s469 + $0xf0] sm:$0xff] %v3698
        %3731 = vst [vmem:[%s469 + $0xf8] sm:$0xff] %v3699
        %s3732 = sand.u32 %s260, 1
        %s3733 = scalar_lea.sflag [#allocation4], %s3732
        %s3734 = sand.u32 %s260, 1
        %s3735 = smul.addr %s3734, 256
        %s3736 = scalar_lea.vmem [#allocation10], %s3735
        %s3737 = sand.u32 %s286, 1
        %s3738 = scalar_lea.sflag [#allocation12], %s3737
        %s3739 = sand.u32 %s286, 1
        %s3740 = smul.addr %s3739, 512
        %s3741 = scalar_lea.vmem [#allocation11], %s3740
        // Predicated region
        $region77: #{tpu_custom_call.1} parent=59 // pred_check
          %p3742 = pneg %p270
        $region78: #{tpu_custom_call.1} parent=59 // pred_check_branch
          %3744 = sbr.rel (%p3742) target = $region80
        $region79: #{tpu_custom_call.1} parent=59 // pred_region
          %s3745 = smul.u32 32, %s32
          %3747 = vsyncadd %s3733, 0
          %s3748 = smul.addr %s3745, 2
          %s3749 = smul.addr %s3748, 4
          %s3750 = scalar_lea.hbm %s10, %s3749
          %s3751 = sshll.u32 %s3736, 4
          %s3752 = int_to_ptr.vmem [resolvable:$true] %s3751
          %s3753 = sshll.u32 %s3750, 4
          %s3754 = int_to_ptr.hbm [resolvable:$true] %s3753
          %3759 = dma.vmem_to_hbm [thread:$0]  %s3752, 4096, %s3754, %s3733, 128, 128, 8
        $region80: #{tpu_custom_call.1} parent=59 // pred_fallthru
          _
        // Predicated region
        $region81: #{tpu_custom_call.1} parent=59 // pred_check
          %p3760 = pneg %p296
        $region82: #{tpu_custom_call.1} parent=59 // pred_check_branch
          %3762 = sbr.rel (%p3760) target = $region84
        $region83: #{tpu_custom_call.1} parent=59 // pred_region
          %s3763 = smul.u32 32, %s32
          %3765 = vsyncadd %s3738, 0
          %s3766 = smul.addr %s3763, 2
          %s3767 = smul.addr %s3766, 8
          %s3768 = scalar_lea.hbm %s11, %s3767
          %s3769 = sshll.u32 %s3741, 4
          %s3770 = int_to_ptr.vmem [resolvable:$true] %s3769
          %s3771 = sshll.u32 %s3768, 4
          %s3772 = int_to_ptr.hbm [resolvable:$true] %s3771
          %3777 = dma.vmem_to_hbm [thread:$0]  %s3770, 8192, %s3772, %s3738, 256, 256, 16
        $region84: #{tpu_custom_call.1} parent=59 // pred_fallthru
          _
      $region60: #{tpu_custom_call.1} parent=5 // pred_fallthru
        _
      %p3778 = scmp.le.s32.totalorder 2, %s27
      // Predicated region
      $region85: #{tpu_custom_call.1} parent=5 // pred_check
        %p3779 = pneg %p3778
      $region86: #{tpu_custom_call.1} parent=5 // pred_check_branch
        %3781 = sbr.rel (%p3779) target = $region88
      $region87: #{tpu_custom_call.1} parent=5 // pred_region
        %s3782 = ssub.s32 %s27, 2
        // Predicated region
        $region89: #{tpu_custom_call.1} parent=87 // pred_check
          %p3783 = pneg %p276
        $region90: #{tpu_custom_call.1} parent=87 // pred_check_branch
          %3785 = sbr.rel (%p3783) target = $region92
        $region91: #{tpu_custom_call.1} parent=87 // pred_region
          %s3786 = sand.u32 %s261, 1
          %s3787 = scalar_lea.sflag [#allocation4], %s3786
          %s3788 = sand.u32 %s261, 1
          %s3789 = smul.addr %s3788, 256
          %s3790 = scalar_lea.vmem [#allocation10], %s3789
          %3792 = dma.done %s3787, 4096
        $region92: #{tpu_custom_call.1} parent=87 // pred_fallthru
          _
        // Predicated region
        $region93: #{tpu_custom_call.1} parent=87 // pred_check
          %p3793 = pneg %p302
        $region94: #{tpu_custom_call.1} parent=87 // pred_check_branch
          %3795 = sbr.rel (%p3793) target = $region96
        $region95: #{tpu_custom_call.1} parent=87 // pred_region
          %s3796 = sand.u32 %s287, 1
          %s3797 = scalar_lea.sflag [#allocation12], %s3796
          %s3798 = sand.u32 %s287, 1
          %s3799 = smul.addr %s3798, 512
          %s3800 = scalar_lea.vmem [#allocation11], %s3799
          %3802 = dma.done %s3797, 8192
        $region96: #{tpu_custom_call.1} parent=87 // pred_fallthru
          _
      $region88: #{tpu_custom_call.1} parent=5 // pred_fallthru
        _
    $region6: #{tpu_custom_call.1} parent=1 // loop_footer
      %s31 = sadd.s32 1, %s27
    $region7: #{tpu_custom_call.1} parent=1 // loop_footer_branch
      %26 = sbr.rel target = $region3
    $region8: #{tpu_custom_call.1} parent=1 // loop_exit
      _
    %3803 = vsyncpa [#allocation3], 1
    %s3804 = scalar_lea.sflag [#allocation3], 1
    %3805 = vsyncpa %s3804, 1
    %3806 = vsyncpa [#allocation6], 1
    %3807 = vsyncpa [#allocation9], 1
    %3808 = vsyncpa [#allocation4], 1
    %s3809 = scalar_lea.sflag [#allocation4], 1
    %3810 = vsyncpa %s3809, 1
    %3811 = vsyncpa [#allocation12], 1
    %s3812 = scalar_lea.sflag [#allocation12], 1
    %3813 = vsyncpa %s3812, 1

// kernel: tpu_custom_call.1
$region0: #{tpu_custom_call.1}
  #allocation0 [shape = 'u32[]', space=smem, size = 0x4, offset = 0x4, fixed_abs, tag = 'smem constant byte address 0x4 - core index']
  #allocation1 [shape = 'u32[72,128]{1,0:T(1,128)}', space=vmem, size = 0x9000, scoped, tag = 'internal scratch']
  %s0 = inlined_call_operand.vmem [shape: bf16[512,256], index: 0, kind: input, shape index: {}]
  %s1 = inlined_call_operand.vmem [shape: f32[512,1], index: 1, kind: input, shape index: {}]
  %s2 = inlined_call_operand.hbm [shape: bf16[256,256], index: 2, kind: input, shape index: {}]
  %s3 = inlined_call_operand.vmem [shape: f32[1,256], index: 3, kind: input, shape index: {}]
  %s4 = inlined_call_operand.hbm [shape: bf16[256,256], index: 4, kind: input, shape index: {}]
  %s5 = inlined_call_operand.vmem [shape: f32[1,256], index: 5, kind: input, shape index: {}]
  %s6 = inlined_call_operand.hbm [shape: bf16[256,256], index: 6, kind: input, shape index: {}]
  %s7 = inlined_call_operand.vmem [shape: f32[1,256], index: 7, kind: input, shape index: {}]
  %s8 = inlined_call_operand.hbm [shape: bf16[256,256], index: 8, kind: input, shape index: {}]
  %s9 = inlined_call_operand.vmem [shape: f32[1,256], index: 9, kind: input, shape index: {}]
  %s10 = inlined_call_operand.hbm [shape: bf16[512,256], index: 10, kind: output, shape index: {0}]
  %s11 = inlined_call_operand.hbm [shape: f32[512,256], index: 11, kind: output, shape index: {1}]
  %12 = xla_tuple %s10, %s11
  %s13 = sld [smem:[#allocation0]]
  $region97: #{tpu_custom_call.1} parent=0
    _
  %s15 = ssub.s32 1, %s13
  %s16 = scalar_select 0, %s15, %s13
  $region1: #{tpu_custom_call.1} parent=0
    #allocation2 [shape = 'u8[131072]{0}', space=vmem, size = 0x20000, scoped, tag = 'input window, operand 2, single buffered']
    #allocation3 [shape = 's32[2]{0}', space=sflag, size = 0x8, scoped, tag = 'scoped memory for tpu_custom_call.1']
    #allocation4 [shape = 's32[2]{0}', space=sflag, size = 0x8, scoped, tag = 'scoped memory for tpu_custom_call.1']
    #allocation5 [shape = 'u8[131072]{0}', space=vmem, size = 0x20000, scoped, tag = 'input window, operand 4, single buffered']
    #allocation6 [shape = 's32[1]{0}', space=sflag, size = 0x4, scoped, tag = 'scoped memory for tpu_custom_call.1']
    #allocation7 [shape = 'u8[131072]{0}', space=vmem, size = 0x20000, scoped, tag = 'input window, operand 6, single buffered']
    #allocation8 [shape = 'u8[131072]{0}', space=vmem, size = 0x20000, scoped, tag = 'input window, operand 8, single buffered']
    #allocation9 [shape = 's32[1]{0}', space=sflag, size = 0x4, scoped, tag = 'scoped memory for tpu_custom_call.1']
    #allocation10 [shape = 'u8[262144]{0}', space=vmem, size = 0x40000, scoped, tag = 'output window, operand 0']
    #allocation11 [shape = 'u8[524288]{0}', space=vmem, size = 0x80000, scoped, tag = 'output window, operand 1']
    #allocation12 [shape = 's32[2]{0}', space=sflag, size = 0x8, scoped, tag = 'scoped memory for tpu_custom_call.1']
    %17 = vsyncpa [#allocation3], 0
    %18 = vsyncpa [#allocation6], 0
    %19 = vsyncpa [#allocation9], 0
    %20 = vsyncpa [#allocation4], 0
    %s21 = scalar_lea.sflag [#allocation4], 1
    %22 = vsyncpa %s21, 0
    %23 = vsyncpa [#allocation12], 0
    %s24 = scalar_lea.sflag [#allocation12], 1
    %25 = vsyncpa %s24, 0
    loop: start=0, step=1, limit=4
    $region2: #{tpu_custom_call.1} parent=1 // loop_pre_header
      _
    $region3: #{tpu_custom_call.1} parent=1 // loop_header
      %s27 = sphi 0, %s31
      %p28 = scmp.ge.s32.totalorder %s27, 4
      %s37 = sphi 0, %s39
      %s40 = sphi 0, %s37
      %s41 = sphi 0, %s40
      %s57 = sphi 0, %s41
      %s63 = sphi 0, %s65
      %s66 = sphi 0, %s63
      %s67 = sphi 0, %s66
      %s83 = sphi 0, %s67
      %s87 = sphi 0, %s87
      %s89 = sphi 0, %s87
      %s90 = sphi 0, %s89
      %s104 = sphi 0, %s90
      %s108 = sphi 0, %s108
      %s110 = sphi 0, %s108
      %s111 = sphi 0, %s110
      %s125 = sphi 0, %s111
      %s129 = sphi 0, %s129
      %s131 = sphi 0, %s129
      %s132 = sphi 0, %s131
      %s146 = sphi 0, %s132
      %s150 = sphi 0, %s150
      %s152 = sphi 0, %s150
      %s153 = sphi 0, %s152
      %s167 = sphi 0, %s153
      %s171 = sphi 0, %s171
      %s173 = sphi 0, %s171
      %s174 = sphi 0, %s173
      %s188 = sphi 0, %s174
      %s192 = sphi 0, %s192
      %s194 = sphi 0, %s192
      %s195 = sphi 0, %s194
      %s209 = sphi 0, %s195
      %s213 = sphi 0, %s213
      %s215 = sphi 0, %s213
      %s216 = sphi 0, %s215
      %s230 = sphi 0, %s216
      %s234 = sphi 0, %s234
      %s236 = sphi 0, %s234
      %s237 = sphi 0, %s236
      %s251 = sphi 0, %s237
      %s257 = sphi 0, %s259
      %s260 = sphi 0, %s257
      %s261 = sphi 0, %s260
      %s277 = sphi 0, %s261
      %s283 = sphi 0, %s285
      %s286 = sphi 0, %s283
      %s287 = sphi 0, %s286
      %s303 = sphi 0, %s287
    $region4: #{tpu_custom_call.1} parent=1 // loop_header_branch
      %30 = sbr.rel (%p28) target = $region8
    $region5: #{tpu_custom_call.1} parent=1 // loop_body
      %s32 = ssub.s32 %s27, 1
      %s33 = ssub.s32 %s27, 2
      %s34 = sadd.s32 %s27, 1
      %s35 = ssub.s32 %s27, %s34
      %p36 = scmp.eq.s32.totalorder %s35, 0
      %s38 = sadd.s32 %s37, 1
      %s39 = scalar_select %p36, %s37, %s38
      %p42 = pneg %p36
      %p43 = scmp.eq.s32.totalorder %s27, 1
      %p44 = por %p42, %p43
      %p45 = scmp.ne.s32.totalorder %s37, %s40
      %p46 = scmp.eq.s32.totalorder %s27, 0
      %p47 = por %p45, %p46
      %p48 = scmp.ne.s32.totalorder %s37, %s40
      %p49 = scmp.eq.s32.totalorder %s32, 1
      %p50 = por %p48, %p49
      %p51 = scmp.ne.s32.totalorder %s40, %s41
      %p52 = scmp.eq.s32.totalorder %s32, 0
      %p53 = por %p51, %p52
      %p54 = scmp.ne.s32.totalorder %s40, %s41
      %p55 = scmp.eq.s32.totalorder %s33, 1
      %p56 = por %p54, %p55
      %p58 = scmp.ne.s32.totalorder %s41, %s57
      %p59 = scmp.eq.s32.totalorder %s33, 0
      %p60 = por %p58, %p59
      %s61 = ssub.s32 %s27, %s34
      %p62 = scmp.eq.s32.totalorder %s61, 0
      %s64 = sadd.s32 %s63, 1
      %s65 = scalar_select %p62, %s63, %s64
      %p68 = pneg %p62
      %p69 = scmp.eq.s32.totalorder %s27, 1
      %p70 = por %p68, %p69
      %p71 = scmp.ne.s32.totalorder %s63, %s66
      %p72 = scmp.eq.s32.totalorder %s27, 0
      %p73 = por %p71, %p72
      %p74 = scmp.ne.s32.totalorder %s63, %s66
      %p75 = scmp.eq.s32.totalorder %s32, 1
      %p76 = por %p74, %p75
      %p77 = scmp.ne.s32.totalorder %s66, %s67
      %p78 = scmp.eq.s32.totalorder %s32, 0
      %p79 = por %p77, %p78
      %p80 = scmp.ne.s32.totalorder %s66, %s67
      %p81 = scmp.eq.s32.totalorder %s33, 1
      %p82 = por %p80, %p81
      %p84 = scmp.ne.s32.totalorder %s67, %s83
      %p85 = scmp.eq.s32.totalorder %s33, 0
      %p86 = por %p84, %p85
      %s88 = sadd.s32 %s87, 1
      %p91 = scmp.eq.s32.totalorder %s27, 1
      %p92 = scmp.ne.s32.totalorder %s87, %s89
      %p93 = scmp.eq.s32.totalorder %s27, 0
      %p94 = por %p92, %p93
      %p95 = scmp.ne.s32.totalorder %s87, %s89
      %p96 = scmp.eq.s32.totalorder %s32, 1
      %p97 = por %p95, %p96
      %p98 = scmp.ne.s32.totalorder %s89, %s90
      %p99 = scmp.eq.s32.totalorder %s32, 0
      %p100 = por %p98, %p99
      %p101 = scmp.ne.s32.totalorder %s89, %s90
      %p102 = scmp.eq.s32.totalorder %s33, 1
      %p103 = por %p101, %p102
      %p105 = scmp.ne.s32.totalorder %s90, %s104
      %p106 = scmp.eq.s32.totalorder %s33, 0
      %p107 = por %p105, %p106
      %s109 = sadd.s32 %s108, 1
      %p112 = scmp.eq.s32.totalorder %s27, 1
      %p113 = scmp.ne.s32.totalorder %s108, %s110
      %p114 = scmp.eq.s32.totalorder %s27, 0
      %p115 = por %p113, %p114
      %p116 = scmp.ne.s32.totalorder %s108, %s110
      %p117 = scmp.eq.s32.totalorder %s32, 1
      %p118 = por %p116, %p117
      %p119 = scmp.ne.s32.totalorder %s110, %s111
      %p120 = scmp.eq.s32.totalorder %s32, 0
      %p121 = por %p119, %p120
      %p122 = scmp.ne.s32.totalorder %s110, %s111
      %p123 = scmp.eq.s32.totalorder %s33, 1
      %p124 = por %p122, %p123
      %p126 = scmp.ne.s32.totalorder %s111, %s125
      %p127 = scmp.eq.s32.totalorder %s33, 0
      %p128 = por %p126, %p127
      %s130 = sadd.s32 %s129, 1
      %p133 = scmp.eq.s32.totalorder %s27, 1
      %p134 = scmp.ne.s32.totalorder %s129, %s131
      %p135 = scmp.eq.s32.totalorder %s27, 0
      %p136 = por %p134, %p135
      %p137 = scmp.ne.s32.totalorder %s129, %s131
      %p138 = scmp.eq.s32.totalorder %s32, 1
      %p139 = por %p137, %p138
      %p140 = scmp.ne.s32.totalorder %s131, %s132
      %p141 = scmp.eq.s32.totalorder %s32, 0
      %p142 = por %p140, %p141
      %p143 = scmp.ne.s32.totalorder %s131, %s132
      %p144 = scmp.eq.s32.totalorder %s33, 1
      %p145 = por %p143, %p144
      %p147 = scmp.ne.s32.totalorder %s132, %s146
      %p148 = scmp.eq.s32.totalorder %s33, 0
      %p149 = por %p147, %p148
      %s151 = sadd.s32 %s150, 1
      %p154 = scmp.eq.s32.totalorder %s27, 1
      %p155 = scmp.ne.s32.totalorder %s150, %s152
      %p156 = scmp.eq.s32.totalorder %s27, 0
      %p157 = por %p155, %p156
      %p158 = scmp.ne.s32.totalorder %s150, %s152
      %p159 = scmp.eq.s32.totalorder %s32, 1
      %p160 = por %p158, %p159
      %p161 = scmp.ne.s32.totalorder %s152, %s153
      %p162 = scmp.eq.s32.totalorder %s32, 0
      %p163 = por %p161, %p162
      %p164 = scmp.ne.s32.totalorder %s152, %s153
      %p165 = scmp.eq.s32.totalorder %s33, 1
      %p166 = por %p164, %p165
      %p168 = scmp.ne.s32.totalorder %s153, %s167
      %p169 = scmp.eq.s32.totalorder %s33, 0
      %p170 = por %p168, %p169
      %s172 = sadd.s32 %s171, 1
      %p175 = scmp.eq.s32.totalorder %s27, 1
      %p176 = scmp.ne.s32.totalorder %s171, %s173
      %p177 = scmp.eq.s32.totalorder %s27, 0
      %p178 = por %p176, %p177
      %p179 = scmp.ne.s32.totalorder %s171, %s173
      %p180 = scmp.eq.s32.totalorder %s32, 1
      %p181 = por %p179, %p180
      %p182 = scmp.ne.s32.totalorder %s173, %s174
      %p183 = scmp.eq.s32.totalorder %s32, 0
      %p184 = por %p182, %p183
      %p185 = scmp.ne.s32.totalorder %s173, %s174
      %p186 = scmp.eq.s32.totalorder %s33, 1
      %p187 = por %p185, %p186
      %p189 = scmp.ne.s32.totalorder %s174, %s188
      %p190 = scmp.eq.s32.totalorder %s33, 0
      %p191 = por %p189, %p190
      %s193 = sadd.s32 %s192, 1
      %p196 = scmp.eq.s32.totalorder %s27, 1
      %p197 = scmp.ne.s32.totalorder %s192, %s194
      %p198 = scmp.eq.s32.totalorder %s27, 0
      %p199 = por %p197, %p198
      %p200 = scmp.ne.s32.totalorder %s192, %s194
      %p201 = scmp.eq.s32.totalorder %s32, 1
      %p202 = por %p200, %p201
      %p203 = scmp.ne.s32.totalorder %s194, %s195
      %p204 = scmp.eq.s32.totalorder %s32, 0
      %p205 = por %p203, %p204
      %p206 = scmp.ne.s32.totalorder %s194, %s195
      %p207 = scmp.eq.s32.totalorder %s33, 1
      %p208 = por %p206, %p207
      %p210 = scmp.ne.s32.totalorder %s195, %s209
      %p211 = scmp.eq.s32.totalorder %s33, 0
      %p212 = por %p210, %p211
      %s214 = sadd.s32 %s213, 1
      %p217 = scmp.eq.s32.totalorder %s27, 1
      %p218 = scmp.ne.s32.totalorder %s213, %s215
      %p219 = scmp.eq.s32.totalorder %s27, 0
      %p220 = por %p218, %p219
      %p221 = scmp.ne.s32.totalorder %s213, %s215
      %p222 = scmp.eq.s32.totalorder %s32, 1
      %p223 = por %p221, %p222
      %p224 = scmp.ne.s32.totalorder %s215, %s216
      %p225 = scmp.eq.s32.totalorder %s32, 0
      %p226 = por %p224, %p225
      %p227 = scmp.ne.s32.totalorder %s215, %s216
      %p228 = scmp.eq.s32.totalorder %s33, 1
      %p229 = por %p227, %p228
      %p231 = scmp.ne.s32.totalorder %s216, %s230
      %p232 = scmp.eq.s32.totalorder %s33, 0
      %p233 = por %p231, %p232
      %s235 = sadd.s32 %s234, 1
      %p238 = scmp.eq.s32.totalorder %s27, 1
      %p239 = scmp.ne.s32.totalorder %s234, %s236
      %p240 = scmp.eq.s32.totalorder %s27, 0
      %p241 = por %p239, %p240
      %p242 = scmp.ne.s32.totalorder %s234, %s236
      %p243 = scmp.eq.s32.totalorder %s32, 1
      %p244 = por %p242, %p243
      %p245 = scmp.ne.s32.totalorder %s236, %s237
      %p246 = scmp.eq.s32.totalorder %s32, 0
      %p247 = por %p245, %p246
      %p248 = scmp.ne.s32.totalorder %s236, %s237
      %p249 = scmp.eq.s32.totalorder %s33, 1
      %p250 = por %p248, %p249
      %p252 = scmp.ne.s32.totalorder %s237, %s251
      %p253 = scmp.eq.s32.totalorder %s33, 0
      %p254 = por %p252, %p253
      %s255 = ssub.s32 %s27, %s34
      %p256 = scmp.eq.s32.totalorder %s255, 0
      %s258 = sadd.s32 %s257, 1
      %s259 = scalar_select %p256, %s257, %s258
      %p262 = pneg %p256
      %p263 = scmp.eq.s32.totalorder %s27, 1
      %p264 = por %p262, %p263
      %p265 = scmp.ne.s32.totalorder %s257, %s260
      %p266 = scmp.eq.s32.totalorder %s27, 0
      %p267 = por %p265, %p266
      %p268 = scmp.ne.s32.totalorder %s257, %s260
      %p269 = scmp.eq.s32.totalorder %s32, 1
      %p270 = por %p268, %p269
      %p271 = scmp.ne.s32.totalorder %s260, %s261
      %p272 = scmp.eq.s32.totalorder %s32, 0
      %p273 = por %p271, %p272
      %p274 = scmp.ne.s32.totalorder %s260, %s261
      %p275 = scmp.eq.s32.totalorder %s33, 1
      %p276 = por %p274, %p275
      %p278 = scmp.ne.s32.totalorder %s261, %s277
      %p279 = scmp.eq.s32.totalorder %s33, 0
      %p280 = por %p278, %p279
      %s281 = ssub.s32 %s27, %s34
      %p282 = scmp.eq.s32.totalorder %s281, 0
      %s284 = sadd.s32 %s283, 1
      %s285 = scalar_select %p282, %s283, %s284
      %p288 = pneg %p282
      %p289 = scmp.eq.s32.totalorder %s27, 1
      %p290 = por %p288, %p289
      %p291 = scmp.ne.s32.totalorder %s283, %s286
      %p292 = scmp.eq.s32.totalorder %s27, 0
      %p293 = por %p291, %p292
      %p294 = scmp.ne.s32.totalorder %s283, %s286
      %p295 = scmp.eq.s32.totalorder %s32, 1
      %p296 = por %p294, %p295
      %p297 = scmp.ne.s32.totalorder %s286, %s287
      %p298 = scmp.eq.s32.totalorder %s32, 0
      %p299 = por %p297, %p298
      %p300 = scmp.ne.s32.totalorder %s286, %s287
      %p301 = scmp.eq.s32.totalorder %s33, 1
      %p302 = por %p300, %p301
      %p304 = scmp.ne.s32.totalorder %s287, %s303
      %p305 = scmp.eq.s32.totalorder %s33, 0
      %p306 = por %p304, %p305
      %p307 = scmp.le.s32.totalorder 1, %s27
      %p308 = scmp.lt.s32.totalorder %s27, 3
      %p309 = pnand %p307, %p308
      %p310 = pneg %p309
      // Predicated region
      $region9: #{tpu_custom_call.1} parent=5 // pred_check
        _
      $region10: #{tpu_custom_call.1} parent=5 // pred_check_branch
        %312 = sbr.rel (%p309) target = $region12
      $region11: #{tpu_custom_call.1} parent=5 // pred_region
        %s313 = ssub.s32 %s27, 1
        // Predicated region
        $region13: #{tpu_custom_call.1} parent=11 // pred_check
          %p314 = pneg %p100
        $region14: #{tpu_custom_call.1} parent=11 // pred_check_branch
          %316 = sbr.rel (%p314) target = $region16
        $region15: #{tpu_custom_call.1} parent=11 // pred_region
          %318 = vsyncadd [#allocation3], 0
          %s319 = sshll.u32 %s2, 4
          %s320 = int_to_ptr.hbm [resolvable:$true] %s319
          %s321 = sshll.u32 [#allocation2], 4
          %s322 = int_to_ptr.vmem [resolvable:$true] %s321
          %327 = dma.hbm_to_vmem [thread:$0]  %s320, 4096, %s322, [#allocation3], 128, 128, 8
        $region16: #{tpu_custom_call.1} parent=11 // pred_fallthru
          _
        // Predicated region
        $region17: #{tpu_custom_call.1} parent=11 // pred_check
          %p328 = pneg %p121
        $region18: #{tpu_custom_call.1} parent=11 // pred_check_branch
          %330 = sbr.rel (%p328) target = $region20
        $region19: #{tpu_custom_call.1} parent=11 // pred_region
          _
        $region20: #{tpu_custom_call.1} parent=11 // pred_fallthru
          _
        // Predicated region
        $region21: #{tpu_custom_call.1} parent=11 // pred_check
          %p331 = pneg %p142
        $region22: #{tpu_custom_call.1} parent=11 // pred_check_branch
          %333 = sbr.rel (%p331) target = $region24
        $region23: #{tpu_custom_call.1} parent=11 // pred_region
          %335 = vsyncadd [#allocation6], 0
          %s336 = sshll.u32 %s4, 4
          %s337 = int_to_ptr.hbm [resolvable:$true] %s336
          %s338 = sshll.u32 [#allocation5], 4
          %s339 = int_to_ptr.vmem [resolvable:$true] %s338
          %344 = dma.hbm_to_vmem [thread:$0]  %s337, 4096, %s339, [#allocation6], 128, 128, 8
        $region24: #{tpu_custom_call.1} parent=11 // pred_fallthru
          _
        // Predicated region
        $region25: #{tpu_custom_call.1} parent=11 // pred_check
          %p345 = pneg %p163
        $region26: #{tpu_custom_call.1} parent=11 // pred_check_branch
          %347 = sbr.rel (%p345) target = $region28
        $region27: #{tpu_custom_call.1} parent=11 // pred_region
          _
        $region28: #{tpu_custom_call.1} parent=11 // pred_fallthru
          _
        // Predicated region
        $region29: #{tpu_custom_call.1} parent=11 // pred_check
          %p348 = pneg %p184
        $region30: #{tpu_custom_call.1} parent=11 // pred_check_branch
          %350 = sbr.rel (%p348) target = $region32
        $region31: #{tpu_custom_call.1} parent=11 // pred_region
          %352 = vsyncadd [#allocation6], 0
          %s353 = sshll.u32 %s6, 4
          %s354 = int_to_ptr.hbm [resolvable:$true] %s353
          %s355 = sshll.u32 [#allocation7], 4
          %s356 = int_to_ptr.vmem [resolvable:$true] %s355
          %361 = dma.hbm_to_vmem [thread:$0]  %s354, 4096, %s356, [#allocation6], 128, 128, 8
        $region32: #{tpu_custom_call.1} parent=11 // pred_fallthru
          _
        // Predicated region
        $region33: #{tpu_custom_call.1} parent=11 // pred_check
          %p362 = pneg %p205
        $region34: #{tpu_custom_call.1} parent=11 // pred_check_branch
          %364 = sbr.rel (%p362) target = $region36
        $region35: #{tpu_custom_call.1} parent=11 // pred_region
          _
        $region36: #{tpu_custom_call.1} parent=11 // pred_fallthru
          _
        // Predicated region
        $region37: #{tpu_custom_call.1} parent=11 // pred_check
          %p365 = pneg %p226
        $region38: #{tpu_custom_call.1} parent=11 // pred_check_branch
          %367 = sbr.rel (%p365) target = $region40
        $region39: #{tpu_custom_call.1} parent=11 // pred_region
          %369 = vsyncadd [#allocation9], 0
          %s370 = sshll.u32 %s8, 4
          %s371 = int_to_ptr.hbm [resolvable:$true] %s370
          %s372 = sshll.u32 [#allocation8], 4
          %s373 = int_to_ptr.vmem [resolvable:$true] %s372
          %378 = dma.hbm_to_vmem [thread:$0]  %s371, 4096, %s373, [#allocation9], 128, 128, 8
        $region40: #{tpu_custom_call.1} parent=11 // pred_fallthru
          _
        // Predicated region
        $region41: #{tpu_custom_call.1} parent=11 // pred_check
          %p379 = pneg %p247
        $region42: #{tpu_custom_call.1} parent=11 // pred_check_branch
          %381 = sbr.rel (%p379) target = $region44
        $region43: #{tpu_custom_call.1} parent=11 // pred_region
          _
        $region44: #{tpu_custom_call.1} parent=11 // pred_fallthru
          _
      $region12: #{tpu_custom_call.1} parent=5 // pred_fallthru
        _
      %p382 = scmp.lt.s32.totalorder %s27, 2
      // Predicated region
      $region45: #{tpu_custom_call.1} parent=5 // pred_check
        %p383 = pneg %p382
      $region46: #{tpu_custom_call.1} parent=5 // pred_check_branch
        %385 = sbr.rel (%p383) target = $region48
      $region47: #{tpu_custom_call.1} parent=5 // pred_region
        // Predicated region
        $region49: #{tpu_custom_call.1} parent=47 // pred_check
          %p386 = pneg %p47
        $region50: #{tpu_custom_call.1} parent=47 // pred_check_branch
          %388 = sbr.rel (%p386) target = $region52
        $region51: #{tpu_custom_call.1} parent=47 // pred_region
          %s389 = smul.u32 32, %s27
          %p390 = scmp.lt.s32.totalorder %s389, 63
          %s391 = scalar_select %p390, %s389, 63
          %s392 = smul.addr %s391, 2
          %s393 = smul.addr %s392, 4
          %s394 = scalar_lea.vmem %s0, %s393
          %s395 = smul.u32 32, %s27
        $region52: #{tpu_custom_call.1} parent=47 // pred_fallthru
          _
        // Predicated region
        $region53: #{tpu_custom_call.1} parent=47 // pred_check
          %p396 = pneg %p73
        $region54: #{tpu_custom_call.1} parent=47 // pred_check_branch
          %398 = sbr.rel (%p396) target = $region56
        $region55: #{tpu_custom_call.1} parent=47 // pred_region
          %s399 = smul.u32 32, %s27
          %p400 = scmp.lt.s32.totalorder %s399, 63
          %s401 = scalar_select %p400, %s399, 63
          %s402 = smul.addr %s401, 8
          %s403 = scalar_lea.vmem %s1, %s402
          %s404 = smul.u32 32, %s27
        $region56: #{tpu_custom_call.1} parent=47 // pred_fallthru
          _
      $region48: #{tpu_custom_call.1} parent=5 // pred_fallthru
        _
      %p405 = scmp.le.s32.totalorder 1, %s27
      %p406 = scmp.lt.s32.totalorder %s27, 3
      %p407 = pnand %p405, %p406
      %p408 = pneg %p407
      // Predicated region
      $region57: #{tpu_custom_call.1} parent=5 // pred_check
        _
      $region58: #{tpu_custom_call.1} parent=5 // pred_check_branch
        %410 = sbr.rel (%p407) target = $region60
      $region59: #{tpu_custom_call.1} parent=5 // pred_region
        %s411 = ssub.s32 %s27, 1
        // Predicated region
        $region61: #{tpu_custom_call.1} parent=59 // pred_check
          %p412 = pneg %p100
        $region62: #{tpu_custom_call.1} parent=59 // pred_check_branch
          %414 = sbr.rel (%p412) target = $region64
        $region63: #{tpu_custom_call.1} parent=59 // pred_region
          %416 = dma.done [#allocation3], 4096
        $region64: #{tpu_custom_call.1} parent=59 // pred_fallthru
          _
        // Predicated region
        $region65: #{tpu_custom_call.1} parent=59 // pred_check
          %p417 = pneg %p142
        $region66: #{tpu_custom_call.1} parent=59 // pred_check_branch
          %419 = sbr.rel (%p417) target = $region68
        $region67: #{tpu_custom_call.1} parent=59 // pred_region
          %421 = dma.done [#allocation6], 4096
        $region68: #{tpu_custom_call.1} parent=59 // pred_fallthru
          _
        // Predicated region
        $region69: #{tpu_custom_call.1} parent=59 // pred_check
          %p422 = pneg %p184
        $region70: #{tpu_custom_call.1} parent=59 // pred_check_branch
          %424 = sbr.rel (%p422) target = $region72
        $region71: #{tpu_custom_call.1} parent=59 // pred_region
          %426 = dma.done [#allocation6], 4096
        $region72: #{tpu_custom_call.1} parent=59 // pred_fallthru
          _
        // Predicated region
        $region73: #{tpu_custom_call.1} parent=59 // pred_check
          %p427 = pneg %p226
        $region74: #{tpu_custom_call.1} parent=59 // pred_check_branch
          %429 = sbr.rel (%p427) target = $region76
        $region75: #{tpu_custom_call.1} parent=59 // pred_region
          %431 = dma.done [#allocation9], 4096
        $region76: #{tpu_custom_call.1} parent=59 // pred_fallthru
          _
        %s432 = smul.u32 32, %s32
        %p433 = scmp.lt.s32.totalorder %s432, 63
        %s434 = scalar_select %p433, %s432, 63
        %s435 = smul.addr %s434, 2
        %s436 = smul.addr %s435, 4
        %s437 = scalar_lea.vmem %s0, %s436
        %p438 = pneg %p53
        %p439 = pneg %p50
        %s440 = smul.u32 32, %s32
        %p441 = scmp.lt.s32.totalorder %s440, 63
        %s442 = scalar_select %p441, %s440, 63
        %s443 = smul.addr %s442, 8
        %s444 = scalar_lea.vmem %s1, %s443
        %p445 = pneg %p79
        %p446 = pneg %p76
        %p447 = pneg %p100
        %p448 = pneg %p97
        %p449 = pneg %p121
        %p450 = pneg %p118
        %p451 = pneg %p142
        %p452 = pneg %p139
        %p453 = pneg %p163
        %p454 = pneg %p160
        %p455 = pneg %p184
        %p456 = pneg %p181
        %p457 = pneg %p205
        %p458 = pneg %p202
        %p459 = pneg %p226
        %p460 = pneg %p223
        %p461 = pneg %p247
        %p462 = pneg %p244
        %p463 = pneg %p273
        %p464 = pneg %p270
        %s465 = sand.u32 %s260, 1
        %s466 = scalar_lea.sflag [#allocation4], %s465
        %s467 = sand.u32 %s260, 1
        %s468 = smul.addr %s467, 256
        %s469 = scalar_lea.vmem [#allocation10], %s468
        %p470 = pneg %p299
        %p471 = pneg %p296
        %s472 = sand.u32 %s286, 1
        %s473 = scalar_lea.sflag [#allocation12], %s472
        %s474 = sand.u32 %s286, 1
        %s475 = smul.addr %s474, 512
        %s476 = scalar_lea.vmem [#allocation11], %s475
        %s477 = smul.u32 32, %s32
        %p478 = scmp.lt.s32.totalorder %s477, 63
        %s479 = scalar_select %p478, %s477, 63
        %s480 = smul.addr %s479, 2
        %s481 = smul.addr %s480, 4
        %s482 = scalar_lea.vmem %s0, %s481
        %s483 = smul.u32 32, %s32
        %s484 = smul.u32 32, %s32
        %p485 = scmp.lt.s32.totalorder %s484, 63
        %s486 = scalar_select %p485, %s484, 63
        %s487 = smul.addr %s486, 8
        %s488 = scalar_lea.vmem %s1, %s487
        %s489 = smul.u32 32, %s32
        %s490 = smul.u32 32, %s32
        %s491 = smul.u32 32, %s32
        %v492 = vld [vmem:[%s482] sm:$0xff]
        %v493 = vld [vmem:[%s482 + $0x8] sm:$0xff]
        %v494 = vld [vmem:[%s482 + $0x10] sm:$0xff]
        %v495 = vld [vmem:[%s482 + $0x18] sm:$0xff]
        %v496 = vld [vmem:[%s482 + $0x20] sm:$0xff]
        %v497 = vld [vmem:[%s482 + $0x28] sm:$0xff]
        %v498 = vld [vmem:[%s482 + $0x30] sm:$0xff]
        %v499 = vld [vmem:[%s482 + $0x38] sm:$0xff]
        %v500 = vld [vmem:[%s482 + $0x40] sm:$0xff]
        %v501 = vld [vmem:[%s482 + $0x48] sm:$0xff]
        %v502 = vld [vmem:[%s482 + $0x50] sm:$0xff]
        %v503 = vld [vmem:[%s482 + $0x58] sm:$0xff]
        %v504 = vld [vmem:[%s482 + $0x60] sm:$0xff]
        %v505 = vld [vmem:[%s482 + $0x68] sm:$0xff]
        %v506 = vld [vmem:[%s482 + $0x70] sm:$0xff]
        %v507 = vld [vmem:[%s482 + $0x78] sm:$0xff]
        %v508 = vld [vmem:[%s482 + $0x80] sm:$0xff]
        %v509 = vld [vmem:[%s482 + $0x88] sm:$0xff]
        %v510 = vld [vmem:[%s482 + $0x90] sm:$0xff]
        %v511 = vld [vmem:[%s482 + $0x98] sm:$0xff]
        %v512 = vld [vmem:[%s482 + $0xa0] sm:$0xff]
        %v513 = vld [vmem:[%s482 + $0xa8] sm:$0xff]
        %v514 = vld [vmem:[%s482 + $0xb0] sm:$0xff]
        %v515 = vld [vmem:[%s482 + $0xb8] sm:$0xff]
        %v516 = vld [vmem:[%s482 + $0xc0] sm:$0xff]
        %v517 = vld [vmem:[%s482 + $0xc8] sm:$0xff]
        %v518 = vld [vmem:[%s482 + $0xd0] sm:$0xff]
        %v519 = vld [vmem:[%s482 + $0xd8] sm:$0xff]
        %v520 = vld [vmem:[%s482 + $0xe0] sm:$0xff]
        %v521 = vld [vmem:[%s482 + $0xe8] sm:$0xff]
        %v522 = vld [vmem:[%s482 + $0xf0] sm:$0xff]
        %v523 = vld [vmem:[%s482 + $0xf8] sm:$0xff]
        %v524 = vld [vmem:[#allocation2] sm:$0xff]
        %v525 = vld [vmem:[#allocation2 + $0x8] sm:$0xff]
        %v526 = vld [vmem:[#allocation2 + $0x10] sm:$0xff]
        %v527 = vld [vmem:[#allocation2 + $0x18] sm:$0xff]
        %v528 = vld [vmem:[#allocation2 + $0x20] sm:$0xff]
        %v529 = vld [vmem:[#allocation2 + $0x28] sm:$0xff]
        %v530 = vld [vmem:[#allocation2 + $0x30] sm:$0xff]
        %v531 = vld [vmem:[#allocation2 + $0x38] sm:$0xff]
        %v532 = vld [vmem:[#allocation2 + $0x40] sm:$0xff]
        %v533 = vld [vmem:[#allocation2 + $0x48] sm:$0xff]
        %v534 = vld [vmem:[#allocation2 + $0x50] sm:$0xff]
        %v535 = vld [vmem:[#allocation2 + $0x58] sm:$0xff]
        %v536 = vld [vmem:[#allocation2 + $0x60] sm:$0xff]
        %v537 = vld [vmem:[#allocation2 + $0x68] sm:$0xff]
        %v538 = vld [vmem:[#allocation2 + $0x70] sm:$0xff]
        %v539 = vld [vmem:[#allocation2 + $0x78] sm:$0xff]
        %v540 = vld [vmem:[#allocation2 + $0x80] sm:$0xff]
        %v541 = vld [vmem:[#allocation2 + $0x88] sm:$0xff]
        %v542 = vld [vmem:[#allocation2 + $0x90] sm:$0xff]
        %v543 = vld [vmem:[#allocation2 + $0x98] sm:$0xff]
        %v544 = vld [vmem:[#allocation2 + $0xa0] sm:$0xff]
        %v545 = vld [vmem:[#allocation2 + $0xa8] sm:$0xff]
        %v546 = vld [vmem:[#allocation2 + $0xb0] sm:$0xff]
        %v547 = vld [vmem:[#allocation2 + $0xb8] sm:$0xff]
        %v548 = vld [vmem:[#allocation2 + $0xc0] sm:$0xff]
        %v549 = vld [vmem:[#allocation2 + $0xc8] sm:$0xff]
        %v550 = vld [vmem:[#allocation2 + $0xd0] sm:$0xff]
        %v551 = vld [vmem:[#allocation2 + $0xd8] sm:$0xff]
        %v552 = vld [vmem:[#allocation2 + $0xe0] sm:$0xff]
        %v553 = vld [vmem:[#allocation2 + $0xe8] sm:$0xff]
        %v554 = vld [vmem:[#allocation2 + $0xf0] sm:$0xff]
        %v555 = vld [vmem:[#allocation2 + $0xf8] sm:$0xff]
        %v588 = vunpack.c.l.b16 %v492
        %v589 = vunpack.c.h.b16 %v492
        %v590 = vunpack.c.l.b16 %v493
        %v591 = vunpack.c.h.b16 %v493
        %v592 = vunpack.c.l.b16 %v494
        %v593 = vunpack.c.h.b16 %v494
        %v594 = vunpack.c.l.b16 %v495
        %v595 = vunpack.c.h.b16 %v495
        %v596 = vunpack.c.l.b16 %v496
        %v597 = vunpack.c.h.b16 %v496
        %v598 = vunpack.c.l.b16 %v497
        %v599 = vunpack.c.h.b16 %v497
        %v600 = vunpack.c.l.b16 %v498
        %v601 = vunpack.c.h.b16 %v498
        %v602 = vunpack.c.l.b16 %v499
        %v603 = vunpack.c.h.b16 %v499
        %v604 = vunpack.c.l.b16 %v500
        %v605 = vunpack.c.h.b16 %v500
        %v606 = vunpack.c.l.b16 %v501
        %v607 = vunpack.c.h.b16 %v501
        %v608 = vunpack.c.l.b16 %v502
        %v609 = vunpack.c.h.b16 %v502
        %v610 = vunpack.c.l.b16 %v503
        %v611 = vunpack.c.h.b16 %v503
        %v612 = vunpack.c.l.b16 %v504
        %v613 = vunpack.c.h.b16 %v504
        %v614 = vunpack.c.l.b16 %v505
        %v615 = vunpack.c.h.b16 %v505
        %v616 = vunpack.c.l.b16 %v506
        %v617 = vunpack.c.h.b16 %v506
        %v618 = vunpack.c.l.b16 %v507
        %v619 = vunpack.c.h.b16 %v507
        %v620 = vunpack.c.l.b16 %v508
        %v621 = vunpack.c.h.b16 %v508
        %v622 = vunpack.c.l.b16 %v509
        %v623 = vunpack.c.h.b16 %v509
        %v624 = vunpack.c.l.b16 %v510
        %v625 = vunpack.c.h.b16 %v510
        %v626 = vunpack.c.l.b16 %v511
        %v627 = vunpack.c.h.b16 %v511
        %v628 = vunpack.c.l.b16 %v512
        %v629 = vunpack.c.h.b16 %v512
        %v630 = vunpack.c.l.b16 %v513
        %v631 = vunpack.c.h.b16 %v513
        %v632 = vunpack.c.l.b16 %v514
        %v633 = vunpack.c.h.b16 %v514
        %v634 = vunpack.c.l.b16 %v515
        %v635 = vunpack.c.h.b16 %v515
        %v636 = vunpack.c.l.b16 %v516
        %v637 = vunpack.c.h.b16 %v516
        %v638 = vunpack.c.l.b16 %v517
        %v639 = vunpack.c.h.b16 %v517
        %v640 = vunpack.c.l.b16 %v518
        %v641 = vunpack.c.h.b16 %v518
        %v642 = vunpack.c.l.b16 %v519
        %v643 = vunpack.c.h.b16 %v519
        %v644 = vunpack.c.l.b16 %v520
        %v645 = vunpack.c.h.b16 %v520
        %v646 = vunpack.c.l.b16 %v521
        %v647 = vunpack.c.h.b16 %v521
        %v648 = vunpack.c.l.b16 %v522
        %v649 = vunpack.c.h.b16 %v522
        %v650 = vunpack.c.l.b16 %v523
        %v651 = vunpack.c.h.b16 %v523
        %v652 = vpack.c.b16 %v590, %v588
        %v653 = vpack.c.b16 %v591, %v589
        %v654 = vpack.c.b16 %v594, %v592
        %v655 = vpack.c.b16 %v595, %v593
        %v656 = vpack.c.b16 %v598, %v596
        %v657 = vpack.c.b16 %v599, %v597
        %v658 = vpack.c.b16 %v602, %v600
        %v659 = vpack.c.b16 %v603, %v601
        %v660 = vpack.c.b16 %v606, %v604
        %v661 = vpack.c.b16 %v607, %v605
        %v662 = vpack.c.b16 %v610, %v608
        %v663 = vpack.c.b16 %v611, %v609
        %v664 = vpack.c.b16 %v614, %v612
        %v665 = vpack.c.b16 %v615, %v613
        %v666 = vpack.c.b16 %v618, %v616
        %v667 = vpack.c.b16 %v619, %v617
        %v668 = vpack.c.b16 %v622, %v620
        %v669 = vpack.c.b16 %v623, %v621
        %v670 = vpack.c.b16 %v626, %v624
        %v671 = vpack.c.b16 %v627, %v625
        %v672 = vpack.c.b16 %v630, %v628
        %v673 = vpack.c.b16 %v631, %v629
        %v674 = vpack.c.b16 %v634, %v632
        %v675 = vpack.c.b16 %v635, %v633
        %v676 = vpack.c.b16 %v638, %v636
        %v677 = vpack.c.b16 %v639, %v637
        %v678 = vpack.c.b16 %v642, %v640
        %v679 = vpack.c.b16 %v643, %v641
        %v680 = vpack.c.b16 %v646, %v644
        %v681 = vpack.c.b16 %v647, %v645
        %v682 = vpack.c.b16 %v650, %v648
        %v683 = vpack.c.b16 %v651, %v649
        %v748 = vunpack.c.l.b16 %v524
        %v749 = vunpack.c.h.b16 %v524
        %v750 = vunpack.c.l.b16 %v525
        %v751 = vunpack.c.h.b16 %v525
        %v752 = vunpack.c.l.b16 %v526
        %v753 = vunpack.c.h.b16 %v526
        %v754 = vunpack.c.l.b16 %v527
        %v755 = vunpack.c.h.b16 %v527
        %v756 = vunpack.c.l.b16 %v528
        %v757 = vunpack.c.h.b16 %v528
        %v758 = vunpack.c.l.b16 %v529
        %v759 = vunpack.c.h.b16 %v529
        %v760 = vunpack.c.l.b16 %v530
        %v761 = vunpack.c.h.b16 %v530
        %v762 = vunpack.c.l.b16 %v531
        %v763 = vunpack.c.h.b16 %v531
        %v764 = vunpack.c.l.b16 %v532
        %v765 = vunpack.c.h.b16 %v532
        %v766 = vunpack.c.l.b16 %v533
        %v767 = vunpack.c.h.b16 %v533
        %v768 = vunpack.c.l.b16 %v534
        %v769 = vunpack.c.h.b16 %v534
        %v770 = vunpack.c.l.b16 %v535
        %v771 = vunpack.c.h.b16 %v535
        %v772 = vunpack.c.l.b16 %v536
        %v773 = vunpack.c.h.b16 %v536
        %v774 = vunpack.c.l.b16 %v537
        %v775 = vunpack.c.h.b16 %v537
        %v776 = vunpack.c.l.b16 %v538
        %v777 = vunpack.c.h.b16 %v538
        %v778 = vunpack.c.l.b16 %v539
        %v779 = vunpack.c.h.b16 %v539
        %v780 = vunpack.c.l.b16 %v540
        %v781 = vunpack.c.h.b16 %v540
        %v782 = vunpack.c.l.b16 %v541
        %v783 = vunpack.c.h.b16 %v541
        %v784 = vunpack.c.l.b16 %v542
        %v785 = vunpack.c.h.b16 %v542
        %v786 = vunpack.c.l.b16 %v543
        %v787 = vunpack.c.h.b16 %v543
        %v788 = vunpack.c.l.b16 %v544
        %v789 = vunpack.c.h.b16 %v544
        %v790 = vunpack.c.l.b16 %v545
        %v791 = vunpack.c.h.b16 %v545
        %v792 = vunpack.c.l.b16 %v546
        %v793 = vunpack.c.h.b16 %v546
        %v794 = vunpack.c.l.b16 %v547
        %v795 = vunpack.c.h.b16 %v547
        %v796 = vunpack.c.l.b16 %v548
        %v797 = vunpack.c.h.b16 %v548
        %v798 = vunpack.c.l.b16 %v549
        %v799 = vunpack.c.h.b16 %v549
        %v800 = vunpack.c.l.b16 %v550
        %v801 = vunpack.c.h.b16 %v550
        %v802 = vunpack.c.l.b16 %v551
        %v803 = vunpack.c.h.b16 %v551
        %v804 = vunpack.c.l.b16 %v552
        %v805 = vunpack.c.h.b16 %v552
        %v806 = vunpack.c.l.b16 %v553
        %v807 = vunpack.c.h.b16 %v553
        %v808 = vunpack.c.l.b16 %v554
        %v809 = vunpack.c.h.b16 %v554
        %v810 = vunpack.c.l.b16 %v555
        %v811 = vunpack.c.h.b16 %v555
        %v812 = vpack.c.b16 %v750, %v748
        %v813 = vpack.c.b16 %v751, %v749
        %v814 = vpack.c.b16 %v754, %v752
        %v815 = vpack.c.b16 %v755, %v753
        %v816 = vpack.c.b16 %v758, %v756
        %v817 = vpack.c.b16 %v759, %v757
        %v818 = vpack.c.b16 %v762, %v760
        %v819 = vpack.c.b16 %v763, %v761
        %v820 = vpack.c.b16 %v766, %v764
        %v821 = vpack.c.b16 %v767, %v765
        %v822 = vpack.c.b16 %v770, %v768
        %v823 = vpack.c.b16 %v771, %v769
        %v824 = vpack.c.b16 %v774, %v772
        %v825 = vpack.c.b16 %v775, %v773
        %v826 = vpack.c.b16 %v778, %v776
        %v827 = vpack.c.b16 %v779, %v777
        %v828 = vpack.c.b16 %v782, %v780
        %v829 = vpack.c.b16 %v783, %v781
        %v830 = vpack.c.b16 %v786, %v784
        %v831 = vpack.c.b16 %v787, %v785
        %v832 = vpack.c.b16 %v790, %v788
        %v833 = vpack.c.b16 %v791, %v789
        %v834 = vpack.c.b16 %v794, %v792
        %v835 = vpack.c.b16 %v795, %v793
        %v836 = vpack.c.b16 %v798, %v796
        %v837 = vpack.c.b16 %v799, %v797
        %v838 = vpack.c.b16 %v802, %v800
        %v839 = vpack.c.b16 %v803, %v801
        %v840 = vpack.c.b16 %v806, %v804
        %v841 = vpack.c.b16 %v807, %v805
        %v842 = vpack.c.b16 %v810, %v808
        %v843 = vpack.c.b16 %v811, %v809
        %876 = vmatpush.bf16.msra.mxu0 %v826
        %877 = vmatpush.bf16.msra.mxu0 %v824
        %878 = vmatpush.bf16.msra.mxu0 %v822
        %879 = vmatpush.bf16.msra.mxu0 %v820
        %880 = vmatpush.bf16.msra.mxu0 %v818
        %881 = vmatpush.bf16.msra.mxu0 %v816
        %882 = vmatpush.bf16.msra.mxu0 %v814
        %883 = vmatpush.bf16.msra.mxu0 %v812
        %884 = vmatmul.bf16.gmra.mxu0 %v652
        %v885 = vpop.f32.mrf.mxu0
        %v886 = vadd.f32 0.0, %v885
        %v887 = vpop.f32.mrf.mxu0
        %v888 = vadd.f32 0.0, %v887
        %889 = vmatmul.bf16.gmra.mxu0 %v654
        %v890 = vpop.f32.mrf.mxu0
        %v891 = vadd.f32 0.0, %v890
        %v892 = vpop.f32.mrf.mxu0
        %v893 = vadd.f32 0.0, %v892
        %894 = vmatmul.bf16.gmra.mxu0 %v656
        %v895 = vpop.f32.mrf.mxu0
        %v896 = vadd.f32 0.0, %v895
        %v897 = vpop.f32.mrf.mxu0
        %v898 = vadd.f32 0.0, %v897
        %899 = vmatmul.bf16.gmra.mxu0 %v658
        %v900 = vpop.f32.mrf.mxu0
        %v901 = vadd.f32 0.0, %v900
        %v902 = vpop.f32.mrf.mxu0
        %v903 = vadd.f32 0.0, %v902
        %904 = vmatmul.bf16.gmra.mxu0 %v660
        %v905 = vpop.f32.mrf.mxu0
        %v906 = vadd.f32 0.0, %v905
        %v907 = vpop.f32.mrf.mxu0
        %v908 = vadd.f32 0.0, %v907
        %909 = vmatmul.bf16.gmra.mxu0 %v662
        %v910 = vpop.f32.mrf.mxu0
        %v911 = vadd.f32 0.0, %v910
        %v912 = vpop.f32.mrf.mxu0
        %v913 = vadd.f32 0.0, %v912
        %914 = vmatmul.bf16.gmra.mxu0 %v664
        %v915 = vpop.f32.mrf.mxu0
        %v916 = vadd.f32 0.0, %v915
        %v917 = vpop.f32.mrf.mxu0
        %v918 = vadd.f32 0.0, %v917
        %919 = vmatmul.bf16.gmra.mxu0 %v666
        %v920 = vpop.f32.mrf.mxu0
        %v921 = vadd.f32 0.0, %v920
        %v922 = vpop.f32.mrf.mxu0
        %v923 = vadd.f32 0.0, %v922
        %924 = vmatmul.bf16.gmra.mxu0 %v668
        %v925 = vpop.f32.mrf.mxu0
        %v926 = vadd.f32 0.0, %v925
        %v927 = vpop.f32.mrf.mxu0
        %v928 = vadd.f32 0.0, %v927
        %929 = vmatmul.bf16.gmra.mxu0 %v670
        %v930 = vpop.f32.mrf.mxu0
        %v931 = vadd.f32 0.0, %v930
        %v932 = vpop.f32.mrf.mxu0
        %v933 = vadd.f32 0.0, %v932
        %934 = vmatmul.bf16.gmra.mxu0 %v672
        %v935 = vpop.f32.mrf.mxu0
        %v936 = vadd.f32 0.0, %v935
        %v937 = vpop.f32.mrf.mxu0
        %v938 = vadd.f32 0.0, %v937
        %939 = vmatmul.bf16.gmra.mxu0 %v674
        %v940 = vpop.f32.mrf.mxu0
        %v941 = vadd.f32 0.0, %v940
        %v942 = vpop.f32.mrf.mxu0
        %v943 = vadd.f32 0.0, %v942
        %944 = vmatmul.bf16.gmra.mxu0 %v676
        %v945 = vpop.f32.mrf.mxu0
        %v946 = vadd.f32 0.0, %v945
        %v947 = vpop.f32.mrf.mxu0
        %v948 = vadd.f32 0.0, %v947
        %949 = vmatmul.bf16.gmra.mxu0 %v678
        %v950 = vpop.f32.mrf.mxu0
        %v951 = vadd.f32 0.0, %v950
        %v952 = vpop.f32.mrf.mxu0
        %v953 = vadd.f32 0.0, %v952
        %954 = vmatmul.bf16.gmra.mxu0 %v680
        %v955 = vpop.f32.mrf.mxu0
        %v956 = vadd.f32 0.0, %v955
        %v957 = vpop.f32.mrf.mxu0
        %v958 = vadd.f32 0.0, %v957
        %959 = vmatmul.bf16.gmra.mxu0 %v682
        %v960 = vpop.f32.mrf.mxu0
        %v961 = vadd.f32 0.0, %v960
        %v962 = vpop.f32.mrf.mxu0
        %v963 = vadd.f32 0.0, %v962
        %964 = vdwg.mxu0
        %965 = vmatpush.bf16.msra.mxu0 %v842
        %966 = vmatpush.bf16.msra.mxu0 %v840
        %967 = vmatpush.bf16.msra.mxu0 %v838
        %968 = vmatpush.bf16.msra.mxu0 %v836
        %969 = vmatpush.bf16.msra.mxu0 %v834
        %970 = vmatpush.bf16.msra.mxu0 %v832
        %971 = vmatpush.bf16.msra.mxu0 %v830
        %972 = vmatpush.bf16.msra.mxu0 %v828
        %973 = vmatmul.bf16.gmra.mxu0 %v653
        %v974 = vpop.f32.mrf.mxu0
        %v975 = vadd.f32 %v886, %v974
        %v976 = vpop.f32.mrf.mxu0
        %v977 = vadd.f32 %v888, %v976
        %978 = vmatmul.bf16.gmra.mxu0 %v655
        %v979 = vpop.f32.mrf.mxu0
        %v980 = vadd.f32 %v891, %v979
        %v981 = vpop.f32.mrf.mxu0
        %v982 = vadd.f32 %v893, %v981
        %983 = vmatmul.bf16.gmra.mxu0 %v657
        %v984 = vpop.f32.mrf.mxu0
        %v985 = vadd.f32 %v896, %v984
        %v986 = vpop.f32.mrf.mxu0
        %v987 = vadd.f32 %v898, %v986
        %988 = vmatmul.bf16.gmra.mxu0 %v659
        %v989 = vpop.f32.mrf.mxu0
        %v990 = vadd.f32 %v901, %v989
        %v991 = vpop.f32.mrf.mxu0
        %v992 = vadd.f32 %v903, %v991
        %993 = vmatmul.bf16.gmra.mxu0 %v661
        %v994 = vpop.f32.mrf.mxu0
        %v995 = vadd.f32 %v906, %v994
        %v996 = vpop.f32.mrf.mxu0
        %v997 = vadd.f32 %v908, %v996
        %998 = vmatmul.bf16.gmra.mxu0 %v663
        %v999 = vpop.f32.mrf.mxu0
        %v1000 = vadd.f32 %v911, %v999
        %v1001 = vpop.f32.mrf.mxu0
        %v1002 = vadd.f32 %v913, %v1001
        %1003 = vmatmul.bf16.gmra.mxu0 %v665
        %v1004 = vpop.f32.mrf.mxu0
        %v1005 = vadd.f32 %v916, %v1004
        %v1006 = vpop.f32.mrf.mxu0
        %v1007 = vadd.f32 %v918, %v1006
        %1008 = vmatmul.bf16.gmra.mxu0 %v667
        %v1009 = vpop.f32.mrf.mxu0
        %v1010 = vadd.f32 %v921, %v1009
        %v1011 = vpop.f32.mrf.mxu0
        %v1012 = vadd.f32 %v923, %v1011
        %1013 = vmatmul.bf16.gmra.mxu0 %v669
        %v1014 = vpop.f32.mrf.mxu0
        %v1015 = vadd.f32 %v926, %v1014
        %v1016 = vpop.f32.mrf.mxu0
        %v1017 = vadd.f32 %v928, %v1016
        %1018 = vmatmul.bf16.gmra.mxu0 %v671
        %v1019 = vpop.f32.mrf.mxu0
        %v1020 = vadd.f32 %v931, %v1019
        %v1021 = vpop.f32.mrf.mxu0
        %v1022 = vadd.f32 %v933, %v1021
        %1023 = vmatmul.bf16.gmra.mxu0 %v673
        %v1024 = vpop.f32.mrf.mxu0
        %v1025 = vadd.f32 %v936, %v1024
        %v1026 = vpop.f32.mrf.mxu0
        %v1027 = vadd.f32 %v938, %v1026
        %1028 = vmatmul.bf16.gmra.mxu0 %v675
        %v1029 = vpop.f32.mrf.mxu0
        %v1030 = vadd.f32 %v941, %v1029
        %v1031 = vpop.f32.mrf.mxu0
        %v1032 = vadd.f32 %v943, %v1031
        %1033 = vmatmul.bf16.gmra.mxu0 %v677
        %v1034 = vpop.f32.mrf.mxu0
        %v1035 = vadd.f32 %v946, %v1034
        %v1036 = vpop.f32.mrf.mxu0
        %v1037 = vadd.f32 %v948, %v1036
        %1038 = vmatmul.bf16.gmra.mxu0 %v679
        %v1039 = vpop.f32.mrf.mxu0
        %v1040 = vadd.f32 %v951, %v1039
        %v1041 = vpop.f32.mrf.mxu0
        %v1042 = vadd.f32 %v953, %v1041
        %1043 = vmatmul.bf16.gmra.mxu0 %v681
        %v1044 = vpop.f32.mrf.mxu0
        %v1045 = vadd.f32 %v956, %v1044
        %v1046 = vpop.f32.mrf.mxu0
        %v1047 = vadd.f32 %v958, %v1046
        %1048 = vmatmul.bf16.gmra.mxu0 %v683
        %v1049 = vpop.f32.mrf.mxu0
        %v1050 = vadd.f32 %v961, %v1049
        %v1051 = vpop.f32.mrf.mxu0
        %v1052 = vadd.f32 %v963, %v1051
        %1053 = vdwg.mxu0
        %1054 = vmatpush.bf16.msra.mxu0 %v827
        %1055 = vmatpush.bf16.msra.mxu0 %v825
        %1056 = vmatpush.bf16.msra.mxu0 %v823
        %1057 = vmatpush.bf16.msra.mxu0 %v821
        %1058 = vmatpush.bf16.msra.mxu0 %v819
        %1059 = vmatpush.bf16.msra.mxu0 %v817
        %1060 = vmatpush.bf16.msra.mxu0 %v815
        %1061 = vmatpush.bf16.msra.mxu0 %v813
        %1062 = vmatmul.bf16.gmra.mxu0 %v652
        %v1063 = vpop.f32.mrf.mxu0
        %v1064 = vadd.f32 0.0, %v1063
        %v1065 = vpop.f32.mrf.mxu0
        %v1066 = vadd.f32 0.0, %v1065
        %1067 = vmatmul.bf16.gmra.mxu0 %v654
        %v1068 = vpop.f32.mrf.mxu0
        %v1069 = vadd.f32 0.0, %v1068
        %v1070 = vpop.f32.mrf.mxu0
        %v1071 = vadd.f32 0.0, %v1070
        %1072 = vmatmul.bf16.gmra.mxu0 %v656
        %v1073 = vpop.f32.mrf.mxu0
        %v1074 = vadd.f32 0.0, %v1073
        %v1075 = vpop.f32.mrf.mxu0
        %v1076 = vadd.f32 0.0, %v1075
        %1077 = vmatmul.bf16.gmra.mxu0 %v658
        %v1078 = vpop.f32.mrf.mxu0
        %v1079 = vadd.f32 0.0, %v1078
        %v1080 = vpop.f32.mrf.mxu0
        %v1081 = vadd.f32 0.0, %v1080
        %1082 = vmatmul.bf16.gmra.mxu0 %v660
        %v1083 = vpop.f32.mrf.mxu0
        %v1084 = vadd.f32 0.0, %v1083
        %v1085 = vpop.f32.mrf.mxu0
        %v1086 = vadd.f32 0.0, %v1085
        %1087 = vmatmul.bf16.gmra.mxu0 %v662
        %v1088 = vpop.f32.mrf.mxu0
        %v1089 = vadd.f32 0.0, %v1088
        %v1090 = vpop.f32.mrf.mxu0
        %v1091 = vadd.f32 0.0, %v1090
        %1092 = vmatmul.bf16.gmra.mxu0 %v664
        %v1093 = vpop.f32.mrf.mxu0
        %v1094 = vadd.f32 0.0, %v1093
        %v1095 = vpop.f32.mrf.mxu0
        %v1096 = vadd.f32 0.0, %v1095
        %1097 = vmatmul.bf16.gmra.mxu0 %v666
        %v1098 = vpop.f32.mrf.mxu0
        %v1099 = vadd.f32 0.0, %v1098
        %v1100 = vpop.f32.mrf.mxu0
        %v1101 = vadd.f32 0.0, %v1100
        %1102 = vmatmul.bf16.gmra.mxu0 %v668
        %v1103 = vpop.f32.mrf.mxu0
        %v1104 = vadd.f32 0.0, %v1103
        %v1105 = vpop.f32.mrf.mxu0
        %v1106 = vadd.f32 0.0, %v1105
        %1107 = vmatmul.bf16.gmra.mxu0 %v670
        %v1108 = vpop.f32.mrf.mxu0
        %v1109 = vadd.f32 0.0, %v1108
        %v1110 = vpop.f32.mrf.mxu0
        %v1111 = vadd.f32 0.0, %v1110
        %1112 = vmatmul.bf16.gmra.mxu0 %v672
        %v1113 = vpop.f32.mrf.mxu0
        %v1114 = vadd.f32 0.0, %v1113
        %v1115 = vpop.f32.mrf.mxu0
        %v1116 = vadd.f32 0.0, %v1115
        %1117 = vmatmul.bf16.gmra.mxu0 %v674
        %v1118 = vpop.f32.mrf.mxu0
        %v1119 = vadd.f32 0.0, %v1118
        %v1120 = vpop.f32.mrf.mxu0
        %v1121 = vadd.f32 0.0, %v1120
        %1122 = vmatmul.bf16.gmra.mxu0 %v676
        %v1123 = vpop.f32.mrf.mxu0
        %v1124 = vadd.f32 0.0, %v1123
        %v1125 = vpop.f32.mrf.mxu0
        %v1126 = vadd.f32 0.0, %v1125
        %1127 = vmatmul.bf16.gmra.mxu0 %v678
        %v1128 = vpop.f32.mrf.mxu0
        %v1129 = vadd.f32 0.0, %v1128
        %v1130 = vpop.f32.mrf.mxu0
        %v1131 = vadd.f32 0.0, %v1130
        %1132 = vmatmul.bf16.gmra.mxu0 %v680
        %v1133 = vpop.f32.mrf.mxu0
        %v1134 = vadd.f32 0.0, %v1133
        %v1135 = vpop.f32.mrf.mxu0
        %v1136 = vadd.f32 0.0, %v1135
        %1137 = vmatmul.bf16.gmra.mxu0 %v682
        %v1138 = vpop.f32.mrf.mxu0
        %v1139 = vadd.f32 0.0, %v1138
        %v1140 = vpop.f32.mrf.mxu0
        %v1141 = vadd.f32 0.0, %v1140
        %1142 = vdwg.mxu0
        %1143 = vmatpush.bf16.msra.mxu0 %v843
        %1144 = vmatpush.bf16.msra.mxu0 %v841
        %1145 = vmatpush.bf16.msra.mxu0 %v839
        %1146 = vmatpush.bf16.msra.mxu0 %v837
        %1147 = vmatpush.bf16.msra.mxu0 %v835
        %1148 = vmatpush.bf16.msra.mxu0 %v833
        %1149 = vmatpush.bf16.msra.mxu0 %v831
        %1150 = vmatpush.bf16.msra.mxu0 %v829
        %1151 = vmatmul.bf16.gmra.mxu0 %v653
        %v1152 = vpop.f32.mrf.mxu0
        %v1153 = vadd.f32 %v1064, %v1152
        %v1154 = vpop.f32.mrf.mxu0
        %v1155 = vadd.f32 %v1066, %v1154
        %1156 = vmatmul.bf16.gmra.mxu0 %v655
        %v1157 = vpop.f32.mrf.mxu0
        %v1158 = vadd.f32 %v1069, %v1157
        %v1159 = vpop.f32.mrf.mxu0
        %v1160 = vadd.f32 %v1071, %v1159
        %1161 = vmatmul.bf16.gmra.mxu0 %v657
        %v1162 = vpop.f32.mrf.mxu0
        %v1163 = vadd.f32 %v1074, %v1162
        %v1164 = vpop.f32.mrf.mxu0
        %v1165 = vadd.f32 %v1076, %v1164
        %1166 = vmatmul.bf16.gmra.mxu0 %v659
        %v1167 = vpop.f32.mrf.mxu0
        %v1168 = vadd.f32 %v1079, %v1167
        %v1169 = vpop.f32.mrf.mxu0
        %v1170 = vadd.f32 %v1081, %v1169
        %1171 = vmatmul.bf16.gmra.mxu0 %v661
        %v1172 = vpop.f32.mrf.mxu0
        %v1173 = vadd.f32 %v1084, %v1172
        %v1174 = vpop.f32.mrf.mxu0
        %v1175 = vadd.f32 %v1086, %v1174
        %1176 = vmatmul.bf16.gmra.mxu0 %v663
        %v1177 = vpop.f32.mrf.mxu0
        %v1178 = vadd.f32 %v1089, %v1177
        %v1179 = vpop.f32.mrf.mxu0
        %v1180 = vadd.f32 %v1091, %v1179
        %1181 = vmatmul.bf16.gmra.mxu0 %v665
        %v1182 = vpop.f32.mrf.mxu0
        %v1183 = vadd.f32 %v1094, %v1182
        %v1184 = vpop.f32.mrf.mxu0
        %v1185 = vadd.f32 %v1096, %v1184
        %1186 = vmatmul.bf16.gmra.mxu0 %v667
        %v1187 = vpop.f32.mrf.mxu0
        %v1188 = vadd.f32 %v1099, %v1187
        %v1189 = vpop.f32.mrf.mxu0
        %v1190 = vadd.f32 %v1101, %v1189
        %1191 = vmatmul.bf16.gmra.mxu0 %v669
        %v1192 = vpop.f32.mrf.mxu0
        %v1193 = vadd.f32 %v1104, %v1192
        %v1194 = vpop.f32.mrf.mxu0
        %v1195 = vadd.f32 %v1106, %v1194
        %1196 = vmatmul.bf16.gmra.mxu0 %v671
        %v1197 = vpop.f32.mrf.mxu0
        %v1198 = vadd.f32 %v1109, %v1197
        %v1199 = vpop.f32.mrf.mxu0
        %v1200 = vadd.f32 %v1111, %v1199
        %1201 = vmatmul.bf16.gmra.mxu0 %v673
        %v1202 = vpop.f32.mrf.mxu0
        %v1203 = vadd.f32 %v1114, %v1202
        %v1204 = vpop.f32.mrf.mxu0
        %v1205 = vadd.f32 %v1116, %v1204
        %1206 = vmatmul.bf16.gmra.mxu0 %v675
        %v1207 = vpop.f32.mrf.mxu0
        %v1208 = vadd.f32 %v1119, %v1207
        %v1209 = vpop.f32.mrf.mxu0
        %v1210 = vadd.f32 %v1121, %v1209
        %1211 = vmatmul.bf16.gmra.mxu0 %v677
        %v1212 = vpop.f32.mrf.mxu0
        %v1213 = vadd.f32 %v1124, %v1212
        %v1214 = vpop.f32.mrf.mxu0
        %v1215 = vadd.f32 %v1126, %v1214
        %1216 = vmatmul.bf16.gmra.mxu0 %v679
        %v1217 = vpop.f32.mrf.mxu0
        %v1218 = vadd.f32 %v1129, %v1217
        %v1219 = vpop.f32.mrf.mxu0
        %v1220 = vadd.f32 %v1131, %v1219
        %1221 = vmatmul.bf16.gmra.mxu0 %v681
        %v1222 = vpop.f32.mrf.mxu0
        %v1223 = vadd.f32 %v1134, %v1222
        %v1224 = vpop.f32.mrf.mxu0
        %v1225 = vadd.f32 %v1136, %v1224
        %1226 = vmatmul.bf16.gmra.mxu0 %v683
        %v1227 = vpop.f32.mrf.mxu0
        %v1228 = vadd.f32 %v1139, %v1227
        %v1229 = vpop.f32.mrf.mxu0
        %v1230 = vadd.f32 %v1141, %v1229
        %1231 = vdwg.mxu0
        %v1232 = vld [vmem:[%s488] sm:$0xff]
        %v1233 = vld [vmem:[%s488 + $0x8] sm:$0xff]
        %v1234 = vld [vmem:[%s488 + $0x10] sm:$0xff]
        %v1235 = vld [vmem:[%s488 + $0x18] sm:$0xff]
        %v1236 = vld [vmem:[%s488 + $0x20] sm:$0xff]
        %v1237 = vld [vmem:[%s488 + $0x28] sm:$0xff]
        %v1238 = vld [vmem:[%s488 + $0x30] sm:$0xff]
        %v1239 = vld [vmem:[%s488 + $0x38] sm:$0xff]
        %v1240 = vld [vmem:[%s488 + $0x40] sm:$0xff]
        %v1241 = vld [vmem:[%s488 + $0x48] sm:$0xff]
        %v1242 = vld [vmem:[%s488 + $0x50] sm:$0xff]
        %v1243 = vld [vmem:[%s488 + $0x58] sm:$0xff]
        %v1244 = vld [vmem:[%s488 + $0x60] sm:$0xff]
        %v1245 = vld [vmem:[%s488 + $0x68] sm:$0xff]
        %v1246 = vld [vmem:[%s488 + $0x70] sm:$0xff]
        %v1247 = vld [vmem:[%s488 + $0x78] sm:$0xff]
        %v1248 = vld [vmem:[%s488 + $0x80] sm:$0xff]
        %v1249 = vld [vmem:[%s488 + $0x88] sm:$0xff]
        %v1250 = vld [vmem:[%s488 + $0x90] sm:$0xff]
        %v1251 = vld [vmem:[%s488 + $0x98] sm:$0xff]
        %v1252 = vld [vmem:[%s488 + $0xa0] sm:$0xff]
        %v1253 = vld [vmem:[%s488 + $0xa8] sm:$0xff]
        %v1254 = vld [vmem:[%s488 + $0xb0] sm:$0xff]
        %v1255 = vld [vmem:[%s488 + $0xb8] sm:$0xff]
        %v1256 = vld [vmem:[%s488 + $0xc0] sm:$0xff]
        %v1257 = vld [vmem:[%s488 + $0xc8] sm:$0xff]
        %v1258 = vld [vmem:[%s488 + $0xd0] sm:$0xff]
        %v1259 = vld [vmem:[%s488 + $0xd8] sm:$0xff]
        %v1260 = vld [vmem:[%s488 + $0xe0] sm:$0xff]
        %v1261 = vld [vmem:[%s488 + $0xe8] sm:$0xff]
        %v1262 = vld [vmem:[%s488 + $0xf0] sm:$0xff]
        %v1263 = vld [vmem:[%s488 + $0xf8] sm:$0xff]
        %1265 = vset.pattern.permute.xlu0 0
        %1266 = vperm.xlu0 %1265, %v1232
        %v1267 = vpop.permute.xlu0 %1266
        %1270 = vset.pattern.permute.xlu0 0
        %1271 = vperm.xlu0 %1270, %v1233
        %v1272 = vpop.permute.xlu0 %1271
        %1275 = vset.pattern.permute.xlu0 0
        %1276 = vperm.xlu0 %1275, %v1234
        %v1277 = vpop.permute.xlu0 %1276
        %1280 = vset.pattern.permute.xlu0 0
        %1281 = vperm.xlu0 %1280, %v1235
        %v1282 = vpop.permute.xlu0 %1281
        %1285 = vset.pattern.permute.xlu0 0
        %1286 = vperm.xlu0 %1285, %v1236
        %v1287 = vpop.permute.xlu0 %1286
        %1290 = vset.pattern.permute.xlu0 0
        %1291 = vperm.xlu0 %1290, %v1237
        %v1292 = vpop.permute.xlu0 %1291
        %1295 = vset.pattern.permute.xlu0 0
        %1296 = vperm.xlu0 %1295, %v1238
        %v1297 = vpop.permute.xlu0 %1296
        %1300 = vset.pattern.permute.xlu0 0
        %1301 = vperm.xlu0 %1300, %v1239
        %v1302 = vpop.permute.xlu0 %1301
        %1305 = vset.pattern.permute.xlu0 0
        %1306 = vperm.xlu0 %1305, %v1240
        %v1307 = vpop.permute.xlu0 %1306
        %1310 = vset.pattern.permute.xlu0 0
        %1311 = vperm.xlu0 %1310, %v1241
        %v1312 = vpop.permute.xlu0 %1311
        %1315 = vset.pattern.permute.xlu0 0
        %1316 = vperm.xlu0 %1315, %v1242
        %v1317 = vpop.permute.xlu0 %1316
        %1320 = vset.pattern.permute.xlu0 0
        %1321 = vperm.xlu0 %1320, %v1243
        %v1322 = vpop.permute.xlu0 %1321
        %1325 = vset.pattern.permute.xlu0 0
        %1326 = vperm.xlu0 %1325, %v1244
        %v1327 = vpop.permute.xlu0 %1326
        %1330 = vset.pattern.permute.xlu0 0
        %1331 = vperm.xlu0 %1330, %v1245
        %v1332 = vpop.permute.xlu0 %1331
        %1335 = vset.pattern.permute.xlu0 0
        %1336 = vperm.xlu0 %1335, %v1246
        %v1337 = vpop.permute.xlu0 %1336
        %1340 = vset.pattern.permute.xlu0 0
        %1341 = vperm.xlu0 %1340, %v1247
        %v1342 = vpop.permute.xlu0 %1341
        %1345 = vset.pattern.permute.xlu0 0
        %1346 = vperm.xlu0 %1345, %v1248
        %v1347 = vpop.permute.xlu0 %1346
        %1350 = vset.pattern.permute.xlu0 0
        %1351 = vperm.xlu0 %1350, %v1249
        %v1352 = vpop.permute.xlu0 %1351
        %1355 = vset.pattern.permute.xlu0 0
        %1356 = vperm.xlu0 %1355, %v1250
        %v1357 = vpop.permute.xlu0 %1356
        %1360 = vset.pattern.permute.xlu0 0
        %1361 = vperm.xlu0 %1360, %v1251
        %v1362 = vpop.permute.xlu0 %1361
        %1365 = vset.pattern.permute.xlu0 0
        %1366 = vperm.xlu0 %1365, %v1252
        %v1367 = vpop.permute.xlu0 %1366
        %1370 = vset.pattern.permute.xlu0 0
        %1371 = vperm.xlu0 %1370, %v1253
        %v1372 = vpop.permute.xlu0 %1371
        %1375 = vset.pattern.permute.xlu0 0
        %1376 = vperm.xlu0 %1375, %v1254
        %v1377 = vpop.permute.xlu0 %1376
        %1380 = vset.pattern.permute.xlu0 0
        %1381 = vperm.xlu0 %1380, %v1255
        %v1382 = vpop.permute.xlu0 %1381
        %1385 = vset.pattern.permute.xlu0 0
        %1386 = vperm.xlu0 %1385, %v1256
        %v1387 = vpop.permute.xlu0 %1386
        %1390 = vset.pattern.permute.xlu0 0
        %1391 = vperm.xlu0 %1390, %v1257
        %v1392 = vpop.permute.xlu0 %1391
        %1395 = vset.pattern.permute.xlu0 0
        %1396 = vperm.xlu0 %1395, %v1258
        %v1397 = vpop.permute.xlu0 %1396
        %1400 = vset.pattern.permute.xlu0 0
        %1401 = vperm.xlu0 %1400, %v1259
        %v1402 = vpop.permute.xlu0 %1401
        %1405 = vset.pattern.permute.xlu0 0
        %1406 = vperm.xlu0 %1405, %v1260
        %v1407 = vpop.permute.xlu0 %1406
        %1410 = vset.pattern.permute.xlu0 0
        %1411 = vperm.xlu0 %1410, %v1261
        %v1412 = vpop.permute.xlu0 %1411
        %1415 = vset.pattern.permute.xlu0 0
        %1416 = vperm.xlu0 %1415, %v1262
        %v1417 = vpop.permute.xlu0 %1416
        %1420 = vset.pattern.permute.xlu0 0
        %1421 = vperm.xlu0 %1420, %v1263
        %v1422 = vpop.permute.xlu0 %1421
        %v1424 = vmul.f32 %v975, %v1267
        %v1425 = vmul.f32 %v1153, %v1267
        %v1426 = vmul.f32 %v977, %v1272
        %v1427 = vmul.f32 %v1155, %v1272
        %v1428 = vmul.f32 %v980, %v1277
        %v1429 = vmul.f32 %v1158, %v1277
        %v1430 = vmul.f32 %v982, %v1282
        %v1431 = vmul.f32 %v1160, %v1282
        %v1432 = vmul.f32 %v985, %v1287
        %v1433 = vmul.f32 %v1163, %v1287
        %v1434 = vmul.f32 %v987, %v1292
        %v1435 = vmul.f32 %v1165, %v1292
        %v1436 = vmul.f32 %v990, %v1297
        %v1437 = vmul.f32 %v1168, %v1297
        %v1438 = vmul.f32 %v992, %v1302
        %v1439 = vmul.f32 %v1170, %v1302
        %v1440 = vmul.f32 %v995, %v1307
        %v1441 = vmul.f32 %v1173, %v1307
        %v1442 = vmul.f32 %v997, %v1312
        %v1443 = vmul.f32 %v1175, %v1312
        %v1444 = vmul.f32 %v1000, %v1317
        %v1445 = vmul.f32 %v1178, %v1317
        %v1446 = vmul.f32 %v1002, %v1322
        %v1447 = vmul.f32 %v1180, %v1322
        %v1448 = vmul.f32 %v1005, %v1327
        %v1449 = vmul.f32 %v1183, %v1327
        %v1450 = vmul.f32 %v1007, %v1332
        %v1451 = vmul.f32 %v1185, %v1332
        %v1452 = vmul.f32 %v1010, %v1337
        %v1453 = vmul.f32 %v1188, %v1337
        %v1454 = vmul.f32 %v1012, %v1342
        %v1455 = vmul.f32 %v1190, %v1342
        %v1456 = vmul.f32 %v1015, %v1347
        %v1457 = vmul.f32 %v1193, %v1347
        %v1458 = vmul.f32 %v1017, %v1352
        %v1459 = vmul.f32 %v1195, %v1352
        %v1460 = vmul.f32 %v1020, %v1357
        %v1461 = vmul.f32 %v1198, %v1357
        %v1462 = vmul.f32 %v1022, %v1362
        %v1463 = vmul.f32 %v1200, %v1362
        %v1464 = vmul.f32 %v1025, %v1367
        %v1465 = vmul.f32 %v1203, %v1367
        %v1466 = vmul.f32 %v1027, %v1372
        %v1467 = vmul.f32 %v1205, %v1372
        %v1468 = vmul.f32 %v1030, %v1377
        %v1469 = vmul.f32 %v1208, %v1377
        %v1470 = vmul.f32 %v1032, %v1382
        %v1471 = vmul.f32 %v1210, %v1382
        %v1472 = vmul.f32 %v1035, %v1387
        %v1473 = vmul.f32 %v1213, %v1387
        %v1474 = vmul.f32 %v1037, %v1392
        %v1475 = vmul.f32 %v1215, %v1392
        %v1476 = vmul.f32 %v1040, %v1397
        %v1477 = vmul.f32 %v1218, %v1397
        %v1478 = vmul.f32 %v1042, %v1402
        %v1479 = vmul.f32 %v1220, %v1402
        %v1480 = vmul.f32 %v1045, %v1407
        %v1481 = vmul.f32 %v1223, %v1407
        %v1482 = vmul.f32 %v1047, %v1412
        %v1483 = vmul.f32 %v1225, %v1412
        %v1484 = vmul.f32 %v1050, %v1417
        %v1485 = vmul.f32 %v1228, %v1417
        %v1486 = vmul.f32 %v1052, %v1422
        %v1487 = vmul.f32 %v1230, %v1422
        %v1488 = vld [vmem:[%s3] sm:$0x3]
        %v1490 = vperm.slane %v1488, 0
        %v1491 = vperm.slane %v1488, 1
        %v1494 = vadd.f32 %v1424, %v1490
        %v1495 = vadd.f32 %v1425, %v1491
        %v1496 = vadd.f32 %v1426, %v1490
        %v1497 = vadd.f32 %v1427, %v1491
        %v1498 = vadd.f32 %v1428, %v1490
        %v1499 = vadd.f32 %v1429, %v1491
        %v1500 = vadd.f32 %v1430, %v1490
        %v1501 = vadd.f32 %v1431, %v1491
        %v1502 = vadd.f32 %v1432, %v1490
        %v1503 = vadd.f32 %v1433, %v1491
        %v1504 = vadd.f32 %v1434, %v1490
        %v1505 = vadd.f32 %v1435, %v1491
        %v1506 = vadd.f32 %v1436, %v1490
        %v1507 = vadd.f32 %v1437, %v1491
        %v1508 = vadd.f32 %v1438, %v1490
        %v1509 = vadd.f32 %v1439, %v1491
        %v1510 = vadd.f32 %v1440, %v1490
        %v1511 = vadd.f32 %v1441, %v1491
        %v1512 = vadd.f32 %v1442, %v1490
        %v1513 = vadd.f32 %v1443, %v1491
        %v1514 = vadd.f32 %v1444, %v1490
        %v1515 = vadd.f32 %v1445, %v1491
        %v1516 = vadd.f32 %v1446, %v1490
        %v1517 = vadd.f32 %v1447, %v1491
        %v1518 = vadd.f32 %v1448, %v1490
        %v1519 = vadd.f32 %v1449, %v1491
        %v1520 = vadd.f32 %v1450, %v1490
        %v1521 = vadd.f32 %v1451, %v1491
        %v1522 = vadd.f32 %v1452, %v1490
        %v1523 = vadd.f32 %v1453, %v1491
        %v1524 = vadd.f32 %v1454, %v1490
        %v1525 = vadd.f32 %v1455, %v1491
        %v1526 = vadd.f32 %v1456, %v1490
        %v1527 = vadd.f32 %v1457, %v1491
        %v1528 = vadd.f32 %v1458, %v1490
        %v1529 = vadd.f32 %v1459, %v1491
        %v1530 = vadd.f32 %v1460, %v1490
        %v1531 = vadd.f32 %v1461, %v1491
        %v1532 = vadd.f32 %v1462, %v1490
        %v1533 = vadd.f32 %v1463, %v1491
        %v1534 = vadd.f32 %v1464, %v1490
        %v1535 = vadd.f32 %v1465, %v1491
        %v1536 = vadd.f32 %v1466, %v1490
        %v1537 = vadd.f32 %v1467, %v1491
        %v1538 = vadd.f32 %v1468, %v1490
        %v1539 = vadd.f32 %v1469, %v1491
        %v1540 = vadd.f32 %v1470, %v1490
        %v1541 = vadd.f32 %v1471, %v1491
        %v1542 = vadd.f32 %v1472, %v1490
        %v1543 = vadd.f32 %v1473, %v1491
        %v1544 = vadd.f32 %v1474, %v1490
        %v1545 = vadd.f32 %v1475, %v1491
        %v1546 = vadd.f32 %v1476, %v1490
        %v1547 = vadd.f32 %v1477, %v1491
        %v1548 = vadd.f32 %v1478, %v1490
        %v1549 = vadd.f32 %v1479, %v1491
        %v1550 = vadd.f32 %v1480, %v1490
        %v1551 = vadd.f32 %v1481, %v1491
        %v1552 = vadd.f32 %v1482, %v1490
        %v1553 = vadd.f32 %v1483, %v1491
        %v1554 = vadd.f32 %v1484, %v1490
        %v1555 = vadd.f32 %v1485, %v1491
        %v1556 = vadd.f32 %v1486, %v1490
        %v1557 = vadd.f32 %v1487, %v1491
        %v1558 = vpack.c.bf16 %v1496, %v1494
        %v1559 = vpack.c.bf16 %v1497, %v1495
        %v1560 = vpack.c.bf16 %v1500, %v1498
        %v1561 = vpack.c.bf16 %v1501, %v1499
        %v1562 = vpack.c.bf16 %v1504, %v1502
        %v1563 = vpack.c.bf16 %v1505, %v1503
        %v1564 = vpack.c.bf16 %v1508, %v1506
        %v1565 = vpack.c.bf16 %v1509, %v1507
        %v1566 = vpack.c.bf16 %v1512, %v1510
        %v1567 = vpack.c.bf16 %v1513, %v1511
        %v1568 = vpack.c.bf16 %v1516, %v1514
        %v1569 = vpack.c.bf16 %v1517, %v1515
        %v1570 = vpack.c.bf16 %v1520, %v1518
        %v1571 = vpack.c.bf16 %v1521, %v1519
        %v1572 = vpack.c.bf16 %v1524, %v1522
        %v1573 = vpack.c.bf16 %v1525, %v1523
        %v1574 = vpack.c.bf16 %v1528, %v1526
        %v1575 = vpack.c.bf16 %v1529, %v1527
        %v1576 = vpack.c.bf16 %v1532, %v1530
        %v1577 = vpack.c.bf16 %v1533, %v1531
        %v1578 = vpack.c.bf16 %v1536, %v1534
        %v1579 = vpack.c.bf16 %v1537, %v1535
        %v1580 = vpack.c.bf16 %v1540, %v1538
        %v1581 = vpack.c.bf16 %v1541, %v1539
        %v1582 = vpack.c.bf16 %v1544, %v1542
        %v1583 = vpack.c.bf16 %v1545, %v1543
        %v1584 = vpack.c.bf16 %v1548, %v1546
        %v1585 = vpack.c.bf16 %v1549, %v1547
        %v1586 = vpack.c.bf16 %v1552, %v1550
        %v1587 = vpack.c.bf16 %v1553, %v1551
        %v1588 = vpack.c.bf16 %v1556, %v1554
        %v1589 = vpack.c.bf16 %v1557, %v1555
        %v1590 = vunpack.c.l.bf16 %v1558
        %v1591 = vunpack.c.l.bf16 %v1559
        %v1592 = vunpack.c.h.bf16 %v1558
        %v1593 = vunpack.c.h.bf16 %v1559
        %v1594 = vunpack.c.l.bf16 %v1560
        %v1595 = vunpack.c.l.bf16 %v1561
        %v1596 = vunpack.c.h.bf16 %v1560
        %v1597 = vunpack.c.h.bf16 %v1561
        %v1598 = vunpack.c.l.bf16 %v1562
        %v1599 = vunpack.c.l.bf16 %v1563
        %v1600 = vunpack.c.h.bf16 %v1562
        %v1601 = vunpack.c.h.bf16 %v1563
        %v1602 = vunpack.c.l.bf16 %v1564
        %v1603 = vunpack.c.l.bf16 %v1565
        %v1604 = vunpack.c.h.bf16 %v1564
        %v1605 = vunpack.c.h.bf16 %v1565
        %v1606 = vunpack.c.l.bf16 %v1566
        %v1607 = vunpack.c.l.bf16 %v1567
        %v1608 = vunpack.c.h.bf16 %v1566
        %v1609 = vunpack.c.h.bf16 %v1567
        %v1610 = vunpack.c.l.bf16 %v1568
        %v1611 = vunpack.c.l.bf16 %v1569
        %v1612 = vunpack.c.h.bf16 %v1568
        %v1613 = vunpack.c.h.bf16 %v1569
        %v1614 = vunpack.c.l.bf16 %v1570
        %v1615 = vunpack.c.l.bf16 %v1571
        %v1616 = vunpack.c.h.bf16 %v1570
        %v1617 = vunpack.c.h.bf16 %v1571
        %v1618 = vunpack.c.l.bf16 %v1572
        %v1619 = vunpack.c.l.bf16 %v1573
        %v1620 = vunpack.c.h.bf16 %v1572
        %v1621 = vunpack.c.h.bf16 %v1573
        %v1622 = vunpack.c.l.bf16 %v1574
        %v1623 = vunpack.c.l.bf16 %v1575
        %v1624 = vunpack.c.h.bf16 %v1574
        %v1625 = vunpack.c.h.bf16 %v1575
        %v1626 = vunpack.c.l.bf16 %v1576
        %v1627 = vunpack.c.l.bf16 %v1577
        %v1628 = vunpack.c.h.bf16 %v1576
        %v1629 = vunpack.c.h.bf16 %v1577
        %v1630 = vunpack.c.l.bf16 %v1578
        %v1631 = vunpack.c.l.bf16 %v1579
        %v1632 = vunpack.c.h.bf16 %v1578
        %v1633 = vunpack.c.h.bf16 %v1579
        %v1634 = vunpack.c.l.bf16 %v1580
        %v1635 = vunpack.c.l.bf16 %v1581
        %v1636 = vunpack.c.h.bf16 %v1580
        %v1637 = vunpack.c.h.bf16 %v1581
        %v1638 = vunpack.c.l.bf16 %v1582
        %v1639 = vunpack.c.l.bf16 %v1583
        %v1640 = vunpack.c.h.bf16 %v1582
        %v1641 = vunpack.c.h.bf16 %v1583
        %v1642 = vunpack.c.l.bf16 %v1584
        %v1643 = vunpack.c.l.bf16 %v1585
        %v1644 = vunpack.c.h.bf16 %v1584
        %v1645 = vunpack.c.h.bf16 %v1585
        %v1646 = vunpack.c.l.bf16 %v1586
        %v1647 = vunpack.c.l.bf16 %v1587
        %v1648 = vunpack.c.h.bf16 %v1586
        %v1649 = vunpack.c.h.bf16 %v1587
        %v1650 = vunpack.c.l.bf16 %v1588
        %v1651 = vunpack.c.l.bf16 %v1589
        %v1652 = vunpack.c.h.bf16 %v1588
        %v1653 = vunpack.c.h.bf16 %v1589
        %v1654 = vtanh.pop %v1590
        %v1655 = vtanh.pop %v1591
        %v1656 = vtanh.pop %v1592
        %v1657 = vtanh.pop %v1593
        %v1658 = vtanh.pop %v1594
        %v1659 = vtanh.pop %v1595
        %v1660 = vtanh.pop %v1596
        %v1661 = vtanh.pop %v1597
        %v1662 = vtanh.pop %v1598
        %v1663 = vtanh.pop %v1599
        %v1664 = vtanh.pop %v1600
        %v1665 = vtanh.pop %v1601
        %v1666 = vtanh.pop %v1602
        %v1667 = vtanh.pop %v1603
        %v1668 = vtanh.pop %v1604
        %v1669 = vtanh.pop %v1605
        %v1670 = vtanh.pop %v1606
        %v1671 = vtanh.pop %v1607
        %v1672 = vtanh.pop %v1608
        %v1673 = vtanh.pop %v1609
        %v1674 = vtanh.pop %v1610
        %v1675 = vtanh.pop %v1611
        %v1676 = vtanh.pop %v1612
        %v1677 = vtanh.pop %v1613
        %v1678 = vtanh.pop %v1614
        %v1679 = vtanh.pop %v1615
        %v1680 = vtanh.pop %v1616
        %v1681 = vtanh.pop %v1617
        %v1682 = vtanh.pop %v1618
        %v1683 = vtanh.pop %v1619
        %v1684 = vtanh.pop %v1620
        %v1685 = vtanh.pop %v1621
        %v1686 = vtanh.pop %v1622
        %v1687 = vtanh.pop %v1623
        %v1688 = vtanh.pop %v1624
        %v1689 = vtanh.pop %v1625
        %v1690 = vtanh.pop %v1626
        %v1691 = vtanh.pop %v1627
        %v1692 = vtanh.pop %v1628
        %v1693 = vtanh.pop %v1629
        %v1694 = vtanh.pop %v1630
        %v1695 = vtanh.pop %v1631
        %v1696 = vtanh.pop %v1632
        %v1697 = vtanh.pop %v1633
        %v1698 = vtanh.pop %v1634
        %v1699 = vtanh.pop %v1635
        %v1700 = vtanh.pop %v1636
        %v1701 = vtanh.pop %v1637
        %v1702 = vtanh.pop %v1638
        %v1703 = vtanh.pop %v1639
        %v1704 = vtanh.pop %v1640
        %v1705 = vtanh.pop %v1641
        %v1706 = vtanh.pop %v1642
        %v1707 = vtanh.pop %v1643
        %v1708 = vtanh.pop %v1644
        %v1709 = vtanh.pop %v1645
        %v1710 = vtanh.pop %v1646
        %v1711 = vtanh.pop %v1647
        %v1712 = vtanh.pop %v1648
        %v1713 = vtanh.pop %v1649
        %v1714 = vtanh.pop %v1650
        %v1715 = vtanh.pop %v1651
        %v1716 = vtanh.pop %v1652
        %v1717 = vtanh.pop %v1653
        %v1718 = vpack.c.bf16 %v1656, %v1654
        %v1719 = vpack.c.bf16 %v1657, %v1655
        %v1720 = vpack.c.bf16 %v1660, %v1658
        %v1721 = vpack.c.bf16 %v1661, %v1659
        %v1722 = vpack.c.bf16 %v1664, %v1662
        %v1723 = vpack.c.bf16 %v1665, %v1663
        %v1724 = vpack.c.bf16 %v1668, %v1666
        %v1725 = vpack.c.bf16 %v1669, %v1667
        %v1726 = vpack.c.bf16 %v1672, %v1670
        %v1727 = vpack.c.bf16 %v1673, %v1671
        %v1728 = vpack.c.bf16 %v1676, %v1674
        %v1729 = vpack.c.bf16 %v1677, %v1675
        %v1730 = vpack.c.bf16 %v1680, %v1678
        %v1731 = vpack.c.bf16 %v1681, %v1679
        %v1732 = vpack.c.bf16 %v1684, %v1682
        %v1733 = vpack.c.bf16 %v1685, %v1683
        %v1734 = vpack.c.bf16 %v1688, %v1686
        %v1735 = vpack.c.bf16 %v1689, %v1687
        %v1736 = vpack.c.bf16 %v1692, %v1690
        %v1737 = vpack.c.bf16 %v1693, %v1691
        %v1738 = vpack.c.bf16 %v1696, %v1694
        %v1739 = vpack.c.bf16 %v1697, %v1695
        %v1740 = vpack.c.bf16 %v1700, %v1698
        %v1741 = vpack.c.bf16 %v1701, %v1699
        %v1742 = vpack.c.bf16 %v1704, %v1702
        %v1743 = vpack.c.bf16 %v1705, %v1703
        %v1744 = vpack.c.bf16 %v1708, %v1706
        %v1745 = vpack.c.bf16 %v1709, %v1707
        %v1746 = vpack.c.bf16 %v1712, %v1710
        %v1747 = vpack.c.bf16 %v1713, %v1711
        %v1748 = vpack.c.bf16 %v1716, %v1714
        %v1749 = vpack.c.bf16 %v1717, %v1715
        %v1750 = vld [vmem:[#allocation5] sm:$0xff]
        %v1751 = vld [vmem:[#allocation5 + $0x8] sm:$0xff]
        %v1752 = vld [vmem:[#allocation5 + $0x10] sm:$0xff]
        %v1753 = vld [vmem:[#allocation5 + $0x18] sm:$0xff]
        %v1754 = vld [vmem:[#allocation5 + $0x20] sm:$0xff]
        %v1755 = vld [vmem:[#allocation5 + $0x28] sm:$0xff]
        %v1756 = vld [vmem:[#allocation5 + $0x30] sm:$0xff]
        %v1757 = vld [vmem:[#allocation5 + $0x38] sm:$0xff]
        %v1758 = vld [vmem:[#allocation5 + $0x40] sm:$0xff]
        %v1759 = vld [vmem:[#allocation5 + $0x48] sm:$0xff]
        %v1760 = vld [vmem:[#allocation5 + $0x50] sm:$0xff]
        %v1761 = vld [vmem:[#allocation5 + $0x58] sm:$0xff]
        %v1762 = vld [vmem:[#allocation5 + $0x60] sm:$0xff]
        %v1763 = vld [vmem:[#allocation5 + $0x68] sm:$0xff]
        %v1764 = vld [vmem:[#allocation5 + $0x70] sm:$0xff]
        %v1765 = vld [vmem:[#allocation5 + $0x78] sm:$0xff]
        %v1766 = vld [vmem:[#allocation5 + $0x80] sm:$0xff]
        %v1767 = vld [vmem:[#allocation5 + $0x88] sm:$0xff]
        %v1768 = vld [vmem:[#allocation5 + $0x90] sm:$0xff]
        %v1769 = vld [vmem:[#allocation5 + $0x98] sm:$0xff]
        %v1770 = vld [vmem:[#allocation5 + $0xa0] sm:$0xff]
        %v1771 = vld [vmem:[#allocation5 + $0xa8] sm:$0xff]
        %v1772 = vld [vmem:[#allocation5 + $0xb0] sm:$0xff]
        %v1773 = vld [vmem:[#allocation5 + $0xb8] sm:$0xff]
        %v1774 = vld [vmem:[#allocation5 + $0xc0] sm:$0xff]
        %v1775 = vld [vmem:[#allocation5 + $0xc8] sm:$0xff]
        %v1776 = vld [vmem:[#allocation5 + $0xd0] sm:$0xff]
        %v1777 = vld [vmem:[#allocation5 + $0xd8] sm:$0xff]
        %v1778 = vld [vmem:[#allocation5 + $0xe0] sm:$0xff]
        %v1779 = vld [vmem:[#allocation5 + $0xe8] sm:$0xff]
        %v1780 = vld [vmem:[#allocation5 + $0xf0] sm:$0xff]
        %v1781 = vld [vmem:[#allocation5 + $0xf8] sm:$0xff]
        %v1782 = vld [vmem:[%s5] sm:$0x3]
        %v1784 = vperm.slane %v1782, 0
        %v1785 = vperm.slane %v1782, 1
        %v1820 = vunpack.c.l.b16 %v1750
        %v1821 = vunpack.c.h.b16 %v1750
        %v1822 = vunpack.c.l.b16 %v1751
        %v1823 = vunpack.c.h.b16 %v1751
        %v1824 = vunpack.c.l.b16 %v1752
        %v1825 = vunpack.c.h.b16 %v1752
        %v1826 = vunpack.c.l.b16 %v1753
        %v1827 = vunpack.c.h.b16 %v1753
        %v1828 = vunpack.c.l.b16 %v1754
        %v1829 = vunpack.c.h.b16 %v1754
        %v1830 = vunpack.c.l.b16 %v1755
        %v1831 = vunpack.c.h.b16 %v1755
        %v1832 = vunpack.c.l.b16 %v1756
        %v1833 = vunpack.c.h.b16 %v1756
        %v1834 = vunpack.c.l.b16 %v1757
        %v1835 = vunpack.c.h.b16 %v1757
        %v1836 = vunpack.c.l.b16 %v1758
        %v1837 = vunpack.c.h.b16 %v1758
        %v1838 = vunpack.c.l.b16 %v1759
        %v1839 = vunpack.c.h.b16 %v1759
        %v1840 = vunpack.c.l.b16 %v1760
        %v1841 = vunpack.c.h.b16 %v1760
        %v1842 = vunpack.c.l.b16 %v1761
        %v1843 = vunpack.c.h.b16 %v1761
        %v1844 = vunpack.c.l.b16 %v1762
        %v1845 = vunpack.c.h.b16 %v1762
        %v1846 = vunpack.c.l.b16 %v1763
        %v1847 = vunpack.c.h.b16 %v1763
        %v1848 = vunpack.c.l.b16 %v1764
        %v1849 = vunpack.c.h.b16 %v1764
        %v1850 = vunpack.c.l.b16 %v1765
        %v1851 = vunpack.c.h.b16 %v1765
        %v1852 = vunpack.c.l.b16 %v1766
        %v1853 = vunpack.c.h.b16 %v1766
        %v1854 = vunpack.c.l.b16 %v1767
        %v1855 = vunpack.c.h.b16 %v1767
        %v1856 = vunpack.c.l.b16 %v1768
        %v1857 = vunpack.c.h.b16 %v1768
        %v1858 = vunpack.c.l.b16 %v1769
        %v1859 = vunpack.c.h.b16 %v1769
        %v1860 = vunpack.c.l.b16 %v1770
        %v1861 = vunpack.c.h.b16 %v1770
        %v1862 = vunpack.c.l.b16 %v1771
        %v1863 = vunpack.c.h.b16 %v1771
        %v1864 = vunpack.c.l.b16 %v1772
        %v1865 = vunpack.c.h.b16 %v1772
        %v1866 = vunpack.c.l.b16 %v1773
        %v1867 = vunpack.c.h.b16 %v1773
        %v1868 = vunpack.c.l.b16 %v1774
        %v1869 = vunpack.c.h.b16 %v1774
        %v1870 = vunpack.c.l.b16 %v1775
        %v1871 = vunpack.c.h.b16 %v1775
        %v1872 = vunpack.c.l.b16 %v1776
        %v1873 = vunpack.c.h.b16 %v1776
        %v1874 = vunpack.c.l.b16 %v1777
        %v1875 = vunpack.c.h.b16 %v1777
        %v1876 = vunpack.c.l.b16 %v1778
        %v1877 = vunpack.c.h.b16 %v1778
        %v1878 = vunpack.c.l.b16 %v1779
        %v1879 = vunpack.c.h.b16 %v1779
        %v1880 = vunpack.c.l.b16 %v1780
        %v1881 = vunpack.c.h.b16 %v1780
        %v1882 = vunpack.c.l.b16 %v1781
        %v1883 = vunpack.c.h.b16 %v1781
        %v1884 = vpack.c.b16 %v1822, %v1820
        %v1885 = vpack.c.b16 %v1823, %v1821
        %v1886 = vpack.c.b16 %v1826, %v1824
        %v1887 = vpack.c.b16 %v1827, %v1825
        %v1888 = vpack.c.b16 %v1830, %v1828
        %v1889 = vpack.c.b16 %v1831, %v1829
        %v1890 = vpack.c.b16 %v1834, %v1832
        %v1891 = vpack.c.b16 %v1835, %v1833
        %v1892 = vpack.c.b16 %v1838, %v1836
        %v1893 = vpack.c.b16 %v1839, %v1837
        %v1894 = vpack.c.b16 %v1842, %v1840
        %v1895 = vpack.c.b16 %v1843, %v1841
        %v1896 = vpack.c.b16 %v1846, %v1844
        %v1897 = vpack.c.b16 %v1847, %v1845
        %v1898 = vpack.c.b16 %v1850, %v1848
        %v1899 = vpack.c.b16 %v1851, %v1849
        %v1900 = vpack.c.b16 %v1854, %v1852
        %v1901 = vpack.c.b16 %v1855, %v1853
        %v1902 = vpack.c.b16 %v1858, %v1856
        %v1903 = vpack.c.b16 %v1859, %v1857
        %v1904 = vpack.c.b16 %v1862, %v1860
        %v1905 = vpack.c.b16 %v1863, %v1861
        %v1906 = vpack.c.b16 %v1866, %v1864
        %v1907 = vpack.c.b16 %v1867, %v1865
        %v1908 = vpack.c.b16 %v1870, %v1868
        %v1909 = vpack.c.b16 %v1871, %v1869
        %v1910 = vpack.c.b16 %v1874, %v1872
        %v1911 = vpack.c.b16 %v1875, %v1873
        %v1912 = vpack.c.b16 %v1878, %v1876
        %v1913 = vpack.c.b16 %v1879, %v1877
        %v1914 = vpack.c.b16 %v1882, %v1880
        %v1915 = vpack.c.b16 %v1883, %v1881
        %1948 = vmatpush.bf16.msra.mxu0 %v1898
        %1949 = vmatpush.bf16.msra.mxu0 %v1896
        %1950 = vmatpush.bf16.msra.mxu0 %v1894
        %1951 = vmatpush.bf16.msra.mxu0 %v1892
        %1952 = vmatpush.bf16.msra.mxu0 %v1890
        %1953 = vmatpush.bf16.msra.mxu0 %v1888
        %1954 = vmatpush.bf16.msra.mxu0 %v1886
        %1955 = vmatpush.bf16.msra.mxu0 %v1884
        %1956 = vmatmul.bf16.gmra.mxu0 %v1718
        %v1957 = vpop.f32.mrf.mxu0
        %v1958 = vadd.f32 %v1784, %v1957
        %v1959 = vpop.f32.mrf.mxu0
        %v1960 = vadd.f32 %v1784, %v1959
        %1961 = vmatmul.bf16.gmra.mxu0 %v1720
        %v1962 = vpop.f32.mrf.mxu0
        %v1963 = vadd.f32 %v1784, %v1962
        %v1964 = vpop.f32.mrf.mxu0
        %v1965 = vadd.f32 %v1784, %v1964
        %1966 = vmatmul.bf16.gmra.mxu0 %v1722
        %v1967 = vpop.f32.mrf.mxu0
        %v1968 = vadd.f32 %v1784, %v1967
        %v1969 = vpop.f32.mrf.mxu0
        %v1970 = vadd.f32 %v1784, %v1969
        %1971 = vmatmul.bf16.gmra.mxu0 %v1724
        %v1972 = vpop.f32.mrf.mxu0
        %v1973 = vadd.f32 %v1784, %v1972
        %v1974 = vpop.f32.mrf.mxu0
        %v1975 = vadd.f32 %v1784, %v1974
        %1976 = vmatmul.bf16.gmra.mxu0 %v1726
        %v1977 = vpop.f32.mrf.mxu0
        %v1978 = vadd.f32 %v1784, %v1977
        %v1979 = vpop.f32.mrf.mxu0
        %v1980 = vadd.f32 %v1784, %v1979
        %1981 = vmatmul.bf16.gmra.mxu0 %v1728
        %v1982 = vpop.f32.mrf.mxu0
        %v1983 = vadd.f32 %v1784, %v1982
        %v1984 = vpop.f32.mrf.mxu0
        %v1985 = vadd.f32 %v1784, %v1984
        %1986 = vmatmul.bf16.gmra.mxu0 %v1730
        %v1987 = vpop.f32.mrf.mxu0
        %v1988 = vadd.f32 %v1784, %v1987
        %v1989 = vpop.f32.mrf.mxu0
        %v1990 = vadd.f32 %v1784, %v1989
        %1991 = vmatmul.bf16.gmra.mxu0 %v1732
        %v1992 = vpop.f32.mrf.mxu0
        %v1993 = vadd.f32 %v1784, %v1992
        %v1994 = vpop.f32.mrf.mxu0
        %v1995 = vadd.f32 %v1784, %v1994
        %1996 = vmatmul.bf16.gmra.mxu0 %v1734
        %v1997 = vpop.f32.mrf.mxu0
        %v1998 = vadd.f32 %v1784, %v1997
        %v1999 = vpop.f32.mrf.mxu0
        %v2000 = vadd.f32 %v1784, %v1999
        %2001 = vmatmul.bf16.gmra.mxu0 %v1736
        %v2002 = vpop.f32.mrf.mxu0
        %v2003 = vadd.f32 %v1784, %v2002
        %v2004 = vpop.f32.mrf.mxu0
        %v2005 = vadd.f32 %v1784, %v2004
        %2006 = vmatmul.bf16.gmra.mxu0 %v1738
        %v2007 = vpop.f32.mrf.mxu0
        %v2008 = vadd.f32 %v1784, %v2007
        %v2009 = vpop.f32.mrf.mxu0
        %v2010 = vadd.f32 %v1784, %v2009
        %2011 = vmatmul.bf16.gmra.mxu0 %v1740
        %v2012 = vpop.f32.mrf.mxu0
        %v2013 = vadd.f32 %v1784, %v2012
        %v2014 = vpop.f32.mrf.mxu0
        %v2015 = vadd.f32 %v1784, %v2014
        %2016 = vmatmul.bf16.gmra.mxu0 %v1742
        %v2017 = vpop.f32.mrf.mxu0
        %v2018 = vadd.f32 %v1784, %v2017
        %v2019 = vpop.f32.mrf.mxu0
        %v2020 = vadd.f32 %v1784, %v2019
        %2021 = vmatmul.bf16.gmra.mxu0 %v1744
        %v2022 = vpop.f32.mrf.mxu0
        %v2023 = vadd.f32 %v1784, %v2022
        %v2024 = vpop.f32.mrf.mxu0
        %v2025 = vadd.f32 %v1784, %v2024
        %2026 = vmatmul.bf16.gmra.mxu0 %v1746
        %v2027 = vpop.f32.mrf.mxu0
        %v2028 = vadd.f32 %v1784, %v2027
        %v2029 = vpop.f32.mrf.mxu0
        %v2030 = vadd.f32 %v1784, %v2029
        %2031 = vmatmul.bf16.gmra.mxu0 %v1748
        %v2032 = vpop.f32.mrf.mxu0
        %v2033 = vadd.f32 %v1784, %v2032
        %v2034 = vpop.f32.mrf.mxu0
        %v2035 = vadd.f32 %v1784, %v2034
        %2036 = vdwg.mxu0
        %2037 = vmatpush.bf16.msra.mxu0 %v1914
        %2038 = vmatpush.bf16.msra.mxu0 %v1912
        %2039 = vmatpush.bf16.msra.mxu0 %v1910
        %2040 = vmatpush.bf16.msra.mxu0 %v1908
        %2041 = vmatpush.bf16.msra.mxu0 %v1906
        %2042 = vmatpush.bf16.msra.mxu0 %v1904
        %2043 = vmatpush.bf16.msra.mxu0 %v1902
        %2044 = vmatpush.bf16.msra.mxu0 %v1900
        %2045 = vmatmul.bf16.gmra.mxu0 %v1719
        %v2046 = vpop.f32.mrf.mxu0
        %v2047 = vadd.f32 %v1958, %v2046
        %v2048 = vpop.f32.mrf.mxu0
        %v2049 = vadd.f32 %v1960, %v2048
        %2050 = vmatmul.bf16.gmra.mxu0 %v1721
        %v2051 = vpop.f32.mrf.mxu0
        %v2052 = vadd.f32 %v1963, %v2051
        %v2053 = vpop.f32.mrf.mxu0
        %v2054 = vadd.f32 %v1965, %v2053
        %2055 = vmatmul.bf16.gmra.mxu0 %v1723
        %v2056 = vpop.f32.mrf.mxu0
        %v2057 = vadd.f32 %v1968, %v2056
        %v2058 = vpop.f32.mrf.mxu0
        %v2059 = vadd.f32 %v1970, %v2058
        %2060 = vmatmul.bf16.gmra.mxu0 %v1725
        %v2061 = vpop.f32.mrf.mxu0
        %v2062 = vadd.f32 %v1973, %v2061
        %v2063 = vpop.f32.mrf.mxu0
        %v2064 = vadd.f32 %v1975, %v2063
        %2065 = vmatmul.bf16.gmra.mxu0 %v1727
        %v2066 = vpop.f32.mrf.mxu0
        %v2067 = vadd.f32 %v1978, %v2066
        %v2068 = vpop.f32.mrf.mxu0
        %v2069 = vadd.f32 %v1980, %v2068
        %2070 = vmatmul.bf16.gmra.mxu0 %v1729
        %v2071 = vpop.f32.mrf.mxu0
        %v2072 = vadd.f32 %v1983, %v2071
        %v2073 = vpop.f32.mrf.mxu0
        %v2074 = vadd.f32 %v1985, %v2073
        %2075 = vmatmul.bf16.gmra.mxu0 %v1731
        %v2076 = vpop.f32.mrf.mxu0
        %v2077 = vadd.f32 %v1988, %v2076
        %v2078 = vpop.f32.mrf.mxu0
        %v2079 = vadd.f32 %v1990, %v2078
        %2080 = vmatmul.bf16.gmra.mxu0 %v1733
        %v2081 = vpop.f32.mrf.mxu0
        %v2082 = vadd.f32 %v1993, %v2081
        %v2083 = vpop.f32.mrf.mxu0
        %v2084 = vadd.f32 %v1995, %v2083
        %2085 = vmatmul.bf16.gmra.mxu0 %v1735
        %v2086 = vpop.f32.mrf.mxu0
        %v2087 = vadd.f32 %v1998, %v2086
        %v2088 = vpop.f32.mrf.mxu0
        %v2089 = vadd.f32 %v2000, %v2088
        %2090 = vmatmul.bf16.gmra.mxu0 %v1737
        %v2091 = vpop.f32.mrf.mxu0
        %v2092 = vadd.f32 %v2003, %v2091
        %v2093 = vpop.f32.mrf.mxu0
        %v2094 = vadd.f32 %v2005, %v2093
        %2095 = vmatmul.bf16.gmra.mxu0 %v1739
        %v2096 = vpop.f32.mrf.mxu0
        %v2097 = vadd.f32 %v2008, %v2096
        %v2098 = vpop.f32.mrf.mxu0
        %v2099 = vadd.f32 %v2010, %v2098
        %2100 = vmatmul.bf16.gmra.mxu0 %v1741
        %v2101 = vpop.f32.mrf.mxu0
        %v2102 = vadd.f32 %v2013, %v2101
        %v2103 = vpop.f32.mrf.mxu0
        %v2104 = vadd.f32 %v2015, %v2103
        %2105 = vmatmul.bf16.gmra.mxu0 %v1743
        %v2106 = vpop.f32.mrf.mxu0
        %v2107 = vadd.f32 %v2018, %v2106
        %v2108 = vpop.f32.mrf.mxu0
        %v2109 = vadd.f32 %v2020, %v2108
        %2110 = vmatmul.bf16.gmra.mxu0 %v1745
        %v2111 = vpop.f32.mrf.mxu0
        %v2112 = vadd.f32 %v2023, %v2111
        %v2113 = vpop.f32.mrf.mxu0
        %v2114 = vadd.f32 %v2025, %v2113
        %2115 = vmatmul.bf16.gmra.mxu0 %v1747
        %v2116 = vpop.f32.mrf.mxu0
        %v2117 = vadd.f32 %v2028, %v2116
        %v2118 = vpop.f32.mrf.mxu0
        %v2119 = vadd.f32 %v2030, %v2118
        %2120 = vmatmul.bf16.gmra.mxu0 %v1749
        %v2121 = vpop.f32.mrf.mxu0
        %v2122 = vadd.f32 %v2033, %v2121
        %v2123 = vpop.f32.mrf.mxu0
        %v2124 = vadd.f32 %v2035, %v2123
        %2125 = vdwg.mxu0
        %2126 = vmatpush.bf16.msra.mxu0 %v1899
        %2127 = vmatpush.bf16.msra.mxu0 %v1897
        %2128 = vmatpush.bf16.msra.mxu0 %v1895
        %2129 = vmatpush.bf16.msra.mxu0 %v1893
        %2130 = vmatpush.bf16.msra.mxu0 %v1891
        %2131 = vmatpush.bf16.msra.mxu0 %v1889
        %2132 = vmatpush.bf16.msra.mxu0 %v1887
        %2133 = vmatpush.bf16.msra.mxu0 %v1885
        %2134 = vmatmul.bf16.gmra.mxu0 %v1718
        %v2135 = vpop.f32.mrf.mxu0
        %v2136 = vadd.f32 %v1785, %v2135
        %v2137 = vpop.f32.mrf.mxu0
        %v2138 = vadd.f32 %v1785, %v2137
        %2139 = vmatmul.bf16.gmra.mxu0 %v1720
        %v2140 = vpop.f32.mrf.mxu0
        %v2141 = vadd.f32 %v1785, %v2140
        %v2142 = vpop.f32.mrf.mxu0
        %v2143 = vadd.f32 %v1785, %v2142
        %2144 = vmatmul.bf16.gmra.mxu0 %v1722
        %v2145 = vpop.f32.mrf.mxu0
        %v2146 = vadd.f32 %v1785, %v2145
        %v2147 = vpop.f32.mrf.mxu0
        %v2148 = vadd.f32 %v1785, %v2147
        %2149 = vmatmul.bf16.gmra.mxu0 %v1724
        %v2150 = vpop.f32.mrf.mxu0
        %v2151 = vadd.f32 %v1785, %v2150
        %v2152 = vpop.f32.mrf.mxu0
        %v2153 = vadd.f32 %v1785, %v2152
        %2154 = vmatmul.bf16.gmra.mxu0 %v1726
        %v2155 = vpop.f32.mrf.mxu0
        %v2156 = vadd.f32 %v1785, %v2155
        %v2157 = vpop.f32.mrf.mxu0
        %v2158 = vadd.f32 %v1785, %v2157
        %2159 = vmatmul.bf16.gmra.mxu0 %v1728
        %v2160 = vpop.f32.mrf.mxu0
        %v2161 = vadd.f32 %v1785, %v2160
        %v2162 = vpop.f32.mrf.mxu0
        %v2163 = vadd.f32 %v1785, %v2162
        %2164 = vmatmul.bf16.gmra.mxu0 %v1730
        %v2165 = vpop.f32.mrf.mxu0
        %v2166 = vadd.f32 %v1785, %v2165
        %v2167 = vpop.f32.mrf.mxu0
        %v2168 = vadd.f32 %v1785, %v2167
        %2169 = vmatmul.bf16.gmra.mxu0 %v1732
        %v2170 = vpop.f32.mrf.mxu0
        %v2171 = vadd.f32 %v1785, %v2170
        %v2172 = vpop.f32.mrf.mxu0
        %v2173 = vadd.f32 %v1785, %v2172
        %2174 = vmatmul.bf16.gmra.mxu0 %v1734
        %v2175 = vpop.f32.mrf.mxu0
        %v2176 = vadd.f32 %v1785, %v2175
        %v2177 = vpop.f32.mrf.mxu0
        %v2178 = vadd.f32 %v1785, %v2177
        %2179 = vmatmul.bf16.gmra.mxu0 %v1736
        %v2180 = vpop.f32.mrf.mxu0
        %v2181 = vadd.f32 %v1785, %v2180
        %v2182 = vpop.f32.mrf.mxu0
        %v2183 = vadd.f32 %v1785, %v2182
        %2184 = vmatmul.bf16.gmra.mxu0 %v1738
        %v2185 = vpop.f32.mrf.mxu0
        %v2186 = vadd.f32 %v1785, %v2185
        %v2187 = vpop.f32.mrf.mxu0
        %v2188 = vadd.f32 %v1785, %v2187
        %2189 = vmatmul.bf16.gmra.mxu0 %v1740
        %v2190 = vpop.f32.mrf.mxu0
        %v2191 = vadd.f32 %v1785, %v2190
        %v2192 = vpop.f32.mrf.mxu0
        %v2193 = vadd.f32 %v1785, %v2192
        %2194 = vmatmul.bf16.gmra.mxu0 %v1742
        %v2195 = vpop.f32.mrf.mxu0
        %v2196 = vadd.f32 %v1785, %v2195
        %v2197 = vpop.f32.mrf.mxu0
        %v2198 = vadd.f32 %v1785, %v2197
        %2199 = vmatmul.bf16.gmra.mxu0 %v1744
        %v2200 = vpop.f32.mrf.mxu0
        %v2201 = vadd.f32 %v1785, %v2200
        %v2202 = vpop.f32.mrf.mxu0
        %v2203 = vadd.f32 %v1785, %v2202
        %2204 = vmatmul.bf16.gmra.mxu0 %v1746
        %v2205 = vpop.f32.mrf.mxu0
        %v2206 = vadd.f32 %v1785, %v2205
        %v2207 = vpop.f32.mrf.mxu0
        %v2208 = vadd.f32 %v1785, %v2207
        %2209 = vmatmul.bf16.gmra.mxu0 %v1748
        %v2210 = vpop.f32.mrf.mxu0
        %v2211 = vadd.f32 %v1785, %v2210
        %v2212 = vpop.f32.mrf.mxu0
        %v2213 = vadd.f32 %v1785, %v2212
        %2214 = vdwg.mxu0
        %2215 = vmatpush.bf16.msra.mxu0 %v1915
        %2216 = vmatpush.bf16.msra.mxu0 %v1913
        %2217 = vmatpush.bf16.msra.mxu0 %v1911
        %2218 = vmatpush.bf16.msra.mxu0 %v1909
        %2219 = vmatpush.bf16.msra.mxu0 %v1907
        %2220 = vmatpush.bf16.msra.mxu0 %v1905
        %2221 = vmatpush.bf16.msra.mxu0 %v1903
        %2222 = vmatpush.bf16.msra.mxu0 %v1901
        %2223 = vmatmul.bf16.gmra.mxu0 %v1719
        %v2224 = vpop.f32.mrf.mxu0
        %v2225 = vadd.f32 %v2136, %v2224
        %v2226 = vpop.f32.mrf.mxu0
        %v2227 = vadd.f32 %v2138, %v2226
        %2228 = vmatmul.bf16.gmra.mxu0 %v1721
        %v2229 = vpop.f32.mrf.mxu0
        %v2230 = vadd.f32 %v2141, %v2229
        %v2231 = vpop.f32.mrf.mxu0
        %v2232 = vadd.f32 %v2143, %v2231
        %2233 = vmatmul.bf16.gmra.mxu0 %v1723
        %v2234 = vpop.f32.mrf.mxu0
        %v2235 = vadd.f32 %v2146, %v2234
        %v2236 = vpop.f32.mrf.mxu0
        %v2237 = vadd.f32 %v2148, %v2236
        %2238 = vmatmul.bf16.gmra.mxu0 %v1725
        %v2239 = vpop.f32.mrf.mxu0
        %v2240 = vadd.f32 %v2151, %v2239
        %v2241 = vpop.f32.mrf.mxu0
        %v2242 = vadd.f32 %v2153, %v2241
        %2243 = vmatmul.bf16.gmra.mxu0 %v1727
        %v2244 = vpop.f32.mrf.mxu0
        %v2245 = vadd.f32 %v2156, %v2244
        %v2246 = vpop.f32.mrf.mxu0
        %v2247 = vadd.f32 %v2158, %v2246
        %2248 = vmatmul.bf16.gmra.mxu0 %v1729
        %v2249 = vpop.f32.mrf.mxu0
        %v2250 = vadd.f32 %v2161, %v2249
        %v2251 = vpop.f32.mrf.mxu0
        %v2252 = vadd.f32 %v2163, %v2251
        %2253 = vmatmul.bf16.gmra.mxu0 %v1731
        %v2254 = vpop.f32.mrf.mxu0
        %v2255 = vadd.f32 %v2166, %v2254
        %v2256 = vpop.f32.mrf.mxu0
        %v2257 = vadd.f32 %v2168, %v2256
        %2258 = vmatmul.bf16.gmra.mxu0 %v1733
        %v2259 = vpop.f32.mrf.mxu0
        %v2260 = vadd.f32 %v2171, %v2259
        %v2261 = vpop.f32.mrf.mxu0
        %v2262 = vadd.f32 %v2173, %v2261
        %2263 = vmatmul.bf16.gmra.mxu0 %v1735
        %v2264 = vpop.f32.mrf.mxu0
        %v2265 = vadd.f32 %v2176, %v2264
        %v2266 = vpop.f32.mrf.mxu0
        %v2267 = vadd.f32 %v2178, %v2266
        %2268 = vmatmul.bf16.gmra.mxu0 %v1737
        %v2269 = vpop.f32.mrf.mxu0
        %v2270 = vadd.f32 %v2181, %v2269
        %v2271 = vpop.f32.mrf.mxu0
        %v2272 = vadd.f32 %v2183, %v2271
        %2273 = vmatmul.bf16.gmra.mxu0 %v1739
        %v2274 = vpop.f32.mrf.mxu0
        %v2275 = vadd.f32 %v2186, %v2274
        %v2276 = vpop.f32.mrf.mxu0
        %v2277 = vadd.f32 %v2188, %v2276
        %2278 = vmatmul.bf16.gmra.mxu0 %v1741
        %v2279 = vpop.f32.mrf.mxu0
        %v2280 = vadd.f32 %v2191, %v2279
        %v2281 = vpop.f32.mrf.mxu0
        %v2282 = vadd.f32 %v2193, %v2281
        %2283 = vmatmul.bf16.gmra.mxu0 %v1743
        %v2284 = vpop.f32.mrf.mxu0
        %v2285 = vadd.f32 %v2196, %v2284
        %v2286 = vpop.f32.mrf.mxu0
        %v2287 = vadd.f32 %v2198, %v2286
        %2288 = vmatmul.bf16.gmra.mxu0 %v1745
        %v2289 = vpop.f32.mrf.mxu0
        %v2290 = vadd.f32 %v2201, %v2289
        %v2291 = vpop.f32.mrf.mxu0
        %v2292 = vadd.f32 %v2203, %v2291
        %2293 = vmatmul.bf16.gmra.mxu0 %v1747
        %v2294 = vpop.f32.mrf.mxu0
        %v2295 = vadd.f32 %v2206, %v2294
        %v2296 = vpop.f32.mrf.mxu0
        %v2297 = vadd.f32 %v2208, %v2296
        %2298 = vmatmul.bf16.gmra.mxu0 %v1749
        %v2299 = vpop.f32.mrf.mxu0
        %v2300 = vadd.f32 %v2211, %v2299
        %v2301 = vpop.f32.mrf.mxu0
        %v2302 = vadd.f32 %v2213, %v2301
        %2303 = vdwg.mxu0
        %2304 = vst [vmem:[%s476] sm:$0xff] %v2047
        %2305 = vst [vmem:[%s476 + $0x8] sm:$0xff] %v2225
        %2306 = vst [vmem:[%s476 + $0x10] sm:$0xff] %v2049
        %2307 = vst [vmem:[%s476 + $0x18] sm:$0xff] %v2227
        %2308 = vst [vmem:[%s476 + $0x20] sm:$0xff] %v2052
        %2309 = vst [vmem:[%s476 + $0x28] sm:$0xff] %v2230
        %2310 = vst [vmem:[%s476 + $0x30] sm:$0xff] %v2054
        %2311 = vst [vmem:[%s476 + $0x38] sm:$0xff] %v2232
        %2312 = vst [vmem:[%s476 + $0x40] sm:$0xff] %v2057
        %2313 = vst [vmem:[%s476 + $0x48] sm:$0xff] %v2235
        %2314 = vst [vmem:[%s476 + $0x50] sm:$0xff] %v2059
        %2315 = vst [vmem:[%s476 + $0x58] sm:$0xff] %v2237
        %2316 = vst [vmem:[%s476 + $0x60] sm:$0xff] %v2062
        %2317 = vst [vmem:[%s476 + $0x68] sm:$0xff] %v2240
        %2318 = vst [vmem:[%s476 + $0x70] sm:$0xff] %v2064
        %2319 = vst [vmem:[%s476 + $0x78] sm:$0xff] %v2242
        %2320 = vst [vmem:[%s476 + $0x80] sm:$0xff] %v2067
        %2321 = vst [vmem:[%s476 + $0x88] sm:$0xff] %v2245
        %2322 = vst [vmem:[%s476 + $0x90] sm:$0xff] %v2069
        %2323 = vst [vmem:[%s476 + $0x98] sm:$0xff] %v2247
        %2324 = vst [vmem:[%s476 + $0xa0] sm:$0xff] %v2072
        %2325 = vst [vmem:[%s476 + $0xa8] sm:$0xff] %v2250
        %2326 = vst [vmem:[%s476 + $0xb0] sm:$0xff] %v2074
        %2327 = vst [vmem:[%s476 + $0xb8] sm:$0xff] %v2252
        %2328 = vst [vmem:[%s476 + $0xc0] sm:$0xff] %v2077
        %2329 = vst [vmem:[%s476 + $0xc8] sm:$0xff] %v2255
        %2330 = vst [vmem:[%s476 + $0xd0] sm:$0xff] %v2079
        %2331 = vst [vmem:[%s476 + $0xd8] sm:$0xff] %v2257
        %2332 = vst [vmem:[%s476 + $0xe0] sm:$0xff] %v2082
        %2333 = vst [vmem:[%s476 + $0xe8] sm:$0xff] %v2260
        %2334 = vst [vmem:[%s476 + $0xf0] sm:$0xff] %v2084
        %2335 = vst [vmem:[%s476 + $0xf8] sm:$0xff] %v2262
        %2336 = vst [vmem:[%s476 + $0x100] sm:$0xff] %v2087
        %2337 = vst [vmem:[%s476 + $0x108] sm:$0xff] %v2265
        %2338 = vst [vmem:[%s476 + $0x110] sm:$0xff] %v2089
        %2339 = vst [vmem:[%s476 + $0x118] sm:$0xff] %v2267
        %2340 = vst [vmem:[%s476 + $0x120] sm:$0xff] %v2092
        %2341 = vst [vmem:[%s476 + $0x128] sm:$0xff] %v2270
        %2342 = vst [vmem:[%s476 + $0x130] sm:$0xff] %v2094
        %2343 = vst [vmem:[%s476 + $0x138] sm:$0xff] %v2272
        %2344 = vst [vmem:[%s476 + $0x140] sm:$0xff] %v2097
        %2345 = vst [vmem:[%s476 + $0x148] sm:$0xff] %v2275
        %2346 = vst [vmem:[%s476 + $0x150] sm:$0xff] %v2099
        %2347 = vst [vmem:[%s476 + $0x158] sm:$0xff] %v2277
        %2348 = vst [vmem:[%s476 + $0x160] sm:$0xff] %v2102
        %2349 = vst [vmem:[%s476 + $0x168] sm:$0xff] %v2280
        %2350 = vst [vmem:[%s476 + $0x170] sm:$0xff] %v2104
        %2351 = vst [vmem:[%s476 + $0x178] sm:$0xff] %v2282
        %2352 = vst [vmem:[%s476 + $0x180] sm:$0xff] %v2107
        %2353 = vst [vmem:[%s476 + $0x188] sm:$0xff] %v2285
        %2354 = vst [vmem:[%s476 + $0x190] sm:$0xff] %v2109
        %2355 = vst [vmem:[%s476 + $0x198] sm:$0xff] %v2287
        %2356 = vst [vmem:[%s476 + $0x1a0] sm:$0xff] %v2112
        %2357 = vst [vmem:[%s476 + $0x1a8] sm:$0xff] %v2290
        %2358 = vst [vmem:[%s476 + $0x1b0] sm:$0xff] %v2114
        %2359 = vst [vmem:[%s476 + $0x1b8] sm:$0xff] %v2292
        %2360 = vst [vmem:[%s476 + $0x1c0] sm:$0xff] %v2117
        %2361 = vst [vmem:[%s476 + $0x1c8] sm:$0xff] %v2295
        %2362 = vst [vmem:[%s476 + $0x1d0] sm:$0xff] %v2119
        %2363 = vst [vmem:[%s476 + $0x1d8] sm:$0xff] %v2297
        %2364 = vst [vmem:[%s476 + $0x1e0] sm:$0xff] %v2122
        %2365 = vst [vmem:[%s476 + $0x1e8] sm:$0xff] %v2300
        %2366 = vst [vmem:[%s476 + $0x1f0] sm:$0xff] %v2124
        %2367 = vst [vmem:[%s476 + $0x1f8] sm:$0xff] %v2302
        %v2368 = vld [vmem:[#allocation7] sm:$0xff]
        %v2369 = vld [vmem:[#allocation7 + $0x8] sm:$0xff]
        %v2370 = vld [vmem:[#allocation7 + $0x10] sm:$0xff]
        %v2371 = vld [vmem:[#allocation7 + $0x18] sm:$0xff]
        %v2372 = vld [vmem:[#allocation7 + $0x20] sm:$0xff]
        %v2373 = vld [vmem:[#allocation7 + $0x28] sm:$0xff]
        %v2374 = vld [vmem:[#allocation7 + $0x30] sm:$0xff]
        %v2375 = vld [vmem:[#allocation7 + $0x38] sm:$0xff]
        %v2376 = vld [vmem:[#allocation7 + $0x40] sm:$0xff]
        %v2377 = vld [vmem:[#allocation7 + $0x48] sm:$0xff]
        %v2378 = vld [vmem:[#allocation7 + $0x50] sm:$0xff]
        %v2379 = vld [vmem:[#allocation7 + $0x58] sm:$0xff]
        %v2380 = vld [vmem:[#allocation7 + $0x60] sm:$0xff]
        %v2381 = vld [vmem:[#allocation7 + $0x68] sm:$0xff]
        %v2382 = vld [vmem:[#allocation7 + $0x70] sm:$0xff]
        %v2383 = vld [vmem:[#allocation7 + $0x78] sm:$0xff]
        %v2384 = vld [vmem:[#allocation7 + $0x80] sm:$0xff]
        %v2385 = vld [vmem:[#allocation7 + $0x88] sm:$0xff]
        %v2386 = vld [vmem:[#allocation7 + $0x90] sm:$0xff]
        %v2387 = vld [vmem:[#allocation7 + $0x98] sm:$0xff]
        %v2388 = vld [vmem:[#allocation7 + $0xa0] sm:$0xff]
        %v2389 = vld [vmem:[#allocation7 + $0xa8] sm:$0xff]
        %v2390 = vld [vmem:[#allocation7 + $0xb0] sm:$0xff]
        %v2391 = vld [vmem:[#allocation7 + $0xb8] sm:$0xff]
        %v2392 = vld [vmem:[#allocation7 + $0xc0] sm:$0xff]
        %v2393 = vld [vmem:[#allocation7 + $0xc8] sm:$0xff]
        %v2394 = vld [vmem:[#allocation7 + $0xd0] sm:$0xff]
        %v2395 = vld [vmem:[#allocation7 + $0xd8] sm:$0xff]
        %v2396 = vld [vmem:[#allocation7 + $0xe0] sm:$0xff]
        %v2397 = vld [vmem:[#allocation7 + $0xe8] sm:$0xff]
        %v2398 = vld [vmem:[#allocation7 + $0xf0] sm:$0xff]
        %v2399 = vld [vmem:[#allocation7 + $0xf8] sm:$0xff]
        %v2400 = vld [vmem:[%s7] sm:$0x3]
        %v2402 = vperm.slane %v2400, 0
        %v2403 = vperm.slane %v2400, 1
        %v2438 = vunpack.c.l.b16 %v2368
        %v2439 = vunpack.c.h.b16 %v2368
        %v2440 = vunpack.c.l.b16 %v2369
        %v2441 = vunpack.c.h.b16 %v2369
        %v2442 = vunpack.c.l.b16 %v2370
        %v2443 = vunpack.c.h.b16 %v2370
        %v2444 = vunpack.c.l.b16 %v2371
        %v2445 = vunpack.c.h.b16 %v2371
        %v2446 = vunpack.c.l.b16 %v2372
        %v2447 = vunpack.c.h.b16 %v2372
        %v2448 = vunpack.c.l.b16 %v2373
        %v2449 = vunpack.c.h.b16 %v2373
        %v2450 = vunpack.c.l.b16 %v2374
        %v2451 = vunpack.c.h.b16 %v2374
        %v2452 = vunpack.c.l.b16 %v2375
        %v2453 = vunpack.c.h.b16 %v2375
        %v2454 = vunpack.c.l.b16 %v2376
        %v2455 = vunpack.c.h.b16 %v2376
        %v2456 = vunpack.c.l.b16 %v2377
        %v2457 = vunpack.c.h.b16 %v2377
        %v2458 = vunpack.c.l.b16 %v2378
        %v2459 = vunpack.c.h.b16 %v2378
        %v2460 = vunpack.c.l.b16 %v2379
        %v2461 = vunpack.c.h.b16 %v2379
        %v2462 = vunpack.c.l.b16 %v2380
        %v2463 = vunpack.c.h.b16 %v2380
        %v2464 = vunpack.c.l.b16 %v2381
        %v2465 = vunpack.c.h.b16 %v2381
        %v2466 = vunpack.c.l.b16 %v2382
        %v2467 = vunpack.c.h.b16 %v2382
        %v2468 = vunpack.c.l.b16 %v2383
        %v2469 = vunpack.c.h.b16 %v2383
        %v2470 = vunpack.c.l.b16 %v2384
        %v2471 = vunpack.c.h.b16 %v2384
        %v2472 = vunpack.c.l.b16 %v2385
        %v2473 = vunpack.c.h.b16 %v2385
        %v2474 = vunpack.c.l.b16 %v2386
        %v2475 = vunpack.c.h.b16 %v2386
        %v2476 = vunpack.c.l.b16 %v2387
        %v2477 = vunpack.c.h.b16 %v2387
        %v2478 = vunpack.c.l.b16 %v2388
        %v2479 = vunpack.c.h.b16 %v2388
        %v2480 = vunpack.c.l.b16 %v2389
        %v2481 = vunpack.c.h.b16 %v2389
        %v2482 = vunpack.c.l.b16 %v2390
        %v2483 = vunpack.c.h.b16 %v2390
        %v2484 = vunpack.c.l.b16 %v2391
        %v2485 = vunpack.c.h.b16 %v2391
        %v2486 = vunpack.c.l.b16 %v2392
        %v2487 = vunpack.c.h.b16 %v2392
        %v2488 = vunpack.c.l.b16 %v2393
        %v2489 = vunpack.c.h.b16 %v2393
        %v2490 = vunpack.c.l.b16 %v2394
        %v2491 = vunpack.c.h.b16 %v2394
        %v2492 = vunpack.c.l.b16 %v2395
        %v2493 = vunpack.c.h.b16 %v2395
        %v2494 = vunpack.c.l.b16 %v2396
        %v2495 = vunpack.c.h.b16 %v2396
        %v2496 = vunpack.c.l.b16 %v2397
        %v2497 = vunpack.c.h.b16 %v2397
        %v2498 = vunpack.c.l.b16 %v2398
        %v2499 = vunpack.c.h.b16 %v2398
        %v2500 = vunpack.c.l.b16 %v2399
        %v2501 = vunpack.c.h.b16 %v2399
        %v2502 = vpack.c.b16 %v2440, %v2438
        %v2503 = vpack.c.b16 %v2441, %v2439
        %v2504 = vpack.c.b16 %v2444, %v2442
        %v2505 = vpack.c.b16 %v2445, %v2443
        %v2506 = vpack.c.b16 %v2448, %v2446
        %v2507 = vpack.c.b16 %v2449, %v2447
        %v2508 = vpack.c.b16 %v2452, %v2450
        %v2509 = vpack.c.b16 %v2453, %v2451
        %v2510 = vpack.c.b16 %v2456, %v2454
        %v2511 = vpack.c.b16 %v2457, %v2455
        %v2512 = vpack.c.b16 %v2460, %v2458
        %v2513 = vpack.c.b16 %v2461, %v2459
        %v2514 = vpack.c.b16 %v2464, %v2462
        %v2515 = vpack.c.b16 %v2465, %v2463
        %v2516 = vpack.c.b16 %v2468, %v2466
        %v2517 = vpack.c.b16 %v2469, %v2467
        %v2518 = vpack.c.b16 %v2472, %v2470
        %v2519 = vpack.c.b16 %v2473, %v2471
        %v2520 = vpack.c.b16 %v2476, %v2474
        %v2521 = vpack.c.b16 %v2477, %v2475
        %v2522 = vpack.c.b16 %v2480, %v2478
        %v2523 = vpack.c.b16 %v2481, %v2479
        %v2524 = vpack.c.b16 %v2484, %v2482
        %v2525 = vpack.c.b16 %v2485, %v2483
        %v2526 = vpack.c.b16 %v2488, %v2486
        %v2527 = vpack.c.b16 %v2489, %v2487
        %v2528 = vpack.c.b16 %v2492, %v2490
        %v2529 = vpack.c.b16 %v2493, %v2491
        %v2530 = vpack.c.b16 %v2496, %v2494
        %v2531 = vpack.c.b16 %v2497, %v2495
        %v2532 = vpack.c.b16 %v2500, %v2498
        %v2533 = vpack.c.b16 %v2501, %v2499
        %2566 = vmatpush.bf16.msra.mxu0 %v2516
        %2567 = vmatpush.bf16.msra.mxu0 %v2514
        %2568 = vmatpush.bf16.msra.mxu0 %v2512
        %2569 = vmatpush.bf16.msra.mxu0 %v2510
        %2570 = vmatpush.bf16.msra.mxu0 %v2508
        %2571 = vmatpush.bf16.msra.mxu0 %v2506
        %2572 = vmatpush.bf16.msra.mxu0 %v2504
        %2573 = vmatpush.bf16.msra.mxu0 %v2502
        %2574 = vmatmul.bf16.gmra.mxu0 %v1718
        %v2575 = vpop.f32.mrf.mxu0
        %v2576 = vadd.f32 %v2402, %v2575
        %v2577 = vpop.f32.mrf.mxu0
        %v2578 = vadd.f32 %v2402, %v2577
        %2579 = vmatmul.bf16.gmra.mxu0 %v1720
        %v2580 = vpop.f32.mrf.mxu0
        %v2581 = vadd.f32 %v2402, %v2580
        %v2582 = vpop.f32.mrf.mxu0
        %v2583 = vadd.f32 %v2402, %v2582
        %2584 = vmatmul.bf16.gmra.mxu0 %v1722
        %v2585 = vpop.f32.mrf.mxu0
        %v2586 = vadd.f32 %v2402, %v2585
        %v2587 = vpop.f32.mrf.mxu0
        %v2588 = vadd.f32 %v2402, %v2587
        %2589 = vmatmul.bf16.gmra.mxu0 %v1724
        %v2590 = vpop.f32.mrf.mxu0
        %v2591 = vadd.f32 %v2402, %v2590
        %v2592 = vpop.f32.mrf.mxu0
        %v2593 = vadd.f32 %v2402, %v2592
        %2594 = vmatmul.bf16.gmra.mxu0 %v1726
        %v2595 = vpop.f32.mrf.mxu0
        %v2596 = vadd.f32 %v2402, %v2595
        %v2597 = vpop.f32.mrf.mxu0
        %v2598 = vadd.f32 %v2402, %v2597
        %2599 = vmatmul.bf16.gmra.mxu0 %v1728
        %v2600 = vpop.f32.mrf.mxu0
        %v2601 = vadd.f32 %v2402, %v2600
        %v2602 = vpop.f32.mrf.mxu0
        %v2603 = vadd.f32 %v2402, %v2602
        %2604 = vmatmul.bf16.gmra.mxu0 %v1730
        %v2605 = vpop.f32.mrf.mxu0
        %v2606 = vadd.f32 %v2402, %v2605
        %v2607 = vpop.f32.mrf.mxu0
        %v2608 = vadd.f32 %v2402, %v2607
        %2609 = vmatmul.bf16.gmra.mxu0 %v1732
        %v2610 = vpop.f32.mrf.mxu0
        %v2611 = vadd.f32 %v2402, %v2610
        %v2612 = vpop.f32.mrf.mxu0
        %v2613 = vadd.f32 %v2402, %v2612
        %2614 = vmatmul.bf16.gmra.mxu0 %v1734
        %v2615 = vpop.f32.mrf.mxu0
        %v2616 = vadd.f32 %v2402, %v2615
        %v2617 = vpop.f32.mrf.mxu0
        %v2618 = vadd.f32 %v2402, %v2617
        %2619 = vmatmul.bf16.gmra.mxu0 %v1736
        %v2620 = vpop.f32.mrf.mxu0
        %v2621 = vadd.f32 %v2402, %v2620
        %v2622 = vpop.f32.mrf.mxu0
        %v2623 = vadd.f32 %v2402, %v2622
        %2624 = vmatmul.bf16.gmra.mxu0 %v1738
        %v2625 = vpop.f32.mrf.mxu0
        %v2626 = vadd.f32 %v2402, %v2625
        %v2627 = vpop.f32.mrf.mxu0
        %v2628 = vadd.f32 %v2402, %v2627
        %2629 = vmatmul.bf16.gmra.mxu0 %v1740
        %v2630 = vpop.f32.mrf.mxu0
        %v2631 = vadd.f32 %v2402, %v2630
        %v2632 = vpop.f32.mrf.mxu0
        %v2633 = vadd.f32 %v2402, %v2632
        %2634 = vmatmul.bf16.gmra.mxu0 %v1742
        %v2635 = vpop.f32.mrf.mxu0
        %v2636 = vadd.f32 %v2402, %v2635
        %v2637 = vpop.f32.mrf.mxu0
        %v2638 = vadd.f32 %v2402, %v2637
        %2639 = vmatmul.bf16.gmra.mxu0 %v1744
        %v2640 = vpop.f32.mrf.mxu0
        %v2641 = vadd.f32 %v2402, %v2640
        %v2642 = vpop.f32.mrf.mxu0
        %v2643 = vadd.f32 %v2402, %v2642
        %2644 = vmatmul.bf16.gmra.mxu0 %v1746
        %v2645 = vpop.f32.mrf.mxu0
        %v2646 = vadd.f32 %v2402, %v2645
        %v2647 = vpop.f32.mrf.mxu0
        %v2648 = vadd.f32 %v2402, %v2647
        %2649 = vmatmul.bf16.gmra.mxu0 %v1748
        %v2650 = vpop.f32.mrf.mxu0
        %v2651 = vadd.f32 %v2402, %v2650
        %v2652 = vpop.f32.mrf.mxu0
        %v2653 = vadd.f32 %v2402, %v2652
        %2654 = vdwg.mxu0
        %2655 = vmatpush.bf16.msra.mxu0 %v2532
        %2656 = vmatpush.bf16.msra.mxu0 %v2530
        %2657 = vmatpush.bf16.msra.mxu0 %v2528
        %2658 = vmatpush.bf16.msra.mxu0 %v2526
        %2659 = vmatpush.bf16.msra.mxu0 %v2524
        %2660 = vmatpush.bf16.msra.mxu0 %v2522
        %2661 = vmatpush.bf16.msra.mxu0 %v2520
        %2662 = vmatpush.bf16.msra.mxu0 %v2518
        %2663 = vmatmul.bf16.gmra.mxu0 %v1719
        %v2664 = vpop.f32.mrf.mxu0
        %v2665 = vadd.f32 %v2576, %v2664
        %v2666 = vpop.f32.mrf.mxu0
        %v2667 = vadd.f32 %v2578, %v2666
        %2668 = vmatmul.bf16.gmra.mxu0 %v1721
        %v2669 = vpop.f32.mrf.mxu0
        %v2670 = vadd.f32 %v2581, %v2669
        %v2671 = vpop.f32.mrf.mxu0
        %v2672 = vadd.f32 %v2583, %v2671
        %2673 = vmatmul.bf16.gmra.mxu0 %v1723
        %v2674 = vpop.f32.mrf.mxu0
        %v2675 = vadd.f32 %v2586, %v2674
        %v2676 = vpop.f32.mrf.mxu0
        %v2677 = vadd.f32 %v2588, %v2676
        %2678 = vmatmul.bf16.gmra.mxu0 %v1725
        %v2679 = vpop.f32.mrf.mxu0
        %v2680 = vadd.f32 %v2591, %v2679
        %v2681 = vpop.f32.mrf.mxu0
        %v2682 = vadd.f32 %v2593, %v2681
        %2683 = vmatmul.bf16.gmra.mxu0 %v1727
        %v2684 = vpop.f32.mrf.mxu0
        %v2685 = vadd.f32 %v2596, %v2684
        %v2686 = vpop.f32.mrf.mxu0
        %v2687 = vadd.f32 %v2598, %v2686
        %2688 = vmatmul.bf16.gmra.mxu0 %v1729
        %v2689 = vpop.f32.mrf.mxu0
        %v2690 = vadd.f32 %v2601, %v2689
        %v2691 = vpop.f32.mrf.mxu0
        %v2692 = vadd.f32 %v2603, %v2691
        %2693 = vmatmul.bf16.gmra.mxu0 %v1731
        %v2694 = vpop.f32.mrf.mxu0
        %v2695 = vadd.f32 %v2606, %v2694
        %v2696 = vpop.f32.mrf.mxu0
        %v2697 = vadd.f32 %v2608, %v2696
        %2698 = vmatmul.bf16.gmra.mxu0 %v1733
        %v2699 = vpop.f32.mrf.mxu0
        %v2700 = vadd.f32 %v2611, %v2699
        %v2701 = vpop.f32.mrf.mxu0
        %v2702 = vadd.f32 %v2613, %v2701
        %2703 = vmatmul.bf16.gmra.mxu0 %v1735
        %v2704 = vpop.f32.mrf.mxu0
        %v2705 = vadd.f32 %v2616, %v2704
        %v2706 = vpop.f32.mrf.mxu0
        %v2707 = vadd.f32 %v2618, %v2706
        %2708 = vmatmul.bf16.gmra.mxu0 %v1737
        %v2709 = vpop.f32.mrf.mxu0
        %v2710 = vadd.f32 %v2621, %v2709
        %v2711 = vpop.f32.mrf.mxu0
        %v2712 = vadd.f32 %v2623, %v2711
        %2713 = vmatmul.bf16.gmra.mxu0 %v1739
        %v2714 = vpop.f32.mrf.mxu0
        %v2715 = vadd.f32 %v2626, %v2714
        %v2716 = vpop.f32.mrf.mxu0
        %v2717 = vadd.f32 %v2628, %v2716
        %2718 = vmatmul.bf16.gmra.mxu0 %v1741
        %v2719 = vpop.f32.mrf.mxu0
        %v2720 = vadd.f32 %v2631, %v2719
        %v2721 = vpop.f32.mrf.mxu0
        %v2722 = vadd.f32 %v2633, %v2721
        %2723 = vmatmul.bf16.gmra.mxu0 %v1743
        %v2724 = vpop.f32.mrf.mxu0
        %v2725 = vadd.f32 %v2636, %v2724
        %v2726 = vpop.f32.mrf.mxu0
        %v2727 = vadd.f32 %v2638, %v2726
        %2728 = vmatmul.bf16.gmra.mxu0 %v1745
        %v2729 = vpop.f32.mrf.mxu0
        %v2730 = vadd.f32 %v2641, %v2729
        %v2731 = vpop.f32.mrf.mxu0
        %v2732 = vadd.f32 %v2643, %v2731
        %2733 = vmatmul.bf16.gmra.mxu0 %v1747
        %v2734 = vpop.f32.mrf.mxu0
        %v2735 = vadd.f32 %v2646, %v2734
        %v2736 = vpop.f32.mrf.mxu0
        %v2737 = vadd.f32 %v2648, %v2736
        %2738 = vmatmul.bf16.gmra.mxu0 %v1749
        %v2739 = vpop.f32.mrf.mxu0
        %v2740 = vadd.f32 %v2651, %v2739
        %v2741 = vpop.f32.mrf.mxu0
        %v2742 = vadd.f32 %v2653, %v2741
        %2743 = vdwg.mxu0
        %2744 = vmatpush.bf16.msra.mxu0 %v2517
        %2745 = vmatpush.bf16.msra.mxu0 %v2515
        %2746 = vmatpush.bf16.msra.mxu0 %v2513
        %2747 = vmatpush.bf16.msra.mxu0 %v2511
        %2748 = vmatpush.bf16.msra.mxu0 %v2509
        %2749 = vmatpush.bf16.msra.mxu0 %v2507
        %2750 = vmatpush.bf16.msra.mxu0 %v2505
        %2751 = vmatpush.bf16.msra.mxu0 %v2503
        %2752 = vmatmul.bf16.gmra.mxu0 %v1718
        %v2753 = vpop.f32.mrf.mxu0
        %v2754 = vadd.f32 %v2403, %v2753
        %v2755 = vpop.f32.mrf.mxu0
        %v2756 = vadd.f32 %v2403, %v2755
        %2757 = vmatmul.bf16.gmra.mxu0 %v1720
        %v2758 = vpop.f32.mrf.mxu0
        %v2759 = vadd.f32 %v2403, %v2758
        %v2760 = vpop.f32.mrf.mxu0
        %v2761 = vadd.f32 %v2403, %v2760
        %2762 = vmatmul.bf16.gmra.mxu0 %v1722
        %v2763 = vpop.f32.mrf.mxu0
        %v2764 = vadd.f32 %v2403, %v2763
        %v2765 = vpop.f32.mrf.mxu0
        %v2766 = vadd.f32 %v2403, %v2765
        %2767 = vmatmul.bf16.gmra.mxu0 %v1724
        %v2768 = vpop.f32.mrf.mxu0
        %v2769 = vadd.f32 %v2403, %v2768
        %v2770 = vpop.f32.mrf.mxu0
        %v2771 = vadd.f32 %v2403, %v2770
        %2772 = vmatmul.bf16.gmra.mxu0 %v1726
        %v2773 = vpop.f32.mrf.mxu0
        %v2774 = vadd.f32 %v2403, %v2773
        %v2775 = vpop.f32.mrf.mxu0
        %v2776 = vadd.f32 %v2403, %v2775
        %2777 = vmatmul.bf16.gmra.mxu0 %v1728
        %v2778 = vpop.f32.mrf.mxu0
        %v2779 = vadd.f32 %v2403, %v2778
        %v2780 = vpop.f32.mrf.mxu0
        %v2781 = vadd.f32 %v2403, %v2780
        %2782 = vmatmul.bf16.gmra.mxu0 %v1730
        %v2783 = vpop.f32.mrf.mxu0
        %v2784 = vadd.f32 %v2403, %v2783
        %v2785 = vpop.f32.mrf.mxu0
        %v2786 = vadd.f32 %v2403, %v2785
        %2787 = vmatmul.bf16.gmra.mxu0 %v1732
        %v2788 = vpop.f32.mrf.mxu0
        %v2789 = vadd.f32 %v2403, %v2788
        %v2790 = vpop.f32.mrf.mxu0
        %v2791 = vadd.f32 %v2403, %v2790
        %2792 = vmatmul.bf16.gmra.mxu0 %v1734
        %v2793 = vpop.f32.mrf.mxu0
        %v2794 = vadd.f32 %v2403, %v2793
        %v2795 = vpop.f32.mrf.mxu0
        %v2796 = vadd.f32 %v2403, %v2795
        %2797 = vmatmul.bf16.gmra.mxu0 %v1736
        %v2798 = vpop.f32.mrf.mxu0
        %v2799 = vadd.f32 %v2403, %v2798
        %v2800 = vpop.f32.mrf.mxu0
        %v2801 = vadd.f32 %v2403, %v2800
        %2802 = vmatmul.bf16.gmra.mxu0 %v1738
        %v2803 = vpop.f32.mrf.mxu0
        %v2804 = vadd.f32 %v2403, %v2803
        %v2805 = vpop.f32.mrf.mxu0
        %v2806 = vadd.f32 %v2403, %v2805
        %2807 = vmatmul.bf16.gmra.mxu0 %v1740
        %v2808 = vpop.f32.mrf.mxu0
        %v2809 = vadd.f32 %v2403, %v2808
        %v2810 = vpop.f32.mrf.mxu0
        %v2811 = vadd.f32 %v2403, %v2810
        %2812 = vmatmul.bf16.gmra.mxu0 %v1742
        %v2813 = vpop.f32.mrf.mxu0
        %v2814 = vadd.f32 %v2403, %v2813
        %v2815 = vpop.f32.mrf.mxu0
        %v2816 = vadd.f32 %v2403, %v2815
        %2817 = vmatmul.bf16.gmra.mxu0 %v1744
        %v2818 = vpop.f32.mrf.mxu0
        %v2819 = vadd.f32 %v2403, %v2818
        %v2820 = vpop.f32.mrf.mxu0
        %v2821 = vadd.f32 %v2403, %v2820
        %2822 = vmatmul.bf16.gmra.mxu0 %v1746
        %v2823 = vpop.f32.mrf.mxu0
        %v2824 = vadd.f32 %v2403, %v2823
        %v2825 = vpop.f32.mrf.mxu0
        %v2826 = vadd.f32 %v2403, %v2825
        %2827 = vmatmul.bf16.gmra.mxu0 %v1748
        %v2828 = vpop.f32.mrf.mxu0
        %v2829 = vadd.f32 %v2403, %v2828
        %v2830 = vpop.f32.mrf.mxu0
        %v2831 = vadd.f32 %v2403, %v2830
        %2832 = vdwg.mxu0
        %2833 = vmatpush.bf16.msra.mxu0 %v2533
        %2834 = vmatpush.bf16.msra.mxu0 %v2531
        %2835 = vmatpush.bf16.msra.mxu0 %v2529
        %2836 = vmatpush.bf16.msra.mxu0 %v2527
        %2837 = vmatpush.bf16.msra.mxu0 %v2525
        %2838 = vmatpush.bf16.msra.mxu0 %v2523
        %2839 = vmatpush.bf16.msra.mxu0 %v2521
        %2840 = vmatpush.bf16.msra.mxu0 %v2519
        %2841 = vmatmul.bf16.gmra.mxu0 %v1719
        %v2842 = vpop.f32.mrf.mxu0
        %v2843 = vadd.f32 %v2754, %v2842
        %v2844 = vpop.f32.mrf.mxu0
        %v2845 = vadd.f32 %v2756, %v2844
        %2846 = vmatmul.bf16.gmra.mxu0 %v1721
        %v2847 = vpop.f32.mrf.mxu0
        %v2848 = vadd.f32 %v2759, %v2847
        %v2849 = vpop.f32.mrf.mxu0
        %v2850 = vadd.f32 %v2761, %v2849
        %2851 = vmatmul.bf16.gmra.mxu0 %v1723
        %v2852 = vpop.f32.mrf.mxu0
        %v2853 = vadd.f32 %v2764, %v2852
        %v2854 = vpop.f32.mrf.mxu0
        %v2855 = vadd.f32 %v2766, %v2854
        %2856 = vmatmul.bf16.gmra.mxu0 %v1725
        %v2857 = vpop.f32.mrf.mxu0
        %v2858 = vadd.f32 %v2769, %v2857
        %v2859 = vpop.f32.mrf.mxu0
        %v2860 = vadd.f32 %v2771, %v2859
        %2861 = vmatmul.bf16.gmra.mxu0 %v1727
        %v2862 = vpop.f32.mrf.mxu0
        %v2863 = vadd.f32 %v2774, %v2862
        %v2864 = vpop.f32.mrf.mxu0
        %v2865 = vadd.f32 %v2776, %v2864
        %2866 = vmatmul.bf16.gmra.mxu0 %v1729
        %v2867 = vpop.f32.mrf.mxu0
        %v2868 = vadd.f32 %v2779, %v2867
        %v2869 = vpop.f32.mrf.mxu0
        %v2870 = vadd.f32 %v2781, %v2869
        %2871 = vmatmul.bf16.gmra.mxu0 %v1731
        %v2872 = vpop.f32.mrf.mxu0
        %v2873 = vadd.f32 %v2784, %v2872
        %v2874 = vpop.f32.mrf.mxu0
        %v2875 = vadd.f32 %v2786, %v2874
        %2876 = vmatmul.bf16.gmra.mxu0 %v1733
        %v2877 = vpop.f32.mrf.mxu0
        %v2878 = vadd.f32 %v2789, %v2877
        %v2879 = vpop.f32.mrf.mxu0
        %v2880 = vadd.f32 %v2791, %v2879
        %2881 = vmatmul.bf16.gmra.mxu0 %v1735
        %v2882 = vpop.f32.mrf.mxu0
        %v2883 = vadd.f32 %v2794, %v2882
        %v2884 = vpop.f32.mrf.mxu0
        %v2885 = vadd.f32 %v2796, %v2884
        %2886 = vmatmul.bf16.gmra.mxu0 %v1737
        %v2887 = vpop.f32.mrf.mxu0
        %v2888 = vadd.f32 %v2799, %v2887
        %v2889 = vpop.f32.mrf.mxu0
        %v2890 = vadd.f32 %v2801, %v2889
        %2891 = vmatmul.bf16.gmra.mxu0 %v1739
        %v2892 = vpop.f32.mrf.mxu0
        %v2893 = vadd.f32 %v2804, %v2892
        %v2894 = vpop.f32.mrf.mxu0
        %v2895 = vadd.f32 %v2806, %v2894
        %2896 = vmatmul.bf16.gmra.mxu0 %v1741
        %v2897 = vpop.f32.mrf.mxu0
        %v2898 = vadd.f32 %v2809, %v2897
        %v2899 = vpop.f32.mrf.mxu0
        %v2900 = vadd.f32 %v2811, %v2899
        %2901 = vmatmul.bf16.gmra.mxu0 %v1743
        %v2902 = vpop.f32.mrf.mxu0
        %v2903 = vadd.f32 %v2814, %v2902
        %v2904 = vpop.f32.mrf.mxu0
        %v2905 = vadd.f32 %v2816, %v2904
        %2906 = vmatmul.bf16.gmra.mxu0 %v1745
        %v2907 = vpop.f32.mrf.mxu0
        %v2908 = vadd.f32 %v2819, %v2907
        %v2909 = vpop.f32.mrf.mxu0
        %v2910 = vadd.f32 %v2821, %v2909
        %2911 = vmatmul.bf16.gmra.mxu0 %v1747
        %v2912 = vpop.f32.mrf.mxu0
        %v2913 = vadd.f32 %v2824, %v2912
        %v2914 = vpop.f32.mrf.mxu0
        %v2915 = vadd.f32 %v2826, %v2914
        %2916 = vmatmul.bf16.gmra.mxu0 %v1749
        %v2917 = vpop.f32.mrf.mxu0
        %v2918 = vadd.f32 %v2829, %v2917
        %v2919 = vpop.f32.mrf.mxu0
        %v2920 = vadd.f32 %v2831, %v2919
        %2921 = vdwg.mxu0
        %v2922 = vpack.c.bf16 %v2667, %v2665
        %v2923 = vpack.c.bf16 %v2845, %v2843
        %v2924 = vpack.c.bf16 %v2672, %v2670
        %v2925 = vpack.c.bf16 %v2850, %v2848
        %v2926 = vpack.c.bf16 %v2677, %v2675
        %v2927 = vpack.c.bf16 %v2855, %v2853
        %v2928 = vpack.c.bf16 %v2682, %v2680
        %v2929 = vpack.c.bf16 %v2860, %v2858
        %v2930 = vpack.c.bf16 %v2687, %v2685
        %v2931 = vpack.c.bf16 %v2865, %v2863
        %v2932 = vpack.c.bf16 %v2692, %v2690
        %v2933 = vpack.c.bf16 %v2870, %v2868
        %v2934 = vpack.c.bf16 %v2697, %v2695
        %v2935 = vpack.c.bf16 %v2875, %v2873
        %v2936 = vpack.c.bf16 %v2702, %v2700
        %v2937 = vpack.c.bf16 %v2880, %v2878
        %v2938 = vpack.c.bf16 %v2707, %v2705
        %v2939 = vpack.c.bf16 %v2885, %v2883
        %v2940 = vpack.c.bf16 %v2712, %v2710
        %v2941 = vpack.c.bf16 %v2890, %v2888
        %v2942 = vpack.c.bf16 %v2717, %v2715
        %v2943 = vpack.c.bf16 %v2895, %v2893
        %v2944 = vpack.c.bf16 %v2722, %v2720
        %v2945 = vpack.c.bf16 %v2900, %v2898
        %v2946 = vpack.c.bf16 %v2727, %v2725
        %v2947 = vpack.c.bf16 %v2905, %v2903
        %v2948 = vpack.c.bf16 %v2732, %v2730
        %v2949 = vpack.c.bf16 %v2910, %v2908
        %v2950 = vpack.c.bf16 %v2737, %v2735
        %v2951 = vpack.c.bf16 %v2915, %v2913
        %v2952 = vpack.c.bf16 %v2742, %v2740
        %v2953 = vpack.c.bf16 %v2920, %v2918
        %v2954 = vunpack.c.l.bf16 %v2922
        %v2955 = vunpack.c.l.bf16 %v2923
        %v2956 = vunpack.c.h.bf16 %v2922
        %v2957 = vunpack.c.h.bf16 %v2923
        %v2958 = vunpack.c.l.bf16 %v2924
        %v2959 = vunpack.c.l.bf16 %v2925
        %v2960 = vunpack.c.h.bf16 %v2924
        %v2961 = vunpack.c.h.bf16 %v2925
        %v2962 = vunpack.c.l.bf16 %v2926
        %v2963 = vunpack.c.l.bf16 %v2927
        %v2964 = vunpack.c.h.bf16 %v2926
        %v2965 = vunpack.c.h.bf16 %v2927
        %v2966 = vunpack.c.l.bf16 %v2928
        %v2967 = vunpack.c.l.bf16 %v2929
        %v2968 = vunpack.c.h.bf16 %v2928
        %v2969 = vunpack.c.h.bf16 %v2929
        %v2970 = vunpack.c.l.bf16 %v2930
        %v2971 = vunpack.c.l.bf16 %v2931
        %v2972 = vunpack.c.h.bf16 %v2930
        %v2973 = vunpack.c.h.bf16 %v2931
        %v2974 = vunpack.c.l.bf16 %v2932
        %v2975 = vunpack.c.l.bf16 %v2933
        %v2976 = vunpack.c.h.bf16 %v2932
        %v2977 = vunpack.c.h.bf16 %v2933
        %v2978 = vunpack.c.l.bf16 %v2934
        %v2979 = vunpack.c.l.bf16 %v2935
        %v2980 = vunpack.c.h.bf16 %v2934
        %v2981 = vunpack.c.h.bf16 %v2935
        %v2982 = vunpack.c.l.bf16 %v2936
        %v2983 = vunpack.c.l.bf16 %v2937
        %v2984 = vunpack.c.h.bf16 %v2936
        %v2985 = vunpack.c.h.bf16 %v2937
        %v2986 = vunpack.c.l.bf16 %v2938
        %v2987 = vunpack.c.l.bf16 %v2939
        %v2988 = vunpack.c.h.bf16 %v2938
        %v2989 = vunpack.c.h.bf16 %v2939
        %v2990 = vunpack.c.l.bf16 %v2940
        %v2991 = vunpack.c.l.bf16 %v2941
        %v2992 = vunpack.c.h.bf16 %v2940
        %v2993 = vunpack.c.h.bf16 %v2941
        %v2994 = vunpack.c.l.bf16 %v2942
        %v2995 = vunpack.c.l.bf16 %v2943
        %v2996 = vunpack.c.h.bf16 %v2942
        %v2997 = vunpack.c.h.bf16 %v2943
        %v2998 = vunpack.c.l.bf16 %v2944
        %v2999 = vunpack.c.l.bf16 %v2945
        %v3000 = vunpack.c.h.bf16 %v2944
        %v3001 = vunpack.c.h.bf16 %v2945
        %v3002 = vunpack.c.l.bf16 %v2946
        %v3003 = vunpack.c.l.bf16 %v2947
        %v3004 = vunpack.c.h.bf16 %v2946
        %v3005 = vunpack.c.h.bf16 %v2947
        %v3006 = vunpack.c.l.bf16 %v2948
        %v3007 = vunpack.c.l.bf16 %v2949
        %v3008 = vunpack.c.h.bf16 %v2948
        %v3009 = vunpack.c.h.bf16 %v2949
        %v3010 = vunpack.c.l.bf16 %v2950
        %v3011 = vunpack.c.l.bf16 %v2951
        %v3012 = vunpack.c.h.bf16 %v2950
        %v3013 = vunpack.c.h.bf16 %v2951
        %v3014 = vunpack.c.l.bf16 %v2952
        %v3015 = vunpack.c.l.bf16 %v2953
        %v3016 = vunpack.c.h.bf16 %v2952
        %v3017 = vunpack.c.h.bf16 %v2953
        %v3018 = vtanh.pop %v2954
        %v3019 = vtanh.pop %v2955
        %v3020 = vtanh.pop %v2956
        %v3021 = vtanh.pop %v2957
        %v3022 = vtanh.pop %v2958
        %v3023 = vtanh.pop %v2959
        %v3024 = vtanh.pop %v2960
        %v3025 = vtanh.pop %v2961
        %v3026 = vtanh.pop %v2962
        %v3027 = vtanh.pop %v2963
        %v3028 = vtanh.pop %v2964
        %v3029 = vtanh.pop %v2965
        %v3030 = vtanh.pop %v2966
        %v3031 = vtanh.pop %v2967
        %v3032 = vtanh.pop %v2968
        %v3033 = vtanh.pop %v2969
        %v3034 = vtanh.pop %v2970
        %v3035 = vtanh.pop %v2971
        %v3036 = vtanh.pop %v2972
        %v3037 = vtanh.pop %v2973
        %v3038 = vtanh.pop %v2974
        %v3039 = vtanh.pop %v2975
        %v3040 = vtanh.pop %v2976
        %v3041 = vtanh.pop %v2977
        %v3042 = vtanh.pop %v2978
        %v3043 = vtanh.pop %v2979
        %v3044 = vtanh.pop %v2980
        %v3045 = vtanh.pop %v2981
        %v3046 = vtanh.pop %v2982
        %v3047 = vtanh.pop %v2983
        %v3048 = vtanh.pop %v2984
        %v3049 = vtanh.pop %v2985
        %v3050 = vtanh.pop %v2986
        %v3051 = vtanh.pop %v2987
        %v3052 = vtanh.pop %v2988
        %v3053 = vtanh.pop %v2989
        %v3054 = vtanh.pop %v2990
        %v3055 = vtanh.pop %v2991
        %v3056 = vtanh.pop %v2992
        %v3057 = vtanh.pop %v2993
        %v3058 = vtanh.pop %v2994
        %v3059 = vtanh.pop %v2995
        %v3060 = vtanh.pop %v2996
        %v3061 = vtanh.pop %v2997
        %v3062 = vtanh.pop %v2998
        %v3063 = vtanh.pop %v2999
        %v3064 = vtanh.pop %v3000
        %v3065 = vtanh.pop %v3001
        %v3066 = vtanh.pop %v3002
        %v3067 = vtanh.pop %v3003
        %v3068 = vtanh.pop %v3004
        %v3069 = vtanh.pop %v3005
        %v3070 = vtanh.pop %v3006
        %v3071 = vtanh.pop %v3007
        %v3072 = vtanh.pop %v3008
        %v3073 = vtanh.pop %v3009
        %v3074 = vtanh.pop %v3010
        %v3075 = vtanh.pop %v3011
        %v3076 = vtanh.pop %v3012
        %v3077 = vtanh.pop %v3013
        %v3078 = vtanh.pop %v3014
        %v3079 = vtanh.pop %v3015
        %v3080 = vtanh.pop %v3016
        %v3081 = vtanh.pop %v3017
        %v3082 = vpack.c.bf16 %v3020, %v3018
        %v3083 = vpack.c.bf16 %v3021, %v3019
        %v3084 = vpack.c.bf16 %v3024, %v3022
        %v3085 = vpack.c.bf16 %v3025, %v3023
        %v3086 = vpack.c.bf16 %v3028, %v3026
        %v3087 = vpack.c.bf16 %v3029, %v3027
        %v3088 = vpack.c.bf16 %v3032, %v3030
        %v3089 = vpack.c.bf16 %v3033, %v3031
        %v3090 = vpack.c.bf16 %v3036, %v3034
        %v3091 = vpack.c.bf16 %v3037, %v3035
        %v3092 = vpack.c.bf16 %v3040, %v3038
        %v3093 = vpack.c.bf16 %v3041, %v3039
        %v3094 = vpack.c.bf16 %v3044, %v3042
        %v3095 = vpack.c.bf16 %v3045, %v3043
        %v3096 = vpack.c.bf16 %v3048, %v3046
        %v3097 = vpack.c.bf16 %v3049, %v3047
        %v3098 = vpack.c.bf16 %v3052, %v3050
        %v3099 = vpack.c.bf16 %v3053, %v3051
        %v3100 = vpack.c.bf16 %v3056, %v3054
        %v3101 = vpack.c.bf16 %v3057, %v3055
        %v3102 = vpack.c.bf16 %v3060, %v3058
        %v3103 = vpack.c.bf16 %v3061, %v3059
        %v3104 = vpack.c.bf16 %v3064, %v3062
        %v3105 = vpack.c.bf16 %v3065, %v3063
        %v3106 = vpack.c.bf16 %v3068, %v3066
        %v3107 = vpack.c.bf16 %v3069, %v3067
        %v3108 = vpack.c.bf16 %v3072, %v3070
        %v3109 = vpack.c.bf16 %v3073, %v3071
        %v3110 = vpack.c.bf16 %v3076, %v3074
        %v3111 = vpack.c.bf16 %v3077, %v3075
        %v3112 = vpack.c.bf16 %v3080, %v3078
        %v3113 = vpack.c.bf16 %v3081, %v3079
        %v3114 = vld [vmem:[#allocation8] sm:$0xff]
        %v3115 = vld [vmem:[#allocation8 + $0x8] sm:$0xff]
        %v3116 = vld [vmem:[#allocation8 + $0x10] sm:$0xff]
        %v3117 = vld [vmem:[#allocation8 + $0x18] sm:$0xff]
        %v3118 = vld [vmem:[#allocation8 + $0x20] sm:$0xff]
        %v3119 = vld [vmem:[#allocation8 + $0x28] sm:$0xff]
        %v3120 = vld [vmem:[#allocation8 + $0x30] sm:$0xff]
        %v3121 = vld [vmem:[#allocation8 + $0x38] sm:$0xff]
        %v3122 = vld [vmem:[#allocation8 + $0x40] sm:$0xff]
        %v3123 = vld [vmem:[#allocation8 + $0x48] sm:$0xff]
        %v3124 = vld [vmem:[#allocation8 + $0x50] sm:$0xff]
        %v3125 = vld [vmem:[#allocation8 + $0x58] sm:$0xff]
        %v3126 = vld [vmem:[#allocation8 + $0x60] sm:$0xff]
        %v3127 = vld [vmem:[#allocation8 + $0x68] sm:$0xff]
        %v3128 = vld [vmem:[#allocation8 + $0x70] sm:$0xff]
        %v3129 = vld [vmem:[#allocation8 + $0x78] sm:$0xff]
        %v3130 = vld [vmem:[#allocation8 + $0x80] sm:$0xff]
        %v3131 = vld [vmem:[#allocation8 + $0x88] sm:$0xff]
        %v3132 = vld [vmem:[#allocation8 + $0x90] sm:$0xff]
        %v3133 = vld [vmem:[#allocation8 + $0x98] sm:$0xff]
        %v3134 = vld [vmem:[#allocation8 + $0xa0] sm:$0xff]
        %v3135 = vld [vmem:[#allocation8 + $0xa8] sm:$0xff]
        %v3136 = vld [vmem:[#allocation8 + $0xb0] sm:$0xff]
        %v3137 = vld [vmem:[#allocation8 + $0xb8] sm:$0xff]
        %v3138 = vld [vmem:[#allocation8 + $0xc0] sm:$0xff]
        %v3139 = vld [vmem:[#allocation8 + $0xc8] sm:$0xff]
        %v3140 = vld [vmem:[#allocation8 + $0xd0] sm:$0xff]
        %v3141 = vld [vmem:[#allocation8 + $0xd8] sm:$0xff]
        %v3142 = vld [vmem:[#allocation8 + $0xe0] sm:$0xff]
        %v3143 = vld [vmem:[#allocation8 + $0xe8] sm:$0xff]
        %v3144 = vld [vmem:[#allocation8 + $0xf0] sm:$0xff]
        %v3145 = vld [vmem:[#allocation8 + $0xf8] sm:$0xff]
        %v3146 = vld [vmem:[%s9] sm:$0x3]
        %v3148 = vperm.slane %v3146, 0
        %v3149 = vperm.slane %v3146, 1
        %v3184 = vunpack.c.l.b16 %v3114
        %v3185 = vunpack.c.h.b16 %v3114
        %v3186 = vunpack.c.l.b16 %v3115
        %v3187 = vunpack.c.h.b16 %v3115
        %v3188 = vunpack.c.l.b16 %v3116
        %v3189 = vunpack.c.h.b16 %v3116
        %v3190 = vunpack.c.l.b16 %v3117
        %v3191 = vunpack.c.h.b16 %v3117
        %v3192 = vunpack.c.l.b16 %v3118
        %v3193 = vunpack.c.h.b16 %v3118
        %v3194 = vunpack.c.l.b16 %v3119
        %v3195 = vunpack.c.h.b16 %v3119
        %v3196 = vunpack.c.l.b16 %v3120
        %v3197 = vunpack.c.h.b16 %v3120
        %v3198 = vunpack.c.l.b16 %v3121
        %v3199 = vunpack.c.h.b16 %v3121
        %v3200 = vunpack.c.l.b16 %v3122
        %v3201 = vunpack.c.h.b16 %v3122
        %v3202 = vunpack.c.l.b16 %v3123
        %v3203 = vunpack.c.h.b16 %v3123
        %v3204 = vunpack.c.l.b16 %v3124
        %v3205 = vunpack.c.h.b16 %v3124
        %v3206 = vunpack.c.l.b16 %v3125
        %v3207 = vunpack.c.h.b16 %v3125
        %v3208 = vunpack.c.l.b16 %v3126
        %v3209 = vunpack.c.h.b16 %v3126
        %v3210 = vunpack.c.l.b16 %v3127
        %v3211 = vunpack.c.h.b16 %v3127
        %v3212 = vunpack.c.l.b16 %v3128
        %v3213 = vunpack.c.h.b16 %v3128
        %v3214 = vunpack.c.l.b16 %v3129
        %v3215 = vunpack.c.h.b16 %v3129
        %v3216 = vunpack.c.l.b16 %v3130
        %v3217 = vunpack.c.h.b16 %v3130
        %v3218 = vunpack.c.l.b16 %v3131
        %v3219 = vunpack.c.h.b16 %v3131
        %v3220 = vunpack.c.l.b16 %v3132
        %v3221 = vunpack.c.h.b16 %v3132
        %v3222 = vunpack.c.l.b16 %v3133
        %v3223 = vunpack.c.h.b16 %v3133
        %v3224 = vunpack.c.l.b16 %v3134
        %v3225 = vunpack.c.h.b16 %v3134
        %v3226 = vunpack.c.l.b16 %v3135
        %v3227 = vunpack.c.h.b16 %v3135
        %v3228 = vunpack.c.l.b16 %v3136
        %v3229 = vunpack.c.h.b16 %v3136
        %v3230 = vunpack.c.l.b16 %v3137
        %v3231 = vunpack.c.h.b16 %v3137
        %v3232 = vunpack.c.l.b16 %v3138
        %v3233 = vunpack.c.h.b16 %v3138
        %v3234 = vunpack.c.l.b16 %v3139
        %v3235 = vunpack.c.h.b16 %v3139
        %v3236 = vunpack.c.l.b16 %v3140
        %v3237 = vunpack.c.h.b16 %v3140
        %v3238 = vunpack.c.l.b16 %v3141
        %v3239 = vunpack.c.h.b16 %v3141
        %v3240 = vunpack.c.l.b16 %v3142
        %v3241 = vunpack.c.h.b16 %v3142
        %v3242 = vunpack.c.l.b16 %v3143
        %v3243 = vunpack.c.h.b16 %v3143
        %v3244 = vunpack.c.l.b16 %v3144
        %v3245 = vunpack.c.h.b16 %v3144
        %v3246 = vunpack.c.l.b16 %v3145
        %v3247 = vunpack.c.h.b16 %v3145
        %v3248 = vpack.c.b16 %v3186, %v3184
        %v3249 = vpack.c.b16 %v3187, %v3185
        %v3250 = vpack.c.b16 %v3190, %v3188
        %v3251 = vpack.c.b16 %v3191, %v3189
        %v3252 = vpack.c.b16 %v3194, %v3192
        %v3253 = vpack.c.b16 %v3195, %v3193
        %v3254 = vpack.c.b16 %v3198, %v3196
        %v3255 = vpack.c.b16 %v3199, %v3197
        %v3256 = vpack.c.b16 %v3202, %v3200
        %v3257 = vpack.c.b16 %v3203, %v3201
        %v3258 = vpack.c.b16 %v3206, %v3204
        %v3259 = vpack.c.b16 %v3207, %v3205
        %v3260 = vpack.c.b16 %v3210, %v3208
        %v3261 = vpack.c.b16 %v3211, %v3209
        %v3262 = vpack.c.b16 %v3214, %v3212
        %v3263 = vpack.c.b16 %v3215, %v3213
        %v3264 = vpack.c.b16 %v3218, %v3216
        %v3265 = vpack.c.b16 %v3219, %v3217
        %v3266 = vpack.c.b16 %v3222, %v3220
        %v3267 = vpack.c.b16 %v3223, %v3221
        %v3268 = vpack.c.b16 %v3226, %v3224
        %v3269 = vpack.c.b16 %v3227, %v3225
        %v3270 = vpack.c.b16 %v3230, %v3228
        %v3271 = vpack.c.b16 %v3231, %v3229
        %v3272 = vpack.c.b16 %v3234, %v3232
        %v3273 = vpack.c.b16 %v3235, %v3233
        %v3274 = vpack.c.b16 %v3238, %v3236
        %v3275 = vpack.c.b16 %v3239, %v3237
        %v3276 = vpack.c.b16 %v3242, %v3240
        %v3277 = vpack.c.b16 %v3243, %v3241
        %v3278 = vpack.c.b16 %v3246, %v3244
        %v3279 = vpack.c.b16 %v3247, %v3245
        %3312 = vmatpush.bf16.msra.mxu0 %v3262
        %3313 = vmatpush.bf16.msra.mxu0 %v3260
        %3314 = vmatpush.bf16.msra.mxu0 %v3258
        %3315 = vmatpush.bf16.msra.mxu0 %v3256
        %3316 = vmatpush.bf16.msra.mxu0 %v3254
        %3317 = vmatpush.bf16.msra.mxu0 %v3252
        %3318 = vmatpush.bf16.msra.mxu0 %v3250
        %3319 = vmatpush.bf16.msra.mxu0 %v3248
        %3320 = vmatmul.bf16.gmra.mxu0 %v3082
        %v3321 = vpop.f32.mrf.mxu0
        %v3322 = vadd.f32 %v3148, %v3321
        %v3323 = vpop.f32.mrf.mxu0
        %v3324 = vadd.f32 %v3148, %v3323
        %3325 = vmatmul.bf16.gmra.mxu0 %v3084
        %v3326 = vpop.f32.mrf.mxu0
        %v3327 = vadd.f32 %v3148, %v3326
        %v3328 = vpop.f32.mrf.mxu0
        %v3329 = vadd.f32 %v3148, %v3328
        %3330 = vmatmul.bf16.gmra.mxu0 %v3086
        %v3331 = vpop.f32.mrf.mxu0
        %v3332 = vadd.f32 %v3148, %v3331
        %v3333 = vpop.f32.mrf.mxu0
        %v3334 = vadd.f32 %v3148, %v3333
        %3335 = vmatmul.bf16.gmra.mxu0 %v3088
        %v3336 = vpop.f32.mrf.mxu0
        %v3337 = vadd.f32 %v3148, %v3336
        %v3338 = vpop.f32.mrf.mxu0
        %v3339 = vadd.f32 %v3148, %v3338
        %3340 = vmatmul.bf16.gmra.mxu0 %v3090
        %v3341 = vpop.f32.mrf.mxu0
        %v3342 = vadd.f32 %v3148, %v3341
        %v3343 = vpop.f32.mrf.mxu0
        %v3344 = vadd.f32 %v3148, %v3343
        %3345 = vmatmul.bf16.gmra.mxu0 %v3092
        %v3346 = vpop.f32.mrf.mxu0
        %v3347 = vadd.f32 %v3148, %v3346
        %v3348 = vpop.f32.mrf.mxu0
        %v3349 = vadd.f32 %v3148, %v3348
        %3350 = vmatmul.bf16.gmra.mxu0 %v3094
        %v3351 = vpop.f32.mrf.mxu0
        %v3352 = vadd.f32 %v3148, %v3351
        %v3353 = vpop.f32.mrf.mxu0
        %v3354 = vadd.f32 %v3148, %v3353
        %3355 = vmatmul.bf16.gmra.mxu0 %v3096
        %v3356 = vpop.f32.mrf.mxu0
        %v3357 = vadd.f32 %v3148, %v3356
        %v3358 = vpop.f32.mrf.mxu0
        %v3359 = vadd.f32 %v3148, %v3358
        %3360 = vmatmul.bf16.gmra.mxu0 %v3098
        %v3361 = vpop.f32.mrf.mxu0
        %v3362 = vadd.f32 %v3148, %v3361
        %v3363 = vpop.f32.mrf.mxu0
        %v3364 = vadd.f32 %v3148, %v3363
        %3365 = vmatmul.bf16.gmra.mxu0 %v3100
        %v3366 = vpop.f32.mrf.mxu0
        %v3367 = vadd.f32 %v3148, %v3366
        %v3368 = vpop.f32.mrf.mxu0
        %v3369 = vadd.f32 %v3148, %v3368
        %3370 = vmatmul.bf16.gmra.mxu0 %v3102
        %v3371 = vpop.f32.mrf.mxu0
        %v3372 = vadd.f32 %v3148, %v3371
        %v3373 = vpop.f32.mrf.mxu0
        %v3374 = vadd.f32 %v3148, %v3373
        %3375 = vmatmul.bf16.gmra.mxu0 %v3104
        %v3376 = vpop.f32.mrf.mxu0
        %v3377 = vadd.f32 %v3148, %v3376
        %v3378 = vpop.f32.mrf.mxu0
        %v3379 = vadd.f32 %v3148, %v3378
        %3380 = vmatmul.bf16.gmra.mxu0 %v3106
        %v3381 = vpop.f32.mrf.mxu0
        %v3382 = vadd.f32 %v3148, %v3381
        %v3383 = vpop.f32.mrf.mxu0
        %v3384 = vadd.f32 %v3148, %v3383
        %3385 = vmatmul.bf16.gmra.mxu0 %v3108
        %v3386 = vpop.f32.mrf.mxu0
        %v3387 = vadd.f32 %v3148, %v3386
        %v3388 = vpop.f32.mrf.mxu0
        %v3389 = vadd.f32 %v3148, %v3388
        %3390 = vmatmul.bf16.gmra.mxu0 %v3110
        %v3391 = vpop.f32.mrf.mxu0
        %v3392 = vadd.f32 %v3148, %v3391
        %v3393 = vpop.f32.mrf.mxu0
        %v3394 = vadd.f32 %v3148, %v3393
        %3395 = vmatmul.bf16.gmra.mxu0 %v3112
        %v3396 = vpop.f32.mrf.mxu0
        %v3397 = vadd.f32 %v3148, %v3396
        %v3398 = vpop.f32.mrf.mxu0
        %v3399 = vadd.f32 %v3148, %v3398
        %3400 = vdwg.mxu0
        %3401 = vmatpush.bf16.msra.mxu0 %v3278
        %3402 = vmatpush.bf16.msra.mxu0 %v3276
        %3403 = vmatpush.bf16.msra.mxu0 %v3274
        %3404 = vmatpush.bf16.msra.mxu0 %v3272
        %3405 = vmatpush.bf16.msra.mxu0 %v3270
        %3406 = vmatpush.bf16.msra.mxu0 %v3268
        %3407 = vmatpush.bf16.msra.mxu0 %v3266
        %3408 = vmatpush.bf16.msra.mxu0 %v3264
        %3409 = vmatmul.bf16.gmra.mxu0 %v3083
        %v3410 = vpop.f32.mrf.mxu0
        %v3411 = vadd.f32 %v3322, %v3410
        %v3412 = vpop.f32.mrf.mxu0
        %v3413 = vadd.f32 %v3324, %v3412
        %3414 = vmatmul.bf16.gmra.mxu0 %v3085
        %v3415 = vpop.f32.mrf.mxu0
        %v3416 = vadd.f32 %v3327, %v3415
        %v3417 = vpop.f32.mrf.mxu0
        %v3418 = vadd.f32 %v3329, %v3417
        %3419 = vmatmul.bf16.gmra.mxu0 %v3087
        %v3420 = vpop.f32.mrf.mxu0
        %v3421 = vadd.f32 %v3332, %v3420
        %v3422 = vpop.f32.mrf.mxu0
        %v3423 = vadd.f32 %v3334, %v3422
        %3424 = vmatmul.bf16.gmra.mxu0 %v3089
        %v3425 = vpop.f32.mrf.mxu0
        %v3426 = vadd.f32 %v3337, %v3425
        %v3427 = vpop.f32.mrf.mxu0
        %v3428 = vadd.f32 %v3339, %v3427
        %3429 = vmatmul.bf16.gmra.mxu0 %v3091
        %v3430 = vpop.f32.mrf.mxu0
        %v3431 = vadd.f32 %v3342, %v3430
        %v3432 = vpop.f32.mrf.mxu0
        %v3433 = vadd.f32 %v3344, %v3432
        %3434 = vmatmul.bf16.gmra.mxu0 %v3093
        %v3435 = vpop.f32.mrf.mxu0
        %v3436 = vadd.f32 %v3347, %v3435
        %v3437 = vpop.f32.mrf.mxu0
        %v3438 = vadd.f32 %v3349, %v3437
        %3439 = vmatmul.bf16.gmra.mxu0 %v3095
        %v3440 = vpop.f32.mrf.mxu0
        %v3441 = vadd.f32 %v3352, %v3440
        %v3442 = vpop.f32.mrf.mxu0
        %v3443 = vadd.f32 %v3354, %v3442
        %3444 = vmatmul.bf16.gmra.mxu0 %v3097
        %v3445 = vpop.f32.mrf.mxu0
        %v3446 = vadd.f32 %v3357, %v3445
        %v3447 = vpop.f32.mrf.mxu0
        %v3448 = vadd.f32 %v3359, %v3447
        %3449 = vmatmul.bf16.gmra.mxu0 %v3099
        %v3450 = vpop.f32.mrf.mxu0
        %v3451 = vadd.f32 %v3362, %v3450
        %v3452 = vpop.f32.mrf.mxu0
        %v3453 = vadd.f32 %v3364, %v3452
        %3454 = vmatmul.bf16.gmra.mxu0 %v3101
        %v3455 = vpop.f32.mrf.mxu0
        %v3456 = vadd.f32 %v3367, %v3455
        %v3457 = vpop.f32.mrf.mxu0
        %v3458 = vadd.f32 %v3369, %v3457
        %3459 = vmatmul.bf16.gmra.mxu0 %v3103
        %v3460 = vpop.f32.mrf.mxu0
        %v3461 = vadd.f32 %v3372, %v3460
        %v3462 = vpop.f32.mrf.mxu0
        %v3463 = vadd.f32 %v3374, %v3462
        %3464 = vmatmul.bf16.gmra.mxu0 %v3105
        %v3465 = vpop.f32.mrf.mxu0
        %v3466 = vadd.f32 %v3377, %v3465
        %v3467 = vpop.f32.mrf.mxu0
        %v3468 = vadd.f32 %v3379, %v3467
        %3469 = vmatmul.bf16.gmra.mxu0 %v3107
        %v3470 = vpop.f32.mrf.mxu0
        %v3471 = vadd.f32 %v3382, %v3470
        %v3472 = vpop.f32.mrf.mxu0
        %v3473 = vadd.f32 %v3384, %v3472
        %3474 = vmatmul.bf16.gmra.mxu0 %v3109
        %v3475 = vpop.f32.mrf.mxu0
        %v3476 = vadd.f32 %v3387, %v3475
        %v3477 = vpop.f32.mrf.mxu0
        %v3478 = vadd.f32 %v3389, %v3477
        %3479 = vmatmul.bf16.gmra.mxu0 %v3111
        %v3480 = vpop.f32.mrf.mxu0
        %v3481 = vadd.f32 %v3392, %v3480
        %v3482 = vpop.f32.mrf.mxu0
        %v3483 = vadd.f32 %v3394, %v3482
        %3484 = vmatmul.bf16.gmra.mxu0 %v3113
        %v3485 = vpop.f32.mrf.mxu0
        %v3486 = vadd.f32 %v3397, %v3485
        %v3487 = vpop.f32.mrf.mxu0
        %v3488 = vadd.f32 %v3399, %v3487
        %3489 = vdwg.mxu0
        %3490 = vmatpush.bf16.msra.mxu0 %v3263
        %3491 = vmatpush.bf16.msra.mxu0 %v3261
        %3492 = vmatpush.bf16.msra.mxu0 %v3259
        %3493 = vmatpush.bf16.msra.mxu0 %v3257
        %3494 = vmatpush.bf16.msra.mxu0 %v3255
        %3495 = vmatpush.bf16.msra.mxu0 %v3253
        %3496 = vmatpush.bf16.msra.mxu0 %v3251
        %3497 = vmatpush.bf16.msra.mxu0 %v3249
        %3498 = vmatmul.bf16.gmra.mxu0 %v3082
        %v3499 = vpop.f32.mrf.mxu0
        %v3500 = vadd.f32 %v3149, %v3499
        %v3501 = vpop.f32.mrf.mxu0
        %v3502 = vadd.f32 %v3149, %v3501
        %3503 = vmatmul.bf16.gmra.mxu0 %v3084
        %v3504 = vpop.f32.mrf.mxu0
        %v3505 = vadd.f32 %v3149, %v3504
        %v3506 = vpop.f32.mrf.mxu0
        %v3507 = vadd.f32 %v3149, %v3506
        %3508 = vmatmul.bf16.gmra.mxu0 %v3086
        %v3509 = vpop.f32.mrf.mxu0
        %v3510 = vadd.f32 %v3149, %v3509
        %v3511 = vpop.f32.mrf.mxu0
        %v3512 = vadd.f32 %v3149, %v3511
        %3513 = vmatmul.bf16.gmra.mxu0 %v3088
        %v3514 = vpop.f32.mrf.mxu0
        %v3515 = vadd.f32 %v3149, %v3514
        %v3516 = vpop.f32.mrf.mxu0
        %v3517 = vadd.f32 %v3149, %v3516
        %3518 = vmatmul.bf16.gmra.mxu0 %v3090
        %v3519 = vpop.f32.mrf.mxu0
        %v3520 = vadd.f32 %v3149, %v3519
        %v3521 = vpop.f32.mrf.mxu0
        %v3522 = vadd.f32 %v3149, %v3521
        %3523 = vmatmul.bf16.gmra.mxu0 %v3092
        %v3524 = vpop.f32.mrf.mxu0
        %v3525 = vadd.f32 %v3149, %v3524
        %v3526 = vpop.f32.mrf.mxu0
        %v3527 = vadd.f32 %v3149, %v3526
        %3528 = vmatmul.bf16.gmra.mxu0 %v3094
        %v3529 = vpop.f32.mrf.mxu0
        %v3530 = vadd.f32 %v3149, %v3529
        %v3531 = vpop.f32.mrf.mxu0
        %v3532 = vadd.f32 %v3149, %v3531
        %3533 = vmatmul.bf16.gmra.mxu0 %v3096
        %v3534 = vpop.f32.mrf.mxu0
        %v3535 = vadd.f32 %v3149, %v3534
        %v3536 = vpop.f32.mrf.mxu0
        %v3537 = vadd.f32 %v3149, %v3536
        %3538 = vmatmul.bf16.gmra.mxu0 %v3098
        %v3539 = vpop.f32.mrf.mxu0
        %v3540 = vadd.f32 %v3149, %v3539
        %v3541 = vpop.f32.mrf.mxu0
        %v3542 = vadd.f32 %v3149, %v3541
        %3543 = vmatmul.bf16.gmra.mxu0 %v3100
        %v3544 = vpop.f32.mrf.mxu0
        %v3545 = vadd.f32 %v3149, %v3544
        %v3546 = vpop.f32.mrf.mxu0
        %v3547 = vadd.f32 %v3149, %v3546
        %3548 = vmatmul.bf16.gmra.mxu0 %v3102
        %v3549 = vpop.f32.mrf.mxu0
        %v3550 = vadd.f32 %v3149, %v3549
        %v3551 = vpop.f32.mrf.mxu0
        %v3552 = vadd.f32 %v3149, %v3551
        %3553 = vmatmul.bf16.gmra.mxu0 %v3104
        %v3554 = vpop.f32.mrf.mxu0
        %v3555 = vadd.f32 %v3149, %v3554
        %v3556 = vpop.f32.mrf.mxu0
        %v3557 = vadd.f32 %v3149, %v3556
        %3558 = vmatmul.bf16.gmra.mxu0 %v3106
        %v3559 = vpop.f32.mrf.mxu0
        %v3560 = vadd.f32 %v3149, %v3559
        %v3561 = vpop.f32.mrf.mxu0
        %v3562 = vadd.f32 %v3149, %v3561
        %3563 = vmatmul.bf16.gmra.mxu0 %v3108
        %v3564 = vpop.f32.mrf.mxu0
        %v3565 = vadd.f32 %v3149, %v3564
        %v3566 = vpop.f32.mrf.mxu0
        %v3567 = vadd.f32 %v3149, %v3566
        %3568 = vmatmul.bf16.gmra.mxu0 %v3110
        %v3569 = vpop.f32.mrf.mxu0
        %v3570 = vadd.f32 %v3149, %v3569
        %v3571 = vpop.f32.mrf.mxu0
        %v3572 = vadd.f32 %v3149, %v3571
        %3573 = vmatmul.bf16.gmra.mxu0 %v3112
        %v3574 = vpop.f32.mrf.mxu0
        %v3575 = vadd.f32 %v3149, %v3574
        %v3576 = vpop.f32.mrf.mxu0
        %v3577 = vadd.f32 %v3149, %v3576
        %3578 = vdwg.mxu0
        %3579 = vmatpush.bf16.msra.mxu0 %v3279
        %3580 = vmatpush.bf16.msra.mxu0 %v3277
        %3581 = vmatpush.bf16.msra.mxu0 %v3275
        %3582 = vmatpush.bf16.msra.mxu0 %v3273
        %3583 = vmatpush.bf16.msra.mxu0 %v3271
        %3584 = vmatpush.bf16.msra.mxu0 %v3269
        %3585 = vmatpush.bf16.msra.mxu0 %v3267
        %3586 = vmatpush.bf16.msra.mxu0 %v3265
        %3587 = vmatmul.bf16.gmra.mxu0 %v3083
        %v3588 = vpop.f32.mrf.mxu0
        %v3589 = vadd.f32 %v3500, %v3588
        %v3590 = vpop.f32.mrf.mxu0
        %v3591 = vadd.f32 %v3502, %v3590
        %3592 = vmatmul.bf16.gmra.mxu0 %v3085
        %v3593 = vpop.f32.mrf.mxu0
        %v3594 = vadd.f32 %v3505, %v3593
        %v3595 = vpop.f32.mrf.mxu0
        %v3596 = vadd.f32 %v3507, %v3595
        %3597 = vmatmul.bf16.gmra.mxu0 %v3087
        %v3598 = vpop.f32.mrf.mxu0
        %v3599 = vadd.f32 %v3510, %v3598
        %v3600 = vpop.f32.mrf.mxu0
        %v3601 = vadd.f32 %v3512, %v3600
        %3602 = vmatmul.bf16.gmra.mxu0 %v3089
        %v3603 = vpop.f32.mrf.mxu0
        %v3604 = vadd.f32 %v3515, %v3603
        %v3605 = vpop.f32.mrf.mxu0
        %v3606 = vadd.f32 %v3517, %v3605
        %3607 = vmatmul.bf16.gmra.mxu0 %v3091
        %v3608 = vpop.f32.mrf.mxu0
        %v3609 = vadd.f32 %v3520, %v3608
        %v3610 = vpop.f32.mrf.mxu0
        %v3611 = vadd.f32 %v3522, %v3610
        %3612 = vmatmul.bf16.gmra.mxu0 %v3093
        %v3613 = vpop.f32.mrf.mxu0
        %v3614 = vadd.f32 %v3525, %v3613
        %v3615 = vpop.f32.mrf.mxu0
        %v3616 = vadd.f32 %v3527, %v3615
        %3617 = vmatmul.bf16.gmra.mxu0 %v3095
        %v3618 = vpop.f32.mrf.mxu0
        %v3619 = vadd.f32 %v3530, %v3618
        %v3620 = vpop.f32.mrf.mxu0
        %v3621 = vadd.f32 %v3532, %v3620
        %3622 = vmatmul.bf16.gmra.mxu0 %v3097
        %v3623 = vpop.f32.mrf.mxu0
        %v3624 = vadd.f32 %v3535, %v3623
        %v3625 = vpop.f32.mrf.mxu0
        %v3626 = vadd.f32 %v3537, %v3625
        %3627 = vmatmul.bf16.gmra.mxu0 %v3099
        %v3628 = vpop.f32.mrf.mxu0
        %v3629 = vadd.f32 %v3540, %v3628
        %v3630 = vpop.f32.mrf.mxu0
        %v3631 = vadd.f32 %v3542, %v3630
        %3632 = vmatmul.bf16.gmra.mxu0 %v3101
        %v3633 = vpop.f32.mrf.mxu0
        %v3634 = vadd.f32 %v3545, %v3633
        %v3635 = vpop.f32.mrf.mxu0
        %v3636 = vadd.f32 %v3547, %v3635
        %3637 = vmatmul.bf16.gmra.mxu0 %v3103
        %v3638 = vpop.f32.mrf.mxu0
        %v3639 = vadd.f32 %v3550, %v3638
        %v3640 = vpop.f32.mrf.mxu0
        %v3641 = vadd.f32 %v3552, %v3640
        %3642 = vmatmul.bf16.gmra.mxu0 %v3105
        %v3643 = vpop.f32.mrf.mxu0
        %v3644 = vadd.f32 %v3555, %v3643
        %v3645 = vpop.f32.mrf.mxu0
        %v3646 = vadd.f32 %v3557, %v3645
        %3647 = vmatmul.bf16.gmra.mxu0 %v3107
        %v3648 = vpop.f32.mrf.mxu0
        %v3649 = vadd.f32 %v3560, %v3648
        %v3650 = vpop.f32.mrf.mxu0
        %v3651 = vadd.f32 %v3562, %v3650
        %3652 = vmatmul.bf16.gmra.mxu0 %v3109
        %v3653 = vpop.f32.mrf.mxu0
        %v3654 = vadd.f32 %v3565, %v3653
        %v3655 = vpop.f32.mrf.mxu0
        %v3656 = vadd.f32 %v3567, %v3655
        %3657 = vmatmul.bf16.gmra.mxu0 %v3111
        %v3658 = vpop.f32.mrf.mxu0
        %v3659 = vadd.f32 %v3570, %v3658
        %v3660 = vpop.f32.mrf.mxu0
        %v3661 = vadd.f32 %v3572, %v3660
        %3662 = vmatmul.bf16.gmra.mxu0 %v3113
        %v3663 = vpop.f32.mrf.mxu0
        %v3664 = vadd.f32 %v3575, %v3663
        %v3665 = vpop.f32.mrf.mxu0
        %v3666 = vadd.f32 %v3577, %v3665
        %3667 = vdwg.mxu0
        %v3668 = vpack.c.bf16 %v3589, %v3411
        %v3669 = vpack.c.bf16 %v3591, %v3413
        %v3670 = vpack.c.bf16 %v3594, %v3416
        %v3671 = vpack.c.bf16 %v3596, %v3418
        %v3672 = vpack.c.bf16 %v3599, %v3421
        %v3673 = vpack.c.bf16 %v3601, %v3423
        %v3674 = vpack.c.bf16 %v3604, %v3426
        %v3675 = vpack.c.bf16 %v3606, %v3428
        %v3676 = vpack.c.bf16 %v3609, %v3431
        %v3677 = vpack.c.bf16 %v3611, %v3433
        %v3678 = vpack.c.bf16 %v3614, %v3436
        %v3679 = vpack.c.bf16 %v3616, %v3438
        %v3680 = vpack.c.bf16 %v3619, %v3441
        %v3681 = vpack.c.bf16 %v3621, %v3443
        %v3682 = vpack.c.bf16 %v3624, %v3446
        %v3683 = vpack.c.bf16 %v3626, %v3448
        %v3684 = vpack.c.bf16 %v3629, %v3451
        %v3685 = vpack.c.bf16 %v3631, %v3453
        %v3686 = vpack.c.bf16 %v3634, %v3456
        %v3687 = vpack.c.bf16 %v3636, %v3458
        %v3688 = vpack.c.bf16 %v3639, %v3461
        %v3689 = vpack.c.bf16 %v3641, %v3463
        %v3690 = vpack.c.bf16 %v3644, %v3466
        %v3691 = vpack.c.bf16 %v3646, %v3468
        %v3692 = vpack.c.bf16 %v3649, %v3471
        %v3693 = vpack.c.bf16 %v3651, %v3473
        %v3694 = vpack.c.bf16 %v3654, %v3476
        %v3695 = vpack.c.bf16 %v3656, %v3478
        %v3696 = vpack.c.bf16 %v3659, %v3481
        %v3697 = vpack.c.bf16 %v3661, %v3483
        %v3698 = vpack.c.bf16 %v3664, %v3486
        %v3699 = vpack.c.bf16 %v3666, %v3488
        %3700 = vst [vmem:[%s469] sm:$0xff] %v3668
        %3701 = vst [vmem:[%s469 + $0x8] sm:$0xff] %v3669
        %3702 = vst [vmem:[%s469 + $0x10] sm:$0xff] %v3670
        %3703 = vst [vmem:[%s469 + $0x18] sm:$0xff] %v3671
        %3704 = vst [vmem:[%s469 + $0x20] sm:$0xff] %v3672
        %3705 = vst [vmem:[%s469 + $0x28] sm:$0xff] %v3673
        %3706 = vst [vmem:[%s469 + $0x30] sm:$0xff] %v3674
        %3707 = vst [vmem:[%s469 + $0x38] sm:$0xff] %v3675
        %3708 = vst [vmem:[%s469 + $0x40] sm:$0xff] %v3676
        %3709 = vst [vmem:[%s469 + $0x48] sm:$0xff] %v3677
        %3710 = vst [vmem:[%s469 + $0x50] sm:$0xff] %v3678
        %3711 = vst [vmem:[%s469 + $0x58] sm:$0xff] %v3679
        %3712 = vst [vmem:[%s469 + $0x60] sm:$0xff] %v3680
        %3713 = vst [vmem:[%s469 + $0x68] sm:$0xff] %v3681
        %3714 = vst [vmem:[%s469 + $0x70] sm:$0xff] %v3682
        %3715 = vst [vmem:[%s469 + $0x78] sm:$0xff] %v3683
        %3716 = vst [vmem:[%s469 + $0x80] sm:$0xff] %v3684
        %3717 = vst [vmem:[%s469 + $0x88] sm:$0xff] %v3685
        %3718 = vst [vmem:[%s469 + $0x90] sm:$0xff] %v3686
        %3719 = vst [vmem:[%s469 + $0x98] sm:$0xff] %v3687
        %3720 = vst [vmem:[%s469 + $0xa0] sm:$0xff] %v3688
        %3721 = vst [vmem:[%s469 + $0xa8] sm:$0xff] %v3689
        %3722 = vst [vmem:[%s469 + $0xb0] sm:$0xff] %v3690
        %3723 = vst [vmem:[%s469 + $0xb8] sm:$0xff] %v3691
        %3724 = vst [vmem:[%s469 + $0xc0] sm:$0xff] %v3692
        %3725 = vst [vmem:[%s469 + $0xc8] sm:$0xff] %v3693
        %3726 = vst [vmem:[%s469 + $0xd0] sm:$0xff] %v3694
        %3727 = vst [vmem:[%s469 + $0xd8] sm:$0xff] %v3695
        %3728 = vst [vmem:[%s469 + $0xe0] sm:$0xff] %v3696
        %3729 = vst [vmem:[%s469 + $0xe8] sm:$0xff] %v3697
        %3730 = vst [vmem:[%s469 + $0xf0] sm:$0xff] %v3698
        %3731 = vst [vmem:[%s469 + $0xf8] sm:$0xff] %v3699
        %s3732 = sand.u32 %s260, 1
        %s3733 = scalar_lea.sflag [#allocation4], %s3732
        %s3734 = sand.u32 %s260, 1
        %s3735 = smul.addr %s3734, 256
        %s3736 = scalar_lea.vmem [#allocation10], %s3735
        %s3737 = sand.u32 %s286, 1
        %s3738 = scalar_lea.sflag [#allocation12], %s3737
        %s3739 = sand.u32 %s286, 1
        %s3740 = smul.addr %s3739, 512
        %s3741 = scalar_lea.vmem [#allocation11], %s3740
        // Predicated region
        $region77: #{tpu_custom_call.1} parent=59 // pred_check
          %p3742 = pneg %p270
        $region78: #{tpu_custom_call.1} parent=59 // pred_check_branch
          %3744 = sbr.rel (%p3742) target = $region80
        $region79: #{tpu_custom_call.1} parent=59 // pred_region
          %s3745 = smul.u32 32, %s32
          %3747 = vsyncadd %s3733, 0
          %s3748 = smul.addr %s3745, 2
          %s3749 = smul.addr %s3748, 4
          %s3750 = scalar_lea.hbm %s10, %s3749
          %s3751 = sshll.u32 %s3736, 4
          %s3752 = int_to_ptr.vmem [resolvable:$true] %s3751
          %s3753 = sshll.u32 %s3750, 4
          %s3754 = int_to_ptr.hbm [resolvable:$true] %s3753
          %3759 = dma.vmem_to_hbm [thread:$0]  %s3752, 4096, %s3754, %s3733, 128, 128, 8
        $region80: #{tpu_custom_call.1} parent=59 // pred_fallthru
          _
        // Predicated region
        $region81: #{tpu_custom_call.1} parent=59 // pred_check
          %p3760 = pneg %p296
        $region82: #{tpu_custom_call.1} parent=59 // pred_check_branch
          %3762 = sbr.rel (%p3760) target = $region84
        $region83: #{tpu_custom_call.1} parent=59 // pred_region
          %s3763 = smul.u32 32, %s32
          %3765 = vsyncadd %s3738, 0
          %s3766 = smul.addr %s3763, 2
          %s3767 = smul.addr %s3766, 8
          %s3768 = scalar_lea.hbm %s11, %s3767
          %s3769 = sshll.u32 %s3741, 4
          %s3770 = int_to_ptr.vmem [resolvable:$true] %s3769
          %s3771 = sshll.u32 %s3768, 4
          %s3772 = int_to_ptr.hbm [resolvable:$true] %s3771
          %3777 = dma.vmem_to_hbm [thread:$0]  %s3770, 8192, %s3772, %s3738, 256, 256, 16
        $region84: #{tpu_custom_call.1} parent=59 // pred_fallthru
          _
      $region60: #{tpu_custom_call.1} parent=5 // pred_fallthru
        _
      %p3778 = scmp.le.s32.totalorder 2, %s27
      // Predicated region
      $region85: #{tpu_custom_call.1} parent=5 // pred_check
        %p3779 = pneg %p3778
      $region86: #{tpu_custom_call.1} parent=5 // pred_check_branch
        %3781 = sbr.rel (%p3779) target = $region88
      $region87: #{tpu_custom_call.1} parent=5 // pred_region
        %s3782 = ssub.s32 %s27, 2
        // Predicated region
        $region89: #{tpu_custom_call.1} parent=87 // pred_check
          %p3783 = pneg %p276
        $region90: #{tpu_custom_call.1} parent=87 // pred_check_branch
          %3785 = sbr.rel (%p3783) target = $region92
        $region91: #{tpu_custom_call.1} parent=87 // pred_region
          %s3786 = sand.u32 %s261, 1
          %s3787 = scalar_lea.sflag [#allocation4], %s3786
          %s3788 = sand.u32 %s261, 1
          %s3789 = smul.addr %s3788, 256
          %s3790 = scalar_lea.vmem [#allocation10], %s3789
          %3792 = dma.done %s3787, 4096
        $region92: #{tpu_custom_call.1} parent=87 // pred_fallthru
          _
        // Predicated region
        $region93: #{tpu_custom_call.1} parent=87 // pred_check
          %p3793 = pneg %p302
        $region94: #{tpu_custom_call.1} parent=87 // pred_check_branch
          %3795 = sbr.rel (%p3793) target = $region96
        $region95: #{tpu_custom_call.1} parent=87 // pred_region
          %s3796 = sand.u32 %s287, 1
          %s3797 = scalar_lea.sflag [#allocation12], %s3796
          %s3798 = sand.u32 %s287, 1
          %s3799 = smul.addr %s3798, 512
          %s3800 = scalar_lea.vmem [#allocation11], %s3799
          %3802 = dma.done %s3797, 8192
        $region96: #{tpu_custom_call.1} parent=87 // pred_fallthru
          _
      $region88: #{tpu_custom_call.1} parent=5 // pred_fallthru
        _
    $region6: #{tpu_custom_call.1} parent=1 // loop_footer
      %s31 = sadd.s32 1, %s27
    $region7: #{tpu_custom_call.1} parent=1 // loop_footer_branch
      %26 = sbr.rel target = $region3
    $region8: #{tpu_custom_call.1} parent=1 // loop_exit
      _
    %3803 = vsyncpa [#allocation3], 1
    %s3804 = scalar_lea.sflag [#allocation3], 1
    %3805 = vsyncpa %s3804, 1
    %3806 = vsyncpa [#allocation6], 1
    %3807 = vsyncpa [#allocation9], 1
    %3808 = vsyncpa [#allocation4], 1
    %s3809 = scalar_lea.sflag [#allocation4], 1
    %3810 = vsyncpa %s3809, 1
    %3811 = vsyncpa [#allocation12], 1
    %s3812 = scalar_lea.sflag [#allocation12], 1
    %3813 = vsyncpa %s3812, 1

</llo_original>
